<compile_context>
chip_gen: v5e
topology: v5e:2x2
jax: 0.10.0
libtpu: 0.0.40
codegen_flags: <defaults>
</compile_context>

<pallas_src>
import jax
import jax.numpy as jnp
from jax.experimental import pallas as pl
from jax.experimental.pallas import tpu as pltpu

ISIZE, NZ, NDF, NGF = 16, 32, 4, 4
_EPS = 1e-5
_NFEAT = ISIZE * ISIZE          # 256 flattened input/output features
TILE_B = 256                    # batch rows per grid step (MXU M dimension)


# ----------------------------------------------------------------------------
# Fused Pallas kernel: full encoder + decoder forward on VMEM-resident data.
# Runs once per batch tile; weights/avg matrices are resident across steps.
# ----------------------------------------------------------------------------
def _aedc_fused_kernel(x_ref, m0, m1, m23, m4, m5, avg_a, avg_b, o_ref):
    f32 = jnp.float32
    bf16 = jnp.bfloat16

    def dense(h, m_ref):
        # One conv layer as a dense matmul over flattened NCHW activations.
        # bf16 operands, f32 accumulation on the MXU.
        return jnp.dot(h.astype(bf16), m_ref[...], preferred_element_type=f32)

    def inst_norm(y, avg_ref):
        # InstanceNorm2d (affine=False, eps=1e-5, biased variance).
        # avg_ref is a block-diagonal matrix averaging within each channel's
        # H*W chunk, so `y @ avg` simultaneously computes and broadcasts the
        # per-(sample, channel) statistics.  bf16 operands, f32 accumulation;
        # subtract-mean variance form (no E[y^2]-mean^2 cancellation risk).
        avg = avg_ref[...]
        mean = jnp.dot(y.astype(bf16), avg, preferred_element_type=f32)
        d = y - mean
        var = jnp.dot((d * d).astype(bf16), avg, preferred_element_type=f32)
        return d * jax.lax.rsqrt(var + _EPS)

    def lrelu(y):                                    # LeakyReLU(0.2)
        return jnp.maximum(y, 0.2 * y)

    x = x_ref[...]                                   # [TILE_B, 256] f32
    # ---- Encoder ----
    h = lrelu(inst_norm(dense(x, m0), avg_a))        # [TILE_B, 4*8*8]
    h = lrelu(inst_norm(dense(h, m1), avg_b))        # [TILE_B, 8*4*4]
    # ---- Encoder final conv fused with decoder first convT (m23 = m2 @ m3) --
    h = jnp.maximum(inst_norm(dense(h, m23), avg_b), 0.0)   # [TILE_B, 8*4*4]
    # ---- Decoder ----
    h = jnp.maximum(inst_norm(dense(h, m4), avg_a), 0.0)    # [TILE_B, 4*8*8]
    y = jnp.tanh(dense(h, m5))                               # [TILE_B, 1*16*16]
    o_ref[...] = y.astype(o_ref.dtype)


def _aedc_pallas_call(x_flat, ops):
    B = x_flat.shape[0]                              # multiple of TILE_B
    grid = (B // TILE_B,)

    def const_spec(arr):
        # Full-array block, constant block index -> stays VMEM-resident.
        return pl.BlockSpec(arr.shape, lambda i: (0, 0))

    return pl.pallas_call(
        _aedc_fused_kernel,
        out_shape=jax.ShapeDtypeStruct((B, _NFEAT), jnp.float32),
        grid=grid,
        in_specs=[pl.BlockSpec((TILE_B, _NFEAT), lambda i: (i, 0)),
                  const_spec(ops["m0"]), const_spec(ops["m1"]),
                  const_spec(ops["m23"]), const_spec(ops["m4"]),
                  const_spec(ops["m5"]),
                  const_spec(ops["avg_a"]), const_spec(ops["avg_b"])],
        out_specs=pl.BlockSpec((TILE_B, _NFEAT), lambda i: (i, 0)),
        compiler_params=pltpu.CompilerParams(
            dimension_semantics=("parallel",)),
    )(x_flat, ops["m0"], ops["m1"], ops["m23"], ops["m4"], ops["m5"],
      ops["avg_a"], ops["avg_b"])


# ----------------------------------------------------------------------------
# One-time weight preprocessing (outside the kernel hot path):
# lower each conv / conv-transpose to a dense operator over flattened NCHW.
# ----------------------------------------------------------------------------
_DN = ("NCHW", "OIHW", "NCHW")


def _conv_operator(w, stride, pad, cin, hin, win):
    # w: [Cout, Cin, kh, kw] (PyTorch Conv2d layout), bias=False.
    n_in = cin * hin * win
    basis = jnp.eye(n_in, dtype=jnp.float32).reshape(n_in, cin, hin, win)
    out = jax.lax.conv_general_dilated(
        basis, w, window_strides=(stride, stride),
        padding=[(pad, pad), (pad, pad)], dimension_numbers=_DN)
    return out.reshape(n_in, -1)


def _conv_transpose_operator(w, stride, pad, cin, hin, win):
    # w: [Cin, Cout, kh, kw] (PyTorch ConvTranspose2d layout), output_padding=0.
    # Equivalent forward conv: stride-dilated input, padding k-1-p, spatially
    # flipped channel-swapped kernel.
    kh, kw = w.shape[2], w.shape[3]
    w_conv = jnp.transpose(jnp.flip(w, axis=(2, 3)), (1, 0, 2, 3))
    n_in = cin * hin * win
    basis = jnp.eye(n_in, dtype=jnp.float32).reshape(n_in, cin, hin, win)
    out = jax.lax.conv_general_dilated(
        basis, w_conv, window_strides=(1, 1),
        padding=[(kh - 1 - pad, kh - 1 - pad), (kw - 1 - pad, kw - 1 - pad)],
        lhs_dilation=(stride, stride), dimension_numbers=_DN)
    return out.reshape(n_in, -1)


def _channel_avg_matrix(chan, hw):
    # Block-diagonal [chan*hw, chan*hw] matrix averaging within each channel's
    # spatial chunk (computes + broadcasts InstanceNorm statistics).
    # Entries (1/hw) are exact powers of two here -> exact in bf16.
    n = chan * hw
    ch = jnp.arange(n) // hw
    return (ch[:, None] == ch[None, :]).astype(jnp.float32) / float(hw)


def prepare_operators(params):
    m0 = _conv_operator(params["e0"], 2, 1, 1, 16, 16)            # [256, 256]
    m1 = _conv_operator(params["e1"], 2, 1, NDF, 8, 8)            # [256, 128]
    m2 = _conv_operator(params["e2"], 1, 0, NDF * 2, 4, 4)        # [128,  32]
    m3 = _conv_transpose_operator(params["d0"], 1, 0, NZ, 1, 1)   # [ 32, 128]
    m4 = _conv_transpose_operator(params["d1"], 2, 1, 8, 4, 4)    # [128, 256]
    m5 = _conv_transpose_operator(params["d2"], 2, 1, 4, 8, 8)    # [256, 256]
    m23 = m2 @ m3                                                  # [128, 128]
    bf = jnp.bfloat16
    return {
        "m0": m0.astype(bf), "m1": m1.astype(bf), "m23": m23.astype(bf),
        "m4": m4.astype(bf), "m5": m5.astype(bf),
        "avg_a": _channel_avg_matrix(NDF, 64).astype(bf),      # 4 ch x 8x8
        "avg_b": _channel_avg_matrix(NDF * 2, 16).astype(bf),  # 8 ch x 4x4
    }


# ----------------------------------------------------------------------------
# Model wrapper
# ----------------------------------------------------------------------------
def init_params(key):
    # Deterministic synthetic weights (no checkpoint load), PyTorch layouts.
    shapes = {
        # Encoder: 1->4 (16->8), 4->8 (8->4), 8->32 (4->1)
        "e0": (NDF, 1, 4, 4),
        "e1": (NDF * 2, NDF, 4, 4),
        "e2": (NZ, NDF * 2, 4, 4),
        # Decoder (cngf=8): 32->8 (1->4), 8->4 (4->8), 4->1 (8->16)
        "d0": (NZ, 8, 4, 4),
        "d1": (8, 4, 4, 4),
        "d2": (4, 1, 4, 4),
    }
    keys = jax.random.split(key, len(shapes))
    return {name: 0.05 * jax.random.normal(k, shp, dtype=jnp.float32)
            for (name, shp), k in zip(shapes.items(), keys)}


@jax.jit
def aedc_forward(ops, data):
    B = data.shape[0]
    x_flat = data.reshape(B, -1).astype(jnp.float32)   # flat NCHW, 256 lanes
    # Pad batch to a TILE_B multiple (also a sublane multiple): per-row math
    # (InstanceNorm is per-sample), so padded rows are independent garbage
    # that gets sliced away.
    b_pad = pl.cdiv(B, TILE_B) * TILE_B
    if b_pad != B:
        x_flat = jnp.pad(x_flat, ((0, b_pad - B), (0, 0)))
    recon_flat = _aedc_pallas_call(x_flat, ops)
    return recon_flat[:B].reshape(B, 1, ISIZE, ISIZE)


# ----------------------------------------------------------------------------
# Pure-XLA reference (same math as the PyTorch module) — validation only.
# ----------------------------------------------------------------------------
def _reference_forward(params, data):
    def conv(x, w, stride, pad):
        return jax.lax.conv_general_dilated(
            x, w, (stride, stride), [(pad, pad), (pad, pad)],
            dimension_numbers=_DN)

    def convT(x, w, stride, pad):
        k = w.shape[2]
        w_conv = jnp.transpose(jnp.flip(w, axis=(2, 3)), (1, 0, 2, 3))
        return jax.lax.conv_general_dilated(
            x, w_conv, (1, 1),
            [(k - 1 - pad, k - 1 - pad), (k - 1 - pad, k - 1 - pad)],
            lhs_dilation=(stride, stride), dimension_numbers=_DN)

    def inorm(x):
        m = jnp.mean(x, axis=(2, 3), keepdims=True)
        v = jnp.mean(jnp.square(x - m), axis=(2, 3), keepdims=True)
        return (x - m) * jax.lax.rsqrt(v + _EPS)

    lrelu = lambda t: jnp.where(t > 0, t, 0.2 * t)
    x = lrelu(inorm(conv(data, params["e0"], 2, 1)))
    x = lrelu(inorm(conv(x, params["e1"], 2, 1)))
    z = conv(x, params["e2"], 1, 0)
    y = jax.nn.relu(inorm(convT(z, params["d0"], 1, 0)))
    y = jax.nn.relu(inorm(convT(y, params["d1"], 2, 1)))
    return jnp.tanh(convT(y, params["d2"], 2, 1))


if __name__ == "__main__":
    key = jax.random.PRNGKey(0)
    pkey, dkey = jax.random.split(key)
    params = init_params(pkey)
    ops = prepare_operators(params)

    data = jax.random.normal(dkey, (2, 1, ISIZE, ISIZE), dtype=jnp.float32)

    recon = aedc_forward(ops, data)
    jax.block_until_ready(recon)

    assert recon.shape == (2, 1, ISIZE, ISIZE), recon.shape
    assert bool(jnp.all(jnp.isfinite(recon)))

    # Sanity check vs the pure-XLA reference (loose tolerance: the conv and
    # InstanceNorm-stats matmuls use bf16 operands on the MXU, elementwise
    # math stays f32).
    ref = _reference_forward(params, data)
    max_diff = float(jnp.max(jnp.abs(recon - ref)))
    assert max_diff < 0.1, f"mismatch vs reference: {max_diff}"

    print("KERNEL_OK")
</pallas_src>

<mosaic_0001>
module attributes {stable_mosaic.version = 11 : i64} {
  func.func @_aedc_fused_kernel(%arg0: i32, %arg1: memref<256x256xf32, #tpu.memory_space<vmem>>, %arg2: memref<256x256xbf16, #tpu.memory_space<vmem>>, %arg3: memref<256x128xbf16, #tpu.memory_space<vmem>>, %arg4: memref<128x128xbf16, #tpu.memory_space<vmem>>, %arg5: memref<128x256xbf16, #tpu.memory_space<vmem>>, %arg6: memref<256x256xbf16, #tpu.memory_space<vmem>>, %arg7: memref<256x256xbf16, #tpu.memory_space<vmem>>, %arg8: memref<128x128xbf16, #tpu.memory_space<vmem>>, %arg9: memref<256x256xf32, #tpu.memory_space<vmem>>) attributes {dimension_semantics = [#tpu.dimension_semantics<parallel>], iteration_bounds = array<i64: 1>, scalar_prefetch = 0 : i64, scratch_operands = 0 : i64, tpu.core_type = #tpu.core_type<tc>, window_params = [{transform_indices = @transform_0, window_bounds = array<i64: 256, 256>}, {pipeline_mode = #tpu.pipeline_mode<synchronous>, transform_indices = @transform_1, window_bounds = array<i64: 256, 256>}, {pipeline_mode = #tpu.pipeline_mode<synchronous>, transform_indices = @transform_2, window_bounds = array<i64: 256, 128>}, {pipeline_mode = #tpu.pipeline_mode<synchronous>, transform_indices = @transform_3, window_bounds = array<i64: 128, 128>}, {pipeline_mode = #tpu.pipeline_mode<synchronous>, transform_indices = @transform_4, window_bounds = array<i64: 128, 256>}, {pipeline_mode = #tpu.pipeline_mode<synchronous>, transform_indices = @transform_5, window_bounds = array<i64: 256, 256>}, {pipeline_mode = #tpu.pipeline_mode<synchronous>, transform_indices = @transform_6, window_bounds = array<i64: 256, 256>}, {pipeline_mode = #tpu.pipeline_mode<synchronous>, transform_indices = @transform_7, window_bounds = array<i64: 128, 128>}, {transform_indices = @transform_8, window_bounds = array<i64: 256, 256>}]} {
    %c0 = arith.constant 0 : index
    %c0_0 = arith.constant 0 : index
    %0 = vector.load %arg1[%c0, %c0_0] : memref<256x256xf32, #tpu.memory_space<vmem>>, vector<256x256xf32>
    %1 = arith.truncf %0 : vector<256x256xf32> to vector<256x256xbf16>
    %c0_1 = arith.constant 0 : index
    %c0_2 = arith.constant 0 : index
    %2 = vector.load %arg2[%c0_1, %c0_2] : memref<256x256xbf16, #tpu.memory_space<vmem>>, vector<256x256xbf16>
    %cst = arith.constant dense<0.000000e+00> : vector<256x256xf32>
    %3 = tpu.matmul %1, %2, %cst {dimension_numbers = #tpu.dot_dimension_numbers<[1], [0], [0], [1], [0, 0, 1, 1], [], []>} : vector<256x256xbf16>, vector<256x256xbf16>, vector<256x256xf32> -> vector<256x256xf32>
    %c0_3 = arith.constant 0 : index
    %c0_4 = arith.constant 0 : index
    %4 = vector.load %arg7[%c0_3, %c0_4] : memref<256x256xbf16, #tpu.memory_space<vmem>>, vector<256x256xbf16>
    %5 = arith.truncf %3 : vector<256x256xf32> to vector<256x256xbf16>
    %cst_5 = arith.constant dense<0.000000e+00> : vector<256x256xf32>
    %6 = tpu.matmul %5, %4, %cst_5 {dimension_numbers = #tpu.dot_dimension_numbers<[1], [0], [0], [1], [0, 0, 1, 1], [], []>} : vector<256x256xbf16>, vector<256x256xbf16>, vector<256x256xf32> -> vector<256x256xf32>
    %7 = arith.subf %3, %6 : vector<256x256xf32>
    %8 = arith.mulf %7, %7 : vector<256x256xf32>
    %9 = arith.truncf %8 : vector<256x256xf32> to vector<256x256xbf16>
    %cst_6 = arith.constant dense<0.000000e+00> : vector<256x256xf32>
    %10 = tpu.matmul %9, %4, %cst_6 {dimension_numbers = #tpu.dot_dimension_numbers<[1], [0], [0], [1], [0, 0, 1, 1], [], []>} : vector<256x256xbf16>, vector<256x256xbf16>, vector<256x256xf32> -> vector<256x256xf32>
    %cst_7 = arith.constant 9.99999974E-6 : f32
    %11 = vector.broadcast %cst_7 : f32 to vector<256x256xf32>
    %12 = arith.addf %10, %11 : vector<256x256xf32>
    %13 = math.rsqrt %12 : vector<256x256xf32>
    %14 = arith.mulf %7, %13 : vector<256x256xf32>
    %cst_8 = arith.constant 2.000000e-01 : f32
    %15 = vector.broadcast %cst_8 : f32 to vector<256x256xf32>
    %16 = arith.mulf %15, %14 : vector<256x256xf32>
    %17 = arith.maximumf %14, %16 : vector<256x256xf32>
    %18 = arith.truncf %17 : vector<256x256xf32> to vector<256x256xbf16>
    %c0_9 = arith.constant 0 : index
    %c0_10 = arith.constant 0 : index
    %19 = vector.load %arg3[%c0_9, %c0_10] : memref<256x128xbf16, #tpu.memory_space<vmem>>, vector<256x128xbf16>
    %cst_11 = arith.constant dense<0.000000e+00> : vector<256x128xf32>
    %20 = tpu.matmul %18, %19, %cst_11 {dimension_numbers = #tpu.dot_dimension_numbers<[1], [0], [0], [1], [0, 0, 1, 1], [], []>} : vector<256x256xbf16>, vector<256x128xbf16>, vector<256x128xf32> -> vector<256x128xf32>
    %c0_12 = arith.constant 0 : index
    %c0_13 = arith.constant 0 : index
    %21 = vector.load %arg8[%c0_12, %c0_13] : memref<128x128xbf16, #tpu.memory_space<vmem>>, vector<128x128xbf16>
    %22 = arith.truncf %20 : vector<256x128xf32> to vector<256x128xbf16>
    %cst_14 = arith.constant dense<0.000000e+00> : vector<256x128xf32>
    %23 = tpu.matmul %22, %21, %cst_14 {dimension_numbers = #tpu.dot_dimension_numbers<[1], [0], [0], [1], [0, 0, 1, 1], [], []>} : vector<256x128xbf16>, vector<128x128xbf16>, vector<256x128xf32> -> vector<256x128xf32>
    %24 = arith.subf %20, %23 : vector<256x128xf32>
    %25 = arith.mulf %24, %24 : vector<256x128xf32>
    %26 = arith.truncf %25 : vector<256x128xf32> to vector<256x128xbf16>
    %cst_15 = arith.constant dense<0.000000e+00> : vector<256x128xf32>
    %27 = tpu.matmul %26, %21, %cst_15 {dimension_numbers = #tpu.dot_dimension_numbers<[1], [0], [0], [1], [0, 0, 1, 1], [], []>} : vector<256x128xbf16>, vector<128x128xbf16>, vector<256x128xf32> -> vector<256x128xf32>
    %cst_16 = arith.constant 9.99999974E-6 : f32
    %28 = vector.broadcast %cst_16 : f32 to vector<256x128xf32>
    %29 = arith.addf %27, %28 : vector<256x128xf32>
    %30 = math.rsqrt %29 : vector<256x128xf32>
    %31 = arith.mulf %24, %30 : vector<256x128xf32>
    %cst_17 = arith.constant 2.000000e-01 : f32
    %32 = vector.broadcast %cst_17 : f32 to vector<256x128xf32>
    %33 = arith.mulf %32, %31 : vector<256x128xf32>
    %34 = arith.maximumf %31, %33 : vector<256x128xf32>
    %35 = arith.truncf %34 : vector<256x128xf32> to vector<256x128xbf16>
    %c0_18 = arith.constant 0 : index
    %c0_19 = arith.constant 0 : index
    %36 = vector.load %arg4[%c0_18, %c0_19] : memref<128x128xbf16, #tpu.memory_space<vmem>>, vector<128x128xbf16>
    %cst_20 = arith.constant dense<0.000000e+00> : vector<256x128xf32>
    %37 = tpu.matmul %35, %36, %cst_20 {dimension_numbers = #tpu.dot_dimension_numbers<[1], [0], [0], [1], [0, 0, 1, 1], [], []>} : vector<256x128xbf16>, vector<128x128xbf16>, vector<256x128xf32> -> vector<256x128xf32>
    %c0_21 = arith.constant 0 : index
    %c0_22 = arith.constant 0 : index
    %38 = vector.load %arg8[%c0_21, %c0_22] : memref<128x128xbf16, #tpu.memory_space<vmem>>, vector<128x128xbf16>
    %39 = arith.truncf %37 : vector<256x128xf32> to vector<256x128xbf16>
    %cst_23 = arith.constant dense<0.000000e+00> : vector<256x128xf32>
    %40 = tpu.matmul %39, %38, %cst_23 {dimension_numbers = #tpu.dot_dimension_numbers<[1], [0], [0], [1], [0, 0, 1, 1], [], []>} : vector<256x128xbf16>, vector<128x128xbf16>, vector<256x128xf32> -> vector<256x128xf32>
    %41 = arith.subf %37, %40 : vector<256x128xf32>
    %42 = arith.mulf %41, %41 : vector<256x128xf32>
    %43 = arith.truncf %42 : vector<256x128xf32> to vector<256x128xbf16>
    %cst_24 = arith.constant dense<0.000000e+00> : vector<256x128xf32>
    %44 = tpu.matmul %43, %38, %cst_24 {dimension_numbers = #tpu.dot_dimension_numbers<[1], [0], [0], [1], [0, 0, 1, 1], [], []>} : vector<256x128xbf16>, vector<128x128xbf16>, vector<256x128xf32> -> vector<256x128xf32>
    %cst_25 = arith.constant 9.99999974E-6 : f32
    %45 = vector.broadcast %cst_25 : f32 to vector<256x128xf32>
    %46 = arith.addf %44, %45 : vector<256x128xf32>
    %47 = math.rsqrt %46 : vector<256x128xf32>
    %48 = arith.mulf %41, %47 : vector<256x128xf32>
    %cst_26 = arith.constant 0.000000e+00 : f32
    %49 = vector.broadcast %cst_26 : f32 to vector<256x128xf32>
    %50 = arith.maximumf %48, %49 : vector<256x128xf32>
    %51 = arith.truncf %50 : vector<256x128xf32> to vector<256x128xbf16>
    %c0_27 = arith.constant 0 : index
    %c0_28 = arith.constant 0 : index
    %52 = vector.load %arg5[%c0_27, %c0_28] : memref<128x256xbf16, #tpu.memory_space<vmem>>, vector<128x256xbf16>
    %cst_29 = arith.constant dense<0.000000e+00> : vector<256x256xf32>
    %53 = tpu.matmul %51, %52, %cst_29 {dimension_numbers = #tpu.dot_dimension_numbers<[1], [0], [0], [1], [0, 0, 1, 1], [], []>} : vector<256x128xbf16>, vector<128x256xbf16>, vector<256x256xf32> -> vector<256x256xf32>
    %c0_30 = arith.constant 0 : index
    %c0_31 = arith.constant 0 : index
    %54 = vector.load %arg7[%c0_30, %c0_31] : memref<256x256xbf16, #tpu.memory_space<vmem>>, vector<256x256xbf16>
    %55 = arith.truncf %53 : vector<256x256xf32> to vector<256x256xbf16>
    %cst_32 = arith.constant dense<0.000000e+00> : vector<256x256xf32>
    %56 = tpu.matmul %55, %54, %cst_32 {dimension_numbers = #tpu.dot_dimension_numbers<[1], [0], [0], [1], [0, 0, 1, 1], [], []>} : vector<256x256xbf16>, vector<256x256xbf16>, vector<256x256xf32> -> vector<256x256xf32>
    %57 = arith.subf %53, %56 : vector<256x256xf32>
    %58 = arith.mulf %57, %57 : vector<256x256xf32>
    %59 = arith.truncf %58 : vector<256x256xf32> to vector<256x256xbf16>
    %cst_33 = arith.constant dense<0.000000e+00> : vector<256x256xf32>
    %60 = tpu.matmul %59, %54, %cst_33 {dimension_numbers = #tpu.dot_dimension_numbers<[1], [0], [0], [1], [0, 0, 1, 1], [], []>} : vector<256x256xbf16>, vector<256x256xbf16>, vector<256x256xf32> -> vector<256x256xf32>
    %cst_34 = arith.constant 9.99999974E-6 : f32
    %61 = vector.broadcast %cst_34 : f32 to vector<256x256xf32>
    %62 = arith.addf %60, %61 : vector<256x256xf32>
    %63 = math.rsqrt %62 : vector<256x256xf32>
    %64 = arith.mulf %57, %63 : vector<256x256xf32>
    %cst_35 = arith.constant 0.000000e+00 : f32
    %65 = vector.broadcast %cst_35 : f32 to vector<256x256xf32>
    %66 = arith.maximumf %64, %65 : vector<256x256xf32>
    %67 = arith.truncf %66 : vector<256x256xf32> to vector<256x256xbf16>
    %c0_36 = arith.constant 0 : index
    %c0_37 = arith.constant 0 : index
    %68 = vector.load %arg6[%c0_36, %c0_37] : memref<256x256xbf16, #tpu.memory_space<vmem>>, vector<256x256xbf16>
    %cst_38 = arith.constant dense<0.000000e+00> : vector<256x256xf32>
    %69 = tpu.matmul %67, %68, %cst_38 {dimension_numbers = #tpu.dot_dimension_numbers<[1], [0], [0], [1], [0, 0, 1, 1], [], []>} : vector<256x256xbf16>, vector<256x256xbf16>, vector<256x256xf32> -> vector<256x256xf32>
    %70 = math.tanh %69 : vector<256x256xf32>
    %c0_39 = arith.constant 0 : index
    %c0_40 = arith.constant 0 : index
    %71 = vector.load %arg9[%c0_39, %c0_40] : memref<256x256xf32, #tpu.memory_space<vmem>>, vector<256x256xf32>
    tpu.vector_store %arg9[%c0_39, %c0_40], %70 {strides = array<i32>} : memref<256x256xf32, #tpu.memory_space<vmem>>, vector<256x256xf32>,
    return
  }
  func.func @transform_0(%arg0: i32) -> (i32, i32) {
    %c0_i32 = arith.constant 0 : i32
    %c0_i32_0 = arith.constant 0 : i32
    return %arg0, %c0_i32 : i32, i32
  }
  func.func @transform_1(%arg0: i32) -> (i32, i32) {
    %c0_i32 = arith.constant 0 : i32
    %c0_i32_0 = arith.constant 0 : i32
    %c0_i32_1 = arith.constant 0 : i32
    return %c0_i32, %c0_i32_0 : i32, i32
  }
  func.func @transform_2(%arg0: i32) -> (i32, i32) {
    %c0_i32 = arith.constant 0 : i32
    %c0_i32_0 = arith.constant 0 : i32
    %c0_i32_1 = arith.constant 0 : i32
    return %c0_i32, %c0_i32_0 : i32, i32
  }
  func.func @transform_3(%arg0: i32) -> (i32, i32) {
    %c0_i32 = arith.constant 0 : i32
    %c0_i32_0 = arith.constant 0 : i32
    %c0_i32_1 = arith.constant 0 : i32
    return %c0_i32, %c0_i32_0 : i32, i32
  }
  func.func @transform_4(%arg0: i32) -> (i32, i32) {
    %c0_i32 = arith.constant 0 : i32
    %c0_i32_0 = arith.constant 0 : i32
    %c0_i32_1 = arith.constant 0 : i32
    return %c0_i32, %c0_i32_0 : i32, i32
  }
  func.func @transform_5(%arg0: i32) -> (i32, i32) {
    %c0_i32 = arith.constant 0 : i32
    %c0_i32_0 = arith.constant 0 : i32
    %c0_i32_1 = arith.constant 0 : i32
    return %c0_i32, %c0_i32_0 : i32, i32
  }
  func.func @transform_6(%arg0: i32) -> (i32, i32) {
    %c0_i32 = arith.constant 0 : i32
    %c0_i32_0 = arith.constant 0 : i32
    %c0_i32_1 = arith.constant 0 : i32
    return %c0_i32, %c0_i32_0 : i32, i32
  }
  func.func @transform_7(%arg0: i32) -> (i32, i32) {
    %c0_i32 = arith.constant 0 : i32
    %c0_i32_0 = arith.constant 0 : i32
    %c0_i32_1 = arith.constant 0 : i32
    return %c0_i32, %c0_i32_0 : i32, i32
  }
  func.func @transform_8(%arg0: i32) -> (i32, i32) {
    %c0_i32 = arith.constant 0 : i32
    %c0_i32_0 = arith.constant 0 : i32
    return %arg0, %c0_i32 : i32, i32
  }
}

</mosaic_0001>

<llo_original>
// kernel: aedc_forward.1
$region0: #{aedc_forward.1}
  #allocation0 [shape = 'u32[]', space=smem, size = 0x4, offset = 0x4, fixed_abs, tag = 'smem constant byte address 0x4 - core index']
  #allocation1 [shape = 'u32[72,128]{1,0:T(1,128)}', space=vmem, size = 0x9000, scoped, tag = 'internal scratch']
  %s0 = inlined_call_operand.vmem [shape: f32[256,256], index: 0, kind: input, shape index: {}]
  %s1 = inlined_call_operand.vmem [shape: bf16[256,256], index: 1, kind: input, shape index: {}]
  %s2 = inlined_call_operand.hbm [shape: bf16[256,128], index: 2, kind: input, shape index: {}]
  %s3 = inlined_call_operand.hbm [shape: bf16[128,128], index: 3, kind: input, shape index: {}]
  %s4 = inlined_call_operand.hbm [shape: bf16[128,256], index: 4, kind: input, shape index: {}]
  %s5 = inlined_call_operand.vmem [shape: bf16[256,256], index: 5, kind: input, shape index: {}]
  %s6 = inlined_call_operand.hbm [shape: bf16[256,256], index: 6, kind: input, shape index: {}]
  %s7 = inlined_call_operand.hbm [shape: bf16[128,128], index: 7, kind: input, shape index: {}]
  %s8 = inlined_call_operand.vmem [shape: f32[256,256], index: 8, kind: output, shape index: {}]
  %s9 = sld [smem:[#allocation0]]
  $region62: #{aedc_forward.1} parent=0
    _
  %s11 = ssub.s32 1, %s9
  %s12 = scalar_select 0, %s11, %s9
  $region1: #{aedc_forward.1} parent=0
    #allocation2 [shape = 'u8[65536]{0}', space=vmem, size = 0x10000, scoped, tag = 'input window, operand 2, single buffered']
    #allocation3 [shape = 's32[1]{0}', space=sflag, size = 0x4, scoped, tag = 'scoped memory for aedc_forward.1']
    #allocation4 [shape = 'u8[32768]{0}', space=vmem, size = 0x8000, scoped, tag = 'input window, operand 3, single buffered']
    #allocation5 [shape = 's32[1]{0}', space=sflag, size = 0x4, scoped, tag = 'scoped memory for aedc_forward.1']
    #allocation6 [shape = 'u8[65536]{0}', space=vmem, size = 0x10000, scoped, tag = 'input window, operand 4, single buffered']
    #allocation7 [shape = 'u8[131072]{0}', space=vmem, size = 0x20000, scoped, tag = 'input window, operand 6, single buffered']
    #allocation8 [shape = 's32[1]{0}', space=sflag, size = 0x4, scoped, tag = 'scoped memory for aedc_forward.1']
    #allocation9 [shape = 'u8[32768]{0}', space=vmem, size = 0x8000, scoped, tag = 'input window, operand 7, single buffered']
    %13 = vsyncpa [#allocation3], 0
    %14 = vsyncpa [#allocation5], 0
    %15 = vsyncpa [#allocation8], 0
    // Predicated region
    $region2: #{aedc_forward.1} parent=1 // pred_check
      _
    $region3: #{aedc_forward.1} parent=1 // pred_check_branch
      %17 = sbr.rel (0) target = $region5
    $region4: #{aedc_forward.1} parent=1 // pred_region
      _
    $region5: #{aedc_forward.1} parent=1 // pred_fallthru
      _
    // Predicated region
    $region6: #{aedc_forward.1} parent=1 // pred_check
      _
    $region7: #{aedc_forward.1} parent=1 // pred_check_branch
      %19 = sbr.rel (0) target = $region9
    $region8: #{aedc_forward.1} parent=1 // pred_region
      _
    $region9: #{aedc_forward.1} parent=1 // pred_fallthru
      _
    // Predicated region
    $region10: #{aedc_forward.1} parent=1 // pred_check
      _
    $region11: #{aedc_forward.1} parent=1 // pred_check_branch
      %21 = sbr.rel (0) target = $region13
    $region12: #{aedc_forward.1} parent=1 // pred_region
      %23 = vsyncadd [#allocation3], 0
      %s24 = sshll.u32 %s2, 4
      %s25 = int_to_ptr.hbm [resolvable:$true] %s24
      %s26 = sshll.u32 [#allocation2], 4
      %s27 = int_to_ptr.vmem [resolvable:$true] %s26
      %32 = dma.hbm_to_vmem [thread:$0]  %s25, 2048, %s27, [#allocation3], 64, 64, 4
    $region13: #{aedc_forward.1} parent=1 // pred_fallthru
      _
    // Predicated region
    $region14: #{aedc_forward.1} parent=1 // pred_check
      _
    $region15: #{aedc_forward.1} parent=1 // pred_check_branch
      %34 = sbr.rel (0) target = $region17
    $region16: #{aedc_forward.1} parent=1 // pred_region
      %36 = vsyncadd [#allocation5], 0
      %s37 = sshll.u32 %s3, 4
      %s38 = int_to_ptr.hbm [resolvable:$true] %s37
      %s39 = sshll.u32 [#allocation4], 4
      %s40 = int_to_ptr.vmem [resolvable:$true] %s39
      %45 = dma.hbm_to_vmem [thread:$0]  %s38, 1024, %s40, [#allocation5], 64, 64, 4
    $region17: #{aedc_forward.1} parent=1 // pred_fallthru
      _
    // Predicated region
    $region18: #{aedc_forward.1} parent=1 // pred_check
      _
    $region19: #{aedc_forward.1} parent=1 // pred_check_branch
      %47 = sbr.rel (0) target = $region21
    $region20: #{aedc_forward.1} parent=1 // pred_region
      %49 = vsyncadd [#allocation5], 0
      %s50 = sshll.u32 %s4, 4
      %s51 = int_to_ptr.hbm [resolvable:$true] %s50
      %s52 = sshll.u32 [#allocation6], 4
      %s53 = int_to_ptr.vmem [resolvable:$true] %s52
      %58 = dma.hbm_to_vmem [thread:$0]  %s51, 2048, %s53, [#allocation5], 128, 128, 8
    $region21: #{aedc_forward.1} parent=1 // pred_fallthru
      _
    // Predicated region
    $region22: #{aedc_forward.1} parent=1 // pred_check
      _
    $region23: #{aedc_forward.1} parent=1 // pred_check_branch
      %60 = sbr.rel (0) target = $region25
    $region24: #{aedc_forward.1} parent=1 // pred_region
      _
    $region25: #{aedc_forward.1} parent=1 // pred_fallthru
      _
    // Predicated region
    $region26: #{aedc_forward.1} parent=1 // pred_check
      _
    $region27: #{aedc_forward.1} parent=1 // pred_check_branch
      %62 = sbr.rel (0) target = $region29
    $region28: #{aedc_forward.1} parent=1 // pred_region
      %64 = vsyncadd [#allocation8], 0
      %s65 = sshll.u32 %s6, 4
      %s66 = int_to_ptr.hbm [resolvable:$true] %s65
      %s67 = sshll.u32 [#allocation7], 4
      %s68 = int_to_ptr.vmem [resolvable:$true] %s67
      %73 = dma.hbm_to_vmem [thread:$0]  %s66, 4096, %s68, [#allocation8], 128, 128, 8
    $region29: #{aedc_forward.1} parent=1 // pred_fallthru
      _
    // Predicated region
    $region30: #{aedc_forward.1} parent=1 // pred_check
      _
    $region31: #{aedc_forward.1} parent=1 // pred_check_branch
      %75 = sbr.rel (0) target = $region33
    $region32: #{aedc_forward.1} parent=1 // pred_region
      %77 = vsyncadd [#allocation8], 0
      %s78 = sshll.u32 %s7, 4
      %s79 = int_to_ptr.hbm [resolvable:$true] %s78
      %s80 = sshll.u32 [#allocation9], 4
      %s81 = int_to_ptr.vmem [resolvable:$true] %s80
      %86 = dma.hbm_to_vmem [thread:$0]  %s79, 1024, %s81, [#allocation8], 64, 64, 4
    $region33: #{aedc_forward.1} parent=1 // pred_fallthru
      _
    // Predicated region
    $region34: #{aedc_forward.1} parent=1 // pred_check
      _
    $region35: #{aedc_forward.1} parent=1 // pred_check_branch
      %88 = sbr.rel (0) target = $region37
    $region36: #{aedc_forward.1} parent=1 // pred_region
      %90 = dma.done [#allocation3], 2048
    $region37: #{aedc_forward.1} parent=1 // pred_fallthru
      _
    // Predicated region
    $region38: #{aedc_forward.1} parent=1 // pred_check
      _
    $region39: #{aedc_forward.1} parent=1 // pred_check_branch
      %92 = sbr.rel (0) target = $region41
    $region40: #{aedc_forward.1} parent=1 // pred_region
      %94 = dma.done [#allocation5], 1024
    $region41: #{aedc_forward.1} parent=1 // pred_fallthru
      _
    // Predicated region
    $region42: #{aedc_forward.1} parent=1 // pred_check
      _
    $region43: #{aedc_forward.1} parent=1 // pred_check_branch
      %96 = sbr.rel (0) target = $region45
    $region44: #{aedc_forward.1} parent=1 // pred_region
      %98 = dma.done [#allocation5], 2048
    $region45: #{aedc_forward.1} parent=1 // pred_fallthru
      _
    // Predicated region
    $region46: #{aedc_forward.1} parent=1 // pred_check
      _
    $region47: #{aedc_forward.1} parent=1 // pred_check_branch
      %100 = sbr.rel (0) target = $region49
    $region48: #{aedc_forward.1} parent=1 // pred_region
      %102 = dma.done [#allocation8], 4096
    $region49: #{aedc_forward.1} parent=1 // pred_fallthru
      _
    // Predicated region
    $region50: #{aedc_forward.1} parent=1 // pred_check
      _
    $region51: #{aedc_forward.1} parent=1 // pred_check_branch
      %104 = sbr.rel (0) target = $region53
    $region52: #{aedc_forward.1} parent=1 // pred_region
      %106 = dma.done [#allocation8], 1024
    $region53: #{aedc_forward.1} parent=1 // pred_fallthru
      _
    %v107 = vld [vmem:[%s0] sm:$0xff]
    %v108 = vld [vmem:[%s0 + $0x8] sm:$0xff]
    %v109 = vld [vmem:[%s0 + $0x10] sm:$0xff]
    %v110 = vld [vmem:[%s0 + $0x18] sm:$0xff]
    %v111 = vld [vmem:[%s0 + $0x20] sm:$0xff]
    %v112 = vld [vmem:[%s0 + $0x28] sm:$0xff]
    %v113 = vld [vmem:[%s0 + $0x30] sm:$0xff]
    %v114 = vld [vmem:[%s0 + $0x38] sm:$0xff]
    %v115 = vld [vmem:[%s0 + $0x40] sm:$0xff]
    %v116 = vld [vmem:[%s0 + $0x48] sm:$0xff]
    %v117 = vld [vmem:[%s0 + $0x50] sm:$0xff]
    %v118 = vld [vmem:[%s0 + $0x58] sm:$0xff]
    %v119 = vld [vmem:[%s0 + $0x60] sm:$0xff]
    %v120 = vld [vmem:[%s0 + $0x68] sm:$0xff]
    %v121 = vld [vmem:[%s0 + $0x70] sm:$0xff]
    %v122 = vld [vmem:[%s0 + $0x78] sm:$0xff]
    %v123 = vld [vmem:[%s0 + $0x80] sm:$0xff]
    %v124 = vld [vmem:[%s0 + $0x88] sm:$0xff]
    %v125 = vld [vmem:[%s0 + $0x90] sm:$0xff]
    %v126 = vld [vmem:[%s0 + $0x98] sm:$0xff]
    %v127 = vld [vmem:[%s0 + $0xa0] sm:$0xff]
    %v128 = vld [vmem:[%s0 + $0xa8] sm:$0xff]
    %v129 = vld [vmem:[%s0 + $0xb0] sm:$0xff]
    %v130 = vld [vmem:[%s0 + $0xb8] sm:$0xff]
    %v131 = vld [vmem:[%s0 + $0xc0] sm:$0xff]
    %v132 = vld [vmem:[%s0 + $0xc8] sm:$0xff]
    %v133 = vld [vmem:[%s0 + $0xd0] sm:$0xff]
    %v134 = vld [vmem:[%s0 + $0xd8] sm:$0xff]
    %v135 = vld [vmem:[%s0 + $0xe0] sm:$0xff]
    %v136 = vld [vmem:[%s0 + $0xe8] sm:$0xff]
    %v137 = vld [vmem:[%s0 + $0xf0] sm:$0xff]
    %v138 = vld [vmem:[%s0 + $0xf8] sm:$0xff]
    %v139 = vld [vmem:[%s0 + $0x100] sm:$0xff]
    %v140 = vld [vmem:[%s0 + $0x108] sm:$0xff]
    %v141 = vld [vmem:[%s0 + $0x110] sm:$0xff]
    %v142 = vld [vmem:[%s0 + $0x118] sm:$0xff]
    %v143 = vld [vmem:[%s0 + $0x120] sm:$0xff]
    %v144 = vld [vmem:[%s0 + $0x128] sm:$0xff]
    %v145 = vld [vmem:[%s0 + $0x130] sm:$0xff]
    %v146 = vld [vmem:[%s0 + $0x138] sm:$0xff]
    %v147 = vld [vmem:[%s0 + $0x140] sm:$0xff]
    %v148 = vld [vmem:[%s0 + $0x148] sm:$0xff]
    %v149 = vld [vmem:[%s0 + $0x150] sm:$0xff]
    %v150 = vld [vmem:[%s0 + $0x158] sm:$0xff]
    %v151 = vld [vmem:[%s0 + $0x160] sm:$0xff]
    %v152 = vld [vmem:[%s0 + $0x168] sm:$0xff]
    %v153 = vld [vmem:[%s0 + $0x170] sm:$0xff]
    %v154 = vld [vmem:[%s0 + $0x178] sm:$0xff]
    %v155 = vld [vmem:[%s0 + $0x180] sm:$0xff]
    %v156 = vld [vmem:[%s0 + $0x188] sm:$0xff]
    %v157 = vld [vmem:[%s0 + $0x190] sm:$0xff]
    %v158 = vld [vmem:[%s0 + $0x198] sm:$0xff]
    %v159 = vld [vmem:[%s0 + $0x1a0] sm:$0xff]
    %v160 = vld [vmem:[%s0 + $0x1a8] sm:$0xff]
    %v161 = vld [vmem:[%s0 + $0x1b0] sm:$0xff]
    %v162 = vld [vmem:[%s0 + $0x1b8] sm:$0xff]
    %v163 = vld [vmem:[%s0 + $0x1c0] sm:$0xff]
    %v164 = vld [vmem:[%s0 + $0x1c8] sm:$0xff]
    %v165 = vld [vmem:[%s0 + $0x1d0] sm:$0xff]
    %v166 = vld [vmem:[%s0 + $0x1d8] sm:$0xff]
    %v167 = vld [vmem:[%s0 + $0x1e0] sm:$0xff]
    %v168 = vld [vmem:[%s0 + $0x1e8] sm:$0xff]
    %v169 = vld [vmem:[%s0 + $0x1f0] sm:$0xff]
    %v170 = vld [vmem:[%s0 + $0x1f8] sm:$0xff]
    %v171 = vpack.c.bf16 %v109, %v107
    %v172 = vpack.c.bf16 %v110, %v108
    %v173 = vpack.c.bf16 %v113, %v111
    %v174 = vpack.c.bf16 %v114, %v112
    %v175 = vpack.c.bf16 %v117, %v115
    %v176 = vpack.c.bf16 %v118, %v116
    %v177 = vpack.c.bf16 %v121, %v119
    %v178 = vpack.c.bf16 %v122, %v120
    %v179 = vpack.c.bf16 %v125, %v123
    %v180 = vpack.c.bf16 %v126, %v124
    %v181 = vpack.c.bf16 %v129, %v127
    %v182 = vpack.c.bf16 %v130, %v128
    %v183 = vpack.c.bf16 %v133, %v131
    %v184 = vpack.c.bf16 %v134, %v132
    %v185 = vpack.c.bf16 %v137, %v135
    %v186 = vpack.c.bf16 %v138, %v136
    %v187 = vpack.c.bf16 %v141, %v139
    %v188 = vpack.c.bf16 %v142, %v140
    %v189 = vpack.c.bf16 %v145, %v143
    %v190 = vpack.c.bf16 %v146, %v144
    %v191 = vpack.c.bf16 %v149, %v147
    %v192 = vpack.c.bf16 %v150, %v148
    %v193 = vpack.c.bf16 %v153, %v151
    %v194 = vpack.c.bf16 %v154, %v152
    %v195 = vpack.c.bf16 %v157, %v155
    %v196 = vpack.c.bf16 %v158, %v156
    %v197 = vpack.c.bf16 %v161, %v159
    %v198 = vpack.c.bf16 %v162, %v160
    %v199 = vpack.c.bf16 %v165, %v163
    %v200 = vpack.c.bf16 %v166, %v164
    %v201 = vpack.c.bf16 %v169, %v167
    %v202 = vpack.c.bf16 %v170, %v168
    %v203 = vld [vmem:[%s1] sm:$0xff]
    %v204 = vld [vmem:[%s1 + $0x8] sm:$0xff]
    %v205 = vld [vmem:[%s1 + $0x10] sm:$0xff]
    %v206 = vld [vmem:[%s1 + $0x18] sm:$0xff]
    %v207 = vld [vmem:[%s1 + $0x20] sm:$0xff]
    %v208 = vld [vmem:[%s1 + $0x28] sm:$0xff]
    %v209 = vld [vmem:[%s1 + $0x30] sm:$0xff]
    %v210 = vld [vmem:[%s1 + $0x38] sm:$0xff]
    %v211 = vld [vmem:[%s1 + $0x40] sm:$0xff]
    %v212 = vld [vmem:[%s1 + $0x48] sm:$0xff]
    %v213 = vld [vmem:[%s1 + $0x50] sm:$0xff]
    %v214 = vld [vmem:[%s1 + $0x58] sm:$0xff]
    %v215 = vld [vmem:[%s1 + $0x60] sm:$0xff]
    %v216 = vld [vmem:[%s1 + $0x68] sm:$0xff]
    %v217 = vld [vmem:[%s1 + $0x70] sm:$0xff]
    %v218 = vld [vmem:[%s1 + $0x78] sm:$0xff]
    %v219 = vld [vmem:[%s1 + $0x80] sm:$0xff]
    %v220 = vld [vmem:[%s1 + $0x88] sm:$0xff]
    %v221 = vld [vmem:[%s1 + $0x90] sm:$0xff]
    %v222 = vld [vmem:[%s1 + $0x98] sm:$0xff]
    %v223 = vld [vmem:[%s1 + $0xa0] sm:$0xff]
    %v224 = vld [vmem:[%s1 + $0xa8] sm:$0xff]
    %v225 = vld [vmem:[%s1 + $0xb0] sm:$0xff]
    %v226 = vld [vmem:[%s1 + $0xb8] sm:$0xff]
    %v227 = vld [vmem:[%s1 + $0xc0] sm:$0xff]
    %v228 = vld [vmem:[%s1 + $0xc8] sm:$0xff]
    %v229 = vld [vmem:[%s1 + $0xd0] sm:$0xff]
    %v230 = vld [vmem:[%s1 + $0xd8] sm:$0xff]
    %v231 = vld [vmem:[%s1 + $0xe0] sm:$0xff]
    %v232 = vld [vmem:[%s1 + $0xe8] sm:$0xff]
    %v233 = vld [vmem:[%s1 + $0xf0] sm:$0xff]
    %v234 = vld [vmem:[%s1 + $0xf8] sm:$0xff]
    %v267 = vunpack.c.l.b16 %v203
    %v268 = vunpack.c.h.b16 %v203
    %v269 = vunpack.c.l.b16 %v204
    %v270 = vunpack.c.h.b16 %v204
    %v271 = vunpack.c.l.b16 %v205
    %v272 = vunpack.c.h.b16 %v205
    %v273 = vunpack.c.l.b16 %v206
    %v274 = vunpack.c.h.b16 %v206
    %v275 = vunpack.c.l.b16 %v207
    %v276 = vunpack.c.h.b16 %v207
    %v277 = vunpack.c.l.b16 %v208
    %v278 = vunpack.c.h.b16 %v208
    %v279 = vunpack.c.l.b16 %v209
    %v280 = vunpack.c.h.b16 %v209
    %v281 = vunpack.c.l.b16 %v210
    %v282 = vunpack.c.h.b16 %v210
    %v283 = vunpack.c.l.b16 %v211
    %v284 = vunpack.c.h.b16 %v211
    %v285 = vunpack.c.l.b16 %v212
    %v286 = vunpack.c.h.b16 %v212
    %v287 = vunpack.c.l.b16 %v213
    %v288 = vunpack.c.h.b16 %v213
    %v289 = vunpack.c.l.b16 %v214
    %v290 = vunpack.c.h.b16 %v214
    %v291 = vunpack.c.l.b16 %v215
    %v292 = vunpack.c.h.b16 %v215
    %v293 = vunpack.c.l.b16 %v216
    %v294 = vunpack.c.h.b16 %v216
    %v295 = vunpack.c.l.b16 %v217
    %v296 = vunpack.c.h.b16 %v217
    %v297 = vunpack.c.l.b16 %v218
    %v298 = vunpack.c.h.b16 %v218
    %v299 = vunpack.c.l.b16 %v219
    %v300 = vunpack.c.h.b16 %v219
    %v301 = vunpack.c.l.b16 %v220
    %v302 = vunpack.c.h.b16 %v220
    %v303 = vunpack.c.l.b16 %v221
    %v304 = vunpack.c.h.b16 %v221
    %v305 = vunpack.c.l.b16 %v222
    %v306 = vunpack.c.h.b16 %v222
    %v307 = vunpack.c.l.b16 %v223
    %v308 = vunpack.c.h.b16 %v223
    %v309 = vunpack.c.l.b16 %v224
    %v310 = vunpack.c.h.b16 %v224
    %v311 = vunpack.c.l.b16 %v225
    %v312 = vunpack.c.h.b16 %v225
    %v313 = vunpack.c.l.b16 %v226
    %v314 = vunpack.c.h.b16 %v226
    %v315 = vunpack.c.l.b16 %v227
    %v316 = vunpack.c.h.b16 %v227
    %v317 = vunpack.c.l.b16 %v228
    %v318 = vunpack.c.h.b16 %v228
    %v319 = vunpack.c.l.b16 %v229
    %v320 = vunpack.c.h.b16 %v229
    %v321 = vunpack.c.l.b16 %v230
    %v322 = vunpack.c.h.b16 %v230
    %v323 = vunpack.c.l.b16 %v231
    %v324 = vunpack.c.h.b16 %v231
    %v325 = vunpack.c.l.b16 %v232
    %v326 = vunpack.c.h.b16 %v232
    %v327 = vunpack.c.l.b16 %v233
    %v328 = vunpack.c.h.b16 %v233
    %v329 = vunpack.c.l.b16 %v234
    %v330 = vunpack.c.h.b16 %v234
    %v331 = vpack.c.b16 %v269, %v267
    %v332 = vpack.c.b16 %v270, %v268
    %v333 = vpack.c.b16 %v273, %v271
    %v334 = vpack.c.b16 %v274, %v272
    %v335 = vpack.c.b16 %v277, %v275
    %v336 = vpack.c.b16 %v278, %v276
    %v337 = vpack.c.b16 %v281, %v279
    %v338 = vpack.c.b16 %v282, %v280
    %v339 = vpack.c.b16 %v285, %v283
    %v340 = vpack.c.b16 %v286, %v284
    %v341 = vpack.c.b16 %v289, %v287
    %v342 = vpack.c.b16 %v290, %v288
    %v343 = vpack.c.b16 %v293, %v291
    %v344 = vpack.c.b16 %v294, %v292
    %v345 = vpack.c.b16 %v297, %v295
    %v346 = vpack.c.b16 %v298, %v296
    %v347 = vpack.c.b16 %v301, %v299
    %v348 = vpack.c.b16 %v302, %v300
    %v349 = vpack.c.b16 %v305, %v303
    %v350 = vpack.c.b16 %v306, %v304
    %v351 = vpack.c.b16 %v309, %v307
    %v352 = vpack.c.b16 %v310, %v308
    %v353 = vpack.c.b16 %v313, %v311
    %v354 = vpack.c.b16 %v314, %v312
    %v355 = vpack.c.b16 %v317, %v315
    %v356 = vpack.c.b16 %v318, %v316
    %v357 = vpack.c.b16 %v321, %v319
    %v358 = vpack.c.b16 %v322, %v320
    %v359 = vpack.c.b16 %v325, %v323
    %v360 = vpack.c.b16 %v326, %v324
    %v361 = vpack.c.b16 %v329, %v327
    %v362 = vpack.c.b16 %v330, %v328
    %395 = vmatpush.bf16.msra.mxu0 %v345
    %396 = vmatpush.bf16.msra.mxu0 %v343
    %397 = vmatpush.bf16.msra.mxu0 %v341
    %398 = vmatpush.bf16.msra.mxu0 %v339
    %399 = vmatpush.bf16.msra.mxu0 %v337
    %400 = vmatpush.bf16.msra.mxu0 %v335
    %401 = vmatpush.bf16.msra.mxu0 %v333
    %402 = vmatpush.bf16.msra.mxu0 %v331
    %403 = vmatmul.bf16.gmra.mxu0 %v171
    %v404 = vpop.f32.mrf.mxu0
    %v405 = vadd.f32 0.0, %v404
    %v406 = vpop.f32.mrf.mxu0
    %v407 = vadd.f32 0.0, %v406
    %408 = vmatmul.bf16.gmra.mxu0 %v173
    %v409 = vpop.f32.mrf.mxu0
    %v410 = vadd.f32 0.0, %v409
    %v411 = vpop.f32.mrf.mxu0
    %v412 = vadd.f32 0.0, %v411
    %413 = vmatmul.bf16.gmra.mxu0 %v175
    %v414 = vpop.f32.mrf.mxu0
    %v415 = vadd.f32 0.0, %v414
    %v416 = vpop.f32.mrf.mxu0
    %v417 = vadd.f32 0.0, %v416
    %418 = vmatmul.bf16.gmra.mxu0 %v177
    %v419 = vpop.f32.mrf.mxu0
    %v420 = vadd.f32 0.0, %v419
    %v421 = vpop.f32.mrf.mxu0
    %v422 = vadd.f32 0.0, %v421
    %423 = vmatmul.bf16.gmra.mxu0 %v179
    %v424 = vpop.f32.mrf.mxu0
    %v425 = vadd.f32 0.0, %v424
    %v426 = vpop.f32.mrf.mxu0
    %v427 = vadd.f32 0.0, %v426
    %428 = vmatmul.bf16.gmra.mxu0 %v181
    %v429 = vpop.f32.mrf.mxu0
    %v430 = vadd.f32 0.0, %v429
    %v431 = vpop.f32.mrf.mxu0
    %v432 = vadd.f32 0.0, %v431
    %433 = vmatmul.bf16.gmra.mxu0 %v183
    %v434 = vpop.f32.mrf.mxu0
    %v435 = vadd.f32 0.0, %v434
    %v436 = vpop.f32.mrf.mxu0
    %v437 = vadd.f32 0.0, %v436
    %438 = vmatmul.bf16.gmra.mxu0 %v185
    %v439 = vpop.f32.mrf.mxu0
    %v440 = vadd.f32 0.0, %v439
    %v441 = vpop.f32.mrf.mxu0
    %v442 = vadd.f32 0.0, %v441
    %443 = vmatmul.bf16.gmra.mxu0 %v187
    %v444 = vpop.f32.mrf.mxu0
    %v445 = vadd.f32 0.0, %v444
    %v446 = vpop.f32.mrf.mxu0
    %v447 = vadd.f32 0.0, %v446
    %448 = vmatmul.bf16.gmra.mxu0 %v189
    %v449 = vpop.f32.mrf.mxu0
    %v450 = vadd.f32 0.0, %v449
    %v451 = vpop.f32.mrf.mxu0
    %v452 = vadd.f32 0.0, %v451
    %453 = vmatmul.bf16.gmra.mxu0 %v191
    %v454 = vpop.f32.mrf.mxu0
    %v455 = vadd.f32 0.0, %v454
    %v456 = vpop.f32.mrf.mxu0
    %v457 = vadd.f32 0.0, %v456
    %458 = vmatmul.bf16.gmra.mxu0 %v193
    %v459 = vpop.f32.mrf.mxu0
    %v460 = vadd.f32 0.0, %v459
    %v461 = vpop.f32.mrf.mxu0
    %v462 = vadd.f32 0.0, %v461
    %463 = vmatmul.bf16.gmra.mxu0 %v195
    %v464 = vpop.f32.mrf.mxu0
    %v465 = vadd.f32 0.0, %v464
    %v466 = vpop.f32.mrf.mxu0
    %v467 = vadd.f32 0.0, %v466
    %468 = vmatmul.bf16.gmra.mxu0 %v197
    %v469 = vpop.f32.mrf.mxu0
    %v470 = vadd.f32 0.0, %v469
    %v471 = vpop.f32.mrf.mxu0
    %v472 = vadd.f32 0.0, %v471
    %473 = vmatmul.bf16.gmra.mxu0 %v199
    %v474 = vpop.f32.mrf.mxu0
    %v475 = vadd.f32 0.0, %v474
    %v476 = vpop.f32.mrf.mxu0
    %v477 = vadd.f32 0.0, %v476
    %478 = vmatmul.bf16.gmra.mxu0 %v201
    %v479 = vpop.f32.mrf.mxu0
    %v480 = vadd.f32 0.0, %v479
    %v481 = vpop.f32.mrf.mxu0
    %v482 = vadd.f32 0.0, %v481
    %483 = vdwg.mxu0
    %484 = vmatpush.bf16.msra.mxu0 %v361
    %485 = vmatpush.bf16.msra.mxu0 %v359
    %486 = vmatpush.bf16.msra.mxu0 %v357
    %487 = vmatpush.bf16.msra.mxu0 %v355
    %488 = vmatpush.bf16.msra.mxu0 %v353
    %489 = vmatpush.bf16.msra.mxu0 %v351
    %490 = vmatpush.bf16.msra.mxu0 %v349
    %491 = vmatpush.bf16.msra.mxu0 %v347
    %492 = vmatmul.bf16.gmra.mxu0 %v172
    %v493 = vpop.f32.mrf.mxu0
    %v494 = vadd.f32 %v405, %v493
    %v495 = vpop.f32.mrf.mxu0
    %v496 = vadd.f32 %v407, %v495
    %497 = vmatmul.bf16.gmra.mxu0 %v174
    %v498 = vpop.f32.mrf.mxu0
    %v499 = vadd.f32 %v410, %v498
    %v500 = vpop.f32.mrf.mxu0
    %v501 = vadd.f32 %v412, %v500
    %502 = vmatmul.bf16.gmra.mxu0 %v176
    %v503 = vpop.f32.mrf.mxu0
    %v504 = vadd.f32 %v415, %v503
    %v505 = vpop.f32.mrf.mxu0
    %v506 = vadd.f32 %v417, %v505
    %507 = vmatmul.bf16.gmra.mxu0 %v178
    %v508 = vpop.f32.mrf.mxu0
    %v509 = vadd.f32 %v420, %v508
    %v510 = vpop.f32.mrf.mxu0
    %v511 = vadd.f32 %v422, %v510
    %512 = vmatmul.bf16.gmra.mxu0 %v180
    %v513 = vpop.f32.mrf.mxu0
    %v514 = vadd.f32 %v425, %v513
    %v515 = vpop.f32.mrf.mxu0
    %v516 = vadd.f32 %v427, %v515
    %517 = vmatmul.bf16.gmra.mxu0 %v182
    %v518 = vpop.f32.mrf.mxu0
    %v519 = vadd.f32 %v430, %v518
    %v520 = vpop.f32.mrf.mxu0
    %v521 = vadd.f32 %v432, %v520
    %522 = vmatmul.bf16.gmra.mxu0 %v184
    %v523 = vpop.f32.mrf.mxu0
    %v524 = vadd.f32 %v435, %v523
    %v525 = vpop.f32.mrf.mxu0
    %v526 = vadd.f32 %v437, %v525
    %527 = vmatmul.bf16.gmra.mxu0 %v186
    %v528 = vpop.f32.mrf.mxu0
    %v529 = vadd.f32 %v440, %v528
    %v530 = vpop.f32.mrf.mxu0
    %v531 = vadd.f32 %v442, %v530
    %532 = vmatmul.bf16.gmra.mxu0 %v188
    %v533 = vpop.f32.mrf.mxu0
    %v534 = vadd.f32 %v445, %v533
    %v535 = vpop.f32.mrf.mxu0
    %v536 = vadd.f32 %v447, %v535
    %537 = vmatmul.bf16.gmra.mxu0 %v190
    %v538 = vpop.f32.mrf.mxu0
    %v539 = vadd.f32 %v450, %v538
    %v540 = vpop.f32.mrf.mxu0
    %v541 = vadd.f32 %v452, %v540
    %542 = vmatmul.bf16.gmra.mxu0 %v192
    %v543 = vpop.f32.mrf.mxu0
    %v544 = vadd.f32 %v455, %v543
    %v545 = vpop.f32.mrf.mxu0
    %v546 = vadd.f32 %v457, %v545
    %547 = vmatmul.bf16.gmra.mxu0 %v194
    %v548 = vpop.f32.mrf.mxu0
    %v549 = vadd.f32 %v460, %v548
    %v550 = vpop.f32.mrf.mxu0
    %v551 = vadd.f32 %v462, %v550
    %552 = vmatmul.bf16.gmra.mxu0 %v196
    %v553 = vpop.f32.mrf.mxu0
    %v554 = vadd.f32 %v465, %v553
    %v555 = vpop.f32.mrf.mxu0
    %v556 = vadd.f32 %v467, %v555
    %557 = vmatmul.bf16.gmra.mxu0 %v198
    %v558 = vpop.f32.mrf.mxu0
    %v559 = vadd.f32 %v470, %v558
    %v560 = vpop.f32.mrf.mxu0
    %v561 = vadd.f32 %v472, %v560
    %562 = vmatmul.bf16.gmra.mxu0 %v200
    %v563 = vpop.f32.mrf.mxu0
    %v564 = vadd.f32 %v475, %v563
    %v565 = vpop.f32.mrf.mxu0
    %v566 = vadd.f32 %v477, %v565
    %567 = vmatmul.bf16.gmra.mxu0 %v202
    %v568 = vpop.f32.mrf.mxu0
    %v569 = vadd.f32 %v480, %v568
    %v570 = vpop.f32.mrf.mxu0
    %v571 = vadd.f32 %v482, %v570
    %572 = vdwg.mxu0
    %573 = vmatpush.bf16.msra.mxu0 %v346
    %574 = vmatpush.bf16.msra.mxu0 %v344
    %575 = vmatpush.bf16.msra.mxu0 %v342
    %576 = vmatpush.bf16.msra.mxu0 %v340
    %577 = vmatpush.bf16.msra.mxu0 %v338
    %578 = vmatpush.bf16.msra.mxu0 %v336
    %579 = vmatpush.bf16.msra.mxu0 %v334
    %580 = vmatpush.bf16.msra.mxu0 %v332
    %581 = vmatmul.bf16.gmra.mxu0 %v171
    %v582 = vpop.f32.mrf.mxu0
    %v583 = vadd.f32 0.0, %v582
    %v584 = vpop.f32.mrf.mxu0
    %v585 = vadd.f32 0.0, %v584
    %586 = vmatmul.bf16.gmra.mxu0 %v173
    %v587 = vpop.f32.mrf.mxu0
    %v588 = vadd.f32 0.0, %v587
    %v589 = vpop.f32.mrf.mxu0
    %v590 = vadd.f32 0.0, %v589
    %591 = vmatmul.bf16.gmra.mxu0 %v175
    %v592 = vpop.f32.mrf.mxu0
    %v593 = vadd.f32 0.0, %v592
    %v594 = vpop.f32.mrf.mxu0
    %v595 = vadd.f32 0.0, %v594
    %596 = vmatmul.bf16.gmra.mxu0 %v177
    %v597 = vpop.f32.mrf.mxu0
    %v598 = vadd.f32 0.0, %v597
    %v599 = vpop.f32.mrf.mxu0
    %v600 = vadd.f32 0.0, %v599
    %601 = vmatmul.bf16.gmra.mxu0 %v179
    %v602 = vpop.f32.mrf.mxu0
    %v603 = vadd.f32 0.0, %v602
    %v604 = vpop.f32.mrf.mxu0
    %v605 = vadd.f32 0.0, %v604
    %606 = vmatmul.bf16.gmra.mxu0 %v181
    %v607 = vpop.f32.mrf.mxu0
    %v608 = vadd.f32 0.0, %v607
    %v609 = vpop.f32.mrf.mxu0
    %v610 = vadd.f32 0.0, %v609
    %611 = vmatmul.bf16.gmra.mxu0 %v183
    %v612 = vpop.f32.mrf.mxu0
    %v613 = vadd.f32 0.0, %v612
    %v614 = vpop.f32.mrf.mxu0
    %v615 = vadd.f32 0.0, %v614
    %616 = vmatmul.bf16.gmra.mxu0 %v185
    %v617 = vpop.f32.mrf.mxu0
    %v618 = vadd.f32 0.0, %v617
    %v619 = vpop.f32.mrf.mxu0
    %v620 = vadd.f32 0.0, %v619
    %621 = vmatmul.bf16.gmra.mxu0 %v187
    %v622 = vpop.f32.mrf.mxu0
    %v623 = vadd.f32 0.0, %v622
    %v624 = vpop.f32.mrf.mxu0
    %v625 = vadd.f32 0.0, %v624
    %626 = vmatmul.bf16.gmra.mxu0 %v189
    %v627 = vpop.f32.mrf.mxu0
    %v628 = vadd.f32 0.0, %v627
    %v629 = vpop.f32.mrf.mxu0
    %v630 = vadd.f32 0.0, %v629
    %631 = vmatmul.bf16.gmra.mxu0 %v191
    %v632 = vpop.f32.mrf.mxu0
    %v633 = vadd.f32 0.0, %v632
    %v634 = vpop.f32.mrf.mxu0
    %v635 = vadd.f32 0.0, %v634
    %636 = vmatmul.bf16.gmra.mxu0 %v193
    %v637 = vpop.f32.mrf.mxu0
    %v638 = vadd.f32 0.0, %v637
    %v639 = vpop.f32.mrf.mxu0
    %v640 = vadd.f32 0.0, %v639
    %641 = vmatmul.bf16.gmra.mxu0 %v195
    %v642 = vpop.f32.mrf.mxu0
    %v643 = vadd.f32 0.0, %v642
    %v644 = vpop.f32.mrf.mxu0
    %v645 = vadd.f32 0.0, %v644
    %646 = vmatmul.bf16.gmra.mxu0 %v197
    %v647 = vpop.f32.mrf.mxu0
    %v648 = vadd.f32 0.0, %v647
    %v649 = vpop.f32.mrf.mxu0
    %v650 = vadd.f32 0.0, %v649
    %651 = vmatmul.bf16.gmra.mxu0 %v199
    %v652 = vpop.f32.mrf.mxu0
    %v653 = vadd.f32 0.0, %v652
    %v654 = vpop.f32.mrf.mxu0
    %v655 = vadd.f32 0.0, %v654
    %656 = vmatmul.bf16.gmra.mxu0 %v201
    %v657 = vpop.f32.mrf.mxu0
    %v658 = vadd.f32 0.0, %v657
    %v659 = vpop.f32.mrf.mxu0
    %v660 = vadd.f32 0.0, %v659
    %661 = vdwg.mxu0
    %662 = vmatpush.bf16.msra.mxu0 %v362
    %663 = vmatpush.bf16.msra.mxu0 %v360
    %664 = vmatpush.bf16.msra.mxu0 %v358
    %665 = vmatpush.bf16.msra.mxu0 %v356
    %666 = vmatpush.bf16.msra.mxu0 %v354
    %667 = vmatpush.bf16.msra.mxu0 %v352
    %668 = vmatpush.bf16.msra.mxu0 %v350
    %669 = vmatpush.bf16.msra.mxu0 %v348
    %670 = vmatmul.bf16.gmra.mxu0 %v172
    %v671 = vpop.f32.mrf.mxu0
    %v672 = vadd.f32 %v583, %v671
    %v673 = vpop.f32.mrf.mxu0
    %v674 = vadd.f32 %v585, %v673
    %675 = vmatmul.bf16.gmra.mxu0 %v174
    %v676 = vpop.f32.mrf.mxu0
    %v677 = vadd.f32 %v588, %v676
    %v678 = vpop.f32.mrf.mxu0
    %v679 = vadd.f32 %v590, %v678
    %680 = vmatmul.bf16.gmra.mxu0 %v176
    %v681 = vpop.f32.mrf.mxu0
    %v682 = vadd.f32 %v593, %v681
    %v683 = vpop.f32.mrf.mxu0
    %v684 = vadd.f32 %v595, %v683
    %685 = vmatmul.bf16.gmra.mxu0 %v178
    %v686 = vpop.f32.mrf.mxu0
    %v687 = vadd.f32 %v598, %v686
    %v688 = vpop.f32.mrf.mxu0
    %v689 = vadd.f32 %v600, %v688
    %690 = vmatmul.bf16.gmra.mxu0 %v180
    %v691 = vpop.f32.mrf.mxu0
    %v692 = vadd.f32 %v603, %v691
    %v693 = vpop.f32.mrf.mxu0
    %v694 = vadd.f32 %v605, %v693
    %695 = vmatmul.bf16.gmra.mxu0 %v182
    %v696 = vpop.f32.mrf.mxu0
    %v697 = vadd.f32 %v608, %v696
    %v698 = vpop.f32.mrf.mxu0
    %v699 = vadd.f32 %v610, %v698
    %700 = vmatmul.bf16.gmra.mxu0 %v184
    %v701 = vpop.f32.mrf.mxu0
    %v702 = vadd.f32 %v613, %v701
    %v703 = vpop.f32.mrf.mxu0
    %v704 = vadd.f32 %v615, %v703
    %705 = vmatmul.bf16.gmra.mxu0 %v186
    %v706 = vpop.f32.mrf.mxu0
    %v707 = vadd.f32 %v618, %v706
    %v708 = vpop.f32.mrf.mxu0
    %v709 = vadd.f32 %v620, %v708
    %710 = vmatmul.bf16.gmra.mxu0 %v188
    %v711 = vpop.f32.mrf.mxu0
    %v712 = vadd.f32 %v623, %v711
    %v713 = vpop.f32.mrf.mxu0
    %v714 = vadd.f32 %v625, %v713
    %715 = vmatmul.bf16.gmra.mxu0 %v190
    %v716 = vpop.f32.mrf.mxu0
    %v717 = vadd.f32 %v628, %v716
    %v718 = vpop.f32.mrf.mxu0
    %v719 = vadd.f32 %v630, %v718
    %720 = vmatmul.bf16.gmra.mxu0 %v192
    %v721 = vpop.f32.mrf.mxu0
    %v722 = vadd.f32 %v633, %v721
    %v723 = vpop.f32.mrf.mxu0
    %v724 = vadd.f32 %v635, %v723
    %725 = vmatmul.bf16.gmra.mxu0 %v194
    %v726 = vpop.f32.mrf.mxu0
    %v727 = vadd.f32 %v638, %v726
    %v728 = vpop.f32.mrf.mxu0
    %v729 = vadd.f32 %v640, %v728
    %730 = vmatmul.bf16.gmra.mxu0 %v196
    %v731 = vpop.f32.mrf.mxu0
    %v732 = vadd.f32 %v643, %v731
    %v733 = vpop.f32.mrf.mxu0
    %v734 = vadd.f32 %v645, %v733
    %735 = vmatmul.bf16.gmra.mxu0 %v198
    %v736 = vpop.f32.mrf.mxu0
    %v737 = vadd.f32 %v648, %v736
    %v738 = vpop.f32.mrf.mxu0
    %v739 = vadd.f32 %v650, %v738
    %740 = vmatmul.bf16.gmra.mxu0 %v200
    %v741 = vpop.f32.mrf.mxu0
    %v742 = vadd.f32 %v653, %v741
    %v743 = vpop.f32.mrf.mxu0
    %v744 = vadd.f32 %v655, %v743
    %745 = vmatmul.bf16.gmra.mxu0 %v202
    %v746 = vpop.f32.mrf.mxu0
    %v747 = vadd.f32 %v658, %v746
    %v748 = vpop.f32.mrf.mxu0
    %v749 = vadd.f32 %v660, %v748
    %750 = vdwg.mxu0
    %v751 = vld [vmem:[#allocation7] sm:$0xff]
    %v752 = vld [vmem:[#allocation7 + $0x8] sm:$0xff]
    %v753 = vld [vmem:[#allocation7 + $0x10] sm:$0xff]
    %v754 = vld [vmem:[#allocation7 + $0x18] sm:$0xff]
    %v755 = vld [vmem:[#allocation7 + $0x20] sm:$0xff]
    %v756 = vld [vmem:[#allocation7 + $0x28] sm:$0xff]
    %v757 = vld [vmem:[#allocation7 + $0x30] sm:$0xff]
    %v758 = vld [vmem:[#allocation7 + $0x38] sm:$0xff]
    %v759 = vld [vmem:[#allocation7 + $0x40] sm:$0xff]
    %v760 = vld [vmem:[#allocation7 + $0x48] sm:$0xff]
    %v761 = vld [vmem:[#allocation7 + $0x50] sm:$0xff]
    %v762 = vld [vmem:[#allocation7 + $0x58] sm:$0xff]
    %v763 = vld [vmem:[#allocation7 + $0x60] sm:$0xff]
    %v764 = vld [vmem:[#allocation7 + $0x68] sm:$0xff]
    %v765 = vld [vmem:[#allocation7 + $0x70] sm:$0xff]
    %v766 = vld [vmem:[#allocation7 + $0x78] sm:$0xff]
    %v767 = vld [vmem:[#allocation7 + $0x80] sm:$0xff]
    %v768 = vld [vmem:[#allocation7 + $0x88] sm:$0xff]
    %v769 = vld [vmem:[#allocation7 + $0x90] sm:$0xff]
    %v770 = vld [vmem:[#allocation7 + $0x98] sm:$0xff]
    %v771 = vld [vmem:[#allocation7 + $0xa0] sm:$0xff]
    %v772 = vld [vmem:[#allocation7 + $0xa8] sm:$0xff]
    %v773 = vld [vmem:[#allocation7 + $0xb0] sm:$0xff]
    %v774 = vld [vmem:[#allocation7 + $0xb8] sm:$0xff]
    %v775 = vld [vmem:[#allocation7 + $0xc0] sm:$0xff]
    %v776 = vld [vmem:[#allocation7 + $0xc8] sm:$0xff]
    %v777 = vld [vmem:[#allocation7 + $0xd0] sm:$0xff]
    %v778 = vld [vmem:[#allocation7 + $0xd8] sm:$0xff]
    %v779 = vld [vmem:[#allocation7 + $0xe0] sm:$0xff]
    %v780 = vld [vmem:[#allocation7 + $0xe8] sm:$0xff]
    %v781 = vld [vmem:[#allocation7 + $0xf0] sm:$0xff]
    %v782 = vld [vmem:[#allocation7 + $0xf8] sm:$0xff]
    %v783 = vpack.c.bf16 %v496, %v494
    %v784 = vpack.c.bf16 %v674, %v672
    %v785 = vpack.c.bf16 %v501, %v499
    %v786 = vpack.c.bf16 %v679, %v677
    %v787 = vpack.c.bf16 %v506, %v504
    %v788 = vpack.c.bf16 %v684, %v682
    %v789 = vpack.c.bf16 %v511, %v509
    %v790 = vpack.c.bf16 %v689, %v687
    %v791 = vpack.c.bf16 %v516, %v514
    %v792 = vpack.c.bf16 %v694, %v692
    %v793 = vpack.c.bf16 %v521, %v519
    %v794 = vpack.c.bf16 %v699, %v697
    %v795 = vpack.c.bf16 %v526, %v524
    %v796 = vpack.c.bf16 %v704, %v702
    %v797 = vpack.c.bf16 %v531, %v529
    %v798 = vpack.c.bf16 %v709, %v707
    %v799 = vpack.c.bf16 %v536, %v534
    %v800 = vpack.c.bf16 %v714, %v712
    %v801 = vpack.c.bf16 %v541, %v539
    %v802 = vpack.c.bf16 %v719, %v717
    %v803 = vpack.c.bf16 %v546, %v544
    %v804 = vpack.c.bf16 %v724, %v722
    %v805 = vpack.c.bf16 %v551, %v549
    %v806 = vpack.c.bf16 %v729, %v727
    %v807 = vpack.c.bf16 %v556, %v554
    %v808 = vpack.c.bf16 %v734, %v732
    %v809 = vpack.c.bf16 %v561, %v559
    %v810 = vpack.c.bf16 %v739, %v737
    %v811 = vpack.c.bf16 %v566, %v564
    %v812 = vpack.c.bf16 %v744, %v742
    %v813 = vpack.c.bf16 %v571, %v569
    %v814 = vpack.c.bf16 %v749, %v747
    %v847 = vunpack.c.l.b16 %v751
    %v848 = vunpack.c.h.b16 %v751
    %v849 = vunpack.c.l.b16 %v752
    %v850 = vunpack.c.h.b16 %v752
    %v851 = vunpack.c.l.b16 %v753
    %v852 = vunpack.c.h.b16 %v753
    %v853 = vunpack.c.l.b16 %v754
    %v854 = vunpack.c.h.b16 %v754
    %v855 = vunpack.c.l.b16 %v755
    %v856 = vunpack.c.h.b16 %v755
    %v857 = vunpack.c.l.b16 %v756
    %v858 = vunpack.c.h.b16 %v756
    %v859 = vunpack.c.l.b16 %v757
    %v860 = vunpack.c.h.b16 %v757
    %v861 = vunpack.c.l.b16 %v758
    %v862 = vunpack.c.h.b16 %v758
    %v863 = vunpack.c.l.b16 %v759
    %v864 = vunpack.c.h.b16 %v759
    %v865 = vunpack.c.l.b16 %v760
    %v866 = vunpack.c.h.b16 %v760
    %v867 = vunpack.c.l.b16 %v761
    %v868 = vunpack.c.h.b16 %v761
    %v869 = vunpack.c.l.b16 %v762
    %v870 = vunpack.c.h.b16 %v762
    %v871 = vunpack.c.l.b16 %v763
    %v872 = vunpack.c.h.b16 %v763
    %v873 = vunpack.c.l.b16 %v764
    %v874 = vunpack.c.h.b16 %v764
    %v875 = vunpack.c.l.b16 %v765
    %v876 = vunpack.c.h.b16 %v765
    %v877 = vunpack.c.l.b16 %v766
    %v878 = vunpack.c.h.b16 %v766
    %v879 = vunpack.c.l.b16 %v767
    %v880 = vunpack.c.h.b16 %v767
    %v881 = vunpack.c.l.b16 %v768
    %v882 = vunpack.c.h.b16 %v768
    %v883 = vunpack.c.l.b16 %v769
    %v884 = vunpack.c.h.b16 %v769
    %v885 = vunpack.c.l.b16 %v770
    %v886 = vunpack.c.h.b16 %v770
    %v887 = vunpack.c.l.b16 %v771
    %v888 = vunpack.c.h.b16 %v771
    %v889 = vunpack.c.l.b16 %v772
    %v890 = vunpack.c.h.b16 %v772
    %v891 = vunpack.c.l.b16 %v773
    %v892 = vunpack.c.h.b16 %v773
    %v893 = vunpack.c.l.b16 %v774
    %v894 = vunpack.c.h.b16 %v774
    %v895 = vunpack.c.l.b16 %v775
    %v896 = vunpack.c.h.b16 %v775
    %v897 = vunpack.c.l.b16 %v776
    %v898 = vunpack.c.h.b16 %v776
    %v899 = vunpack.c.l.b16 %v777
    %v900 = vunpack.c.h.b16 %v777
    %v901 = vunpack.c.l.b16 %v778
    %v902 = vunpack.c.h.b16 %v778
    %v903 = vunpack.c.l.b16 %v779
    %v904 = vunpack.c.h.b16 %v779
    %v905 = vunpack.c.l.b16 %v780
    %v906 = vunpack.c.h.b16 %v780
    %v907 = vunpack.c.l.b16 %v781
    %v908 = vunpack.c.h.b16 %v781
    %v909 = vunpack.c.l.b16 %v782
    %v910 = vunpack.c.h.b16 %v782
    %v911 = vpack.c.b16 %v849, %v847
    %v912 = vpack.c.b16 %v850, %v848
    %v913 = vpack.c.b16 %v853, %v851
    %v914 = vpack.c.b16 %v854, %v852
    %v915 = vpack.c.b16 %v857, %v855
    %v916 = vpack.c.b16 %v858, %v856
    %v917 = vpack.c.b16 %v861, %v859
    %v918 = vpack.c.b16 %v862, %v860
    %v919 = vpack.c.b16 %v865, %v863
    %v920 = vpack.c.b16 %v866, %v864
    %v921 = vpack.c.b16 %v869, %v867
    %v922 = vpack.c.b16 %v870, %v868
    %v923 = vpack.c.b16 %v873, %v871
    %v924 = vpack.c.b16 %v874, %v872
    %v925 = vpack.c.b16 %v877, %v875
    %v926 = vpack.c.b16 %v878, %v876
    %v927 = vpack.c.b16 %v881, %v879
    %v928 = vpack.c.b16 %v882, %v880
    %v929 = vpack.c.b16 %v885, %v883
    %v930 = vpack.c.b16 %v886, %v884
    %v931 = vpack.c.b16 %v889, %v887
    %v932 = vpack.c.b16 %v890, %v888
    %v933 = vpack.c.b16 %v893, %v891
    %v934 = vpack.c.b16 %v894, %v892
    %v935 = vpack.c.b16 %v897, %v895
    %v936 = vpack.c.b16 %v898, %v896
    %v937 = vpack.c.b16 %v901, %v899
    %v938 = vpack.c.b16 %v902, %v900
    %v939 = vpack.c.b16 %v905, %v903
    %v940 = vpack.c.b16 %v906, %v904
    %v941 = vpack.c.b16 %v909, %v907
    %v942 = vpack.c.b16 %v910, %v908
    %975 = vmatpush.bf16.msra.mxu0 %v925
    %976 = vmatpush.bf16.msra.mxu0 %v923
    %977 = vmatpush.bf16.msra.mxu0 %v921
    %978 = vmatpush.bf16.msra.mxu0 %v919
    %979 = vmatpush.bf16.msra.mxu0 %v917
    %980 = vmatpush.bf16.msra.mxu0 %v915
    %981 = vmatpush.bf16.msra.mxu0 %v913
    %982 = vmatpush.bf16.msra.mxu0 %v911
    %983 = vmatmul.bf16.gmra.mxu0 %v783
    %v984 = vpop.f32.mrf.mxu0
    %v985 = vadd.f32 0.0, %v984
    %v986 = vpop.f32.mrf.mxu0
    %v987 = vadd.f32 0.0, %v986
    %988 = vmatmul.bf16.gmra.mxu0 %v785
    %v989 = vpop.f32.mrf.mxu0
    %v990 = vadd.f32 0.0, %v989
    %v991 = vpop.f32.mrf.mxu0
    %v992 = vadd.f32 0.0, %v991
    %993 = vmatmul.bf16.gmra.mxu0 %v787
    %v994 = vpop.f32.mrf.mxu0
    %v995 = vadd.f32 0.0, %v994
    %v996 = vpop.f32.mrf.mxu0
    %v997 = vadd.f32 0.0, %v996
    %998 = vmatmul.bf16.gmra.mxu0 %v789
    %v999 = vpop.f32.mrf.mxu0
    %v1000 = vadd.f32 0.0, %v999
    %v1001 = vpop.f32.mrf.mxu0
    %v1002 = vadd.f32 0.0, %v1001
    %1003 = vmatmul.bf16.gmra.mxu0 %v791
    %v1004 = vpop.f32.mrf.mxu0
    %v1005 = vadd.f32 0.0, %v1004
    %v1006 = vpop.f32.mrf.mxu0
    %v1007 = vadd.f32 0.0, %v1006
    %1008 = vmatmul.bf16.gmra.mxu0 %v793
    %v1009 = vpop.f32.mrf.mxu0
    %v1010 = vadd.f32 0.0, %v1009
    %v1011 = vpop.f32.mrf.mxu0
    %v1012 = vadd.f32 0.0, %v1011
    %1013 = vmatmul.bf16.gmra.mxu0 %v795
    %v1014 = vpop.f32.mrf.mxu0
    %v1015 = vadd.f32 0.0, %v1014
    %v1016 = vpop.f32.mrf.mxu0
    %v1017 = vadd.f32 0.0, %v1016
    %1018 = vmatmul.bf16.gmra.mxu0 %v797
    %v1019 = vpop.f32.mrf.mxu0
    %v1020 = vadd.f32 0.0, %v1019
    %v1021 = vpop.f32.mrf.mxu0
    %v1022 = vadd.f32 0.0, %v1021
    %1023 = vmatmul.bf16.gmra.mxu0 %v799
    %v1024 = vpop.f32.mrf.mxu0
    %v1025 = vadd.f32 0.0, %v1024
    %v1026 = vpop.f32.mrf.mxu0
    %v1027 = vadd.f32 0.0, %v1026
    %1028 = vmatmul.bf16.gmra.mxu0 %v801
    %v1029 = vpop.f32.mrf.mxu0
    %v1030 = vadd.f32 0.0, %v1029
    %v1031 = vpop.f32.mrf.mxu0
    %v1032 = vadd.f32 0.0, %v1031
    %1033 = vmatmul.bf16.gmra.mxu0 %v803
    %v1034 = vpop.f32.mrf.mxu0
    %v1035 = vadd.f32 0.0, %v1034
    %v1036 = vpop.f32.mrf.mxu0
    %v1037 = vadd.f32 0.0, %v1036
    %1038 = vmatmul.bf16.gmra.mxu0 %v805
    %v1039 = vpop.f32.mrf.mxu0
    %v1040 = vadd.f32 0.0, %v1039
    %v1041 = vpop.f32.mrf.mxu0
    %v1042 = vadd.f32 0.0, %v1041
    %1043 = vmatmul.bf16.gmra.mxu0 %v807
    %v1044 = vpop.f32.mrf.mxu0
    %v1045 = vadd.f32 0.0, %v1044
    %v1046 = vpop.f32.mrf.mxu0
    %v1047 = vadd.f32 0.0, %v1046
    %1048 = vmatmul.bf16.gmra.mxu0 %v809
    %v1049 = vpop.f32.mrf.mxu0
    %v1050 = vadd.f32 0.0, %v1049
    %v1051 = vpop.f32.mrf.mxu0
    %v1052 = vadd.f32 0.0, %v1051
    %1053 = vmatmul.bf16.gmra.mxu0 %v811
    %v1054 = vpop.f32.mrf.mxu0
    %v1055 = vadd.f32 0.0, %v1054
    %v1056 = vpop.f32.mrf.mxu0
    %v1057 = vadd.f32 0.0, %v1056
    %1058 = vmatmul.bf16.gmra.mxu0 %v813
    %v1059 = vpop.f32.mrf.mxu0
    %v1060 = vadd.f32 0.0, %v1059
    %v1061 = vpop.f32.mrf.mxu0
    %v1062 = vadd.f32 0.0, %v1061
    %1063 = vdwg.mxu0
    %1064 = vmatpush.bf16.msra.mxu0 %v941
    %1065 = vmatpush.bf16.msra.mxu0 %v939
    %1066 = vmatpush.bf16.msra.mxu0 %v937
    %1067 = vmatpush.bf16.msra.mxu0 %v935
    %1068 = vmatpush.bf16.msra.mxu0 %v933
    %1069 = vmatpush.bf16.msra.mxu0 %v931
    %1070 = vmatpush.bf16.msra.mxu0 %v929
    %1071 = vmatpush.bf16.msra.mxu0 %v927
    %1072 = vmatmul.bf16.gmra.mxu0 %v784
    %v1073 = vpop.f32.mrf.mxu0
    %v1074 = vadd.f32 %v985, %v1073
    %v1075 = vpop.f32.mrf.mxu0
    %v1076 = vadd.f32 %v987, %v1075
    %1077 = vmatmul.bf16.gmra.mxu0 %v786
    %v1078 = vpop.f32.mrf.mxu0
    %v1079 = vadd.f32 %v990, %v1078
    %v1080 = vpop.f32.mrf.mxu0
    %v1081 = vadd.f32 %v992, %v1080
    %1082 = vmatmul.bf16.gmra.mxu0 %v788
    %v1083 = vpop.f32.mrf.mxu0
    %v1084 = vadd.f32 %v995, %v1083
    %v1085 = vpop.f32.mrf.mxu0
    %v1086 = vadd.f32 %v997, %v1085
    %1087 = vmatmul.bf16.gmra.mxu0 %v790
    %v1088 = vpop.f32.mrf.mxu0
    %v1089 = vadd.f32 %v1000, %v1088
    %v1090 = vpop.f32.mrf.mxu0
    %v1091 = vadd.f32 %v1002, %v1090
    %1092 = vmatmul.bf16.gmra.mxu0 %v792
    %v1093 = vpop.f32.mrf.mxu0
    %v1094 = vadd.f32 %v1005, %v1093
    %v1095 = vpop.f32.mrf.mxu0
    %v1096 = vadd.f32 %v1007, %v1095
    %1097 = vmatmul.bf16.gmra.mxu0 %v794
    %v1098 = vpop.f32.mrf.mxu0
    %v1099 = vadd.f32 %v1010, %v1098
    %v1100 = vpop.f32.mrf.mxu0
    %v1101 = vadd.f32 %v1012, %v1100
    %1102 = vmatmul.bf16.gmra.mxu0 %v796
    %v1103 = vpop.f32.mrf.mxu0
    %v1104 = vadd.f32 %v1015, %v1103
    %v1105 = vpop.f32.mrf.mxu0
    %v1106 = vadd.f32 %v1017, %v1105
    %1107 = vmatmul.bf16.gmra.mxu0 %v798
    %v1108 = vpop.f32.mrf.mxu0
    %v1109 = vadd.f32 %v1020, %v1108
    %v1110 = vpop.f32.mrf.mxu0
    %v1111 = vadd.f32 %v1022, %v1110
    %1112 = vmatmul.bf16.gmra.mxu0 %v800
    %v1113 = vpop.f32.mrf.mxu0
    %v1114 = vadd.f32 %v1025, %v1113
    %v1115 = vpop.f32.mrf.mxu0
    %v1116 = vadd.f32 %v1027, %v1115
    %1117 = vmatmul.bf16.gmra.mxu0 %v802
    %v1118 = vpop.f32.mrf.mxu0
    %v1119 = vadd.f32 %v1030, %v1118
    %v1120 = vpop.f32.mrf.mxu0
    %v1121 = vadd.f32 %v1032, %v1120
    %1122 = vmatmul.bf16.gmra.mxu0 %v804
    %v1123 = vpop.f32.mrf.mxu0
    %v1124 = vadd.f32 %v1035, %v1123
    %v1125 = vpop.f32.mrf.mxu0
    %v1126 = vadd.f32 %v1037, %v1125
    %1127 = vmatmul.bf16.gmra.mxu0 %v806
    %v1128 = vpop.f32.mrf.mxu0
    %v1129 = vadd.f32 %v1040, %v1128
    %v1130 = vpop.f32.mrf.mxu0
    %v1131 = vadd.f32 %v1042, %v1130
    %1132 = vmatmul.bf16.gmra.mxu0 %v808
    %v1133 = vpop.f32.mrf.mxu0
    %v1134 = vadd.f32 %v1045, %v1133
    %v1135 = vpop.f32.mrf.mxu0
    %v1136 = vadd.f32 %v1047, %v1135
    %1137 = vmatmul.bf16.gmra.mxu0 %v810
    %v1138 = vpop.f32.mrf.mxu0
    %v1139 = vadd.f32 %v1050, %v1138
    %v1140 = vpop.f32.mrf.mxu0
    %v1141 = vadd.f32 %v1052, %v1140
    %1142 = vmatmul.bf16.gmra.mxu0 %v812
    %v1143 = vpop.f32.mrf.mxu0
    %v1144 = vadd.f32 %v1055, %v1143
    %v1145 = vpop.f32.mrf.mxu0
    %v1146 = vadd.f32 %v1057, %v1145
    %1147 = vmatmul.bf16.gmra.mxu0 %v814
    %v1148 = vpop.f32.mrf.mxu0
    %v1149 = vadd.f32 %v1060, %v1148
    %v1150 = vpop.f32.mrf.mxu0
    %v1151 = vadd.f32 %v1062, %v1150
    %1152 = vdwg.mxu0
    %1153 = vmatpush.bf16.msra.mxu0 %v926
    %1154 = vmatpush.bf16.msra.mxu0 %v924
    %1155 = vmatpush.bf16.msra.mxu0 %v922
    %1156 = vmatpush.bf16.msra.mxu0 %v920
    %1157 = vmatpush.bf16.msra.mxu0 %v918
    %1158 = vmatpush.bf16.msra.mxu0 %v916
    %1159 = vmatpush.bf16.msra.mxu0 %v914
    %1160 = vmatpush.bf16.msra.mxu0 %v912
    %1161 = vmatmul.bf16.gmra.mxu0 %v783
    %v1162 = vpop.f32.mrf.mxu0
    %v1163 = vadd.f32 0.0, %v1162
    %v1164 = vpop.f32.mrf.mxu0
    %v1165 = vadd.f32 0.0, %v1164
    %1166 = vmatmul.bf16.gmra.mxu0 %v785
    %v1167 = vpop.f32.mrf.mxu0
    %v1168 = vadd.f32 0.0, %v1167
    %v1169 = vpop.f32.mrf.mxu0
    %v1170 = vadd.f32 0.0, %v1169
    %1171 = vmatmul.bf16.gmra.mxu0 %v787
    %v1172 = vpop.f32.mrf.mxu0
    %v1173 = vadd.f32 0.0, %v1172
    %v1174 = vpop.f32.mrf.mxu0
    %v1175 = vadd.f32 0.0, %v1174
    %1176 = vmatmul.bf16.gmra.mxu0 %v789
    %v1177 = vpop.f32.mrf.mxu0
    %v1178 = vadd.f32 0.0, %v1177
    %v1179 = vpop.f32.mrf.mxu0
    %v1180 = vadd.f32 0.0, %v1179
    %1181 = vmatmul.bf16.gmra.mxu0 %v791
    %v1182 = vpop.f32.mrf.mxu0
    %v1183 = vadd.f32 0.0, %v1182
    %v1184 = vpop.f32.mrf.mxu0
    %v1185 = vadd.f32 0.0, %v1184
    %1186 = vmatmul.bf16.gmra.mxu0 %v793
    %v1187 = vpop.f32.mrf.mxu0
    %v1188 = vadd.f32 0.0, %v1187
    %v1189 = vpop.f32.mrf.mxu0
    %v1190 = vadd.f32 0.0, %v1189
    %1191 = vmatmul.bf16.gmra.mxu0 %v795
    %v1192 = vpop.f32.mrf.mxu0
    %v1193 = vadd.f32 0.0, %v1192
    %v1194 = vpop.f32.mrf.mxu0
    %v1195 = vadd.f32 0.0, %v1194
    %1196 = vmatmul.bf16.gmra.mxu0 %v797
    %v1197 = vpop.f32.mrf.mxu0
    %v1198 = vadd.f32 0.0, %v1197
    %v1199 = vpop.f32.mrf.mxu0
    %v1200 = vadd.f32 0.0, %v1199
    %1201 = vmatmul.bf16.gmra.mxu0 %v799
    %v1202 = vpop.f32.mrf.mxu0
    %v1203 = vadd.f32 0.0, %v1202
    %v1204 = vpop.f32.mrf.mxu0
    %v1205 = vadd.f32 0.0, %v1204
    %1206 = vmatmul.bf16.gmra.mxu0 %v801
    %v1207 = vpop.f32.mrf.mxu0
    %v1208 = vadd.f32 0.0, %v1207
    %v1209 = vpop.f32.mrf.mxu0
    %v1210 = vadd.f32 0.0, %v1209
    %1211 = vmatmul.bf16.gmra.mxu0 %v803
    %v1212 = vpop.f32.mrf.mxu0
    %v1213 = vadd.f32 0.0, %v1212
    %v1214 = vpop.f32.mrf.mxu0
    %v1215 = vadd.f32 0.0, %v1214
    %1216 = vmatmul.bf16.gmra.mxu0 %v805
    %v1217 = vpop.f32.mrf.mxu0
    %v1218 = vadd.f32 0.0, %v1217
    %v1219 = vpop.f32.mrf.mxu0
    %v1220 = vadd.f32 0.0, %v1219
    %1221 = vmatmul.bf16.gmra.mxu0 %v807
    %v1222 = vpop.f32.mrf.mxu0
    %v1223 = vadd.f32 0.0, %v1222
    %v1224 = vpop.f32.mrf.mxu0
    %v1225 = vadd.f32 0.0, %v1224
    %1226 = vmatmul.bf16.gmra.mxu0 %v809
    %v1227 = vpop.f32.mrf.mxu0
    %v1228 = vadd.f32 0.0, %v1227
    %v1229 = vpop.f32.mrf.mxu0
    %v1230 = vadd.f32 0.0, %v1229
    %1231 = vmatmul.bf16.gmra.mxu0 %v811
    %v1232 = vpop.f32.mrf.mxu0
    %v1233 = vadd.f32 0.0, %v1232
    %v1234 = vpop.f32.mrf.mxu0
    %v1235 = vadd.f32 0.0, %v1234
    %1236 = vmatmul.bf16.gmra.mxu0 %v813
    %v1237 = vpop.f32.mrf.mxu0
    %v1238 = vadd.f32 0.0, %v1237
    %v1239 = vpop.f32.mrf.mxu0
    %v1240 = vadd.f32 0.0, %v1239
    %1241 = vdwg.mxu0
    %1242 = vmatpush.bf16.msra.mxu0 %v942
    %1243 = vmatpush.bf16.msra.mxu0 %v940
    %1244 = vmatpush.bf16.msra.mxu0 %v938
    %1245 = vmatpush.bf16.msra.mxu0 %v936
    %1246 = vmatpush.bf16.msra.mxu0 %v934
    %1247 = vmatpush.bf16.msra.mxu0 %v932
    %1248 = vmatpush.bf16.msra.mxu0 %v930
    %1249 = vmatpush.bf16.msra.mxu0 %v928
    %1250 = vmatmul.bf16.gmra.mxu0 %v784
    %v1251 = vpop.f32.mrf.mxu0
    %v1252 = vadd.f32 %v1163, %v1251
    %v1253 = vpop.f32.mrf.mxu0
    %v1254 = vadd.f32 %v1165, %v1253
    %1255 = vmatmul.bf16.gmra.mxu0 %v786
    %v1256 = vpop.f32.mrf.mxu0
    %v1257 = vadd.f32 %v1168, %v1256
    %v1258 = vpop.f32.mrf.mxu0
    %v1259 = vadd.f32 %v1170, %v1258
    %1260 = vmatmul.bf16.gmra.mxu0 %v788
    %v1261 = vpop.f32.mrf.mxu0
    %v1262 = vadd.f32 %v1173, %v1261
    %v1263 = vpop.f32.mrf.mxu0
    %v1264 = vadd.f32 %v1175, %v1263
    %1265 = vmatmul.bf16.gmra.mxu0 %v790
    %v1266 = vpop.f32.mrf.mxu0
    %v1267 = vadd.f32 %v1178, %v1266
    %v1268 = vpop.f32.mrf.mxu0
    %v1269 = vadd.f32 %v1180, %v1268
    %1270 = vmatmul.bf16.gmra.mxu0 %v792
    %v1271 = vpop.f32.mrf.mxu0
    %v1272 = vadd.f32 %v1183, %v1271
    %v1273 = vpop.f32.mrf.mxu0
    %v1274 = vadd.f32 %v1185, %v1273
    %1275 = vmatmul.bf16.gmra.mxu0 %v794
    %v1276 = vpop.f32.mrf.mxu0
    %v1277 = vadd.f32 %v1188, %v1276
    %v1278 = vpop.f32.mrf.mxu0
    %v1279 = vadd.f32 %v1190, %v1278
    %1280 = vmatmul.bf16.gmra.mxu0 %v796
    %v1281 = vpop.f32.mrf.mxu0
    %v1282 = vadd.f32 %v1193, %v1281
    %v1283 = vpop.f32.mrf.mxu0
    %v1284 = vadd.f32 %v1195, %v1283
    %1285 = vmatmul.bf16.gmra.mxu0 %v798
    %v1286 = vpop.f32.mrf.mxu0
    %v1287 = vadd.f32 %v1198, %v1286
    %v1288 = vpop.f32.mrf.mxu0
    %v1289 = vadd.f32 %v1200, %v1288
    %1290 = vmatmul.bf16.gmra.mxu0 %v800
    %v1291 = vpop.f32.mrf.mxu0
    %v1292 = vadd.f32 %v1203, %v1291
    %v1293 = vpop.f32.mrf.mxu0
    %v1294 = vadd.f32 %v1205, %v1293
    %1295 = vmatmul.bf16.gmra.mxu0 %v802
    %v1296 = vpop.f32.mrf.mxu0
    %v1297 = vadd.f32 %v1208, %v1296
    %v1298 = vpop.f32.mrf.mxu0
    %v1299 = vadd.f32 %v1210, %v1298
    %1300 = vmatmul.bf16.gmra.mxu0 %v804
    %v1301 = vpop.f32.mrf.mxu0
    %v1302 = vadd.f32 %v1213, %v1301
    %v1303 = vpop.f32.mrf.mxu0
    %v1304 = vadd.f32 %v1215, %v1303
    %1305 = vmatmul.bf16.gmra.mxu0 %v806
    %v1306 = vpop.f32.mrf.mxu0
    %v1307 = vadd.f32 %v1218, %v1306
    %v1308 = vpop.f32.mrf.mxu0
    %v1309 = vadd.f32 %v1220, %v1308
    %1310 = vmatmul.bf16.gmra.mxu0 %v808
    %v1311 = vpop.f32.mrf.mxu0
    %v1312 = vadd.f32 %v1223, %v1311
    %v1313 = vpop.f32.mrf.mxu0
    %v1314 = vadd.f32 %v1225, %v1313
    %1315 = vmatmul.bf16.gmra.mxu0 %v810
    %v1316 = vpop.f32.mrf.mxu0
    %v1317 = vadd.f32 %v1228, %v1316
    %v1318 = vpop.f32.mrf.mxu0
    %v1319 = vadd.f32 %v1230, %v1318
    %1320 = vmatmul.bf16.gmra.mxu0 %v812
    %v1321 = vpop.f32.mrf.mxu0
    %v1322 = vadd.f32 %v1233, %v1321
    %v1323 = vpop.f32.mrf.mxu0
    %v1324 = vadd.f32 %v1235, %v1323
    %1325 = vmatmul.bf16.gmra.mxu0 %v814
    %v1326 = vpop.f32.mrf.mxu0
    %v1327 = vadd.f32 %v1238, %v1326
    %v1328 = vpop.f32.mrf.mxu0
    %v1329 = vadd.f32 %v1240, %v1328
    %1330 = vdwg.mxu0
    %v1331 = vsub.f32 %v494, %v1074
    %v1332 = vsub.f32 %v672, %v1252
    %v1333 = vsub.f32 %v496, %v1076
    %v1334 = vsub.f32 %v674, %v1254
    %v1335 = vsub.f32 %v499, %v1079
    %v1336 = vsub.f32 %v677, %v1257
    %v1337 = vsub.f32 %v501, %v1081
    %v1338 = vsub.f32 %v679, %v1259
    %v1339 = vsub.f32 %v504, %v1084
    %v1340 = vsub.f32 %v682, %v1262
    %v1341 = vsub.f32 %v506, %v1086
    %v1342 = vsub.f32 %v684, %v1264
    %v1343 = vsub.f32 %v509, %v1089
    %v1344 = vsub.f32 %v687, %v1267
    %v1345 = vsub.f32 %v511, %v1091
    %v1346 = vsub.f32 %v689, %v1269
    %v1347 = vsub.f32 %v514, %v1094
    %v1348 = vsub.f32 %v692, %v1272
    %v1349 = vsub.f32 %v516, %v1096
    %v1350 = vsub.f32 %v694, %v1274
    %v1351 = vsub.f32 %v519, %v1099
    %v1352 = vsub.f32 %v697, %v1277
    %v1353 = vsub.f32 %v521, %v1101
    %v1354 = vsub.f32 %v699, %v1279
    %v1355 = vsub.f32 %v524, %v1104
    %v1356 = vsub.f32 %v702, %v1282
    %v1357 = vsub.f32 %v526, %v1106
    %v1358 = vsub.f32 %v704, %v1284
    %v1359 = vsub.f32 %v529, %v1109
    %v1360 = vsub.f32 %v707, %v1287
    %v1361 = vsub.f32 %v531, %v1111
    %v1362 = vsub.f32 %v709, %v1289
    %v1363 = vsub.f32 %v534, %v1114
    %v1364 = vsub.f32 %v712, %v1292
    %v1365 = vsub.f32 %v536, %v1116
    %v1366 = vsub.f32 %v714, %v1294
    %v1367 = vsub.f32 %v539, %v1119
    %v1368 = vsub.f32 %v717, %v1297
    %v1369 = vsub.f32 %v541, %v1121
    %v1370 = vsub.f32 %v719, %v1299
    %v1371 = vsub.f32 %v544, %v1124
    %v1372 = vsub.f32 %v722, %v1302
    %v1373 = vsub.f32 %v546, %v1126
    %v1374 = vsub.f32 %v724, %v1304
    %v1375 = vsub.f32 %v549, %v1129
    %v1376 = vsub.f32 %v727, %v1307
    %v1377 = vsub.f32 %v551, %v1131
    %v1378 = vsub.f32 %v729, %v1309
    %v1379 = vsub.f32 %v554, %v1134
    %v1380 = vsub.f32 %v732, %v1312
    %v1381 = vsub.f32 %v556, %v1136
    %v1382 = vsub.f32 %v734, %v1314
    %v1383 = vsub.f32 %v559, %v1139
    %v1384 = vsub.f32 %v737, %v1317
    %v1385 = vsub.f32 %v561, %v1141
    %v1386 = vsub.f32 %v739, %v1319
    %v1387 = vsub.f32 %v564, %v1144
    %v1388 = vsub.f32 %v742, %v1322
    %v1389 = vsub.f32 %v566, %v1146
    %v1390 = vsub.f32 %v744, %v1324
    %v1391 = vsub.f32 %v569, %v1149
    %v1392 = vsub.f32 %v747, %v1327
    %v1393 = vsub.f32 %v571, %v1151
    %v1394 = vsub.f32 %v749, %v1329
    %v1395 = vmul.f32 %v1331, %v1331
    %v1396 = vmul.f32 %v1332, %v1332
    %v1397 = vmul.f32 %v1333, %v1333
    %v1398 = vmul.f32 %v1334, %v1334
    %v1399 = vmul.f32 %v1335, %v1335
    %v1400 = vmul.f32 %v1336, %v1336
    %v1401 = vmul.f32 %v1337, %v1337
    %v1402 = vmul.f32 %v1338, %v1338
    %v1403 = vmul.f32 %v1339, %v1339
    %v1404 = vmul.f32 %v1340, %v1340
    %v1405 = vmul.f32 %v1341, %v1341
    %v1406 = vmul.f32 %v1342, %v1342
    %v1407 = vmul.f32 %v1343, %v1343
    %v1408 = vmul.f32 %v1344, %v1344
    %v1409 = vmul.f32 %v1345, %v1345
    %v1410 = vmul.f32 %v1346, %v1346
    %v1411 = vmul.f32 %v1347, %v1347
    %v1412 = vmul.f32 %v1348, %v1348
    %v1413 = vmul.f32 %v1349, %v1349
    %v1414 = vmul.f32 %v1350, %v1350
    %v1415 = vmul.f32 %v1351, %v1351
    %v1416 = vmul.f32 %v1352, %v1352
    %v1417 = vmul.f32 %v1353, %v1353
    %v1418 = vmul.f32 %v1354, %v1354
    %v1419 = vmul.f32 %v1355, %v1355
    %v1420 = vmul.f32 %v1356, %v1356
    %v1421 = vmul.f32 %v1357, %v1357
    %v1422 = vmul.f32 %v1358, %v1358
    %v1423 = vmul.f32 %v1359, %v1359
    %v1424 = vmul.f32 %v1360, %v1360
    %v1425 = vmul.f32 %v1361, %v1361
    %v1426 = vmul.f32 %v1362, %v1362
    %v1427 = vmul.f32 %v1363, %v1363
    %v1428 = vmul.f32 %v1364, %v1364
    %v1429 = vmul.f32 %v1365, %v1365
    %v1430 = vmul.f32 %v1366, %v1366
    %v1431 = vmul.f32 %v1367, %v1367
    %v1432 = vmul.f32 %v1368, %v1368
    %v1433 = vmul.f32 %v1369, %v1369
    %v1434 = vmul.f32 %v1370, %v1370
    %v1435 = vmul.f32 %v1371, %v1371
    %v1436 = vmul.f32 %v1372, %v1372
    %v1437 = vmul.f32 %v1373, %v1373
    %v1438 = vmul.f32 %v1374, %v1374
    %v1439 = vmul.f32 %v1375, %v1375
    %v1440 = vmul.f32 %v1376, %v1376
    %v1441 = vmul.f32 %v1377, %v1377
    %v1442 = vmul.f32 %v1378, %v1378
    %v1443 = vmul.f32 %v1379, %v1379
    %v1444 = vmul.f32 %v1380, %v1380
    %v1445 = vmul.f32 %v1381, %v1381
    %v1446 = vmul.f32 %v1382, %v1382
    %v1447 = vmul.f32 %v1383, %v1383
    %v1448 = vmul.f32 %v1384, %v1384
    %v1449 = vmul.f32 %v1385, %v1385
    %v1450 = vmul.f32 %v1386, %v1386
    %v1451 = vmul.f32 %v1387, %v1387
    %v1452 = vmul.f32 %v1388, %v1388
    %v1453 = vmul.f32 %v1389, %v1389
    %v1454 = vmul.f32 %v1390, %v1390
    %v1455 = vmul.f32 %v1391, %v1391
    %v1456 = vmul.f32 %v1392, %v1392
    %v1457 = vmul.f32 %v1393, %v1393
    %v1458 = vmul.f32 %v1394, %v1394
    %v1459 = vpack.c.bf16 %v1397, %v1395
    %v1460 = vpack.c.bf16 %v1398, %v1396
    %v1461 = vpack.c.bf16 %v1401, %v1399
    %v1462 = vpack.c.bf16 %v1402, %v1400
    %v1463 = vpack.c.bf16 %v1405, %v1403
    %v1464 = vpack.c.bf16 %v1406, %v1404
    %v1465 = vpack.c.bf16 %v1409, %v1407
    %v1466 = vpack.c.bf16 %v1410, %v1408
    %v1467 = vpack.c.bf16 %v1413, %v1411
    %v1468 = vpack.c.bf16 %v1414, %v1412
    %v1469 = vpack.c.bf16 %v1417, %v1415
    %v1470 = vpack.c.bf16 %v1418, %v1416
    %v1471 = vpack.c.bf16 %v1421, %v1419
    %v1472 = vpack.c.bf16 %v1422, %v1420
    %v1473 = vpack.c.bf16 %v1425, %v1423
    %v1474 = vpack.c.bf16 %v1426, %v1424
    %v1475 = vpack.c.bf16 %v1429, %v1427
    %v1476 = vpack.c.bf16 %v1430, %v1428
    %v1477 = vpack.c.bf16 %v1433, %v1431
    %v1478 = vpack.c.bf16 %v1434, %v1432
    %v1479 = vpack.c.bf16 %v1437, %v1435
    %v1480 = vpack.c.bf16 %v1438, %v1436
    %v1481 = vpack.c.bf16 %v1441, %v1439
    %v1482 = vpack.c.bf16 %v1442, %v1440
    %v1483 = vpack.c.bf16 %v1445, %v1443
    %v1484 = vpack.c.bf16 %v1446, %v1444
    %v1485 = vpack.c.bf16 %v1449, %v1447
    %v1486 = vpack.c.bf16 %v1450, %v1448
    %v1487 = vpack.c.bf16 %v1453, %v1451
    %v1488 = vpack.c.bf16 %v1454, %v1452
    %v1489 = vpack.c.bf16 %v1457, %v1455
    %v1490 = vpack.c.bf16 %v1458, %v1456
    %1491 = vmatpush.bf16.msra.mxu0 %v925
    %1492 = vmatpush.bf16.msra.mxu0 %v923
    %1493 = vmatpush.bf16.msra.mxu0 %v921
    %1494 = vmatpush.bf16.msra.mxu0 %v919
    %1495 = vmatpush.bf16.msra.mxu0 %v917
    %1496 = vmatpush.bf16.msra.mxu0 %v915
    %1497 = vmatpush.bf16.msra.mxu0 %v913
    %1498 = vmatpush.bf16.msra.mxu0 %v911
    %1499 = vmatmul.bf16.gmra.mxu0 %v1459
    %v1500 = vpop.f32.mrf.mxu0
    %v1501 = vadd.f32 1e-05, %v1500
    %v1502 = vpop.f32.mrf.mxu0
    %v1503 = vadd.f32 1e-05, %v1502
    %1504 = vmatmul.bf16.gmra.mxu0 %v1461
    %v1505 = vpop.f32.mrf.mxu0
    %v1506 = vadd.f32 1e-05, %v1505
    %v1507 = vpop.f32.mrf.mxu0
    %v1508 = vadd.f32 1e-05, %v1507
    %1509 = vmatmul.bf16.gmra.mxu0 %v1463
    %v1510 = vpop.f32.mrf.mxu0
    %v1511 = vadd.f32 1e-05, %v1510
    %v1512 = vpop.f32.mrf.mxu0
    %v1513 = vadd.f32 1e-05, %v1512
    %1514 = vmatmul.bf16.gmra.mxu0 %v1465
    %v1515 = vpop.f32.mrf.mxu0
    %v1516 = vadd.f32 1e-05, %v1515
    %v1517 = vpop.f32.mrf.mxu0
    %v1518 = vadd.f32 1e-05, %v1517
    %1519 = vmatmul.bf16.gmra.mxu0 %v1467
    %v1520 = vpop.f32.mrf.mxu0
    %v1521 = vadd.f32 1e-05, %v1520
    %v1522 = vpop.f32.mrf.mxu0
    %v1523 = vadd.f32 1e-05, %v1522
    %1524 = vmatmul.bf16.gmra.mxu0 %v1469
    %v1525 = vpop.f32.mrf.mxu0
    %v1526 = vadd.f32 1e-05, %v1525
    %v1527 = vpop.f32.mrf.mxu0
    %v1528 = vadd.f32 1e-05, %v1527
    %1529 = vmatmul.bf16.gmra.mxu0 %v1471
    %v1530 = vpop.f32.mrf.mxu0
    %v1531 = vadd.f32 1e-05, %v1530
    %v1532 = vpop.f32.mrf.mxu0
    %v1533 = vadd.f32 1e-05, %v1532
    %1534 = vmatmul.bf16.gmra.mxu0 %v1473
    %v1535 = vpop.f32.mrf.mxu0
    %v1536 = vadd.f32 1e-05, %v1535
    %v1537 = vpop.f32.mrf.mxu0
    %v1538 = vadd.f32 1e-05, %v1537
    %1539 = vmatmul.bf16.gmra.mxu0 %v1475
    %v1540 = vpop.f32.mrf.mxu0
    %v1541 = vadd.f32 1e-05, %v1540
    %v1542 = vpop.f32.mrf.mxu0
    %v1543 = vadd.f32 1e-05, %v1542
    %1544 = vmatmul.bf16.gmra.mxu0 %v1477
    %v1545 = vpop.f32.mrf.mxu0
    %v1546 = vadd.f32 1e-05, %v1545
    %v1547 = vpop.f32.mrf.mxu0
    %v1548 = vadd.f32 1e-05, %v1547
    %1549 = vmatmul.bf16.gmra.mxu0 %v1479
    %v1550 = vpop.f32.mrf.mxu0
    %v1551 = vadd.f32 1e-05, %v1550
    %v1552 = vpop.f32.mrf.mxu0
    %v1553 = vadd.f32 1e-05, %v1552
    %1554 = vmatmul.bf16.gmra.mxu0 %v1481
    %v1555 = vpop.f32.mrf.mxu0
    %v1556 = vadd.f32 1e-05, %v1555
    %v1557 = vpop.f32.mrf.mxu0
    %v1558 = vadd.f32 1e-05, %v1557
    %1559 = vmatmul.bf16.gmra.mxu0 %v1483
    %v1560 = vpop.f32.mrf.mxu0
    %v1561 = vadd.f32 1e-05, %v1560
    %v1562 = vpop.f32.mrf.mxu0
    %v1563 = vadd.f32 1e-05, %v1562
    %1564 = vmatmul.bf16.gmra.mxu0 %v1485
    %v1565 = vpop.f32.mrf.mxu0
    %v1566 = vadd.f32 1e-05, %v1565
    %v1567 = vpop.f32.mrf.mxu0
    %v1568 = vadd.f32 1e-05, %v1567
    %1569 = vmatmul.bf16.gmra.mxu0 %v1487
    %v1570 = vpop.f32.mrf.mxu0
    %v1571 = vadd.f32 1e-05, %v1570
    %v1572 = vpop.f32.mrf.mxu0
    %v1573 = vadd.f32 1e-05, %v1572
    %1574 = vmatmul.bf16.gmra.mxu0 %v1489
    %v1575 = vpop.f32.mrf.mxu0
    %v1576 = vadd.f32 1e-05, %v1575
    %v1577 = vpop.f32.mrf.mxu0
    %v1578 = vadd.f32 1e-05, %v1577
    %1579 = vdwg.mxu0
    %1580 = vmatpush.bf16.msra.mxu0 %v941
    %1581 = vmatpush.bf16.msra.mxu0 %v939
    %1582 = vmatpush.bf16.msra.mxu0 %v937
    %1583 = vmatpush.bf16.msra.mxu0 %v935
    %1584 = vmatpush.bf16.msra.mxu0 %v933
    %1585 = vmatpush.bf16.msra.mxu0 %v931
    %1586 = vmatpush.bf16.msra.mxu0 %v929
    %1587 = vmatpush.bf16.msra.mxu0 %v927
    %1588 = vmatmul.bf16.gmra.mxu0 %v1460
    %v1589 = vpop.f32.mrf.mxu0
    %v1590 = vadd.f32 %v1501, %v1589
    %v1591 = vpop.f32.mrf.mxu0
    %v1592 = vadd.f32 %v1503, %v1591
    %1593 = vmatmul.bf16.gmra.mxu0 %v1462
    %v1594 = vpop.f32.mrf.mxu0
    %v1595 = vadd.f32 %v1506, %v1594
    %v1596 = vpop.f32.mrf.mxu0
    %v1597 = vadd.f32 %v1508, %v1596
    %1598 = vmatmul.bf16.gmra.mxu0 %v1464
    %v1599 = vpop.f32.mrf.mxu0
    %v1600 = vadd.f32 %v1511, %v1599
    %v1601 = vpop.f32.mrf.mxu0
    %v1602 = vadd.f32 %v1513, %v1601
    %1603 = vmatmul.bf16.gmra.mxu0 %v1466
    %v1604 = vpop.f32.mrf.mxu0
    %v1605 = vadd.f32 %v1516, %v1604
    %v1606 = vpop.f32.mrf.mxu0
    %v1607 = vadd.f32 %v1518, %v1606
    %1608 = vmatmul.bf16.gmra.mxu0 %v1468
    %v1609 = vpop.f32.mrf.mxu0
    %v1610 = vadd.f32 %v1521, %v1609
    %v1611 = vpop.f32.mrf.mxu0
    %v1612 = vadd.f32 %v1523, %v1611
    %1613 = vmatmul.bf16.gmra.mxu0 %v1470
    %v1614 = vpop.f32.mrf.mxu0
    %v1615 = vadd.f32 %v1526, %v1614
    %v1616 = vpop.f32.mrf.mxu0
    %v1617 = vadd.f32 %v1528, %v1616
    %1618 = vmatmul.bf16.gmra.mxu0 %v1472
    %v1619 = vpop.f32.mrf.mxu0
    %v1620 = vadd.f32 %v1531, %v1619
    %v1621 = vpop.f32.mrf.mxu0
    %v1622 = vadd.f32 %v1533, %v1621
    %1623 = vmatmul.bf16.gmra.mxu0 %v1474
    %v1624 = vpop.f32.mrf.mxu0
    %v1625 = vadd.f32 %v1536, %v1624
    %v1626 = vpop.f32.mrf.mxu0
    %v1627 = vadd.f32 %v1538, %v1626
    %1628 = vmatmul.bf16.gmra.mxu0 %v1476
    %v1629 = vpop.f32.mrf.mxu0
    %v1630 = vadd.f32 %v1541, %v1629
    %v1631 = vpop.f32.mrf.mxu0
    %v1632 = vadd.f32 %v1543, %v1631
    %1633 = vmatmul.bf16.gmra.mxu0 %v1478
    %v1634 = vpop.f32.mrf.mxu0
    %v1635 = vadd.f32 %v1546, %v1634
    %v1636 = vpop.f32.mrf.mxu0
    %v1637 = vadd.f32 %v1548, %v1636
    %1638 = vmatmul.bf16.gmra.mxu0 %v1480
    %v1639 = vpop.f32.mrf.mxu0
    %v1640 = vadd.f32 %v1551, %v1639
    %v1641 = vpop.f32.mrf.mxu0
    %v1642 = vadd.f32 %v1553, %v1641
    %1643 = vmatmul.bf16.gmra.mxu0 %v1482
    %v1644 = vpop.f32.mrf.mxu0
    %v1645 = vadd.f32 %v1556, %v1644
    %v1646 = vpop.f32.mrf.mxu0
    %v1647 = vadd.f32 %v1558, %v1646
    %1648 = vmatmul.bf16.gmra.mxu0 %v1484
    %v1649 = vpop.f32.mrf.mxu0
    %v1650 = vadd.f32 %v1561, %v1649
    %v1651 = vpop.f32.mrf.mxu0
    %v1652 = vadd.f32 %v1563, %v1651
    %1653 = vmatmul.bf16.gmra.mxu0 %v1486
    %v1654 = vpop.f32.mrf.mxu0
    %v1655 = vadd.f32 %v1566, %v1654
    %v1656 = vpop.f32.mrf.mxu0
    %v1657 = vadd.f32 %v1568, %v1656
    %1658 = vmatmul.bf16.gmra.mxu0 %v1488
    %v1659 = vpop.f32.mrf.mxu0
    %v1660 = vadd.f32 %v1571, %v1659
    %v1661 = vpop.f32.mrf.mxu0
    %v1662 = vadd.f32 %v1573, %v1661
    %1663 = vmatmul.bf16.gmra.mxu0 %v1490
    %v1664 = vpop.f32.mrf.mxu0
    %v1665 = vadd.f32 %v1576, %v1664
    %v1666 = vpop.f32.mrf.mxu0
    %v1667 = vadd.f32 %v1578, %v1666
    %1668 = vdwg.mxu0
    %1669 = vmatpush.bf16.msra.mxu0 %v926
    %1670 = vmatpush.bf16.msra.mxu0 %v924
    %1671 = vmatpush.bf16.msra.mxu0 %v922
    %1672 = vmatpush.bf16.msra.mxu0 %v920
    %1673 = vmatpush.bf16.msra.mxu0 %v918
    %1674 = vmatpush.bf16.msra.mxu0 %v916
    %1675 = vmatpush.bf16.msra.mxu0 %v914
    %1676 = vmatpush.bf16.msra.mxu0 %v912
    %1677 = vmatmul.bf16.gmra.mxu0 %v1459
    %v1678 = vpop.f32.mrf.mxu0
    %v1679 = vadd.f32 1e-05, %v1678
    %v1680 = vpop.f32.mrf.mxu0
    %v1681 = vadd.f32 1e-05, %v1680
    %1682 = vmatmul.bf16.gmra.mxu0 %v1461
    %v1683 = vpop.f32.mrf.mxu0
    %v1684 = vadd.f32 1e-05, %v1683
    %v1685 = vpop.f32.mrf.mxu0
    %v1686 = vadd.f32 1e-05, %v1685
    %1687 = vmatmul.bf16.gmra.mxu0 %v1463
    %v1688 = vpop.f32.mrf.mxu0
    %v1689 = vadd.f32 1e-05, %v1688
    %v1690 = vpop.f32.mrf.mxu0
    %v1691 = vadd.f32 1e-05, %v1690
    %1692 = vmatmul.bf16.gmra.mxu0 %v1465
    %v1693 = vpop.f32.mrf.mxu0
    %v1694 = vadd.f32 1e-05, %v1693
    %v1695 = vpop.f32.mrf.mxu0
    %v1696 = vadd.f32 1e-05, %v1695
    %1697 = vmatmul.bf16.gmra.mxu0 %v1467
    %v1698 = vpop.f32.mrf.mxu0
    %v1699 = vadd.f32 1e-05, %v1698
    %v1700 = vpop.f32.mrf.mxu0
    %v1701 = vadd.f32 1e-05, %v1700
    %1702 = vmatmul.bf16.gmra.mxu0 %v1469
    %v1703 = vpop.f32.mrf.mxu0
    %v1704 = vadd.f32 1e-05, %v1703
    %v1705 = vpop.f32.mrf.mxu0
    %v1706 = vadd.f32 1e-05, %v1705
    %1707 = vmatmul.bf16.gmra.mxu0 %v1471
    %v1708 = vpop.f32.mrf.mxu0
    %v1709 = vadd.f32 1e-05, %v1708
    %v1710 = vpop.f32.mrf.mxu0
    %v1711 = vadd.f32 1e-05, %v1710
    %1712 = vmatmul.bf16.gmra.mxu0 %v1473
    %v1713 = vpop.f32.mrf.mxu0
    %v1714 = vadd.f32 1e-05, %v1713
    %v1715 = vpop.f32.mrf.mxu0
    %v1716 = vadd.f32 1e-05, %v1715
    %1717 = vmatmul.bf16.gmra.mxu0 %v1475
    %v1718 = vpop.f32.mrf.mxu0
    %v1719 = vadd.f32 1e-05, %v1718
    %v1720 = vpop.f32.mrf.mxu0
    %v1721 = vadd.f32 1e-05, %v1720
    %1722 = vmatmul.bf16.gmra.mxu0 %v1477
    %v1723 = vpop.f32.mrf.mxu0
    %v1724 = vadd.f32 1e-05, %v1723
    %v1725 = vpop.f32.mrf.mxu0
    %v1726 = vadd.f32 1e-05, %v1725
    %1727 = vmatmul.bf16.gmra.mxu0 %v1479
    %v1728 = vpop.f32.mrf.mxu0
    %v1729 = vadd.f32 1e-05, %v1728
    %v1730 = vpop.f32.mrf.mxu0
    %v1731 = vadd.f32 1e-05, %v1730
    %1732 = vmatmul.bf16.gmra.mxu0 %v1481
    %v1733 = vpop.f32.mrf.mxu0
    %v1734 = vadd.f32 1e-05, %v1733
    %v1735 = vpop.f32.mrf.mxu0
    %v1736 = vadd.f32 1e-05, %v1735
    %1737 = vmatmul.bf16.gmra.mxu0 %v1483
    %v1738 = vpop.f32.mrf.mxu0
    %v1739 = vadd.f32 1e-05, %v1738
    %v1740 = vpop.f32.mrf.mxu0
    %v1741 = vadd.f32 1e-05, %v1740
    %1742 = vmatmul.bf16.gmra.mxu0 %v1485
    %v1743 = vpop.f32.mrf.mxu0
    %v1744 = vadd.f32 1e-05, %v1743
    %v1745 = vpop.f32.mrf.mxu0
    %v1746 = vadd.f32 1e-05, %v1745
    %1747 = vmatmul.bf16.gmra.mxu0 %v1487
    %v1748 = vpop.f32.mrf.mxu0
    %v1749 = vadd.f32 1e-05, %v1748
    %v1750 = vpop.f32.mrf.mxu0
    %v1751 = vadd.f32 1e-05, %v1750
    %1752 = vmatmul.bf16.gmra.mxu0 %v1489
    %v1753 = vpop.f32.mrf.mxu0
    %v1754 = vadd.f32 1e-05, %v1753
    %v1755 = vpop.f32.mrf.mxu0
    %v1756 = vadd.f32 1e-05, %v1755
    %1757 = vdwg.mxu0
    %1758 = vmatpush.bf16.msra.mxu0 %v942
    %1759 = vmatpush.bf16.msra.mxu0 %v940
    %1760 = vmatpush.bf16.msra.mxu0 %v938
    %1761 = vmatpush.bf16.msra.mxu0 %v936
    %1762 = vmatpush.bf16.msra.mxu0 %v934
    %1763 = vmatpush.bf16.msra.mxu0 %v932
    %1764 = vmatpush.bf16.msra.mxu0 %v930
    %1765 = vmatpush.bf16.msra.mxu0 %v928
    %1766 = vmatmul.bf16.gmra.mxu0 %v1460
    %v1767 = vpop.f32.mrf.mxu0
    %v1768 = vadd.f32 %v1679, %v1767
    %v1769 = vpop.f32.mrf.mxu0
    %v1770 = vadd.f32 %v1681, %v1769
    %1771 = vmatmul.bf16.gmra.mxu0 %v1462
    %v1772 = vpop.f32.mrf.mxu0
    %v1773 = vadd.f32 %v1684, %v1772
    %v1774 = vpop.f32.mrf.mxu0
    %v1775 = vadd.f32 %v1686, %v1774
    %1776 = vmatmul.bf16.gmra.mxu0 %v1464
    %v1777 = vpop.f32.mrf.mxu0
    %v1778 = vadd.f32 %v1689, %v1777
    %v1779 = vpop.f32.mrf.mxu0
    %v1780 = vadd.f32 %v1691, %v1779
    %1781 = vmatmul.bf16.gmra.mxu0 %v1466
    %v1782 = vpop.f32.mrf.mxu0
    %v1783 = vadd.f32 %v1694, %v1782
    %v1784 = vpop.f32.mrf.mxu0
    %v1785 = vadd.f32 %v1696, %v1784
    %1786 = vmatmul.bf16.gmra.mxu0 %v1468
    %v1787 = vpop.f32.mrf.mxu0
    %v1788 = vadd.f32 %v1699, %v1787
    %v1789 = vpop.f32.mrf.mxu0
    %v1790 = vadd.f32 %v1701, %v1789
    %1791 = vmatmul.bf16.gmra.mxu0 %v1470
    %v1792 = vpop.f32.mrf.mxu0
    %v1793 = vadd.f32 %v1704, %v1792
    %v1794 = vpop.f32.mrf.mxu0
    %v1795 = vadd.f32 %v1706, %v1794
    %1796 = vmatmul.bf16.gmra.mxu0 %v1472
    %v1797 = vpop.f32.mrf.mxu0
    %v1798 = vadd.f32 %v1709, %v1797
    %v1799 = vpop.f32.mrf.mxu0
    %v1800 = vadd.f32 %v1711, %v1799
    %1801 = vmatmul.bf16.gmra.mxu0 %v1474
    %v1802 = vpop.f32.mrf.mxu0
    %v1803 = vadd.f32 %v1714, %v1802
    %v1804 = vpop.f32.mrf.mxu0
    %v1805 = vadd.f32 %v1716, %v1804
    %1806 = vmatmul.bf16.gmra.mxu0 %v1476
    %v1807 = vpop.f32.mrf.mxu0
    %v1808 = vadd.f32 %v1719, %v1807
    %v1809 = vpop.f32.mrf.mxu0
    %v1810 = vadd.f32 %v1721, %v1809
    %1811 = vmatmul.bf16.gmra.mxu0 %v1478
    %v1812 = vpop.f32.mrf.mxu0
    %v1813 = vadd.f32 %v1724, %v1812
    %v1814 = vpop.f32.mrf.mxu0
    %v1815 = vadd.f32 %v1726, %v1814
    %1816 = vmatmul.bf16.gmra.mxu0 %v1480
    %v1817 = vpop.f32.mrf.mxu0
    %v1818 = vadd.f32 %v1729, %v1817
    %v1819 = vpop.f32.mrf.mxu0
    %v1820 = vadd.f32 %v1731, %v1819
    %1821 = vmatmul.bf16.gmra.mxu0 %v1482
    %v1822 = vpop.f32.mrf.mxu0
    %v1823 = vadd.f32 %v1734, %v1822
    %v1824 = vpop.f32.mrf.mxu0
    %v1825 = vadd.f32 %v1736, %v1824
    %1826 = vmatmul.bf16.gmra.mxu0 %v1484
    %v1827 = vpop.f32.mrf.mxu0
    %v1828 = vadd.f32 %v1739, %v1827
    %v1829 = vpop.f32.mrf.mxu0
    %v1830 = vadd.f32 %v1741, %v1829
    %1831 = vmatmul.bf16.gmra.mxu0 %v1486
    %v1832 = vpop.f32.mrf.mxu0
    %v1833 = vadd.f32 %v1744, %v1832
    %v1834 = vpop.f32.mrf.mxu0
    %v1835 = vadd.f32 %v1746, %v1834
    %1836 = vmatmul.bf16.gmra.mxu0 %v1488
    %v1837 = vpop.f32.mrf.mxu0
    %v1838 = vadd.f32 %v1749, %v1837
    %v1839 = vpop.f32.mrf.mxu0
    %v1840 = vadd.f32 %v1751, %v1839
    %1841 = vmatmul.bf16.gmra.mxu0 %v1490
    %v1842 = vpop.f32.mrf.mxu0
    %v1843 = vadd.f32 %v1754, %v1842
    %v1844 = vpop.f32.mrf.mxu0
    %v1845 = vadd.f32 %v1756, %v1844
    %1846 = vdwg.mxu0
    %v1847 = vrsqrt.pop %v1590
    %v1848 = vmul.f32 %v1847, %v1590
    %v1849 = vmul.f32 %v1848, %v1847
    %v1850 = vmul.f32 0.5, %v1849
    %v1851 = vsub.f32 1.5, %v1850
    %v1852 = vmul.f32 %v1847, %v1851
    %vm1853 = vweird.f32 %v1590
    %vm1854 = vweird.f32 %v1847
    %vm1855 = vmor %vm1853, %vm1854
    %v1856 = vsel %vm1855, %v1847, %v1852
    %v1857 = vrsqrt.pop %v1768
    %v1858 = vmul.f32 %v1857, %v1768
    %v1859 = vmul.f32 %v1858, %v1857
    %v1860 = vmul.f32 0.5, %v1859
    %v1861 = vsub.f32 1.5, %v1860
    %v1862 = vmul.f32 %v1857, %v1861
    %vm1863 = vweird.f32 %v1768
    %vm1864 = vweird.f32 %v1857
    %vm1865 = vmor %vm1863, %vm1864
    %v1866 = vsel %vm1865, %v1857, %v1862
    %v1867 = vrsqrt.pop %v1592
    %v1868 = vmul.f32 %v1867, %v1592
    %v1869 = vmul.f32 %v1868, %v1867
    %v1870 = vmul.f32 0.5, %v1869
    %v1871 = vsub.f32 1.5, %v1870
    %v1872 = vmul.f32 %v1867, %v1871
    %vm1873 = vweird.f32 %v1592
    %vm1874 = vweird.f32 %v1867
    %vm1875 = vmor %vm1873, %vm1874
    %v1876 = vsel %vm1875, %v1867, %v1872
    %v1877 = vrsqrt.pop %v1770
    %v1878 = vmul.f32 %v1877, %v1770
    %v1879 = vmul.f32 %v1878, %v1877
    %v1880 = vmul.f32 0.5, %v1879
    %v1881 = vsub.f32 1.5, %v1880
    %v1882 = vmul.f32 %v1877, %v1881
    %vm1883 = vweird.f32 %v1770
    %vm1884 = vweird.f32 %v1877
    %vm1885 = vmor %vm1883, %vm1884
    %v1886 = vsel %vm1885, %v1877, %v1882
    %v1887 = vrsqrt.pop %v1595
    %v1888 = vmul.f32 %v1887, %v1595
    %v1889 = vmul.f32 %v1888, %v1887
    %v1890 = vmul.f32 0.5, %v1889
    %v1891 = vsub.f32 1.5, %v1890
    %v1892 = vmul.f32 %v1887, %v1891
    %vm1893 = vweird.f32 %v1595
    %vm1894 = vweird.f32 %v1887
    %vm1895 = vmor %vm1893, %vm1894
    %v1896 = vsel %vm1895, %v1887, %v1892
    %v1897 = vrsqrt.pop %v1773
    %v1898 = vmul.f32 %v1897, %v1773
    %v1899 = vmul.f32 %v1898, %v1897
    %v1900 = vmul.f32 0.5, %v1899
    %v1901 = vsub.f32 1.5, %v1900
    %v1902 = vmul.f32 %v1897, %v1901
    %vm1903 = vweird.f32 %v1773
    %vm1904 = vweird.f32 %v1897
    %vm1905 = vmor %vm1903, %vm1904
    %v1906 = vsel %vm1905, %v1897, %v1902
    %v1907 = vrsqrt.pop %v1597
    %v1908 = vmul.f32 %v1907, %v1597
    %v1909 = vmul.f32 %v1908, %v1907
    %v1910 = vmul.f32 0.5, %v1909
    %v1911 = vsub.f32 1.5, %v1910
    %v1912 = vmul.f32 %v1907, %v1911
    %vm1913 = vweird.f32 %v1597
    %vm1914 = vweird.f32 %v1907
    %vm1915 = vmor %vm1913, %vm1914
    %v1916 = vsel %vm1915, %v1907, %v1912
    %v1917 = vrsqrt.pop %v1775
    %v1918 = vmul.f32 %v1917, %v1775
    %v1919 = vmul.f32 %v1918, %v1917
    %v1920 = vmul.f32 0.5, %v1919
    %v1921 = vsub.f32 1.5, %v1920
    %v1922 = vmul.f32 %v1917, %v1921
    %vm1923 = vweird.f32 %v1775
    %vm1924 = vweird.f32 %v1917
    %vm1925 = vmor %vm1923, %vm1924
    %v1926 = vsel %vm1925, %v1917, %v1922
    %v1927 = vrsqrt.pop %v1600
    %v1928 = vmul.f32 %v1927, %v1600
    %v1929 = vmul.f32 %v1928, %v1927
    %v1930 = vmul.f32 0.5, %v1929
    %v1931 = vsub.f32 1.5, %v1930
    %v1932 = vmul.f32 %v1927, %v1931
    %vm1933 = vweird.f32 %v1600
    %vm1934 = vweird.f32 %v1927
    %vm1935 = vmor %vm1933, %vm1934
    %v1936 = vsel %vm1935, %v1927, %v1932
    %v1937 = vrsqrt.pop %v1778
    %v1938 = vmul.f32 %v1937, %v1778
    %v1939 = vmul.f32 %v1938, %v1937
    %v1940 = vmul.f32 0.5, %v1939
    %v1941 = vsub.f32 1.5, %v1940
    %v1942 = vmul.f32 %v1937, %v1941
    %vm1943 = vweird.f32 %v1778
    %vm1944 = vweird.f32 %v1937
    %vm1945 = vmor %vm1943, %vm1944
    %v1946 = vsel %vm1945, %v1937, %v1942
    %v1947 = vrsqrt.pop %v1602
    %v1948 = vmul.f32 %v1947, %v1602
    %v1949 = vmul.f32 %v1948, %v1947
    %v1950 = vmul.f32 0.5, %v1949
    %v1951 = vsub.f32 1.5, %v1950
    %v1952 = vmul.f32 %v1947, %v1951
    %vm1953 = vweird.f32 %v1602
    %vm1954 = vweird.f32 %v1947
    %vm1955 = vmor %vm1953, %vm1954
    %v1956 = vsel %vm1955, %v1947, %v1952
    %v1957 = vrsqrt.pop %v1780
    %v1958 = vmul.f32 %v1957, %v1780
    %v1959 = vmul.f32 %v1958, %v1957
    %v1960 = vmul.f32 0.5, %v1959
    %v1961 = vsub.f32 1.5, %v1960
    %v1962 = vmul.f32 %v1957, %v1961
    %vm1963 = vweird.f32 %v1780
    %vm1964 = vweird.f32 %v1957
    %vm1965 = vmor %vm1963, %vm1964
    %v1966 = vsel %vm1965, %v1957, %v1962
    %v1967 = vrsqrt.pop %v1605
    %v1968 = vmul.f32 %v1967, %v1605
    %v1969 = vmul.f32 %v1968, %v1967
    %v1970 = vmul.f32 0.5, %v1969
    %v1971 = vsub.f32 1.5, %v1970
    %v1972 = vmul.f32 %v1967, %v1971
    %vm1973 = vweird.f32 %v1605
    %vm1974 = vweird.f32 %v1967
    %vm1975 = vmor %vm1973, %vm1974
    %v1976 = vsel %vm1975, %v1967, %v1972
    %v1977 = vrsqrt.pop %v1783
    %v1978 = vmul.f32 %v1977, %v1783
    %v1979 = vmul.f32 %v1978, %v1977
    %v1980 = vmul.f32 0.5, %v1979
    %v1981 = vsub.f32 1.5, %v1980
    %v1982 = vmul.f32 %v1977, %v1981
    %vm1983 = vweird.f32 %v1783
    %vm1984 = vweird.f32 %v1977
    %vm1985 = vmor %vm1983, %vm1984
    %v1986 = vsel %vm1985, %v1977, %v1982
    %v1987 = vrsqrt.pop %v1607
    %v1988 = vmul.f32 %v1987, %v1607
    %v1989 = vmul.f32 %v1988, %v1987
    %v1990 = vmul.f32 0.5, %v1989
    %v1991 = vsub.f32 1.5, %v1990
    %v1992 = vmul.f32 %v1987, %v1991
    %vm1993 = vweird.f32 %v1607
    %vm1994 = vweird.f32 %v1987
    %vm1995 = vmor %vm1993, %vm1994
    %v1996 = vsel %vm1995, %v1987, %v1992
    %v1997 = vrsqrt.pop %v1785
    %v1998 = vmul.f32 %v1997, %v1785
    %v1999 = vmul.f32 %v1998, %v1997
    %v2000 = vmul.f32 0.5, %v1999
    %v2001 = vsub.f32 1.5, %v2000
    %v2002 = vmul.f32 %v1997, %v2001
    %vm2003 = vweird.f32 %v1785
    %vm2004 = vweird.f32 %v1997
    %vm2005 = vmor %vm2003, %vm2004
    %v2006 = vsel %vm2005, %v1997, %v2002
    %v2007 = vrsqrt.pop %v1610
    %v2008 = vmul.f32 %v2007, %v1610
    %v2009 = vmul.f32 %v2008, %v2007
    %v2010 = vmul.f32 0.5, %v2009
    %v2011 = vsub.f32 1.5, %v2010
    %v2012 = vmul.f32 %v2007, %v2011
    %vm2013 = vweird.f32 %v1610
    %vm2014 = vweird.f32 %v2007
    %vm2015 = vmor %vm2013, %vm2014
    %v2016 = vsel %vm2015, %v2007, %v2012
    %v2017 = vrsqrt.pop %v1788
    %v2018 = vmul.f32 %v2017, %v1788
    %v2019 = vmul.f32 %v2018, %v2017
    %v2020 = vmul.f32 0.5, %v2019
    %v2021 = vsub.f32 1.5, %v2020
    %v2022 = vmul.f32 %v2017, %v2021
    %vm2023 = vweird.f32 %v1788
    %vm2024 = vweird.f32 %v2017
    %vm2025 = vmor %vm2023, %vm2024
    %v2026 = vsel %vm2025, %v2017, %v2022
    %v2027 = vrsqrt.pop %v1612
    %v2028 = vmul.f32 %v2027, %v1612
    %v2029 = vmul.f32 %v2028, %v2027
    %v2030 = vmul.f32 0.5, %v2029
    %v2031 = vsub.f32 1.5, %v2030
    %v2032 = vmul.f32 %v2027, %v2031
    %vm2033 = vweird.f32 %v1612
    %vm2034 = vweird.f32 %v2027
    %vm2035 = vmor %vm2033, %vm2034
    %v2036 = vsel %vm2035, %v2027, %v2032
    %v2037 = vrsqrt.pop %v1790
    %v2038 = vmul.f32 %v2037, %v1790
    %v2039 = vmul.f32 %v2038, %v2037
    %v2040 = vmul.f32 0.5, %v2039
    %v2041 = vsub.f32 1.5, %v2040
    %v2042 = vmul.f32 %v2037, %v2041
    %vm2043 = vweird.f32 %v1790
    %vm2044 = vweird.f32 %v2037
    %vm2045 = vmor %vm2043, %vm2044
    %v2046 = vsel %vm2045, %v2037, %v2042
    %v2047 = vrsqrt.pop %v1615
    %v2048 = vmul.f32 %v2047, %v1615
    %v2049 = vmul.f32 %v2048, %v2047
    %v2050 = vmul.f32 0.5, %v2049
    %v2051 = vsub.f32 1.5, %v2050
    %v2052 = vmul.f32 %v2047, %v2051
    %vm2053 = vweird.f32 %v1615
    %vm2054 = vweird.f32 %v2047
    %vm2055 = vmor %vm2053, %vm2054
    %v2056 = vsel %vm2055, %v2047, %v2052
    %v2057 = vrsqrt.pop %v1793
    %v2058 = vmul.f32 %v2057, %v1793
    %v2059 = vmul.f32 %v2058, %v2057
    %v2060 = vmul.f32 0.5, %v2059
    %v2061 = vsub.f32 1.5, %v2060
    %v2062 = vmul.f32 %v2057, %v2061
    %vm2063 = vweird.f32 %v1793
    %vm2064 = vweird.f32 %v2057
    %vm2065 = vmor %vm2063, %vm2064
    %v2066 = vsel %vm2065, %v2057, %v2062
    %v2067 = vrsqrt.pop %v1617
    %v2068 = vmul.f32 %v2067, %v1617
    %v2069 = vmul.f32 %v2068, %v2067
    %v2070 = vmul.f32 0.5, %v2069
    %v2071 = vsub.f32 1.5, %v2070
    %v2072 = vmul.f32 %v2067, %v2071
    %vm2073 = vweird.f32 %v1617
    %vm2074 = vweird.f32 %v2067
    %vm2075 = vmor %vm2073, %vm2074
    %v2076 = vsel %vm2075, %v2067, %v2072
    %v2077 = vrsqrt.pop %v1795
    %v2078 = vmul.f32 %v2077, %v1795
    %v2079 = vmul.f32 %v2078, %v2077
    %v2080 = vmul.f32 0.5, %v2079
    %v2081 = vsub.f32 1.5, %v2080
    %v2082 = vmul.f32 %v2077, %v2081
    %vm2083 = vweird.f32 %v1795
    %vm2084 = vweird.f32 %v2077
    %vm2085 = vmor %vm2083, %vm2084
    %v2086 = vsel %vm2085, %v2077, %v2082
    %v2087 = vrsqrt.pop %v1620
    %v2088 = vmul.f32 %v2087, %v1620
    %v2089 = vmul.f32 %v2088, %v2087
    %v2090 = vmul.f32 0.5, %v2089
    %v2091 = vsub.f32 1.5, %v2090
    %v2092 = vmul.f32 %v2087, %v2091
    %vm2093 = vweird.f32 %v1620
    %vm2094 = vweird.f32 %v2087
    %vm2095 = vmor %vm2093, %vm2094
    %v2096 = vsel %vm2095, %v2087, %v2092
    %v2097 = vrsqrt.pop %v1798
    %v2098 = vmul.f32 %v2097, %v1798
    %v2099 = vmul.f32 %v2098, %v2097
    %v2100 = vmul.f32 0.5, %v2099
    %v2101 = vsub.f32 1.5, %v2100
    %v2102 = vmul.f32 %v2097, %v2101
    %vm2103 = vweird.f32 %v1798
    %vm2104 = vweird.f32 %v2097
    %vm2105 = vmor %vm2103, %vm2104
    %v2106 = vsel %vm2105, %v2097, %v2102
    %v2107 = vrsqrt.pop %v1622
    %v2108 = vmul.f32 %v2107, %v1622
    %v2109 = vmul.f32 %v2108, %v2107
    %v2110 = vmul.f32 0.5, %v2109
    %v2111 = vsub.f32 1.5, %v2110
    %v2112 = vmul.f32 %v2107, %v2111
    %vm2113 = vweird.f32 %v1622
    %vm2114 = vweird.f32 %v2107
    %vm2115 = vmor %vm2113, %vm2114
    %v2116 = vsel %vm2115, %v2107, %v2112
    %v2117 = vrsqrt.pop %v1800
    %v2118 = vmul.f32 %v2117, %v1800
    %v2119 = vmul.f32 %v2118, %v2117
    %v2120 = vmul.f32 0.5, %v2119
    %v2121 = vsub.f32 1.5, %v2120
    %v2122 = vmul.f32 %v2117, %v2121
    %vm2123 = vweird.f32 %v1800
    %vm2124 = vweird.f32 %v2117
    %vm2125 = vmor %vm2123, %vm2124
    %v2126 = vsel %vm2125, %v2117, %v2122
    %v2127 = vrsqrt.pop %v1625
    %v2128 = vmul.f32 %v2127, %v1625
    %v2129 = vmul.f32 %v2128, %v2127
    %v2130 = vmul.f32 0.5, %v2129
    %v2131 = vsub.f32 1.5, %v2130
    %v2132 = vmul.f32 %v2127, %v2131
    %vm2133 = vweird.f32 %v1625
    %vm2134 = vweird.f32 %v2127
    %vm2135 = vmor %vm2133, %vm2134
    %v2136 = vsel %vm2135, %v2127, %v2132
    %v2137 = vrsqrt.pop %v1803
    %v2138 = vmul.f32 %v2137, %v1803
    %v2139 = vmul.f32 %v2138, %v2137
    %v2140 = vmul.f32 0.5, %v2139
    %v2141 = vsub.f32 1.5, %v2140
    %v2142 = vmul.f32 %v2137, %v2141
    %vm2143 = vweird.f32 %v1803
    %vm2144 = vweird.f32 %v2137
    %vm2145 = vmor %vm2143, %vm2144
    %v2146 = vsel %vm2145, %v2137, %v2142
    %v2147 = vrsqrt.pop %v1627
    %v2148 = vmul.f32 %v2147, %v1627
    %v2149 = vmul.f32 %v2148, %v2147
    %v2150 = vmul.f32 0.5, %v2149
    %v2151 = vsub.f32 1.5, %v2150
    %v2152 = vmul.f32 %v2147, %v2151
    %vm2153 = vweird.f32 %v1627
    %vm2154 = vweird.f32 %v2147
    %vm2155 = vmor %vm2153, %vm2154
    %v2156 = vsel %vm2155, %v2147, %v2152
    %v2157 = vrsqrt.pop %v1805
    %v2158 = vmul.f32 %v2157, %v1805
    %v2159 = vmul.f32 %v2158, %v2157
    %v2160 = vmul.f32 0.5, %v2159
    %v2161 = vsub.f32 1.5, %v2160
    %v2162 = vmul.f32 %v2157, %v2161
    %vm2163 = vweird.f32 %v1805
    %vm2164 = vweird.f32 %v2157
    %vm2165 = vmor %vm2163, %vm2164
    %v2166 = vsel %vm2165, %v2157, %v2162
    %v2167 = vrsqrt.pop %v1630
    %v2168 = vmul.f32 %v2167, %v1630
    %v2169 = vmul.f32 %v2168, %v2167
    %v2170 = vmul.f32 0.5, %v2169
    %v2171 = vsub.f32 1.5, %v2170
    %v2172 = vmul.f32 %v2167, %v2171
    %vm2173 = vweird.f32 %v1630
    %vm2174 = vweird.f32 %v2167
    %vm2175 = vmor %vm2173, %vm2174
    %v2176 = vsel %vm2175, %v2167, %v2172
    %v2177 = vrsqrt.pop %v1808
    %v2178 = vmul.f32 %v2177, %v1808
    %v2179 = vmul.f32 %v2178, %v2177
    %v2180 = vmul.f32 0.5, %v2179
    %v2181 = vsub.f32 1.5, %v2180
    %v2182 = vmul.f32 %v2177, %v2181
    %vm2183 = vweird.f32 %v1808
    %vm2184 = vweird.f32 %v2177
    %vm2185 = vmor %vm2183, %vm2184
    %v2186 = vsel %vm2185, %v2177, %v2182
    %v2187 = vrsqrt.pop %v1632
    %v2188 = vmul.f32 %v2187, %v1632
    %v2189 = vmul.f32 %v2188, %v2187
    %v2190 = vmul.f32 0.5, %v2189
    %v2191 = vsub.f32 1.5, %v2190
    %v2192 = vmul.f32 %v2187, %v2191
    %vm2193 = vweird.f32 %v1632
    %vm2194 = vweird.f32 %v2187
    %vm2195 = vmor %vm2193, %vm2194
    %v2196 = vsel %vm2195, %v2187, %v2192
    %v2197 = vrsqrt.pop %v1810
    %v2198 = vmul.f32 %v2197, %v1810
    %v2199 = vmul.f32 %v2198, %v2197
    %v2200 = vmul.f32 0.5, %v2199
    %v2201 = vsub.f32 1.5, %v2200
    %v2202 = vmul.f32 %v2197, %v2201
    %vm2203 = vweird.f32 %v1810
    %vm2204 = vweird.f32 %v2197
    %vm2205 = vmor %vm2203, %vm2204
    %v2206 = vsel %vm2205, %v2197, %v2202
    %v2207 = vrsqrt.pop %v1635
    %v2208 = vmul.f32 %v2207, %v1635
    %v2209 = vmul.f32 %v2208, %v2207
    %v2210 = vmul.f32 0.5, %v2209
    %v2211 = vsub.f32 1.5, %v2210
    %v2212 = vmul.f32 %v2207, %v2211
    %vm2213 = vweird.f32 %v1635
    %vm2214 = vweird.f32 %v2207
    %vm2215 = vmor %vm2213, %vm2214
    %v2216 = vsel %vm2215, %v2207, %v2212
    %v2217 = vrsqrt.pop %v1813
    %v2218 = vmul.f32 %v2217, %v1813
    %v2219 = vmul.f32 %v2218, %v2217
    %v2220 = vmul.f32 0.5, %v2219
    %v2221 = vsub.f32 1.5, %v2220
    %v2222 = vmul.f32 %v2217, %v2221
    %vm2223 = vweird.f32 %v1813
    %vm2224 = vweird.f32 %v2217
    %vm2225 = vmor %vm2223, %vm2224
    %v2226 = vsel %vm2225, %v2217, %v2222
    %v2227 = vrsqrt.pop %v1637
    %v2228 = vmul.f32 %v2227, %v1637
    %v2229 = vmul.f32 %v2228, %v2227
    %v2230 = vmul.f32 0.5, %v2229
    %v2231 = vsub.f32 1.5, %v2230
    %v2232 = vmul.f32 %v2227, %v2231
    %vm2233 = vweird.f32 %v1637
    %vm2234 = vweird.f32 %v2227
    %vm2235 = vmor %vm2233, %vm2234
    %v2236 = vsel %vm2235, %v2227, %v2232
    %v2237 = vrsqrt.pop %v1815
    %v2238 = vmul.f32 %v2237, %v1815
    %v2239 = vmul.f32 %v2238, %v2237
    %v2240 = vmul.f32 0.5, %v2239
    %v2241 = vsub.f32 1.5, %v2240
    %v2242 = vmul.f32 %v2237, %v2241
    %vm2243 = vweird.f32 %v1815
    %vm2244 = vweird.f32 %v2237
    %vm2245 = vmor %vm2243, %vm2244
    %v2246 = vsel %vm2245, %v2237, %v2242
    %v2247 = vrsqrt.pop %v1640
    %v2248 = vmul.f32 %v2247, %v1640
    %v2249 = vmul.f32 %v2248, %v2247
    %v2250 = vmul.f32 0.5, %v2249
    %v2251 = vsub.f32 1.5, %v2250
    %v2252 = vmul.f32 %v2247, %v2251
    %vm2253 = vweird.f32 %v1640
    %vm2254 = vweird.f32 %v2247
    %vm2255 = vmor %vm2253, %vm2254
    %v2256 = vsel %vm2255, %v2247, %v2252
    %v2257 = vrsqrt.pop %v1818
    %v2258 = vmul.f32 %v2257, %v1818
    %v2259 = vmul.f32 %v2258, %v2257
    %v2260 = vmul.f32 0.5, %v2259
    %v2261 = vsub.f32 1.5, %v2260
    %v2262 = vmul.f32 %v2257, %v2261
    %vm2263 = vweird.f32 %v1818
    %vm2264 = vweird.f32 %v2257
    %vm2265 = vmor %vm2263, %vm2264
    %v2266 = vsel %vm2265, %v2257, %v2262
    %v2267 = vrsqrt.pop %v1642
    %v2268 = vmul.f32 %v2267, %v1642
    %v2269 = vmul.f32 %v2268, %v2267
    %v2270 = vmul.f32 0.5, %v2269
    %v2271 = vsub.f32 1.5, %v2270
    %v2272 = vmul.f32 %v2267, %v2271
    %vm2273 = vweird.f32 %v1642
    %vm2274 = vweird.f32 %v2267
    %vm2275 = vmor %vm2273, %vm2274
    %v2276 = vsel %vm2275, %v2267, %v2272
    %v2277 = vrsqrt.pop %v1820
    %v2278 = vmul.f32 %v2277, %v1820
    %v2279 = vmul.f32 %v2278, %v2277
    %v2280 = vmul.f32 0.5, %v2279
    %v2281 = vsub.f32 1.5, %v2280
    %v2282 = vmul.f32 %v2277, %v2281
    %vm2283 = vweird.f32 %v1820
    %vm2284 = vweird.f32 %v2277
    %vm2285 = vmor %vm2283, %vm2284
    %v2286 = vsel %vm2285, %v2277, %v2282
    %v2287 = vrsqrt.pop %v1645
    %v2288 = vmul.f32 %v2287, %v1645
    %v2289 = vmul.f32 %v2288, %v2287
    %v2290 = vmul.f32 0.5, %v2289
    %v2291 = vsub.f32 1.5, %v2290
    %v2292 = vmul.f32 %v2287, %v2291
    %vm2293 = vweird.f32 %v1645
    %vm2294 = vweird.f32 %v2287
    %vm2295 = vmor %vm2293, %vm2294
    %v2296 = vsel %vm2295, %v2287, %v2292
    %v2297 = vrsqrt.pop %v1823
    %v2298 = vmul.f32 %v2297, %v1823
    %v2299 = vmul.f32 %v2298, %v2297
    %v2300 = vmul.f32 0.5, %v2299
    %v2301 = vsub.f32 1.5, %v2300
    %v2302 = vmul.f32 %v2297, %v2301
    %vm2303 = vweird.f32 %v1823
    %vm2304 = vweird.f32 %v2297
    %vm2305 = vmor %vm2303, %vm2304
    %v2306 = vsel %vm2305, %v2297, %v2302
    %v2307 = vrsqrt.pop %v1647
    %v2308 = vmul.f32 %v2307, %v1647
    %v2309 = vmul.f32 %v2308, %v2307
    %v2310 = vmul.f32 0.5, %v2309
    %v2311 = vsub.f32 1.5, %v2310
    %v2312 = vmul.f32 %v2307, %v2311
    %vm2313 = vweird.f32 %v1647
    %vm2314 = vweird.f32 %v2307
    %vm2315 = vmor %vm2313, %vm2314
    %v2316 = vsel %vm2315, %v2307, %v2312
    %v2317 = vrsqrt.pop %v1825
    %v2318 = vmul.f32 %v2317, %v1825
    %v2319 = vmul.f32 %v2318, %v2317
    %v2320 = vmul.f32 0.5, %v2319
    %v2321 = vsub.f32 1.5, %v2320
    %v2322 = vmul.f32 %v2317, %v2321
    %vm2323 = vweird.f32 %v1825
    %vm2324 = vweird.f32 %v2317
    %vm2325 = vmor %vm2323, %vm2324
    %v2326 = vsel %vm2325, %v2317, %v2322
    %v2327 = vrsqrt.pop %v1650
    %v2328 = vmul.f32 %v2327, %v1650
    %v2329 = vmul.f32 %v2328, %v2327
    %v2330 = vmul.f32 0.5, %v2329
    %v2331 = vsub.f32 1.5, %v2330
    %v2332 = vmul.f32 %v2327, %v2331
    %vm2333 = vweird.f32 %v1650
    %vm2334 = vweird.f32 %v2327
    %vm2335 = vmor %vm2333, %vm2334
    %v2336 = vsel %vm2335, %v2327, %v2332
    %v2337 = vrsqrt.pop %v1828
    %v2338 = vmul.f32 %v2337, %v1828
    %v2339 = vmul.f32 %v2338, %v2337
    %v2340 = vmul.f32 0.5, %v2339
    %v2341 = vsub.f32 1.5, %v2340
    %v2342 = vmul.f32 %v2337, %v2341
    %vm2343 = vweird.f32 %v1828
    %vm2344 = vweird.f32 %v2337
    %vm2345 = vmor %vm2343, %vm2344
    %v2346 = vsel %vm2345, %v2337, %v2342
    %v2347 = vrsqrt.pop %v1652
    %v2348 = vmul.f32 %v2347, %v1652
    %v2349 = vmul.f32 %v2348, %v2347
    %v2350 = vmul.f32 0.5, %v2349
    %v2351 = vsub.f32 1.5, %v2350
    %v2352 = vmul.f32 %v2347, %v2351
    %vm2353 = vweird.f32 %v1652
    %vm2354 = vweird.f32 %v2347
    %vm2355 = vmor %vm2353, %vm2354
    %v2356 = vsel %vm2355, %v2347, %v2352
    %v2357 = vrsqrt.pop %v1830
    %v2358 = vmul.f32 %v2357, %v1830
    %v2359 = vmul.f32 %v2358, %v2357
    %v2360 = vmul.f32 0.5, %v2359
    %v2361 = vsub.f32 1.5, %v2360
    %v2362 = vmul.f32 %v2357, %v2361
    %vm2363 = vweird.f32 %v1830
    %vm2364 = vweird.f32 %v2357
    %vm2365 = vmor %vm2363, %vm2364
    %v2366 = vsel %vm2365, %v2357, %v2362
    %v2367 = vrsqrt.pop %v1655
    %v2368 = vmul.f32 %v2367, %v1655
    %v2369 = vmul.f32 %v2368, %v2367
    %v2370 = vmul.f32 0.5, %v2369
    %v2371 = vsub.f32 1.5, %v2370
    %v2372 = vmul.f32 %v2367, %v2371
    %vm2373 = vweird.f32 %v1655
    %vm2374 = vweird.f32 %v2367
    %vm2375 = vmor %vm2373, %vm2374
    %v2376 = vsel %vm2375, %v2367, %v2372
    %v2377 = vrsqrt.pop %v1833
    %v2378 = vmul.f32 %v2377, %v1833
    %v2379 = vmul.f32 %v2378, %v2377
    %v2380 = vmul.f32 0.5, %v2379
    %v2381 = vsub.f32 1.5, %v2380
    %v2382 = vmul.f32 %v2377, %v2381
    %vm2383 = vweird.f32 %v1833
    %vm2384 = vweird.f32 %v2377
    %vm2385 = vmor %vm2383, %vm2384
    %v2386 = vsel %vm2385, %v2377, %v2382
    %v2387 = vrsqrt.pop %v1657
    %v2388 = vmul.f32 %v2387, %v1657
    %v2389 = vmul.f32 %v2388, %v2387
    %v2390 = vmul.f32 0.5, %v2389
    %v2391 = vsub.f32 1.5, %v2390
    %v2392 = vmul.f32 %v2387, %v2391
    %vm2393 = vweird.f32 %v1657
    %vm2394 = vweird.f32 %v2387
    %vm2395 = vmor %vm2393, %vm2394
    %v2396 = vsel %vm2395, %v2387, %v2392
    %v2397 = vrsqrt.pop %v1835
    %v2398 = vmul.f32 %v2397, %v1835
    %v2399 = vmul.f32 %v2398, %v2397
    %v2400 = vmul.f32 0.5, %v2399
    %v2401 = vsub.f32 1.5, %v2400
    %v2402 = vmul.f32 %v2397, %v2401
    %vm2403 = vweird.f32 %v1835
    %vm2404 = vweird.f32 %v2397
    %vm2405 = vmor %vm2403, %vm2404
    %v2406 = vsel %vm2405, %v2397, %v2402
    %v2407 = vrsqrt.pop %v1660
    %v2408 = vmul.f32 %v2407, %v1660
    %v2409 = vmul.f32 %v2408, %v2407
    %v2410 = vmul.f32 0.5, %v2409
    %v2411 = vsub.f32 1.5, %v2410
    %v2412 = vmul.f32 %v2407, %v2411
    %vm2413 = vweird.f32 %v1660
    %vm2414 = vweird.f32 %v2407
    %vm2415 = vmor %vm2413, %vm2414
    %v2416 = vsel %vm2415, %v2407, %v2412
    %v2417 = vrsqrt.pop %v1838
    %v2418 = vmul.f32 %v2417, %v1838
    %v2419 = vmul.f32 %v2418, %v2417
    %v2420 = vmul.f32 0.5, %v2419
    %v2421 = vsub.f32 1.5, %v2420
    %v2422 = vmul.f32 %v2417, %v2421
    %vm2423 = vweird.f32 %v1838
    %vm2424 = vweird.f32 %v2417
    %vm2425 = vmor %vm2423, %vm2424
    %v2426 = vsel %vm2425, %v2417, %v2422
    %v2427 = vrsqrt.pop %v1662
    %v2428 = vmul.f32 %v2427, %v1662
    %v2429 = vmul.f32 %v2428, %v2427
    %v2430 = vmul.f32 0.5, %v2429
    %v2431 = vsub.f32 1.5, %v2430
    %v2432 = vmul.f32 %v2427, %v2431
    %vm2433 = vweird.f32 %v1662
    %vm2434 = vweird.f32 %v2427
    %vm2435 = vmor %vm2433, %vm2434
    %v2436 = vsel %vm2435, %v2427, %v2432
    %v2437 = vrsqrt.pop %v1840
    %v2438 = vmul.f32 %v2437, %v1840
    %v2439 = vmul.f32 %v2438, %v2437
    %v2440 = vmul.f32 0.5, %v2439
    %v2441 = vsub.f32 1.5, %v2440
    %v2442 = vmul.f32 %v2437, %v2441
    %vm2443 = vweird.f32 %v1840
    %vm2444 = vweird.f32 %v2437
    %vm2445 = vmor %vm2443, %vm2444
    %v2446 = vsel %vm2445, %v2437, %v2442
    %v2447 = vrsqrt.pop %v1665
    %v2448 = vmul.f32 %v2447, %v1665
    %v2449 = vmul.f32 %v2448, %v2447
    %v2450 = vmul.f32 0.5, %v2449
    %v2451 = vsub.f32 1.5, %v2450
    %v2452 = vmul.f32 %v2447, %v2451
    %vm2453 = vweird.f32 %v1665
    %vm2454 = vweird.f32 %v2447
    %vm2455 = vmor %vm2453, %vm2454
    %v2456 = vsel %vm2455, %v2447, %v2452
    %v2457 = vrsqrt.pop %v1843
    %v2458 = vmul.f32 %v2457, %v1843
    %v2459 = vmul.f32 %v2458, %v2457
    %v2460 = vmul.f32 0.5, %v2459
    %v2461 = vsub.f32 1.5, %v2460
    %v2462 = vmul.f32 %v2457, %v2461
    %vm2463 = vweird.f32 %v1843
    %vm2464 = vweird.f32 %v2457
    %vm2465 = vmor %vm2463, %vm2464
    %v2466 = vsel %vm2465, %v2457, %v2462
    %v2467 = vrsqrt.pop %v1667
    %v2468 = vmul.f32 %v2467, %v1667
    %v2469 = vmul.f32 %v2468, %v2467
    %v2470 = vmul.f32 0.5, %v2469
    %v2471 = vsub.f32 1.5, %v2470
    %v2472 = vmul.f32 %v2467, %v2471
    %vm2473 = vweird.f32 %v1667
    %vm2474 = vweird.f32 %v2467
    %vm2475 = vmor %vm2473, %vm2474
    %v2476 = vsel %vm2475, %v2467, %v2472
    %v2477 = vrsqrt.pop %v1845
    %v2478 = vmul.f32 %v2477, %v1845
    %v2479 = vmul.f32 %v2478, %v2477
    %v2480 = vmul.f32 0.5, %v2479
    %v2481 = vsub.f32 1.5, %v2480
    %v2482 = vmul.f32 %v2477, %v2481
    %vm2483 = vweird.f32 %v1845
    %vm2484 = vweird.f32 %v2477
    %vm2485 = vmor %vm2483, %vm2484
    %v2486 = vsel %vm2485, %v2477, %v2482
    %v2487 = vmul.f32 %v1331, %v1856
    %v2488 = vmul.f32 %v1332, %v1866
    %v2489 = vmul.f32 %v1333, %v1876
    %v2490 = vmul.f32 %v1334, %v1886
    %v2491 = vmul.f32 %v1335, %v1896
    %v2492 = vmul.f32 %v1336, %v1906
    %v2493 = vmul.f32 %v1337, %v1916
    %v2494 = vmul.f32 %v1338, %v1926
    %v2495 = vmul.f32 %v1339, %v1936
    %v2496 = vmul.f32 %v1340, %v1946
    %v2497 = vmul.f32 %v1341, %v1956
    %v2498 = vmul.f32 %v1342, %v1966
    %v2499 = vmul.f32 %v1343, %v1976
    %v2500 = vmul.f32 %v1344, %v1986
    %v2501 = vmul.f32 %v1345, %v1996
    %v2502 = vmul.f32 %v1346, %v2006
    %v2503 = vmul.f32 %v1347, %v2016
    %v2504 = vmul.f32 %v1348, %v2026
    %v2505 = vmul.f32 %v1349, %v2036
    %v2506 = vmul.f32 %v1350, %v2046
    %v2507 = vmul.f32 %v1351, %v2056
    %v2508 = vmul.f32 %v1352, %v2066
    %v2509 = vmul.f32 %v1353, %v2076
    %v2510 = vmul.f32 %v1354, %v2086
    %v2511 = vmul.f32 %v1355, %v2096
    %v2512 = vmul.f32 %v1356, %v2106
    %v2513 = vmul.f32 %v1357, %v2116
    %v2514 = vmul.f32 %v1358, %v2126
    %v2515 = vmul.f32 %v1359, %v2136
    %v2516 = vmul.f32 %v1360, %v2146
    %v2517 = vmul.f32 %v1361, %v2156
    %v2518 = vmul.f32 %v1362, %v2166
    %v2519 = vmul.f32 %v1363, %v2176
    %v2520 = vmul.f32 %v1364, %v2186
    %v2521 = vmul.f32 %v1365, %v2196
    %v2522 = vmul.f32 %v1366, %v2206
    %v2523 = vmul.f32 %v1367, %v2216
    %v2524 = vmul.f32 %v1368, %v2226
    %v2525 = vmul.f32 %v1369, %v2236
    %v2526 = vmul.f32 %v1370, %v2246
    %v2527 = vmul.f32 %v1371, %v2256
    %v2528 = vmul.f32 %v1372, %v2266
    %v2529 = vmul.f32 %v1373, %v2276
    %v2530 = vmul.f32 %v1374, %v2286
    %v2531 = vmul.f32 %v1375, %v2296
    %v2532 = vmul.f32 %v1376, %v2306
    %v2533 = vmul.f32 %v1377, %v2316
    %v2534 = vmul.f32 %v1378, %v2326
    %v2535 = vmul.f32 %v1379, %v2336
    %v2536 = vmul.f32 %v1380, %v2346
    %v2537 = vmul.f32 %v1381, %v2356
    %v2538 = vmul.f32 %v1382, %v2366
    %v2539 = vmul.f32 %v1383, %v2376
    %v2540 = vmul.f32 %v1384, %v2386
    %v2541 = vmul.f32 %v1385, %v2396
    %v2542 = vmul.f32 %v1386, %v2406
    %v2543 = vmul.f32 %v1387, %v2416
    %v2544 = vmul.f32 %v1388, %v2426
    %v2545 = vmul.f32 %v1389, %v2436
    %v2546 = vmul.f32 %v1390, %v2446
    %v2547 = vmul.f32 %v1391, %v2456
    %v2548 = vmul.f32 %v1392, %v2466
    %v2549 = vmul.f32 %v1393, %v2476
    %v2550 = vmul.f32 %v1394, %v2486
    %v2551 = vmul.f32 %v2487, 0.2
    %v2552 = vmul.f32 %v2488, 0.2
    %v2553 = vmul.f32 %v2489, 0.2
    %v2554 = vmul.f32 %v2490, 0.2
    %v2555 = vmul.f32 %v2491, 0.2
    %v2556 = vmul.f32 %v2492, 0.2
    %v2557 = vmul.f32 %v2493, 0.2
    %v2558 = vmul.f32 %v2494, 0.2
    %v2559 = vmul.f32 %v2495, 0.2
    %v2560 = vmul.f32 %v2496, 0.2
    %v2561 = vmul.f32 %v2497, 0.2
    %v2562 = vmul.f32 %v2498, 0.2
    %v2563 = vmul.f32 %v2499, 0.2
    %v2564 = vmul.f32 %v2500, 0.2
    %v2565 = vmul.f32 %v2501, 0.2
    %v2566 = vmul.f32 %v2502, 0.2
    %v2567 = vmul.f32 %v2503, 0.2
    %v2568 = vmul.f32 %v2504, 0.2
    %v2569 = vmul.f32 %v2505, 0.2
    %v2570 = vmul.f32 %v2506, 0.2
    %v2571 = vmul.f32 %v2507, 0.2
    %v2572 = vmul.f32 %v2508, 0.2
    %v2573 = vmul.f32 %v2509, 0.2
    %v2574 = vmul.f32 %v2510, 0.2
    %v2575 = vmul.f32 %v2511, 0.2
    %v2576 = vmul.f32 %v2512, 0.2
    %v2577 = vmul.f32 %v2513, 0.2
    %v2578 = vmul.f32 %v2514, 0.2
    %v2579 = vmul.f32 %v2515, 0.2
    %v2580 = vmul.f32 %v2516, 0.2
    %v2581 = vmul.f32 %v2517, 0.2
    %v2582 = vmul.f32 %v2518, 0.2
    %v2583 = vmul.f32 %v2519, 0.2
    %v2584 = vmul.f32 %v2520, 0.2
    %v2585 = vmul.f32 %v2521, 0.2
    %v2586 = vmul.f32 %v2522, 0.2
    %v2587 = vmul.f32 %v2523, 0.2
    %v2588 = vmul.f32 %v2524, 0.2
    %v2589 = vmul.f32 %v2525, 0.2
    %v2590 = vmul.f32 %v2526, 0.2
    %v2591 = vmul.f32 %v2527, 0.2
    %v2592 = vmul.f32 %v2528, 0.2
    %v2593 = vmul.f32 %v2529, 0.2
    %v2594 = vmul.f32 %v2530, 0.2
    %v2595 = vmul.f32 %v2531, 0.2
    %v2596 = vmul.f32 %v2532, 0.2
    %v2597 = vmul.f32 %v2533, 0.2
    %v2598 = vmul.f32 %v2534, 0.2
    %v2599 = vmul.f32 %v2535, 0.2
    %v2600 = vmul.f32 %v2536, 0.2
    %v2601 = vmul.f32 %v2537, 0.2
    %v2602 = vmul.f32 %v2538, 0.2
    %v2603 = vmul.f32 %v2539, 0.2
    %v2604 = vmul.f32 %v2540, 0.2
    %v2605 = vmul.f32 %v2541, 0.2
    %v2606 = vmul.f32 %v2542, 0.2
    %v2607 = vmul.f32 %v2543, 0.2
    %v2608 = vmul.f32 %v2544, 0.2
    %v2609 = vmul.f32 %v2545, 0.2
    %v2610 = vmul.f32 %v2546, 0.2
    %v2611 = vmul.f32 %v2547, 0.2
    %v2612 = vmul.f32 %v2548, 0.2
    %v2613 = vmul.f32 %v2549, 0.2
    %v2614 = vmul.f32 %v2550, 0.2
    %v2615 = vmax.f32 %v2487, %v2551
    %v2616 = vmax.f32 %v2488, %v2552
    %v2617 = vmax.f32 %v2489, %v2553
    %v2618 = vmax.f32 %v2490, %v2554
    %v2619 = vmax.f32 %v2491, %v2555
    %v2620 = vmax.f32 %v2492, %v2556
    %v2621 = vmax.f32 %v2493, %v2557
    %v2622 = vmax.f32 %v2494, %v2558
    %v2623 = vmax.f32 %v2495, %v2559
    %v2624 = vmax.f32 %v2496, %v2560
    %v2625 = vmax.f32 %v2497, %v2561
    %v2626 = vmax.f32 %v2498, %v2562
    %v2627 = vmax.f32 %v2499, %v2563
    %v2628 = vmax.f32 %v2500, %v2564
    %v2629 = vmax.f32 %v2501, %v2565
    %v2630 = vmax.f32 %v2502, %v2566
    %v2631 = vmax.f32 %v2503, %v2567
    %v2632 = vmax.f32 %v2504, %v2568
    %v2633 = vmax.f32 %v2505, %v2569
    %v2634 = vmax.f32 %v2506, %v2570
    %v2635 = vmax.f32 %v2507, %v2571
    %v2636 = vmax.f32 %v2508, %v2572
    %v2637 = vmax.f32 %v2509, %v2573
    %v2638 = vmax.f32 %v2510, %v2574
    %v2639 = vmax.f32 %v2511, %v2575
    %v2640 = vmax.f32 %v2512, %v2576
    %v2641 = vmax.f32 %v2513, %v2577
    %v2642 = vmax.f32 %v2514, %v2578
    %v2643 = vmax.f32 %v2515, %v2579
    %v2644 = vmax.f32 %v2516, %v2580
    %v2645 = vmax.f32 %v2517, %v2581
    %v2646 = vmax.f32 %v2518, %v2582
    %v2647 = vmax.f32 %v2519, %v2583
    %v2648 = vmax.f32 %v2520, %v2584
    %v2649 = vmax.f32 %v2521, %v2585
    %v2650 = vmax.f32 %v2522, %v2586
    %v2651 = vmax.f32 %v2523, %v2587
    %v2652 = vmax.f32 %v2524, %v2588
    %v2653 = vmax.f32 %v2525, %v2589
    %v2654 = vmax.f32 %v2526, %v2590
    %v2655 = vmax.f32 %v2527, %v2591
    %v2656 = vmax.f32 %v2528, %v2592
    %v2657 = vmax.f32 %v2529, %v2593
    %v2658 = vmax.f32 %v2530, %v2594
    %v2659 = vmax.f32 %v2531, %v2595
    %v2660 = vmax.f32 %v2532, %v2596
    %v2661 = vmax.f32 %v2533, %v2597
    %v2662 = vmax.f32 %v2534, %v2598
    %v2663 = vmax.f32 %v2535, %v2599
    %v2664 = vmax.f32 %v2536, %v2600
    %v2665 = vmax.f32 %v2537, %v2601
    %v2666 = vmax.f32 %v2538, %v2602
    %v2667 = vmax.f32 %v2539, %v2603
    %v2668 = vmax.f32 %v2540, %v2604
    %v2669 = vmax.f32 %v2541, %v2605
    %v2670 = vmax.f32 %v2542, %v2606
    %v2671 = vmax.f32 %v2543, %v2607
    %v2672 = vmax.f32 %v2544, %v2608
    %v2673 = vmax.f32 %v2545, %v2609
    %v2674 = vmax.f32 %v2546, %v2610
    %v2675 = vmax.f32 %v2547, %v2611
    %v2676 = vmax.f32 %v2548, %v2612
    %v2677 = vmax.f32 %v2549, %v2613
    %v2678 = vmax.f32 %v2550, %v2614
    %v2679 = vpack.c.bf16 %v2617, %v2615
    %v2680 = vpack.c.bf16 %v2618, %v2616
    %v2681 = vpack.c.bf16 %v2621, %v2619
    %v2682 = vpack.c.bf16 %v2622, %v2620
    %v2683 = vpack.c.bf16 %v2625, %v2623
    %v2684 = vpack.c.bf16 %v2626, %v2624
    %v2685 = vpack.c.bf16 %v2629, %v2627
    %v2686 = vpack.c.bf16 %v2630, %v2628
    %v2687 = vpack.c.bf16 %v2633, %v2631
    %v2688 = vpack.c.bf16 %v2634, %v2632
    %v2689 = vpack.c.bf16 %v2637, %v2635
    %v2690 = vpack.c.bf16 %v2638, %v2636
    %v2691 = vpack.c.bf16 %v2641, %v2639
    %v2692 = vpack.c.bf16 %v2642, %v2640
    %v2693 = vpack.c.bf16 %v2645, %v2643
    %v2694 = vpack.c.bf16 %v2646, %v2644
    %v2695 = vpack.c.bf16 %v2649, %v2647
    %v2696 = vpack.c.bf16 %v2650, %v2648
    %v2697 = vpack.c.bf16 %v2653, %v2651
    %v2698 = vpack.c.bf16 %v2654, %v2652
    %v2699 = vpack.c.bf16 %v2657, %v2655
    %v2700 = vpack.c.bf16 %v2658, %v2656
    %v2701 = vpack.c.bf16 %v2661, %v2659
    %v2702 = vpack.c.bf16 %v2662, %v2660
    %v2703 = vpack.c.bf16 %v2665, %v2663
    %v2704 = vpack.c.bf16 %v2666, %v2664
    %v2705 = vpack.c.bf16 %v2669, %v2667
    %v2706 = vpack.c.bf16 %v2670, %v2668
    %v2707 = vpack.c.bf16 %v2673, %v2671
    %v2708 = vpack.c.bf16 %v2674, %v2672
    %v2709 = vpack.c.bf16 %v2677, %v2675
    %v2710 = vpack.c.bf16 %v2678, %v2676
    %v2711 = vld [vmem:[#allocation2] sm:$0xf]
    %v2712 = vld [vmem:[#allocation2 + $0x4] sm:$0xf]
    %v2713 = vld [vmem:[#allocation2 + $0x8] sm:$0xf]
    %v2714 = vld [vmem:[#allocation2 + $0xc] sm:$0xf]
    %v2715 = vld [vmem:[#allocation2 + $0x10] sm:$0xf]
    %v2716 = vld [vmem:[#allocation2 + $0x14] sm:$0xf]
    %v2717 = vld [vmem:[#allocation2 + $0x18] sm:$0xf]
    %v2718 = vld [vmem:[#allocation2 + $0x1c] sm:$0xf]
    %v2719 = vld [vmem:[#allocation2 + $0x20] sm:$0xf]
    %v2720 = vld [vmem:[#allocation2 + $0x24] sm:$0xf]
    %v2721 = vld [vmem:[#allocation2 + $0x28] sm:$0xf]
    %v2722 = vld [vmem:[#allocation2 + $0x2c] sm:$0xf]
    %v2723 = vld [vmem:[#allocation2 + $0x30] sm:$0xf]
    %v2724 = vld [vmem:[#allocation2 + $0x34] sm:$0xf]
    %v2725 = vld [vmem:[#allocation2 + $0x38] sm:$0xf]
    %v2726 = vld [vmem:[#allocation2 + $0x3c] sm:$0xf]
    %v2727 = vld [vmem:[#allocation2 + $0x40] sm:$0xf]
    %v2728 = vld [vmem:[#allocation2 + $0x44] sm:$0xf]
    %v2729 = vld [vmem:[#allocation2 + $0x48] sm:$0xf]
    %v2730 = vld [vmem:[#allocation2 + $0x4c] sm:$0xf]
    %v2731 = vld [vmem:[#allocation2 + $0x50] sm:$0xf]
    %v2732 = vld [vmem:[#allocation2 + $0x54] sm:$0xf]
    %v2733 = vld [vmem:[#allocation2 + $0x58] sm:$0xf]
    %v2734 = vld [vmem:[#allocation2 + $0x5c] sm:$0xf]
    %v2735 = vld [vmem:[#allocation2 + $0x60] sm:$0xf]
    %v2736 = vld [vmem:[#allocation2 + $0x64] sm:$0xf]
    %v2737 = vld [vmem:[#allocation2 + $0x68] sm:$0xf]
    %v2738 = vld [vmem:[#allocation2 + $0x6c] sm:$0xf]
    %v2739 = vld [vmem:[#allocation2 + $0x70] sm:$0xf]
    %v2740 = vld [vmem:[#allocation2 + $0x74] sm:$0xf]
    %v2741 = vld [vmem:[#allocation2 + $0x78] sm:$0xf]
    %v2742 = vld [vmem:[#allocation2 + $0x7c] sm:$0xf]
    %v2775 = vunpack.c.l.b16 %v2711
    %v2776 = vunpack.c.l.b16 %v2712
    %v2777 = vunpack.c.l.b16 %v2713
    %v2778 = vunpack.c.l.b16 %v2714
    %v2779 = vunpack.c.l.b16 %v2715
    %v2780 = vunpack.c.l.b16 %v2716
    %v2781 = vunpack.c.l.b16 %v2717
    %v2782 = vunpack.c.l.b16 %v2718
    %v2783 = vunpack.c.l.b16 %v2719
    %v2784 = vunpack.c.l.b16 %v2720
    %v2785 = vunpack.c.l.b16 %v2721
    %v2786 = vunpack.c.l.b16 %v2722
    %v2787 = vunpack.c.l.b16 %v2723
    %v2788 = vunpack.c.l.b16 %v2724
    %v2789 = vunpack.c.l.b16 %v2725
    %v2790 = vunpack.c.l.b16 %v2726
    %v2791 = vunpack.c.l.b16 %v2727
    %v2792 = vunpack.c.l.b16 %v2728
    %v2793 = vunpack.c.l.b16 %v2729
    %v2794 = vunpack.c.l.b16 %v2730
    %v2795 = vunpack.c.l.b16 %v2731
    %v2796 = vunpack.c.l.b16 %v2732
    %v2797 = vunpack.c.l.b16 %v2733
    %v2798 = vunpack.c.l.b16 %v2734
    %v2799 = vunpack.c.l.b16 %v2735
    %v2800 = vunpack.c.l.b16 %v2736
    %v2801 = vunpack.c.l.b16 %v2737
    %v2802 = vunpack.c.l.b16 %v2738
    %v2803 = vunpack.c.l.b16 %v2739
    %v2804 = vunpack.c.l.b16 %v2740
    %v2805 = vunpack.c.l.b16 %v2741
    %v2806 = vunpack.c.l.b16 %v2742
    %v2807 = vpack.c.b16 %v2776, %v2775
    %v2808 = vpack.c.b16 %v2778, %v2777
    %v2809 = vpack.c.b16 %v2780, %v2779
    %v2810 = vpack.c.b16 %v2782, %v2781
    %v2811 = vpack.c.b16 %v2784, %v2783
    %v2812 = vpack.c.b16 %v2786, %v2785
    %v2813 = vpack.c.b16 %v2788, %v2787
    %v2814 = vpack.c.b16 %v2790, %v2789
    %v2815 = vpack.c.b16 %v2792, %v2791
    %v2816 = vpack.c.b16 %v2794, %v2793
    %v2817 = vpack.c.b16 %v2796, %v2795
    %v2818 = vpack.c.b16 %v2798, %v2797
    %v2819 = vpack.c.b16 %v2800, %v2799
    %v2820 = vpack.c.b16 %v2802, %v2801
    %v2821 = vpack.c.b16 %v2804, %v2803
    %v2822 = vpack.c.b16 %v2806, %v2805
    %2839 = vmatpush.bf16.msra.mxu0 %v2814
    %2840 = vmatpush.bf16.msra.mxu0 %v2813
    %2841 = vmatpush.bf16.msra.mxu0 %v2812
    %2842 = vmatpush.bf16.msra.mxu0 %v2811
    %2843 = vmatpush.bf16.msra.mxu0 %v2810
    %2844 = vmatpush.bf16.msra.mxu0 %v2809
    %2845 = vmatpush.bf16.msra.mxu0 %v2808
    %2846 = vmatpush.bf16.msra.mxu0 %v2807
    %2847 = vmatmul.bf16.gmra.mxu0 %v2679
    %v2848 = vpop.f32.mrf.mxu0
    %v2849 = vadd.f32 0.0, %v2848
    %v2850 = vpop.f32.mrf.mxu0
    %v2851 = vadd.f32 0.0, %v2850
    %2852 = vmatmul.bf16.gmra.mxu0 %v2681
    %v2853 = vpop.f32.mrf.mxu0
    %v2854 = vadd.f32 0.0, %v2853
    %v2855 = vpop.f32.mrf.mxu0
    %v2856 = vadd.f32 0.0, %v2855
    %2857 = vmatmul.bf16.gmra.mxu0 %v2683
    %v2858 = vpop.f32.mrf.mxu0
    %v2859 = vadd.f32 0.0, %v2858
    %v2860 = vpop.f32.mrf.mxu0
    %v2861 = vadd.f32 0.0, %v2860
    %2862 = vmatmul.bf16.gmra.mxu0 %v2685
    %v2863 = vpop.f32.mrf.mxu0
    %v2864 = vadd.f32 0.0, %v2863
    %v2865 = vpop.f32.mrf.mxu0
    %v2866 = vadd.f32 0.0, %v2865
    %2867 = vmatmul.bf16.gmra.mxu0 %v2687
    %v2868 = vpop.f32.mrf.mxu0
    %v2869 = vadd.f32 0.0, %v2868
    %v2870 = vpop.f32.mrf.mxu0
    %v2871 = vadd.f32 0.0, %v2870
    %2872 = vmatmul.bf16.gmra.mxu0 %v2689
    %v2873 = vpop.f32.mrf.mxu0
    %v2874 = vadd.f32 0.0, %v2873
    %v2875 = vpop.f32.mrf.mxu0
    %v2876 = vadd.f32 0.0, %v2875
    %2877 = vmatmul.bf16.gmra.mxu0 %v2691
    %v2878 = vpop.f32.mrf.mxu0
    %v2879 = vadd.f32 0.0, %v2878
    %v2880 = vpop.f32.mrf.mxu0
    %v2881 = vadd.f32 0.0, %v2880
    %2882 = vmatmul.bf16.gmra.mxu0 %v2693
    %v2883 = vpop.f32.mrf.mxu0
    %v2884 = vadd.f32 0.0, %v2883
    %v2885 = vpop.f32.mrf.mxu0
    %v2886 = vadd.f32 0.0, %v2885
    %2887 = vmatmul.bf16.gmra.mxu0 %v2695
    %v2888 = vpop.f32.mrf.mxu0
    %v2889 = vadd.f32 0.0, %v2888
    %v2890 = vpop.f32.mrf.mxu0
    %v2891 = vadd.f32 0.0, %v2890
    %2892 = vmatmul.bf16.gmra.mxu0 %v2697
    %v2893 = vpop.f32.mrf.mxu0
    %v2894 = vadd.f32 0.0, %v2893
    %v2895 = vpop.f32.mrf.mxu0
    %v2896 = vadd.f32 0.0, %v2895
    %2897 = vmatmul.bf16.gmra.mxu0 %v2699
    %v2898 = vpop.f32.mrf.mxu0
    %v2899 = vadd.f32 0.0, %v2898
    %v2900 = vpop.f32.mrf.mxu0
    %v2901 = vadd.f32 0.0, %v2900
    %2902 = vmatmul.bf16.gmra.mxu0 %v2701
    %v2903 = vpop.f32.mrf.mxu0
    %v2904 = vadd.f32 0.0, %v2903
    %v2905 = vpop.f32.mrf.mxu0
    %v2906 = vadd.f32 0.0, %v2905
    %2907 = vmatmul.bf16.gmra.mxu0 %v2703
    %v2908 = vpop.f32.mrf.mxu0
    %v2909 = vadd.f32 0.0, %v2908
    %v2910 = vpop.f32.mrf.mxu0
    %v2911 = vadd.f32 0.0, %v2910
    %2912 = vmatmul.bf16.gmra.mxu0 %v2705
    %v2913 = vpop.f32.mrf.mxu0
    %v2914 = vadd.f32 0.0, %v2913
    %v2915 = vpop.f32.mrf.mxu0
    %v2916 = vadd.f32 0.0, %v2915
    %2917 = vmatmul.bf16.gmra.mxu0 %v2707
    %v2918 = vpop.f32.mrf.mxu0
    %v2919 = vadd.f32 0.0, %v2918
    %v2920 = vpop.f32.mrf.mxu0
    %v2921 = vadd.f32 0.0, %v2920
    %2922 = vmatmul.bf16.gmra.mxu0 %v2709
    %v2923 = vpop.f32.mrf.mxu0
    %v2924 = vadd.f32 0.0, %v2923
    %v2925 = vpop.f32.mrf.mxu0
    %v2926 = vadd.f32 0.0, %v2925
    %2927 = vdwg.mxu0
    %2928 = vmatpush.bf16.msra.mxu0 %v2822
    %2929 = vmatpush.bf16.msra.mxu0 %v2821
    %2930 = vmatpush.bf16.msra.mxu0 %v2820
    %2931 = vmatpush.bf16.msra.mxu0 %v2819
    %2932 = vmatpush.bf16.msra.mxu0 %v2818
    %2933 = vmatpush.bf16.msra.mxu0 %v2817
    %2934 = vmatpush.bf16.msra.mxu0 %v2816
    %2935 = vmatpush.bf16.msra.mxu0 %v2815
    %2936 = vmatmul.bf16.gmra.mxu0 %v2680
    %v2937 = vpop.f32.mrf.mxu0
    %v2938 = vadd.f32 %v2849, %v2937
    %v2939 = vpop.f32.mrf.mxu0
    %v2940 = vadd.f32 %v2851, %v2939
    %2941 = vmatmul.bf16.gmra.mxu0 %v2682
    %v2942 = vpop.f32.mrf.mxu0
    %v2943 = vadd.f32 %v2854, %v2942
    %v2944 = vpop.f32.mrf.mxu0
    %v2945 = vadd.f32 %v2856, %v2944
    %2946 = vmatmul.bf16.gmra.mxu0 %v2684
    %v2947 = vpop.f32.mrf.mxu0
    %v2948 = vadd.f32 %v2859, %v2947
    %v2949 = vpop.f32.mrf.mxu0
    %v2950 = vadd.f32 %v2861, %v2949
    %2951 = vmatmul.bf16.gmra.mxu0 %v2686
    %v2952 = vpop.f32.mrf.mxu0
    %v2953 = vadd.f32 %v2864, %v2952
    %v2954 = vpop.f32.mrf.mxu0
    %v2955 = vadd.f32 %v2866, %v2954
    %2956 = vmatmul.bf16.gmra.mxu0 %v2688
    %v2957 = vpop.f32.mrf.mxu0
    %v2958 = vadd.f32 %v2869, %v2957
    %v2959 = vpop.f32.mrf.mxu0
    %v2960 = vadd.f32 %v2871, %v2959
    %2961 = vmatmul.bf16.gmra.mxu0 %v2690
    %v2962 = vpop.f32.mrf.mxu0
    %v2963 = vadd.f32 %v2874, %v2962
    %v2964 = vpop.f32.mrf.mxu0
    %v2965 = vadd.f32 %v2876, %v2964
    %2966 = vmatmul.bf16.gmra.mxu0 %v2692
    %v2967 = vpop.f32.mrf.mxu0
    %v2968 = vadd.f32 %v2879, %v2967
    %v2969 = vpop.f32.mrf.mxu0
    %v2970 = vadd.f32 %v2881, %v2969
    %2971 = vmatmul.bf16.gmra.mxu0 %v2694
    %v2972 = vpop.f32.mrf.mxu0
    %v2973 = vadd.f32 %v2884, %v2972
    %v2974 = vpop.f32.mrf.mxu0
    %v2975 = vadd.f32 %v2886, %v2974
    %2976 = vmatmul.bf16.gmra.mxu0 %v2696
    %v2977 = vpop.f32.mrf.mxu0
    %v2978 = vadd.f32 %v2889, %v2977
    %v2979 = vpop.f32.mrf.mxu0
    %v2980 = vadd.f32 %v2891, %v2979
    %2981 = vmatmul.bf16.gmra.mxu0 %v2698
    %v2982 = vpop.f32.mrf.mxu0
    %v2983 = vadd.f32 %v2894, %v2982
    %v2984 = vpop.f32.mrf.mxu0
    %v2985 = vadd.f32 %v2896, %v2984
    %2986 = vmatmul.bf16.gmra.mxu0 %v2700
    %v2987 = vpop.f32.mrf.mxu0
    %v2988 = vadd.f32 %v2899, %v2987
    %v2989 = vpop.f32.mrf.mxu0
    %v2990 = vadd.f32 %v2901, %v2989
    %2991 = vmatmul.bf16.gmra.mxu0 %v2702
    %v2992 = vpop.f32.mrf.mxu0
    %v2993 = vadd.f32 %v2904, %v2992
    %v2994 = vpop.f32.mrf.mxu0
    %v2995 = vadd.f32 %v2906, %v2994
    %2996 = vmatmul.bf16.gmra.mxu0 %v2704
    %v2997 = vpop.f32.mrf.mxu0
    %v2998 = vadd.f32 %v2909, %v2997
    %v2999 = vpop.f32.mrf.mxu0
    %v3000 = vadd.f32 %v2911, %v2999
    %3001 = vmatmul.bf16.gmra.mxu0 %v2706
    %v3002 = vpop.f32.mrf.mxu0
    %v3003 = vadd.f32 %v2914, %v3002
    %v3004 = vpop.f32.mrf.mxu0
    %v3005 = vadd.f32 %v2916, %v3004
    %3006 = vmatmul.bf16.gmra.mxu0 %v2708
    %v3007 = vpop.f32.mrf.mxu0
    %v3008 = vadd.f32 %v2919, %v3007
    %v3009 = vpop.f32.mrf.mxu0
    %v3010 = vadd.f32 %v2921, %v3009
    %3011 = vmatmul.bf16.gmra.mxu0 %v2710
    %v3012 = vpop.f32.mrf.mxu0
    %v3013 = vadd.f32 %v2924, %v3012
    %v3014 = vpop.f32.mrf.mxu0
    %v3015 = vadd.f32 %v2926, %v3014
    %3016 = vdwg.mxu0
    %v3017 = vld [vmem:[#allocation9] sm:$0xf]
    %v3018 = vld [vmem:[#allocation9 + $0x4] sm:$0xf]
    %v3019 = vld [vmem:[#allocation9 + $0x8] sm:$0xf]
    %v3020 = vld [vmem:[#allocation9 + $0xc] sm:$0xf]
    %v3021 = vld [vmem:[#allocation9 + $0x10] sm:$0xf]
    %v3022 = vld [vmem:[#allocation9 + $0x14] sm:$0xf]
    %v3023 = vld [vmem:[#allocation9 + $0x18] sm:$0xf]
    %v3024 = vld [vmem:[#allocation9 + $0x1c] sm:$0xf]
    %v3025 = vld [vmem:[#allocation9 + $0x20] sm:$0xf]
    %v3026 = vld [vmem:[#allocation9 + $0x24] sm:$0xf]
    %v3027 = vld [vmem:[#allocation9 + $0x28] sm:$0xf]
    %v3028 = vld [vmem:[#allocation9 + $0x2c] sm:$0xf]
    %v3029 = vld [vmem:[#allocation9 + $0x30] sm:$0xf]
    %v3030 = vld [vmem:[#allocation9 + $0x34] sm:$0xf]
    %v3031 = vld [vmem:[#allocation9 + $0x38] sm:$0xf]
    %v3032 = vld [vmem:[#allocation9 + $0x3c] sm:$0xf]
    %v3033 = vpack.c.bf16 %v2940, %v2938
    %v3034 = vpack.c.bf16 %v2945, %v2943
    %v3035 = vpack.c.bf16 %v2950, %v2948
    %v3036 = vpack.c.bf16 %v2955, %v2953
    %v3037 = vpack.c.bf16 %v2960, %v2958
    %v3038 = vpack.c.bf16 %v2965, %v2963
    %v3039 = vpack.c.bf16 %v2970, %v2968
    %v3040 = vpack.c.bf16 %v2975, %v2973
    %v3041 = vpack.c.bf16 %v2980, %v2978
    %v3042 = vpack.c.bf16 %v2985, %v2983
    %v3043 = vpack.c.bf16 %v2990, %v2988
    %v3044 = vpack.c.bf16 %v2995, %v2993
    %v3045 = vpack.c.bf16 %v3000, %v2998
    %v3046 = vpack.c.bf16 %v3005, %v3003
    %v3047 = vpack.c.bf16 %v3010, %v3008
    %v3048 = vpack.c.bf16 %v3015, %v3013
    %v3065 = vunpack.c.l.b16 %v3017
    %v3066 = vunpack.c.l.b16 %v3018
    %v3067 = vunpack.c.l.b16 %v3019
    %v3068 = vunpack.c.l.b16 %v3020
    %v3069 = vunpack.c.l.b16 %v3021
    %v3070 = vunpack.c.l.b16 %v3022
    %v3071 = vunpack.c.l.b16 %v3023
    %v3072 = vunpack.c.l.b16 %v3024
    %v3073 = vunpack.c.l.b16 %v3025
    %v3074 = vunpack.c.l.b16 %v3026
    %v3075 = vunpack.c.l.b16 %v3027
    %v3076 = vunpack.c.l.b16 %v3028
    %v3077 = vunpack.c.l.b16 %v3029
    %v3078 = vunpack.c.l.b16 %v3030
    %v3079 = vunpack.c.l.b16 %v3031
    %v3080 = vunpack.c.l.b16 %v3032
    %v3081 = vpack.c.b16 %v3066, %v3065
    %v3082 = vpack.c.b16 %v3068, %v3067
    %v3083 = vpack.c.b16 %v3070, %v3069
    %v3084 = vpack.c.b16 %v3072, %v3071
    %v3085 = vpack.c.b16 %v3074, %v3073
    %v3086 = vpack.c.b16 %v3076, %v3075
    %v3087 = vpack.c.b16 %v3078, %v3077
    %v3088 = vpack.c.b16 %v3080, %v3079
    %3097 = vmatpush.bf16.msra.mxu0 %v3088
    %3098 = vmatpush.bf16.msra.mxu0 %v3087
    %3099 = vmatpush.bf16.msra.mxu0 %v3086
    %3100 = vmatpush.bf16.msra.mxu0 %v3085
    %3101 = vmatpush.bf16.msra.mxu0 %v3084
    %3102 = vmatpush.bf16.msra.mxu0 %v3083
    %3103 = vmatpush.bf16.msra.mxu0 %v3082
    %3104 = vmatpush.bf16.msra.mxu0 %v3081
    %3105 = vmatmul.bf16.gmra.mxu0 %v3033
    %v3106 = vpop.f32.mrf.mxu0
    %v3107 = vadd.f32 0.0, %v3106
    %v3108 = vpop.f32.mrf.mxu0
    %v3109 = vadd.f32 0.0, %v3108
    %3110 = vmatmul.bf16.gmra.mxu0 %v3034
    %v3111 = vpop.f32.mrf.mxu0
    %v3112 = vadd.f32 0.0, %v3111
    %v3113 = vpop.f32.mrf.mxu0
    %v3114 = vadd.f32 0.0, %v3113
    %3115 = vmatmul.bf16.gmra.mxu0 %v3035
    %v3116 = vpop.f32.mrf.mxu0
    %v3117 = vadd.f32 0.0, %v3116
    %v3118 = vpop.f32.mrf.mxu0
    %v3119 = vadd.f32 0.0, %v3118
    %3120 = vmatmul.bf16.gmra.mxu0 %v3036
    %v3121 = vpop.f32.mrf.mxu0
    %v3122 = vadd.f32 0.0, %v3121
    %v3123 = vpop.f32.mrf.mxu0
    %v3124 = vadd.f32 0.0, %v3123
    %3125 = vmatmul.bf16.gmra.mxu0 %v3037
    %v3126 = vpop.f32.mrf.mxu0
    %v3127 = vadd.f32 0.0, %v3126
    %v3128 = vpop.f32.mrf.mxu0
    %v3129 = vadd.f32 0.0, %v3128
    %3130 = vmatmul.bf16.gmra.mxu0 %v3038
    %v3131 = vpop.f32.mrf.mxu0
    %v3132 = vadd.f32 0.0, %v3131
    %v3133 = vpop.f32.mrf.mxu0
    %v3134 = vadd.f32 0.0, %v3133
    %3135 = vmatmul.bf16.gmra.mxu0 %v3039
    %v3136 = vpop.f32.mrf.mxu0
    %v3137 = vadd.f32 0.0, %v3136
    %v3138 = vpop.f32.mrf.mxu0
    %v3139 = vadd.f32 0.0, %v3138
    %3140 = vmatmul.bf16.gmra.mxu0 %v3040
    %v3141 = vpop.f32.mrf.mxu0
    %v3142 = vadd.f32 0.0, %v3141
    %v3143 = vpop.f32.mrf.mxu0
    %v3144 = vadd.f32 0.0, %v3143
    %3145 = vmatmul.bf16.gmra.mxu0 %v3041
    %v3146 = vpop.f32.mrf.mxu0
    %v3147 = vadd.f32 0.0, %v3146
    %v3148 = vpop.f32.mrf.mxu0
    %v3149 = vadd.f32 0.0, %v3148
    %3150 = vmatmul.bf16.gmra.mxu0 %v3042
    %v3151 = vpop.f32.mrf.mxu0
    %v3152 = vadd.f32 0.0, %v3151
    %v3153 = vpop.f32.mrf.mxu0
    %v3154 = vadd.f32 0.0, %v3153
    %3155 = vmatmul.bf16.gmra.mxu0 %v3043
    %v3156 = vpop.f32.mrf.mxu0
    %v3157 = vadd.f32 0.0, %v3156
    %v3158 = vpop.f32.mrf.mxu0
    %v3159 = vadd.f32 0.0, %v3158
    %3160 = vmatmul.bf16.gmra.mxu0 %v3044
    %v3161 = vpop.f32.mrf.mxu0
    %v3162 = vadd.f32 0.0, %v3161
    %v3163 = vpop.f32.mrf.mxu0
    %v3164 = vadd.f32 0.0, %v3163
    %3165 = vmatmul.bf16.gmra.mxu0 %v3045
    %v3166 = vpop.f32.mrf.mxu0
    %v3167 = vadd.f32 0.0, %v3166
    %v3168 = vpop.f32.mrf.mxu0
    %v3169 = vadd.f32 0.0, %v3168
    %3170 = vmatmul.bf16.gmra.mxu0 %v3046
    %v3171 = vpop.f32.mrf.mxu0
    %v3172 = vadd.f32 0.0, %v3171
    %v3173 = vpop.f32.mrf.mxu0
    %v3174 = vadd.f32 0.0, %v3173
    %3175 = vmatmul.bf16.gmra.mxu0 %v3047
    %v3176 = vpop.f32.mrf.mxu0
    %v3177 = vadd.f32 0.0, %v3176
    %v3178 = vpop.f32.mrf.mxu0
    %v3179 = vadd.f32 0.0, %v3178
    %3180 = vmatmul.bf16.gmra.mxu0 %v3048
    %v3181 = vpop.f32.mrf.mxu0
    %v3182 = vadd.f32 0.0, %v3181
    %v3183 = vpop.f32.mrf.mxu0
    %v3184 = vadd.f32 0.0, %v3183
    %3185 = vdwg.mxu0
    %v3186 = vsub.f32 %v2938, %v3107
    %v3187 = vsub.f32 %v2940, %v3109
    %v3188 = vsub.f32 %v2943, %v3112
    %v3189 = vsub.f32 %v2945, %v3114
    %v3190 = vsub.f32 %v2948, %v3117
    %v3191 = vsub.f32 %v2950, %v3119
    %v3192 = vsub.f32 %v2953, %v3122
    %v3193 = vsub.f32 %v2955, %v3124
    %v3194 = vsub.f32 %v2958, %v3127
    %v3195 = vsub.f32 %v2960, %v3129
    %v3196 = vsub.f32 %v2963, %v3132
    %v3197 = vsub.f32 %v2965, %v3134
    %v3198 = vsub.f32 %v2968, %v3137
    %v3199 = vsub.f32 %v2970, %v3139
    %v3200 = vsub.f32 %v2973, %v3142
    %v3201 = vsub.f32 %v2975, %v3144
    %v3202 = vsub.f32 %v2978, %v3147
    %v3203 = vsub.f32 %v2980, %v3149
    %v3204 = vsub.f32 %v2983, %v3152
    %v3205 = vsub.f32 %v2985, %v3154
    %v3206 = vsub.f32 %v2988, %v3157
    %v3207 = vsub.f32 %v2990, %v3159
    %v3208 = vsub.f32 %v2993, %v3162
    %v3209 = vsub.f32 %v2995, %v3164
    %v3210 = vsub.f32 %v2998, %v3167
    %v3211 = vsub.f32 %v3000, %v3169
    %v3212 = vsub.f32 %v3003, %v3172
    %v3213 = vsub.f32 %v3005, %v3174
    %v3214 = vsub.f32 %v3008, %v3177
    %v3215 = vsub.f32 %v3010, %v3179
    %v3216 = vsub.f32 %v3013, %v3182
    %v3217 = vsub.f32 %v3015, %v3184
    %v3218 = vmul.f32 %v3186, %v3186
    %v3219 = vmul.f32 %v3187, %v3187
    %v3220 = vmul.f32 %v3188, %v3188
    %v3221 = vmul.f32 %v3189, %v3189
    %v3222 = vmul.f32 %v3190, %v3190
    %v3223 = vmul.f32 %v3191, %v3191
    %v3224 = vmul.f32 %v3192, %v3192
    %v3225 = vmul.f32 %v3193, %v3193
    %v3226 = vmul.f32 %v3194, %v3194
    %v3227 = vmul.f32 %v3195, %v3195
    %v3228 = vmul.f32 %v3196, %v3196
    %v3229 = vmul.f32 %v3197, %v3197
    %v3230 = vmul.f32 %v3198, %v3198
    %v3231 = vmul.f32 %v3199, %v3199
    %v3232 = vmul.f32 %v3200, %v3200
    %v3233 = vmul.f32 %v3201, %v3201
    %v3234 = vmul.f32 %v3202, %v3202
    %v3235 = vmul.f32 %v3203, %v3203
    %v3236 = vmul.f32 %v3204, %v3204
    %v3237 = vmul.f32 %v3205, %v3205
    %v3238 = vmul.f32 %v3206, %v3206
    %v3239 = vmul.f32 %v3207, %v3207
    %v3240 = vmul.f32 %v3208, %v3208
    %v3241 = vmul.f32 %v3209, %v3209
    %v3242 = vmul.f32 %v3210, %v3210
    %v3243 = vmul.f32 %v3211, %v3211
    %v3244 = vmul.f32 %v3212, %v3212
    %v3245 = vmul.f32 %v3213, %v3213
    %v3246 = vmul.f32 %v3214, %v3214
    %v3247 = vmul.f32 %v3215, %v3215
    %v3248 = vmul.f32 %v3216, %v3216
    %v3249 = vmul.f32 %v3217, %v3217
    %v3250 = vpack.c.bf16 %v3219, %v3218
    %v3251 = vpack.c.bf16 %v3221, %v3220
    %v3252 = vpack.c.bf16 %v3223, %v3222
    %v3253 = vpack.c.bf16 %v3225, %v3224
    %v3254 = vpack.c.bf16 %v3227, %v3226
    %v3255 = vpack.c.bf16 %v3229, %v3228
    %v3256 = vpack.c.bf16 %v3231, %v3230
    %v3257 = vpack.c.bf16 %v3233, %v3232
    %v3258 = vpack.c.bf16 %v3235, %v3234
    %v3259 = vpack.c.bf16 %v3237, %v3236
    %v3260 = vpack.c.bf16 %v3239, %v3238
    %v3261 = vpack.c.bf16 %v3241, %v3240
    %v3262 = vpack.c.bf16 %v3243, %v3242
    %v3263 = vpack.c.bf16 %v3245, %v3244
    %v3264 = vpack.c.bf16 %v3247, %v3246
    %v3265 = vpack.c.bf16 %v3249, %v3248
    %3266 = vmatpush.bf16.msra.mxu0 %v3088
    %3267 = vmatpush.bf16.msra.mxu0 %v3087
    %3268 = vmatpush.bf16.msra.mxu0 %v3086
    %3269 = vmatpush.bf16.msra.mxu0 %v3085
    %3270 = vmatpush.bf16.msra.mxu0 %v3084
    %3271 = vmatpush.bf16.msra.mxu0 %v3083
    %3272 = vmatpush.bf16.msra.mxu0 %v3082
    %3273 = vmatpush.bf16.msra.mxu0 %v3081
    %3274 = vmatmul.bf16.gmra.mxu0 %v3250
    %v3275 = vpop.f32.mrf.mxu0
    %v3276 = vadd.f32 1e-05, %v3275
    %v3277 = vpop.f32.mrf.mxu0
    %v3278 = vadd.f32 1e-05, %v3277
    %3279 = vmatmul.bf16.gmra.mxu0 %v3251
    %v3280 = vpop.f32.mrf.mxu0
    %v3281 = vadd.f32 1e-05, %v3280
    %v3282 = vpop.f32.mrf.mxu0
    %v3283 = vadd.f32 1e-05, %v3282
    %3284 = vmatmul.bf16.gmra.mxu0 %v3252
    %v3285 = vpop.f32.mrf.mxu0
    %v3286 = vadd.f32 1e-05, %v3285
    %v3287 = vpop.f32.mrf.mxu0
    %v3288 = vadd.f32 1e-05, %v3287
    %3289 = vmatmul.bf16.gmra.mxu0 %v3253
    %v3290 = vpop.f32.mrf.mxu0
    %v3291 = vadd.f32 1e-05, %v3290
    %v3292 = vpop.f32.mrf.mxu0
    %v3293 = vadd.f32 1e-05, %v3292
    %3294 = vmatmul.bf16.gmra.mxu0 %v3254
    %v3295 = vpop.f32.mrf.mxu0
    %v3296 = vadd.f32 1e-05, %v3295
    %v3297 = vpop.f32.mrf.mxu0
    %v3298 = vadd.f32 1e-05, %v3297
    %3299 = vmatmul.bf16.gmra.mxu0 %v3255
    %v3300 = vpop.f32.mrf.mxu0
    %v3301 = vadd.f32 1e-05, %v3300
    %v3302 = vpop.f32.mrf.mxu0
    %v3303 = vadd.f32 1e-05, %v3302
    %3304 = vmatmul.bf16.gmra.mxu0 %v3256
    %v3305 = vpop.f32.mrf.mxu0
    %v3306 = vadd.f32 1e-05, %v3305
    %v3307 = vpop.f32.mrf.mxu0
    %v3308 = vadd.f32 1e-05, %v3307
    %3309 = vmatmul.bf16.gmra.mxu0 %v3257
    %v3310 = vpop.f32.mrf.mxu0
    %v3311 = vadd.f32 1e-05, %v3310
    %v3312 = vpop.f32.mrf.mxu0
    %v3313 = vadd.f32 1e-05, %v3312
    %3314 = vmatmul.bf16.gmra.mxu0 %v3258
    %v3315 = vpop.f32.mrf.mxu0
    %v3316 = vadd.f32 1e-05, %v3315
    %v3317 = vpop.f32.mrf.mxu0
    %v3318 = vadd.f32 1e-05, %v3317
    %3319 = vmatmul.bf16.gmra.mxu0 %v3259
    %v3320 = vpop.f32.mrf.mxu0
    %v3321 = vadd.f32 1e-05, %v3320
    %v3322 = vpop.f32.mrf.mxu0
    %v3323 = vadd.f32 1e-05, %v3322
    %3324 = vmatmul.bf16.gmra.mxu0 %v3260
    %v3325 = vpop.f32.mrf.mxu0
    %v3326 = vadd.f32 1e-05, %v3325
    %v3327 = vpop.f32.mrf.mxu0
    %v3328 = vadd.f32 1e-05, %v3327
    %3329 = vmatmul.bf16.gmra.mxu0 %v3261
    %v3330 = vpop.f32.mrf.mxu0
    %v3331 = vadd.f32 1e-05, %v3330
    %v3332 = vpop.f32.mrf.mxu0
    %v3333 = vadd.f32 1e-05, %v3332
    %3334 = vmatmul.bf16.gmra.mxu0 %v3262
    %v3335 = vpop.f32.mrf.mxu0
    %v3336 = vadd.f32 1e-05, %v3335
    %v3337 = vpop.f32.mrf.mxu0
    %v3338 = vadd.f32 1e-05, %v3337
    %3339 = vmatmul.bf16.gmra.mxu0 %v3263
    %v3340 = vpop.f32.mrf.mxu0
    %v3341 = vadd.f32 1e-05, %v3340
    %v3342 = vpop.f32.mrf.mxu0
    %v3343 = vadd.f32 1e-05, %v3342
    %3344 = vmatmul.bf16.gmra.mxu0 %v3264
    %v3345 = vpop.f32.mrf.mxu0
    %v3346 = vadd.f32 1e-05, %v3345
    %v3347 = vpop.f32.mrf.mxu0
    %v3348 = vadd.f32 1e-05, %v3347
    %3349 = vmatmul.bf16.gmra.mxu0 %v3265
    %v3350 = vpop.f32.mrf.mxu0
    %v3351 = vadd.f32 1e-05, %v3350
    %v3352 = vpop.f32.mrf.mxu0
    %v3353 = vadd.f32 1e-05, %v3352
    %3354 = vdwg.mxu0
    %v3355 = vrsqrt.pop %v3276
    %v3356 = vmul.f32 %v3355, %v3276
    %v3357 = vmul.f32 %v3356, %v3355
    %v3358 = vmul.f32 0.5, %v3357
    %v3359 = vsub.f32 1.5, %v3358
    %v3360 = vmul.f32 %v3355, %v3359
    %vm3361 = vweird.f32 %v3276
    %vm3362 = vweird.f32 %v3355
    %vm3363 = vmor %vm3361, %vm3362
    %v3364 = vsel %vm3363, %v3355, %v3360
    %v3365 = vrsqrt.pop %v3278
    %v3366 = vmul.f32 %v3365, %v3278
    %v3367 = vmul.f32 %v3366, %v3365
    %v3368 = vmul.f32 0.5, %v3367
    %v3369 = vsub.f32 1.5, %v3368
    %v3370 = vmul.f32 %v3365, %v3369
    %vm3371 = vweird.f32 %v3278
    %vm3372 = vweird.f32 %v3365
    %vm3373 = vmor %vm3371, %vm3372
    %v3374 = vsel %vm3373, %v3365, %v3370
    %v3375 = vrsqrt.pop %v3281
    %v3376 = vmul.f32 %v3375, %v3281
    %v3377 = vmul.f32 %v3376, %v3375
    %v3378 = vmul.f32 0.5, %v3377
    %v3379 = vsub.f32 1.5, %v3378
    %v3380 = vmul.f32 %v3375, %v3379
    %vm3381 = vweird.f32 %v3281
    %vm3382 = vweird.f32 %v3375
    %vm3383 = vmor %vm3381, %vm3382
    %v3384 = vsel %vm3383, %v3375, %v3380
    %v3385 = vrsqrt.pop %v3283
    %v3386 = vmul.f32 %v3385, %v3283
    %v3387 = vmul.f32 %v3386, %v3385
    %v3388 = vmul.f32 0.5, %v3387
    %v3389 = vsub.f32 1.5, %v3388
    %v3390 = vmul.f32 %v3385, %v3389
    %vm3391 = vweird.f32 %v3283
    %vm3392 = vweird.f32 %v3385
    %vm3393 = vmor %vm3391, %vm3392
    %v3394 = vsel %vm3393, %v3385, %v3390
    %v3395 = vrsqrt.pop %v3286
    %v3396 = vmul.f32 %v3395, %v3286
    %v3397 = vmul.f32 %v3396, %v3395
    %v3398 = vmul.f32 0.5, %v3397
    %v3399 = vsub.f32 1.5, %v3398
    %v3400 = vmul.f32 %v3395, %v3399
    %vm3401 = vweird.f32 %v3286
    %vm3402 = vweird.f32 %v3395
    %vm3403 = vmor %vm3401, %vm3402
    %v3404 = vsel %vm3403, %v3395, %v3400
    %v3405 = vrsqrt.pop %v3288
    %v3406 = vmul.f32 %v3405, %v3288
    %v3407 = vmul.f32 %v3406, %v3405
    %v3408 = vmul.f32 0.5, %v3407
    %v3409 = vsub.f32 1.5, %v3408
    %v3410 = vmul.f32 %v3405, %v3409
    %vm3411 = vweird.f32 %v3288
    %vm3412 = vweird.f32 %v3405
    %vm3413 = vmor %vm3411, %vm3412
    %v3414 = vsel %vm3413, %v3405, %v3410
    %v3415 = vrsqrt.pop %v3291
    %v3416 = vmul.f32 %v3415, %v3291
    %v3417 = vmul.f32 %v3416, %v3415
    %v3418 = vmul.f32 0.5, %v3417
    %v3419 = vsub.f32 1.5, %v3418
    %v3420 = vmul.f32 %v3415, %v3419
    %vm3421 = vweird.f32 %v3291
    %vm3422 = vweird.f32 %v3415
    %vm3423 = vmor %vm3421, %vm3422
    %v3424 = vsel %vm3423, %v3415, %v3420
    %v3425 = vrsqrt.pop %v3293
    %v3426 = vmul.f32 %v3425, %v3293
    %v3427 = vmul.f32 %v3426, %v3425
    %v3428 = vmul.f32 0.5, %v3427
    %v3429 = vsub.f32 1.5, %v3428
    %v3430 = vmul.f32 %v3425, %v3429
    %vm3431 = vweird.f32 %v3293
    %vm3432 = vweird.f32 %v3425
    %vm3433 = vmor %vm3431, %vm3432
    %v3434 = vsel %vm3433, %v3425, %v3430
    %v3435 = vrsqrt.pop %v3296
    %v3436 = vmul.f32 %v3435, %v3296
    %v3437 = vmul.f32 %v3436, %v3435
    %v3438 = vmul.f32 0.5, %v3437
    %v3439 = vsub.f32 1.5, %v3438
    %v3440 = vmul.f32 %v3435, %v3439
    %vm3441 = vweird.f32 %v3296
    %vm3442 = vweird.f32 %v3435
    %vm3443 = vmor %vm3441, %vm3442
    %v3444 = vsel %vm3443, %v3435, %v3440
    %v3445 = vrsqrt.pop %v3298
    %v3446 = vmul.f32 %v3445, %v3298
    %v3447 = vmul.f32 %v3446, %v3445
    %v3448 = vmul.f32 0.5, %v3447
    %v3449 = vsub.f32 1.5, %v3448
    %v3450 = vmul.f32 %v3445, %v3449
    %vm3451 = vweird.f32 %v3298
    %vm3452 = vweird.f32 %v3445
    %vm3453 = vmor %vm3451, %vm3452
    %v3454 = vsel %vm3453, %v3445, %v3450
    %v3455 = vrsqrt.pop %v3301
    %v3456 = vmul.f32 %v3455, %v3301
    %v3457 = vmul.f32 %v3456, %v3455
    %v3458 = vmul.f32 0.5, %v3457
    %v3459 = vsub.f32 1.5, %v3458
    %v3460 = vmul.f32 %v3455, %v3459
    %vm3461 = vweird.f32 %v3301
    %vm3462 = vweird.f32 %v3455
    %vm3463 = vmor %vm3461, %vm3462
    %v3464 = vsel %vm3463, %v3455, %v3460
    %v3465 = vrsqrt.pop %v3303
    %v3466 = vmul.f32 %v3465, %v3303
    %v3467 = vmul.f32 %v3466, %v3465
    %v3468 = vmul.f32 0.5, %v3467
    %v3469 = vsub.f32 1.5, %v3468
    %v3470 = vmul.f32 %v3465, %v3469
    %vm3471 = vweird.f32 %v3303
    %vm3472 = vweird.f32 %v3465
    %vm3473 = vmor %vm3471, %vm3472
    %v3474 = vsel %vm3473, %v3465, %v3470
    %v3475 = vrsqrt.pop %v3306
    %v3476 = vmul.f32 %v3475, %v3306
    %v3477 = vmul.f32 %v3476, %v3475
    %v3478 = vmul.f32 0.5, %v3477
    %v3479 = vsub.f32 1.5, %v3478
    %v3480 = vmul.f32 %v3475, %v3479
    %vm3481 = vweird.f32 %v3306
    %vm3482 = vweird.f32 %v3475
    %vm3483 = vmor %vm3481, %vm3482
    %v3484 = vsel %vm3483, %v3475, %v3480
    %v3485 = vrsqrt.pop %v3308
    %v3486 = vmul.f32 %v3485, %v3308
    %v3487 = vmul.f32 %v3486, %v3485
    %v3488 = vmul.f32 0.5, %v3487
    %v3489 = vsub.f32 1.5, %v3488
    %v3490 = vmul.f32 %v3485, %v3489
    %vm3491 = vweird.f32 %v3308
    %vm3492 = vweird.f32 %v3485
    %vm3493 = vmor %vm3491, %vm3492
    %v3494 = vsel %vm3493, %v3485, %v3490
    %v3495 = vrsqrt.pop %v3311
    %v3496 = vmul.f32 %v3495, %v3311
    %v3497 = vmul.f32 %v3496, %v3495
    %v3498 = vmul.f32 0.5, %v3497
    %v3499 = vsub.f32 1.5, %v3498
    %v3500 = vmul.f32 %v3495, %v3499
    %vm3501 = vweird.f32 %v3311
    %vm3502 = vweird.f32 %v3495
    %vm3503 = vmor %vm3501, %vm3502
    %v3504 = vsel %vm3503, %v3495, %v3500
    %v3505 = vrsqrt.pop %v3313
    %v3506 = vmul.f32 %v3505, %v3313
    %v3507 = vmul.f32 %v3506, %v3505
    %v3508 = vmul.f32 0.5, %v3507
    %v3509 = vsub.f32 1.5, %v3508
    %v3510 = vmul.f32 %v3505, %v3509
    %vm3511 = vweird.f32 %v3313
    %vm3512 = vweird.f32 %v3505
    %vm3513 = vmor %vm3511, %vm3512
    %v3514 = vsel %vm3513, %v3505, %v3510
    %v3515 = vrsqrt.pop %v3316
    %v3516 = vmul.f32 %v3515, %v3316
    %v3517 = vmul.f32 %v3516, %v3515
    %v3518 = vmul.f32 0.5, %v3517
    %v3519 = vsub.f32 1.5, %v3518
    %v3520 = vmul.f32 %v3515, %v3519
    %vm3521 = vweird.f32 %v3316
    %vm3522 = vweird.f32 %v3515
    %vm3523 = vmor %vm3521, %vm3522
    %v3524 = vsel %vm3523, %v3515, %v3520
    %v3525 = vrsqrt.pop %v3318
    %v3526 = vmul.f32 %v3525, %v3318
    %v3527 = vmul.f32 %v3526, %v3525
    %v3528 = vmul.f32 0.5, %v3527
    %v3529 = vsub.f32 1.5, %v3528
    %v3530 = vmul.f32 %v3525, %v3529
    %vm3531 = vweird.f32 %v3318
    %vm3532 = vweird.f32 %v3525
    %vm3533 = vmor %vm3531, %vm3532
    %v3534 = vsel %vm3533, %v3525, %v3530
    %v3535 = vrsqrt.pop %v3321
    %v3536 = vmul.f32 %v3535, %v3321
    %v3537 = vmul.f32 %v3536, %v3535
    %v3538 = vmul.f32 0.5, %v3537
    %v3539 = vsub.f32 1.5, %v3538
    %v3540 = vmul.f32 %v3535, %v3539
    %vm3541 = vweird.f32 %v3321
    %vm3542 = vweird.f32 %v3535
    %vm3543 = vmor %vm3541, %vm3542
    %v3544 = vsel %vm3543, %v3535, %v3540
    %v3545 = vrsqrt.pop %v3323
    %v3546 = vmul.f32 %v3545, %v3323
    %v3547 = vmul.f32 %v3546, %v3545
    %v3548 = vmul.f32 0.5, %v3547
    %v3549 = vsub.f32 1.5, %v3548
    %v3550 = vmul.f32 %v3545, %v3549
    %vm3551 = vweird.f32 %v3323
    %vm3552 = vweird.f32 %v3545
    %vm3553 = vmor %vm3551, %vm3552
    %v3554 = vsel %vm3553, %v3545, %v3550
    %v3555 = vrsqrt.pop %v3326
    %v3556 = vmul.f32 %v3555, %v3326
    %v3557 = vmul.f32 %v3556, %v3555
    %v3558 = vmul.f32 0.5, %v3557
    %v3559 = vsub.f32 1.5, %v3558
    %v3560 = vmul.f32 %v3555, %v3559
    %vm3561 = vweird.f32 %v3326
    %vm3562 = vweird.f32 %v3555
    %vm3563 = vmor %vm3561, %vm3562
    %v3564 = vsel %vm3563, %v3555, %v3560
    %v3565 = vrsqrt.pop %v3328
    %v3566 = vmul.f32 %v3565, %v3328
    %v3567 = vmul.f32 %v3566, %v3565
    %v3568 = vmul.f32 0.5, %v3567
    %v3569 = vsub.f32 1.5, %v3568
    %v3570 = vmul.f32 %v3565, %v3569
    %vm3571 = vweird.f32 %v3328
    %vm3572 = vweird.f32 %v3565
    %vm3573 = vmor %vm3571, %vm3572
    %v3574 = vsel %vm3573, %v3565, %v3570
    %v3575 = vrsqrt.pop %v3331
    %v3576 = vmul.f32 %v3575, %v3331
    %v3577 = vmul.f32 %v3576, %v3575
    %v3578 = vmul.f32 0.5, %v3577
    %v3579 = vsub.f32 1.5, %v3578
    %v3580 = vmul.f32 %v3575, %v3579
    %vm3581 = vweird.f32 %v3331
    %vm3582 = vweird.f32 %v3575
    %vm3583 = vmor %vm3581, %vm3582
    %v3584 = vsel %vm3583, %v3575, %v3580
    %v3585 = vrsqrt.pop %v3333
    %v3586 = vmul.f32 %v3585, %v3333
    %v3587 = vmul.f32 %v3586, %v3585
    %v3588 = vmul.f32 0.5, %v3587
    %v3589 = vsub.f32 1.5, %v3588
    %v3590 = vmul.f32 %v3585, %v3589
    %vm3591 = vweird.f32 %v3333
    %vm3592 = vweird.f32 %v3585
    %vm3593 = vmor %vm3591, %vm3592
    %v3594 = vsel %vm3593, %v3585, %v3590
    %v3595 = vrsqrt.pop %v3336
    %v3596 = vmul.f32 %v3595, %v3336
    %v3597 = vmul.f32 %v3596, %v3595
    %v3598 = vmul.f32 0.5, %v3597
    %v3599 = vsub.f32 1.5, %v3598
    %v3600 = vmul.f32 %v3595, %v3599
    %vm3601 = vweird.f32 %v3336
    %vm3602 = vweird.f32 %v3595
    %vm3603 = vmor %vm3601, %vm3602
    %v3604 = vsel %vm3603, %v3595, %v3600
    %v3605 = vrsqrt.pop %v3338
    %v3606 = vmul.f32 %v3605, %v3338
    %v3607 = vmul.f32 %v3606, %v3605
    %v3608 = vmul.f32 0.5, %v3607
    %v3609 = vsub.f32 1.5, %v3608
    %v3610 = vmul.f32 %v3605, %v3609
    %vm3611 = vweird.f32 %v3338
    %vm3612 = vweird.f32 %v3605
    %vm3613 = vmor %vm3611, %vm3612
    %v3614 = vsel %vm3613, %v3605, %v3610
    %v3615 = vrsqrt.pop %v3341
    %v3616 = vmul.f32 %v3615, %v3341
    %v3617 = vmul.f32 %v3616, %v3615
    %v3618 = vmul.f32 0.5, %v3617
    %v3619 = vsub.f32 1.5, %v3618
    %v3620 = vmul.f32 %v3615, %v3619
    %vm3621 = vweird.f32 %v3341
    %vm3622 = vweird.f32 %v3615
    %vm3623 = vmor %vm3621, %vm3622
    %v3624 = vsel %vm3623, %v3615, %v3620
    %v3625 = vrsqrt.pop %v3343
    %v3626 = vmul.f32 %v3625, %v3343
    %v3627 = vmul.f32 %v3626, %v3625
    %v3628 = vmul.f32 0.5, %v3627
    %v3629 = vsub.f32 1.5, %v3628
    %v3630 = vmul.f32 %v3625, %v3629
    %vm3631 = vweird.f32 %v3343
    %vm3632 = vweird.f32 %v3625
    %vm3633 = vmor %vm3631, %vm3632
    %v3634 = vsel %vm3633, %v3625, %v3630
    %v3635 = vrsqrt.pop %v3346
    %v3636 = vmul.f32 %v3635, %v3346
    %v3637 = vmul.f32 %v3636, %v3635
    %v3638 = vmul.f32 0.5, %v3637
    %v3639 = vsub.f32 1.5, %v3638
    %v3640 = vmul.f32 %v3635, %v3639
    %vm3641 = vweird.f32 %v3346
    %vm3642 = vweird.f32 %v3635
    %vm3643 = vmor %vm3641, %vm3642
    %v3644 = vsel %vm3643, %v3635, %v3640
    %v3645 = vrsqrt.pop %v3348
    %v3646 = vmul.f32 %v3645, %v3348
    %v3647 = vmul.f32 %v3646, %v3645
    %v3648 = vmul.f32 0.5, %v3647
    %v3649 = vsub.f32 1.5, %v3648
    %v3650 = vmul.f32 %v3645, %v3649
    %vm3651 = vweird.f32 %v3348
    %vm3652 = vweird.f32 %v3645
    %vm3653 = vmor %vm3651, %vm3652
    %v3654 = vsel %vm3653, %v3645, %v3650
    %v3655 = vrsqrt.pop %v3351
    %v3656 = vmul.f32 %v3655, %v3351
    %v3657 = vmul.f32 %v3656, %v3655
    %v3658 = vmul.f32 0.5, %v3657
    %v3659 = vsub.f32 1.5, %v3658
    %v3660 = vmul.f32 %v3655, %v3659
    %vm3661 = vweird.f32 %v3351
    %vm3662 = vweird.f32 %v3655
    %vm3663 = vmor %vm3661, %vm3662
    %v3664 = vsel %vm3663, %v3655, %v3660
    %v3665 = vrsqrt.pop %v3353
    %v3666 = vmul.f32 %v3665, %v3353
    %v3667 = vmul.f32 %v3666, %v3665
    %v3668 = vmul.f32 0.5, %v3667
    %v3669 = vsub.f32 1.5, %v3668
    %v3670 = vmul.f32 %v3665, %v3669
    %vm3671 = vweird.f32 %v3353
    %vm3672 = vweird.f32 %v3665
    %vm3673 = vmor %vm3671, %vm3672
    %v3674 = vsel %vm3673, %v3665, %v3670
    %v3675 = vmul.f32 %v3186, %v3364
    %v3676 = vmul.f32 %v3187, %v3374
    %v3677 = vmul.f32 %v3188, %v3384
    %v3678 = vmul.f32 %v3189, %v3394
    %v3679 = vmul.f32 %v3190, %v3404
    %v3680 = vmul.f32 %v3191, %v3414
    %v3681 = vmul.f32 %v3192, %v3424
    %v3682 = vmul.f32 %v3193, %v3434
    %v3683 = vmul.f32 %v3194, %v3444
    %v3684 = vmul.f32 %v3195, %v3454
    %v3685 = vmul.f32 %v3196, %v3464
    %v3686 = vmul.f32 %v3197, %v3474
    %v3687 = vmul.f32 %v3198, %v3484
    %v3688 = vmul.f32 %v3199, %v3494
    %v3689 = vmul.f32 %v3200, %v3504
    %v3690 = vmul.f32 %v3201, %v3514
    %v3691 = vmul.f32 %v3202, %v3524
    %v3692 = vmul.f32 %v3203, %v3534
    %v3693 = vmul.f32 %v3204, %v3544
    %v3694 = vmul.f32 %v3205, %v3554
    %v3695 = vmul.f32 %v3206, %v3564
    %v3696 = vmul.f32 %v3207, %v3574
    %v3697 = vmul.f32 %v3208, %v3584
    %v3698 = vmul.f32 %v3209, %v3594
    %v3699 = vmul.f32 %v3210, %v3604
    %v3700 = vmul.f32 %v3211, %v3614
    %v3701 = vmul.f32 %v3212, %v3624
    %v3702 = vmul.f32 %v3213, %v3634
    %v3703 = vmul.f32 %v3214, %v3644
    %v3704 = vmul.f32 %v3215, %v3654
    %v3705 = vmul.f32 %v3216, %v3664
    %v3706 = vmul.f32 %v3217, %v3674
    %v3707 = vmul.f32 %v3675, 0.2
    %v3708 = vmul.f32 %v3676, 0.2
    %v3709 = vmul.f32 %v3677, 0.2
    %v3710 = vmul.f32 %v3678, 0.2
    %v3711 = vmul.f32 %v3679, 0.2
    %v3712 = vmul.f32 %v3680, 0.2
    %v3713 = vmul.f32 %v3681, 0.2
    %v3714 = vmul.f32 %v3682, 0.2
    %v3715 = vmul.f32 %v3683, 0.2
    %v3716 = vmul.f32 %v3684, 0.2
    %v3717 = vmul.f32 %v3685, 0.2
    %v3718 = vmul.f32 %v3686, 0.2
    %v3719 = vmul.f32 %v3687, 0.2
    %v3720 = vmul.f32 %v3688, 0.2
    %v3721 = vmul.f32 %v3689, 0.2
    %v3722 = vmul.f32 %v3690, 0.2
    %v3723 = vmul.f32 %v3691, 0.2
    %v3724 = vmul.f32 %v3692, 0.2
    %v3725 = vmul.f32 %v3693, 0.2
    %v3726 = vmul.f32 %v3694, 0.2
    %v3727 = vmul.f32 %v3695, 0.2
    %v3728 = vmul.f32 %v3696, 0.2
    %v3729 = vmul.f32 %v3697, 0.2
    %v3730 = vmul.f32 %v3698, 0.2
    %v3731 = vmul.f32 %v3699, 0.2
    %v3732 = vmul.f32 %v3700, 0.2
    %v3733 = vmul.f32 %v3701, 0.2
    %v3734 = vmul.f32 %v3702, 0.2
    %v3735 = vmul.f32 %v3703, 0.2
    %v3736 = vmul.f32 %v3704, 0.2
    %v3737 = vmul.f32 %v3705, 0.2
    %v3738 = vmul.f32 %v3706, 0.2
    %v3739 = vmax.f32 %v3675, %v3707
    %v3740 = vmax.f32 %v3676, %v3708
    %v3741 = vmax.f32 %v3677, %v3709
    %v3742 = vmax.f32 %v3678, %v3710
    %v3743 = vmax.f32 %v3679, %v3711
    %v3744 = vmax.f32 %v3680, %v3712
    %v3745 = vmax.f32 %v3681, %v3713
    %v3746 = vmax.f32 %v3682, %v3714
    %v3747 = vmax.f32 %v3683, %v3715
    %v3748 = vmax.f32 %v3684, %v3716
    %v3749 = vmax.f32 %v3685, %v3717
    %v3750 = vmax.f32 %v3686, %v3718
    %v3751 = vmax.f32 %v3687, %v3719
    %v3752 = vmax.f32 %v3688, %v3720
    %v3753 = vmax.f32 %v3689, %v3721
    %v3754 = vmax.f32 %v3690, %v3722
    %v3755 = vmax.f32 %v3691, %v3723
    %v3756 = vmax.f32 %v3692, %v3724
    %v3757 = vmax.f32 %v3693, %v3725
    %v3758 = vmax.f32 %v3694, %v3726
    %v3759 = vmax.f32 %v3695, %v3727
    %v3760 = vmax.f32 %v3696, %v3728
    %v3761 = vmax.f32 %v3697, %v3729
    %v3762 = vmax.f32 %v3698, %v3730
    %v3763 = vmax.f32 %v3699, %v3731
    %v3764 = vmax.f32 %v3700, %v3732
    %v3765 = vmax.f32 %v3701, %v3733
    %v3766 = vmax.f32 %v3702, %v3734
    %v3767 = vmax.f32 %v3703, %v3735
    %v3768 = vmax.f32 %v3704, %v3736
    %v3769 = vmax.f32 %v3705, %v3737
    %v3770 = vmax.f32 %v3706, %v3738
    %v3771 = vpack.c.bf16 %v3740, %v3739
    %v3772 = vpack.c.bf16 %v3742, %v3741
    %v3773 = vpack.c.bf16 %v3744, %v3743
    %v3774 = vpack.c.bf16 %v3746, %v3745
    %v3775 = vpack.c.bf16 %v3748, %v3747
    %v3776 = vpack.c.bf16 %v3750, %v3749
    %v3777 = vpack.c.bf16 %v3752, %v3751
    %v3778 = vpack.c.bf16 %v3754, %v3753
    %v3779 = vpack.c.bf16 %v3756, %v3755
    %v3780 = vpack.c.bf16 %v3758, %v3757
    %v3781 = vpack.c.bf16 %v3760, %v3759
    %v3782 = vpack.c.bf16 %v3762, %v3761
    %v3783 = vpack.c.bf16 %v3764, %v3763
    %v3784 = vpack.c.bf16 %v3766, %v3765
    %v3785 = vpack.c.bf16 %v3768, %v3767
    %v3786 = vpack.c.bf16 %v3770, %v3769
    %v3787 = vld [vmem:[#allocation4] sm:$0xf]
    %v3788 = vld [vmem:[#allocation4 + $0x4] sm:$0xf]
    %v3789 = vld [vmem:[#allocation4 + $0x8] sm:$0xf]
    %v3790 = vld [vmem:[#allocation4 + $0xc] sm:$0xf]
    %v3791 = vld [vmem:[#allocation4 + $0x10] sm:$0xf]
    %v3792 = vld [vmem:[#allocation4 + $0x14] sm:$0xf]
    %v3793 = vld [vmem:[#allocation4 + $0x18] sm:$0xf]
    %v3794 = vld [vmem:[#allocation4 + $0x1c] sm:$0xf]
    %v3795 = vld [vmem:[#allocation4 + $0x20] sm:$0xf]
    %v3796 = vld [vmem:[#allocation4 + $0x24] sm:$0xf]
    %v3797 = vld [vmem:[#allocation4 + $0x28] sm:$0xf]
    %v3798 = vld [vmem:[#allocation4 + $0x2c] sm:$0xf]
    %v3799 = vld [vmem:[#allocation4 + $0x30] sm:$0xf]
    %v3800 = vld [vmem:[#allocation4 + $0x34] sm:$0xf]
    %v3801 = vld [vmem:[#allocation4 + $0x38] sm:$0xf]
    %v3802 = vld [vmem:[#allocation4 + $0x3c] sm:$0xf]
    %v3819 = vunpack.c.l.b16 %v3787
    %v3820 = vunpack.c.l.b16 %v3788
    %v3821 = vunpack.c.l.b16 %v3789
    %v3822 = vunpack.c.l.b16 %v3790
    %v3823 = vunpack.c.l.b16 %v3791
    %v3824 = vunpack.c.l.b16 %v3792
    %v3825 = vunpack.c.l.b16 %v3793
    %v3826 = vunpack.c.l.b16 %v3794
    %v3827 = vunpack.c.l.b16 %v3795
    %v3828 = vunpack.c.l.b16 %v3796
    %v3829 = vunpack.c.l.b16 %v3797
    %v3830 = vunpack.c.l.b16 %v3798
    %v3831 = vunpack.c.l.b16 %v3799
    %v3832 = vunpack.c.l.b16 %v3800
    %v3833 = vunpack.c.l.b16 %v3801
    %v3834 = vunpack.c.l.b16 %v3802
    %v3835 = vpack.c.b16 %v3820, %v3819
    %v3836 = vpack.c.b16 %v3822, %v3821
    %v3837 = vpack.c.b16 %v3824, %v3823
    %v3838 = vpack.c.b16 %v3826, %v3825
    %v3839 = vpack.c.b16 %v3828, %v3827
    %v3840 = vpack.c.b16 %v3830, %v3829
    %v3841 = vpack.c.b16 %v3832, %v3831
    %v3842 = vpack.c.b16 %v3834, %v3833
    %3851 = vmatpush.bf16.msra.mxu0 %v3842
    %3852 = vmatpush.bf16.msra.mxu0 %v3841
    %3853 = vmatpush.bf16.msra.mxu0 %v3840
    %3854 = vmatpush.bf16.msra.mxu0 %v3839
    %3855 = vmatpush.bf16.msra.mxu0 %v3838
    %3856 = vmatpush.bf16.msra.mxu0 %v3837
    %3857 = vmatpush.bf16.msra.mxu0 %v3836
    %3858 = vmatpush.bf16.msra.mxu0 %v3835
    %3859 = vmatmul.bf16.gmra.mxu0 %v3771
    %v3860 = vpop.f32.mrf.mxu0
    %v3861 = vadd.f32 0.0, %v3860
    %v3862 = vpop.f32.mrf.mxu0
    %v3863 = vadd.f32 0.0, %v3862
    %3864 = vmatmul.bf16.gmra.mxu0 %v3772
    %v3865 = vpop.f32.mrf.mxu0
    %v3866 = vadd.f32 0.0, %v3865
    %v3867 = vpop.f32.mrf.mxu0
    %v3868 = vadd.f32 0.0, %v3867
    %3869 = vmatmul.bf16.gmra.mxu0 %v3773
    %v3870 = vpop.f32.mrf.mxu0
    %v3871 = vadd.f32 0.0, %v3870
    %v3872 = vpop.f32.mrf.mxu0
    %v3873 = vadd.f32 0.0, %v3872
    %3874 = vmatmul.bf16.gmra.mxu0 %v3774
    %v3875 = vpop.f32.mrf.mxu0
    %v3876 = vadd.f32 0.0, %v3875
    %v3877 = vpop.f32.mrf.mxu0
    %v3878 = vadd.f32 0.0, %v3877
    %3879 = vmatmul.bf16.gmra.mxu0 %v3775
    %v3880 = vpop.f32.mrf.mxu0
    %v3881 = vadd.f32 0.0, %v3880
    %v3882 = vpop.f32.mrf.mxu0
    %v3883 = vadd.f32 0.0, %v3882
    %3884 = vmatmul.bf16.gmra.mxu0 %v3776
    %v3885 = vpop.f32.mrf.mxu0
    %v3886 = vadd.f32 0.0, %v3885
    %v3887 = vpop.f32.mrf.mxu0
    %v3888 = vadd.f32 0.0, %v3887
    %3889 = vmatmul.bf16.gmra.mxu0 %v3777
    %v3890 = vpop.f32.mrf.mxu0
    %v3891 = vadd.f32 0.0, %v3890
    %v3892 = vpop.f32.mrf.mxu0
    %v3893 = vadd.f32 0.0, %v3892
    %3894 = vmatmul.bf16.gmra.mxu0 %v3778
    %v3895 = vpop.f32.mrf.mxu0
    %v3896 = vadd.f32 0.0, %v3895
    %v3897 = vpop.f32.mrf.mxu0
    %v3898 = vadd.f32 0.0, %v3897
    %3899 = vmatmul.bf16.gmra.mxu0 %v3779
    %v3900 = vpop.f32.mrf.mxu0
    %v3901 = vadd.f32 0.0, %v3900
    %v3902 = vpop.f32.mrf.mxu0
    %v3903 = vadd.f32 0.0, %v3902
    %3904 = vmatmul.bf16.gmra.mxu0 %v3780
    %v3905 = vpop.f32.mrf.mxu0
    %v3906 = vadd.f32 0.0, %v3905
    %v3907 = vpop.f32.mrf.mxu0
    %v3908 = vadd.f32 0.0, %v3907
    %3909 = vmatmul.bf16.gmra.mxu0 %v3781
    %v3910 = vpop.f32.mrf.mxu0
    %v3911 = vadd.f32 0.0, %v3910
    %v3912 = vpop.f32.mrf.mxu0
    %v3913 = vadd.f32 0.0, %v3912
    %3914 = vmatmul.bf16.gmra.mxu0 %v3782
    %v3915 = vpop.f32.mrf.mxu0
    %v3916 = vadd.f32 0.0, %v3915
    %v3917 = vpop.f32.mrf.mxu0
    %v3918 = vadd.f32 0.0, %v3917
    %3919 = vmatmul.bf16.gmra.mxu0 %v3783
    %v3920 = vpop.f32.mrf.mxu0
    %v3921 = vadd.f32 0.0, %v3920
    %v3922 = vpop.f32.mrf.mxu0
    %v3923 = vadd.f32 0.0, %v3922
    %3924 = vmatmul.bf16.gmra.mxu0 %v3784
    %v3925 = vpop.f32.mrf.mxu0
    %v3926 = vadd.f32 0.0, %v3925
    %v3927 = vpop.f32.mrf.mxu0
    %v3928 = vadd.f32 0.0, %v3927
    %3929 = vmatmul.bf16.gmra.mxu0 %v3785
    %v3930 = vpop.f32.mrf.mxu0
    %v3931 = vadd.f32 0.0, %v3930
    %v3932 = vpop.f32.mrf.mxu0
    %v3933 = vadd.f32 0.0, %v3932
    %3934 = vmatmul.bf16.gmra.mxu0 %v3786
    %v3935 = vpop.f32.mrf.mxu0
    %v3936 = vadd.f32 0.0, %v3935
    %v3937 = vpop.f32.mrf.mxu0
    %v3938 = vadd.f32 0.0, %v3937
    %3939 = vdwg.mxu0
    %v3940 = vpack.c.bf16 %v3863, %v3861
    %v3941 = vpack.c.bf16 %v3868, %v3866
    %v3942 = vpack.c.bf16 %v3873, %v3871
    %v3943 = vpack.c.bf16 %v3878, %v3876
    %v3944 = vpack.c.bf16 %v3883, %v3881
    %v3945 = vpack.c.bf16 %v3888, %v3886
    %v3946 = vpack.c.bf16 %v3893, %v3891
    %v3947 = vpack.c.bf16 %v3898, %v3896
    %v3948 = vpack.c.bf16 %v3903, %v3901
    %v3949 = vpack.c.bf16 %v3908, %v3906
    %v3950 = vpack.c.bf16 %v3913, %v3911
    %v3951 = vpack.c.bf16 %v3918, %v3916
    %v3952 = vpack.c.bf16 %v3923, %v3921
    %v3953 = vpack.c.bf16 %v3928, %v3926
    %v3954 = vpack.c.bf16 %v3933, %v3931
    %v3955 = vpack.c.bf16 %v3938, %v3936
    %3956 = vmatpush.bf16.msra.mxu0 %v3088
    %3957 = vmatpush.bf16.msra.mxu0 %v3087
    %3958 = vmatpush.bf16.msra.mxu0 %v3086
    %3959 = vmatpush.bf16.msra.mxu0 %v3085
    %3960 = vmatpush.bf16.msra.mxu0 %v3084
    %3961 = vmatpush.bf16.msra.mxu0 %v3083
    %3962 = vmatpush.bf16.msra.mxu0 %v3082
    %3963 = vmatpush.bf16.msra.mxu0 %v3081
    %3964 = vmatmul.bf16.gmra.mxu0 %v3940
    %v3965 = vpop.f32.mrf.mxu0
    %v3966 = vadd.f32 0.0, %v3965
    %v3967 = vpop.f32.mrf.mxu0
    %v3968 = vadd.f32 0.0, %v3967
    %3969 = vmatmul.bf16.gmra.mxu0 %v3941
    %v3970 = vpop.f32.mrf.mxu0
    %v3971 = vadd.f32 0.0, %v3970
    %v3972 = vpop.f32.mrf.mxu0
    %v3973 = vadd.f32 0.0, %v3972
    %3974 = vmatmul.bf16.gmra.mxu0 %v3942
    %v3975 = vpop.f32.mrf.mxu0
    %v3976 = vadd.f32 0.0, %v3975
    %v3977 = vpop.f32.mrf.mxu0
    %v3978 = vadd.f32 0.0, %v3977
    %3979 = vmatmul.bf16.gmra.mxu0 %v3943
    %v3980 = vpop.f32.mrf.mxu0
    %v3981 = vadd.f32 0.0, %v3980
    %v3982 = vpop.f32.mrf.mxu0
    %v3983 = vadd.f32 0.0, %v3982
    %3984 = vmatmul.bf16.gmra.mxu0 %v3944
    %v3985 = vpop.f32.mrf.mxu0
    %v3986 = vadd.f32 0.0, %v3985
    %v3987 = vpop.f32.mrf.mxu0
    %v3988 = vadd.f32 0.0, %v3987
    %3989 = vmatmul.bf16.gmra.mxu0 %v3945
    %v3990 = vpop.f32.mrf.mxu0
    %v3991 = vadd.f32 0.0, %v3990
    %v3992 = vpop.f32.mrf.mxu0
    %v3993 = vadd.f32 0.0, %v3992
    %3994 = vmatmul.bf16.gmra.mxu0 %v3946
    %v3995 = vpop.f32.mrf.mxu0
    %v3996 = vadd.f32 0.0, %v3995
    %v3997 = vpop.f32.mrf.mxu0
    %v3998 = vadd.f32 0.0, %v3997
    %3999 = vmatmul.bf16.gmra.mxu0 %v3947
    %v4000 = vpop.f32.mrf.mxu0
    %v4001 = vadd.f32 0.0, %v4000
    %v4002 = vpop.f32.mrf.mxu0
    %v4003 = vadd.f32 0.0, %v4002
    %4004 = vmatmul.bf16.gmra.mxu0 %v3948
    %v4005 = vpop.f32.mrf.mxu0
    %v4006 = vadd.f32 0.0, %v4005
    %v4007 = vpop.f32.mrf.mxu0
    %v4008 = vadd.f32 0.0, %v4007
    %4009 = vmatmul.bf16.gmra.mxu0 %v3949
    %v4010 = vpop.f32.mrf.mxu0
    %v4011 = vadd.f32 0.0, %v4010
    %v4012 = vpop.f32.mrf.mxu0
    %v4013 = vadd.f32 0.0, %v4012
    %4014 = vmatmul.bf16.gmra.mxu0 %v3950
    %v4015 = vpop.f32.mrf.mxu0
    %v4016 = vadd.f32 0.0, %v4015
    %v4017 = vpop.f32.mrf.mxu0
    %v4018 = vadd.f32 0.0, %v4017
    %4019 = vmatmul.bf16.gmra.mxu0 %v3951
    %v4020 = vpop.f32.mrf.mxu0
    %v4021 = vadd.f32 0.0, %v4020
    %v4022 = vpop.f32.mrf.mxu0
    %v4023 = vadd.f32 0.0, %v4022
    %4024 = vmatmul.bf16.gmra.mxu0 %v3952
    %v4025 = vpop.f32.mrf.mxu0
    %v4026 = vadd.f32 0.0, %v4025
    %v4027 = vpop.f32.mrf.mxu0
    %v4028 = vadd.f32 0.0, %v4027
    %4029 = vmatmul.bf16.gmra.mxu0 %v3953
    %v4030 = vpop.f32.mrf.mxu0
    %v4031 = vadd.f32 0.0, %v4030
    %v4032 = vpop.f32.mrf.mxu0
    %v4033 = vadd.f32 0.0, %v4032
    %4034 = vmatmul.bf16.gmra.mxu0 %v3954
    %v4035 = vpop.f32.mrf.mxu0
    %v4036 = vadd.f32 0.0, %v4035
    %v4037 = vpop.f32.mrf.mxu0
    %v4038 = vadd.f32 0.0, %v4037
    %4039 = vmatmul.bf16.gmra.mxu0 %v3955
    %v4040 = vpop.f32.mrf.mxu0
    %v4041 = vadd.f32 0.0, %v4040
    %v4042 = vpop.f32.mrf.mxu0
    %v4043 = vadd.f32 0.0, %v4042
    %4044 = vdwg.mxu0
    %v4045 = vsub.f32 %v3861, %v3966
    %v4046 = vsub.f32 %v3863, %v3968
    %v4047 = vsub.f32 %v3866, %v3971
    %v4048 = vsub.f32 %v3868, %v3973
    %v4049 = vsub.f32 %v3871, %v3976
    %v4050 = vsub.f32 %v3873, %v3978
    %v4051 = vsub.f32 %v3876, %v3981
    %v4052 = vsub.f32 %v3878, %v3983
    %v4053 = vsub.f32 %v3881, %v3986
    %v4054 = vsub.f32 %v3883, %v3988
    %v4055 = vsub.f32 %v3886, %v3991
    %v4056 = vsub.f32 %v3888, %v3993
    %v4057 = vsub.f32 %v3891, %v3996
    %v4058 = vsub.f32 %v3893, %v3998
    %v4059 = vsub.f32 %v3896, %v4001
    %v4060 = vsub.f32 %v3898, %v4003
    %v4061 = vsub.f32 %v3901, %v4006
    %v4062 = vsub.f32 %v3903, %v4008
    %v4063 = vsub.f32 %v3906, %v4011
    %v4064 = vsub.f32 %v3908, %v4013
    %v4065 = vsub.f32 %v3911, %v4016
    %v4066 = vsub.f32 %v3913, %v4018
    %v4067 = vsub.f32 %v3916, %v4021
    %v4068 = vsub.f32 %v3918, %v4023
    %v4069 = vsub.f32 %v3921, %v4026
    %v4070 = vsub.f32 %v3923, %v4028
    %v4071 = vsub.f32 %v3926, %v4031
    %v4072 = vsub.f32 %v3928, %v4033
    %v4073 = vsub.f32 %v3931, %v4036
    %v4074 = vsub.f32 %v3933, %v4038
    %v4075 = vsub.f32 %v3936, %v4041
    %v4076 = vsub.f32 %v3938, %v4043
    %v4077 = vmul.f32 %v4045, %v4045
    %v4078 = vmul.f32 %v4046, %v4046
    %v4079 = vmul.f32 %v4047, %v4047
    %v4080 = vmul.f32 %v4048, %v4048
    %v4081 = vmul.f32 %v4049, %v4049
    %v4082 = vmul.f32 %v4050, %v4050
    %v4083 = vmul.f32 %v4051, %v4051
    %v4084 = vmul.f32 %v4052, %v4052
    %v4085 = vmul.f32 %v4053, %v4053
    %v4086 = vmul.f32 %v4054, %v4054
    %v4087 = vmul.f32 %v4055, %v4055
    %v4088 = vmul.f32 %v4056, %v4056
    %v4089 = vmul.f32 %v4057, %v4057
    %v4090 = vmul.f32 %v4058, %v4058
    %v4091 = vmul.f32 %v4059, %v4059
    %v4092 = vmul.f32 %v4060, %v4060
    %v4093 = vmul.f32 %v4061, %v4061
    %v4094 = vmul.f32 %v4062, %v4062
    %v4095 = vmul.f32 %v4063, %v4063
    %v4096 = vmul.f32 %v4064, %v4064
    %v4097 = vmul.f32 %v4065, %v4065
    %v4098 = vmul.f32 %v4066, %v4066
    %v4099 = vmul.f32 %v4067, %v4067
    %v4100 = vmul.f32 %v4068, %v4068
    %v4101 = vmul.f32 %v4069, %v4069
    %v4102 = vmul.f32 %v4070, %v4070
    %v4103 = vmul.f32 %v4071, %v4071
    %v4104 = vmul.f32 %v4072, %v4072
    %v4105 = vmul.f32 %v4073, %v4073
    %v4106 = vmul.f32 %v4074, %v4074
    %v4107 = vmul.f32 %v4075, %v4075
    %v4108 = vmul.f32 %v4076, %v4076
    %v4109 = vpack.c.bf16 %v4078, %v4077
    %v4110 = vpack.c.bf16 %v4080, %v4079
    %v4111 = vpack.c.bf16 %v4082, %v4081
    %v4112 = vpack.c.bf16 %v4084, %v4083
    %v4113 = vpack.c.bf16 %v4086, %v4085
    %v4114 = vpack.c.bf16 %v4088, %v4087
    %v4115 = vpack.c.bf16 %v4090, %v4089
    %v4116 = vpack.c.bf16 %v4092, %v4091
    %v4117 = vpack.c.bf16 %v4094, %v4093
    %v4118 = vpack.c.bf16 %v4096, %v4095
    %v4119 = vpack.c.bf16 %v4098, %v4097
    %v4120 = vpack.c.bf16 %v4100, %v4099
    %v4121 = vpack.c.bf16 %v4102, %v4101
    %v4122 = vpack.c.bf16 %v4104, %v4103
    %v4123 = vpack.c.bf16 %v4106, %v4105
    %v4124 = vpack.c.bf16 %v4108, %v4107
    %4125 = vmatpush.bf16.msra.mxu0 %v3088
    %4126 = vmatpush.bf16.msra.mxu0 %v3087
    %4127 = vmatpush.bf16.msra.mxu0 %v3086
    %4128 = vmatpush.bf16.msra.mxu0 %v3085
    %4129 = vmatpush.bf16.msra.mxu0 %v3084
    %4130 = vmatpush.bf16.msra.mxu0 %v3083
    %4131 = vmatpush.bf16.msra.mxu0 %v3082
    %4132 = vmatpush.bf16.msra.mxu0 %v3081
    %4133 = vmatmul.bf16.gmra.mxu0 %v4109
    %v4134 = vpop.f32.mrf.mxu0
    %v4135 = vadd.f32 1e-05, %v4134
    %v4136 = vpop.f32.mrf.mxu0
    %v4137 = vadd.f32 1e-05, %v4136
    %4138 = vmatmul.bf16.gmra.mxu0 %v4110
    %v4139 = vpop.f32.mrf.mxu0
    %v4140 = vadd.f32 1e-05, %v4139
    %v4141 = vpop.f32.mrf.mxu0
    %v4142 = vadd.f32 1e-05, %v4141
    %4143 = vmatmul.bf16.gmra.mxu0 %v4111
    %v4144 = vpop.f32.mrf.mxu0
    %v4145 = vadd.f32 1e-05, %v4144
    %v4146 = vpop.f32.mrf.mxu0
    %v4147 = vadd.f32 1e-05, %v4146
    %4148 = vmatmul.bf16.gmra.mxu0 %v4112
    %v4149 = vpop.f32.mrf.mxu0
    %v4150 = vadd.f32 1e-05, %v4149
    %v4151 = vpop.f32.mrf.mxu0
    %v4152 = vadd.f32 1e-05, %v4151
    %4153 = vmatmul.bf16.gmra.mxu0 %v4113
    %v4154 = vpop.f32.mrf.mxu0
    %v4155 = vadd.f32 1e-05, %v4154
    %v4156 = vpop.f32.mrf.mxu0
    %v4157 = vadd.f32 1e-05, %v4156
    %4158 = vmatmul.bf16.gmra.mxu0 %v4114
    %v4159 = vpop.f32.mrf.mxu0
    %v4160 = vadd.f32 1e-05, %v4159
    %v4161 = vpop.f32.mrf.mxu0
    %v4162 = vadd.f32 1e-05, %v4161
    %4163 = vmatmul.bf16.gmra.mxu0 %v4115
    %v4164 = vpop.f32.mrf.mxu0
    %v4165 = vadd.f32 1e-05, %v4164
    %v4166 = vpop.f32.mrf.mxu0
    %v4167 = vadd.f32 1e-05, %v4166
    %4168 = vmatmul.bf16.gmra.mxu0 %v4116
    %v4169 = vpop.f32.mrf.mxu0
    %v4170 = vadd.f32 1e-05, %v4169
    %v4171 = vpop.f32.mrf.mxu0
    %v4172 = vadd.f32 1e-05, %v4171
    %4173 = vmatmul.bf16.gmra.mxu0 %v4117
    %v4174 = vpop.f32.mrf.mxu0
    %v4175 = vadd.f32 1e-05, %v4174
    %v4176 = vpop.f32.mrf.mxu0
    %v4177 = vadd.f32 1e-05, %v4176
    %4178 = vmatmul.bf16.gmra.mxu0 %v4118
    %v4179 = vpop.f32.mrf.mxu0
    %v4180 = vadd.f32 1e-05, %v4179
    %v4181 = vpop.f32.mrf.mxu0
    %v4182 = vadd.f32 1e-05, %v4181
    %4183 = vmatmul.bf16.gmra.mxu0 %v4119
    %v4184 = vpop.f32.mrf.mxu0
    %v4185 = vadd.f32 1e-05, %v4184
    %v4186 = vpop.f32.mrf.mxu0
    %v4187 = vadd.f32 1e-05, %v4186
    %4188 = vmatmul.bf16.gmra.mxu0 %v4120
    %v4189 = vpop.f32.mrf.mxu0
    %v4190 = vadd.f32 1e-05, %v4189
    %v4191 = vpop.f32.mrf.mxu0
    %v4192 = vadd.f32 1e-05, %v4191
    %4193 = vmatmul.bf16.gmra.mxu0 %v4121
    %v4194 = vpop.f32.mrf.mxu0
    %v4195 = vadd.f32 1e-05, %v4194
    %v4196 = vpop.f32.mrf.mxu0
    %v4197 = vadd.f32 1e-05, %v4196
    %4198 = vmatmul.bf16.gmra.mxu0 %v4122
    %v4199 = vpop.f32.mrf.mxu0
    %v4200 = vadd.f32 1e-05, %v4199
    %v4201 = vpop.f32.mrf.mxu0
    %v4202 = vadd.f32 1e-05, %v4201
    %4203 = vmatmul.bf16.gmra.mxu0 %v4123
    %v4204 = vpop.f32.mrf.mxu0
    %v4205 = vadd.f32 1e-05, %v4204
    %v4206 = vpop.f32.mrf.mxu0
    %v4207 = vadd.f32 1e-05, %v4206
    %4208 = vmatmul.bf16.gmra.mxu0 %v4124
    %v4209 = vpop.f32.mrf.mxu0
    %v4210 = vadd.f32 1e-05, %v4209
    %v4211 = vpop.f32.mrf.mxu0
    %v4212 = vadd.f32 1e-05, %v4211
    %4213 = vdwg.mxu0
    %v4214 = vrsqrt.pop %v4135
    %v4215 = vmul.f32 %v4214, %v4135
    %v4216 = vmul.f32 %v4215, %v4214
    %v4217 = vmul.f32 0.5, %v4216
    %v4218 = vsub.f32 1.5, %v4217
    %v4219 = vmul.f32 %v4214, %v4218
    %vm4220 = vweird.f32 %v4135
    %vm4221 = vweird.f32 %v4214
    %vm4222 = vmor %vm4220, %vm4221
    %v4223 = vsel %vm4222, %v4214, %v4219
    %v4224 = vrsqrt.pop %v4137
    %v4225 = vmul.f32 %v4224, %v4137
    %v4226 = vmul.f32 %v4225, %v4224
    %v4227 = vmul.f32 0.5, %v4226
    %v4228 = vsub.f32 1.5, %v4227
    %v4229 = vmul.f32 %v4224, %v4228
    %vm4230 = vweird.f32 %v4137
    %vm4231 = vweird.f32 %v4224
    %vm4232 = vmor %vm4230, %vm4231
    %v4233 = vsel %vm4232, %v4224, %v4229
    %v4234 = vrsqrt.pop %v4140
    %v4235 = vmul.f32 %v4234, %v4140
    %v4236 = vmul.f32 %v4235, %v4234
    %v4237 = vmul.f32 0.5, %v4236
    %v4238 = vsub.f32 1.5, %v4237
    %v4239 = vmul.f32 %v4234, %v4238
    %vm4240 = vweird.f32 %v4140
    %vm4241 = vweird.f32 %v4234
    %vm4242 = vmor %vm4240, %vm4241
    %v4243 = vsel %vm4242, %v4234, %v4239
    %v4244 = vrsqrt.pop %v4142
    %v4245 = vmul.f32 %v4244, %v4142
    %v4246 = vmul.f32 %v4245, %v4244
    %v4247 = vmul.f32 0.5, %v4246
    %v4248 = vsub.f32 1.5, %v4247
    %v4249 = vmul.f32 %v4244, %v4248
    %vm4250 = vweird.f32 %v4142
    %vm4251 = vweird.f32 %v4244
    %vm4252 = vmor %vm4250, %vm4251
    %v4253 = vsel %vm4252, %v4244, %v4249
    %v4254 = vrsqrt.pop %v4145
    %v4255 = vmul.f32 %v4254, %v4145
    %v4256 = vmul.f32 %v4255, %v4254
    %v4257 = vmul.f32 0.5, %v4256
    %v4258 = vsub.f32 1.5, %v4257
    %v4259 = vmul.f32 %v4254, %v4258
    %vm4260 = vweird.f32 %v4145
    %vm4261 = vweird.f32 %v4254
    %vm4262 = vmor %vm4260, %vm4261
    %v4263 = vsel %vm4262, %v4254, %v4259
    %v4264 = vrsqrt.pop %v4147
    %v4265 = vmul.f32 %v4264, %v4147
    %v4266 = vmul.f32 %v4265, %v4264
    %v4267 = vmul.f32 0.5, %v4266
    %v4268 = vsub.f32 1.5, %v4267
    %v4269 = vmul.f32 %v4264, %v4268
    %vm4270 = vweird.f32 %v4147
    %vm4271 = vweird.f32 %v4264
    %vm4272 = vmor %vm4270, %vm4271
    %v4273 = vsel %vm4272, %v4264, %v4269
    %v4274 = vrsqrt.pop %v4150
    %v4275 = vmul.f32 %v4274, %v4150
    %v4276 = vmul.f32 %v4275, %v4274
    %v4277 = vmul.f32 0.5, %v4276
    %v4278 = vsub.f32 1.5, %v4277
    %v4279 = vmul.f32 %v4274, %v4278
    %vm4280 = vweird.f32 %v4150
    %vm4281 = vweird.f32 %v4274
    %vm4282 = vmor %vm4280, %vm4281
    %v4283 = vsel %vm4282, %v4274, %v4279
    %v4284 = vrsqrt.pop %v4152
    %v4285 = vmul.f32 %v4284, %v4152
    %v4286 = vmul.f32 %v4285, %v4284
    %v4287 = vmul.f32 0.5, %v4286
    %v4288 = vsub.f32 1.5, %v4287
    %v4289 = vmul.f32 %v4284, %v4288
    %vm4290 = vweird.f32 %v4152
    %vm4291 = vweird.f32 %v4284
    %vm4292 = vmor %vm4290, %vm4291
    %v4293 = vsel %vm4292, %v4284, %v4289
    %v4294 = vrsqrt.pop %v4155
    %v4295 = vmul.f32 %v4294, %v4155
    %v4296 = vmul.f32 %v4295, %v4294
    %v4297 = vmul.f32 0.5, %v4296
    %v4298 = vsub.f32 1.5, %v4297
    %v4299 = vmul.f32 %v4294, %v4298
    %vm4300 = vweird.f32 %v4155
    %vm4301 = vweird.f32 %v4294
    %vm4302 = vmor %vm4300, %vm4301
    %v4303 = vsel %vm4302, %v4294, %v4299
    %v4304 = vrsqrt.pop %v4157
    %v4305 = vmul.f32 %v4304, %v4157
    %v4306 = vmul.f32 %v4305, %v4304
    %v4307 = vmul.f32 0.5, %v4306
    %v4308 = vsub.f32 1.5, %v4307
    %v4309 = vmul.f32 %v4304, %v4308
    %vm4310 = vweird.f32 %v4157
    %vm4311 = vweird.f32 %v4304
    %vm4312 = vmor %vm4310, %vm4311
    %v4313 = vsel %vm4312, %v4304, %v4309
    %v4314 = vrsqrt.pop %v4160
    %v4315 = vmul.f32 %v4314, %v4160
    %v4316 = vmul.f32 %v4315, %v4314
    %v4317 = vmul.f32 0.5, %v4316
    %v4318 = vsub.f32 1.5, %v4317
    %v4319 = vmul.f32 %v4314, %v4318
    %vm4320 = vweird.f32 %v4160
    %vm4321 = vweird.f32 %v4314
    %vm4322 = vmor %vm4320, %vm4321
    %v4323 = vsel %vm4322, %v4314, %v4319
    %v4324 = vrsqrt.pop %v4162
    %v4325 = vmul.f32 %v4324, %v4162
    %v4326 = vmul.f32 %v4325, %v4324
    %v4327 = vmul.f32 0.5, %v4326
    %v4328 = vsub.f32 1.5, %v4327
    %v4329 = vmul.f32 %v4324, %v4328
    %vm4330 = vweird.f32 %v4162
    %vm4331 = vweird.f32 %v4324
    %vm4332 = vmor %vm4330, %vm4331
    %v4333 = vsel %vm4332, %v4324, %v4329
    %v4334 = vrsqrt.pop %v4165
    %v4335 = vmul.f32 %v4334, %v4165
    %v4336 = vmul.f32 %v4335, %v4334
    %v4337 = vmul.f32 0.5, %v4336
    %v4338 = vsub.f32 1.5, %v4337
    %v4339 = vmul.f32 %v4334, %v4338
    %vm4340 = vweird.f32 %v4165
    %vm4341 = vweird.f32 %v4334
    %vm4342 = vmor %vm4340, %vm4341
    %v4343 = vsel %vm4342, %v4334, %v4339
    %v4344 = vrsqrt.pop %v4167
    %v4345 = vmul.f32 %v4344, %v4167
    %v4346 = vmul.f32 %v4345, %v4344
    %v4347 = vmul.f32 0.5, %v4346
    %v4348 = vsub.f32 1.5, %v4347
    %v4349 = vmul.f32 %v4344, %v4348
    %vm4350 = vweird.f32 %v4167
    %vm4351 = vweird.f32 %v4344
    %vm4352 = vmor %vm4350, %vm4351
    %v4353 = vsel %vm4352, %v4344, %v4349
    %v4354 = vrsqrt.pop %v4170
    %v4355 = vmul.f32 %v4354, %v4170
    %v4356 = vmul.f32 %v4355, %v4354
    %v4357 = vmul.f32 0.5, %v4356
    %v4358 = vsub.f32 1.5, %v4357
    %v4359 = vmul.f32 %v4354, %v4358
    %vm4360 = vweird.f32 %v4170
    %vm4361 = vweird.f32 %v4354
    %vm4362 = vmor %vm4360, %vm4361
    %v4363 = vsel %vm4362, %v4354, %v4359
    %v4364 = vrsqrt.pop %v4172
    %v4365 = vmul.f32 %v4364, %v4172
    %v4366 = vmul.f32 %v4365, %v4364
    %v4367 = vmul.f32 0.5, %v4366
    %v4368 = vsub.f32 1.5, %v4367
    %v4369 = vmul.f32 %v4364, %v4368
    %vm4370 = vweird.f32 %v4172
    %vm4371 = vweird.f32 %v4364
    %vm4372 = vmor %vm4370, %vm4371
    %v4373 = vsel %vm4372, %v4364, %v4369
    %v4374 = vrsqrt.pop %v4175
    %v4375 = vmul.f32 %v4374, %v4175
    %v4376 = vmul.f32 %v4375, %v4374
    %v4377 = vmul.f32 0.5, %v4376
    %v4378 = vsub.f32 1.5, %v4377
    %v4379 = vmul.f32 %v4374, %v4378
    %vm4380 = vweird.f32 %v4175
    %vm4381 = vweird.f32 %v4374
    %vm4382 = vmor %vm4380, %vm4381
    %v4383 = vsel %vm4382, %v4374, %v4379
    %v4384 = vrsqrt.pop %v4177
    %v4385 = vmul.f32 %v4384, %v4177
    %v4386 = vmul.f32 %v4385, %v4384
    %v4387 = vmul.f32 0.5, %v4386
    %v4388 = vsub.f32 1.5, %v4387
    %v4389 = vmul.f32 %v4384, %v4388
    %vm4390 = vweird.f32 %v4177
    %vm4391 = vweird.f32 %v4384
    %vm4392 = vmor %vm4390, %vm4391
    %v4393 = vsel %vm4392, %v4384, %v4389
    %v4394 = vrsqrt.pop %v4180
    %v4395 = vmul.f32 %v4394, %v4180
    %v4396 = vmul.f32 %v4395, %v4394
    %v4397 = vmul.f32 0.5, %v4396
    %v4398 = vsub.f32 1.5, %v4397
    %v4399 = vmul.f32 %v4394, %v4398
    %vm4400 = vweird.f32 %v4180
    %vm4401 = vweird.f32 %v4394
    %vm4402 = vmor %vm4400, %vm4401
    %v4403 = vsel %vm4402, %v4394, %v4399
    %v4404 = vrsqrt.pop %v4182
    %v4405 = vmul.f32 %v4404, %v4182
    %v4406 = vmul.f32 %v4405, %v4404
    %v4407 = vmul.f32 0.5, %v4406
    %v4408 = vsub.f32 1.5, %v4407
    %v4409 = vmul.f32 %v4404, %v4408
    %vm4410 = vweird.f32 %v4182
    %vm4411 = vweird.f32 %v4404
    %vm4412 = vmor %vm4410, %vm4411
    %v4413 = vsel %vm4412, %v4404, %v4409
    %v4414 = vrsqrt.pop %v4185
    %v4415 = vmul.f32 %v4414, %v4185
    %v4416 = vmul.f32 %v4415, %v4414
    %v4417 = vmul.f32 0.5, %v4416
    %v4418 = vsub.f32 1.5, %v4417
    %v4419 = vmul.f32 %v4414, %v4418
    %vm4420 = vweird.f32 %v4185
    %vm4421 = vweird.f32 %v4414
    %vm4422 = vmor %vm4420, %vm4421
    %v4423 = vsel %vm4422, %v4414, %v4419
    %v4424 = vrsqrt.pop %v4187
    %v4425 = vmul.f32 %v4424, %v4187
    %v4426 = vmul.f32 %v4425, %v4424
    %v4427 = vmul.f32 0.5, %v4426
    %v4428 = vsub.f32 1.5, %v4427
    %v4429 = vmul.f32 %v4424, %v4428
    %vm4430 = vweird.f32 %v4187
    %vm4431 = vweird.f32 %v4424
    %vm4432 = vmor %vm4430, %vm4431
    %v4433 = vsel %vm4432, %v4424, %v4429
    %v4434 = vrsqrt.pop %v4190
    %v4435 = vmul.f32 %v4434, %v4190
    %v4436 = vmul.f32 %v4435, %v4434
    %v4437 = vmul.f32 0.5, %v4436
    %v4438 = vsub.f32 1.5, %v4437
    %v4439 = vmul.f32 %v4434, %v4438
    %vm4440 = vweird.f32 %v4190
    %vm4441 = vweird.f32 %v4434
    %vm4442 = vmor %vm4440, %vm4441
    %v4443 = vsel %vm4442, %v4434, %v4439
    %v4444 = vrsqrt.pop %v4192
    %v4445 = vmul.f32 %v4444, %v4192
    %v4446 = vmul.f32 %v4445, %v4444
    %v4447 = vmul.f32 0.5, %v4446
    %v4448 = vsub.f32 1.5, %v4447
    %v4449 = vmul.f32 %v4444, %v4448
    %vm4450 = vweird.f32 %v4192
    %vm4451 = vweird.f32 %v4444
    %vm4452 = vmor %vm4450, %vm4451
    %v4453 = vsel %vm4452, %v4444, %v4449
    %v4454 = vrsqrt.pop %v4195
    %v4455 = vmul.f32 %v4454, %v4195
    %v4456 = vmul.f32 %v4455, %v4454
    %v4457 = vmul.f32 0.5, %v4456
    %v4458 = vsub.f32 1.5, %v4457
    %v4459 = vmul.f32 %v4454, %v4458
    %vm4460 = vweird.f32 %v4195
    %vm4461 = vweird.f32 %v4454
    %vm4462 = vmor %vm4460, %vm4461
    %v4463 = vsel %vm4462, %v4454, %v4459
    %v4464 = vrsqrt.pop %v4197
    %v4465 = vmul.f32 %v4464, %v4197
    %v4466 = vmul.f32 %v4465, %v4464
    %v4467 = vmul.f32 0.5, %v4466
    %v4468 = vsub.f32 1.5, %v4467
    %v4469 = vmul.f32 %v4464, %v4468
    %vm4470 = vweird.f32 %v4197
    %vm4471 = vweird.f32 %v4464
    %vm4472 = vmor %vm4470, %vm4471
    %v4473 = vsel %vm4472, %v4464, %v4469
    %v4474 = vrsqrt.pop %v4200
    %v4475 = vmul.f32 %v4474, %v4200
    %v4476 = vmul.f32 %v4475, %v4474
    %v4477 = vmul.f32 0.5, %v4476
    %v4478 = vsub.f32 1.5, %v4477
    %v4479 = vmul.f32 %v4474, %v4478
    %vm4480 = vweird.f32 %v4200
    %vm4481 = vweird.f32 %v4474
    %vm4482 = vmor %vm4480, %vm4481
    %v4483 = vsel %vm4482, %v4474, %v4479
    %v4484 = vrsqrt.pop %v4202
    %v4485 = vmul.f32 %v4484, %v4202
    %v4486 = vmul.f32 %v4485, %v4484
    %v4487 = vmul.f32 0.5, %v4486
    %v4488 = vsub.f32 1.5, %v4487
    %v4489 = vmul.f32 %v4484, %v4488
    %vm4490 = vweird.f32 %v4202
    %vm4491 = vweird.f32 %v4484
    %vm4492 = vmor %vm4490, %vm4491
    %v4493 = vsel %vm4492, %v4484, %v4489
    %v4494 = vrsqrt.pop %v4205
    %v4495 = vmul.f32 %v4494, %v4205
    %v4496 = vmul.f32 %v4495, %v4494
    %v4497 = vmul.f32 0.5, %v4496
    %v4498 = vsub.f32 1.5, %v4497
    %v4499 = vmul.f32 %v4494, %v4498
    %vm4500 = vweird.f32 %v4205
    %vm4501 = vweird.f32 %v4494
    %vm4502 = vmor %vm4500, %vm4501
    %v4503 = vsel %vm4502, %v4494, %v4499
    %v4504 = vrsqrt.pop %v4207
    %v4505 = vmul.f32 %v4504, %v4207
    %v4506 = vmul.f32 %v4505, %v4504
    %v4507 = vmul.f32 0.5, %v4506
    %v4508 = vsub.f32 1.5, %v4507
    %v4509 = vmul.f32 %v4504, %v4508
    %vm4510 = vweird.f32 %v4207
    %vm4511 = vweird.f32 %v4504
    %vm4512 = vmor %vm4510, %vm4511
    %v4513 = vsel %vm4512, %v4504, %v4509
    %v4514 = vrsqrt.pop %v4210
    %v4515 = vmul.f32 %v4514, %v4210
    %v4516 = vmul.f32 %v4515, %v4514
    %v4517 = vmul.f32 0.5, %v4516
    %v4518 = vsub.f32 1.5, %v4517
    %v4519 = vmul.f32 %v4514, %v4518
    %vm4520 = vweird.f32 %v4210
    %vm4521 = vweird.f32 %v4514
    %vm4522 = vmor %vm4520, %vm4521
    %v4523 = vsel %vm4522, %v4514, %v4519
    %v4524 = vrsqrt.pop %v4212
    %v4525 = vmul.f32 %v4524, %v4212
    %v4526 = vmul.f32 %v4525, %v4524
    %v4527 = vmul.f32 0.5, %v4526
    %v4528 = vsub.f32 1.5, %v4527
    %v4529 = vmul.f32 %v4524, %v4528
    %vm4530 = vweird.f32 %v4212
    %vm4531 = vweird.f32 %v4524
    %vm4532 = vmor %vm4530, %vm4531
    %v4533 = vsel %vm4532, %v4524, %v4529
    %v4534 = vmul.f32 %v4045, %v4223
    %v4535 = vmul.f32 %v4046, %v4233
    %v4536 = vmul.f32 %v4047, %v4243
    %v4537 = vmul.f32 %v4048, %v4253
    %v4538 = vmul.f32 %v4049, %v4263
    %v4539 = vmul.f32 %v4050, %v4273
    %v4540 = vmul.f32 %v4051, %v4283
    %v4541 = vmul.f32 %v4052, %v4293
    %v4542 = vmul.f32 %v4053, %v4303
    %v4543 = vmul.f32 %v4054, %v4313
    %v4544 = vmul.f32 %v4055, %v4323
    %v4545 = vmul.f32 %v4056, %v4333
    %v4546 = vmul.f32 %v4057, %v4343
    %v4547 = vmul.f32 %v4058, %v4353
    %v4548 = vmul.f32 %v4059, %v4363
    %v4549 = vmul.f32 %v4060, %v4373
    %v4550 = vmul.f32 %v4061, %v4383
    %v4551 = vmul.f32 %v4062, %v4393
    %v4552 = vmul.f32 %v4063, %v4403
    %v4553 = vmul.f32 %v4064, %v4413
    %v4554 = vmul.f32 %v4065, %v4423
    %v4555 = vmul.f32 %v4066, %v4433
    %v4556 = vmul.f32 %v4067, %v4443
    %v4557 = vmul.f32 %v4068, %v4453
    %v4558 = vmul.f32 %v4069, %v4463
    %v4559 = vmul.f32 %v4070, %v4473
    %v4560 = vmul.f32 %v4071, %v4483
    %v4561 = vmul.f32 %v4072, %v4493
    %v4562 = vmul.f32 %v4073, %v4503
    %v4563 = vmul.f32 %v4074, %v4513
    %v4564 = vmul.f32 %v4075, %v4523
    %v4565 = vmul.f32 %v4076, %v4533
    %v4566 = vmax.f32 %v4534, 0.0
    %v4567 = vmax.f32 %v4535, 0.0
    %v4568 = vmax.f32 %v4536, 0.0
    %v4569 = vmax.f32 %v4537, 0.0
    %v4570 = vmax.f32 %v4538, 0.0
    %v4571 = vmax.f32 %v4539, 0.0
    %v4572 = vmax.f32 %v4540, 0.0
    %v4573 = vmax.f32 %v4541, 0.0
    %v4574 = vmax.f32 %v4542, 0.0
    %v4575 = vmax.f32 %v4543, 0.0
    %v4576 = vmax.f32 %v4544, 0.0
    %v4577 = vmax.f32 %v4545, 0.0
    %v4578 = vmax.f32 %v4546, 0.0
    %v4579 = vmax.f32 %v4547, 0.0
    %v4580 = vmax.f32 %v4548, 0.0
    %v4581 = vmax.f32 %v4549, 0.0
    %v4582 = vmax.f32 %v4550, 0.0
    %v4583 = vmax.f32 %v4551, 0.0
    %v4584 = vmax.f32 %v4552, 0.0
    %v4585 = vmax.f32 %v4553, 0.0
    %v4586 = vmax.f32 %v4554, 0.0
    %v4587 = vmax.f32 %v4555, 0.0
    %v4588 = vmax.f32 %v4556, 0.0
    %v4589 = vmax.f32 %v4557, 0.0
    %v4590 = vmax.f32 %v4558, 0.0
    %v4591 = vmax.f32 %v4559, 0.0
    %v4592 = vmax.f32 %v4560, 0.0
    %v4593 = vmax.f32 %v4561, 0.0
    %v4594 = vmax.f32 %v4562, 0.0
    %v4595 = vmax.f32 %v4563, 0.0
    %v4596 = vmax.f32 %v4564, 0.0
    %v4597 = vmax.f32 %v4565, 0.0
    %v4598 = vpack.c.bf16 %v4567, %v4566
    %v4599 = vpack.c.bf16 %v4569, %v4568
    %v4600 = vpack.c.bf16 %v4571, %v4570
    %v4601 = vpack.c.bf16 %v4573, %v4572
    %v4602 = vpack.c.bf16 %v4575, %v4574
    %v4603 = vpack.c.bf16 %v4577, %v4576
    %v4604 = vpack.c.bf16 %v4579, %v4578
    %v4605 = vpack.c.bf16 %v4581, %v4580
    %v4606 = vpack.c.bf16 %v4583, %v4582
    %v4607 = vpack.c.bf16 %v4585, %v4584
    %v4608 = vpack.c.bf16 %v4587, %v4586
    %v4609 = vpack.c.bf16 %v4589, %v4588
    %v4610 = vpack.c.bf16 %v4591, %v4590
    %v4611 = vpack.c.bf16 %v4593, %v4592
    %v4612 = vpack.c.bf16 %v4595, %v4594
    %v4613 = vpack.c.bf16 %v4597, %v4596
    %v4614 = vld [vmem:[#allocation6] sm:$0xff]
    %v4615 = vld [vmem:[#allocation6 + $0x8] sm:$0xff]
    %v4616 = vld [vmem:[#allocation6 + $0x10] sm:$0xff]
    %v4617 = vld [vmem:[#allocation6 + $0x18] sm:$0xff]
    %v4618 = vld [vmem:[#allocation6 + $0x20] sm:$0xff]
    %v4619 = vld [vmem:[#allocation6 + $0x28] sm:$0xff]
    %v4620 = vld [vmem:[#allocation6 + $0x30] sm:$0xff]
    %v4621 = vld [vmem:[#allocation6 + $0x38] sm:$0xff]
    %v4622 = vld [vmem:[#allocation6 + $0x40] sm:$0xff]
    %v4623 = vld [vmem:[#allocation6 + $0x48] sm:$0xff]
    %v4624 = vld [vmem:[#allocation6 + $0x50] sm:$0xff]
    %v4625 = vld [vmem:[#allocation6 + $0x58] sm:$0xff]
    %v4626 = vld [vmem:[#allocation6 + $0x60] sm:$0xff]
    %v4627 = vld [vmem:[#allocation6 + $0x68] sm:$0xff]
    %v4628 = vld [vmem:[#allocation6 + $0x70] sm:$0xff]
    %v4629 = vld [vmem:[#allocation6 + $0x78] sm:$0xff]
    %v4646 = vunpack.c.l.b16 %v4614
    %v4647 = vunpack.c.h.b16 %v4614
    %v4648 = vunpack.c.l.b16 %v4615
    %v4649 = vunpack.c.h.b16 %v4615
    %v4650 = vunpack.c.l.b16 %v4616
    %v4651 = vunpack.c.h.b16 %v4616
    %v4652 = vunpack.c.l.b16 %v4617
    %v4653 = vunpack.c.h.b16 %v4617
    %v4654 = vunpack.c.l.b16 %v4618
    %v4655 = vunpack.c.h.b16 %v4618
    %v4656 = vunpack.c.l.b16 %v4619
    %v4657 = vunpack.c.h.b16 %v4619
    %v4658 = vunpack.c.l.b16 %v4620
    %v4659 = vunpack.c.h.b16 %v4620
    %v4660 = vunpack.c.l.b16 %v4621
    %v4661 = vunpack.c.h.b16 %v4621
    %v4662 = vunpack.c.l.b16 %v4622
    %v4663 = vunpack.c.h.b16 %v4622
    %v4664 = vunpack.c.l.b16 %v4623
    %v4665 = vunpack.c.h.b16 %v4623
    %v4666 = vunpack.c.l.b16 %v4624
    %v4667 = vunpack.c.h.b16 %v4624
    %v4668 = vunpack.c.l.b16 %v4625
    %v4669 = vunpack.c.h.b16 %v4625
    %v4670 = vunpack.c.l.b16 %v4626
    %v4671 = vunpack.c.h.b16 %v4626
    %v4672 = vunpack.c.l.b16 %v4627
    %v4673 = vunpack.c.h.b16 %v4627
    %v4674 = vunpack.c.l.b16 %v4628
    %v4675 = vunpack.c.h.b16 %v4628
    %v4676 = vunpack.c.l.b16 %v4629
    %v4677 = vunpack.c.h.b16 %v4629
    %v4678 = vpack.c.b16 %v4648, %v4646
    %v4679 = vpack.c.b16 %v4649, %v4647
    %v4680 = vpack.c.b16 %v4652, %v4650
    %v4681 = vpack.c.b16 %v4653, %v4651
    %v4682 = vpack.c.b16 %v4656, %v4654
    %v4683 = vpack.c.b16 %v4657, %v4655
    %v4684 = vpack.c.b16 %v4660, %v4658
    %v4685 = vpack.c.b16 %v4661, %v4659
    %v4686 = vpack.c.b16 %v4664, %v4662
    %v4687 = vpack.c.b16 %v4665, %v4663
    %v4688 = vpack.c.b16 %v4668, %v4666
    %v4689 = vpack.c.b16 %v4669, %v4667
    %v4690 = vpack.c.b16 %v4672, %v4670
    %v4691 = vpack.c.b16 %v4673, %v4671
    %v4692 = vpack.c.b16 %v4676, %v4674
    %v4693 = vpack.c.b16 %v4677, %v4675
    %4710 = vmatpush.bf16.msra.mxu0 %v4692
    %4711 = vmatpush.bf16.msra.mxu0 %v4690
    %4712 = vmatpush.bf16.msra.mxu0 %v4688
    %4713 = vmatpush.bf16.msra.mxu0 %v4686
    %4714 = vmatpush.bf16.msra.mxu0 %v4684
    %4715 = vmatpush.bf16.msra.mxu0 %v4682
    %4716 = vmatpush.bf16.msra.mxu0 %v4680
    %4717 = vmatpush.bf16.msra.mxu0 %v4678
    %4718 = vmatmul.bf16.gmra.mxu0 %v4598
    %v4719 = vpop.f32.mrf.mxu0
    %v4720 = vadd.f32 0.0, %v4719
    %v4721 = vpop.f32.mrf.mxu0
    %v4722 = vadd.f32 0.0, %v4721
    %4723 = vmatmul.bf16.gmra.mxu0 %v4599
    %v4724 = vpop.f32.mrf.mxu0
    %v4725 = vadd.f32 0.0, %v4724
    %v4726 = vpop.f32.mrf.mxu0
    %v4727 = vadd.f32 0.0, %v4726
    %4728 = vmatmul.bf16.gmra.mxu0 %v4600
    %v4729 = vpop.f32.mrf.mxu0
    %v4730 = vadd.f32 0.0, %v4729
    %v4731 = vpop.f32.mrf.mxu0
    %v4732 = vadd.f32 0.0, %v4731
    %4733 = vmatmul.bf16.gmra.mxu0 %v4601
    %v4734 = vpop.f32.mrf.mxu0
    %v4735 = vadd.f32 0.0, %v4734
    %v4736 = vpop.f32.mrf.mxu0
    %v4737 = vadd.f32 0.0, %v4736
    %4738 = vmatmul.bf16.gmra.mxu0 %v4602
    %v4739 = vpop.f32.mrf.mxu0
    %v4740 = vadd.f32 0.0, %v4739
    %v4741 = vpop.f32.mrf.mxu0
    %v4742 = vadd.f32 0.0, %v4741
    %4743 = vmatmul.bf16.gmra.mxu0 %v4603
    %v4744 = vpop.f32.mrf.mxu0
    %v4745 = vadd.f32 0.0, %v4744
    %v4746 = vpop.f32.mrf.mxu0
    %v4747 = vadd.f32 0.0, %v4746
    %4748 = vmatmul.bf16.gmra.mxu0 %v4604
    %v4749 = vpop.f32.mrf.mxu0
    %v4750 = vadd.f32 0.0, %v4749
    %v4751 = vpop.f32.mrf.mxu0
    %v4752 = vadd.f32 0.0, %v4751
    %4753 = vmatmul.bf16.gmra.mxu0 %v4605
    %v4754 = vpop.f32.mrf.mxu0
    %v4755 = vadd.f32 0.0, %v4754
    %v4756 = vpop.f32.mrf.mxu0
    %v4757 = vadd.f32 0.0, %v4756
    %4758 = vmatmul.bf16.gmra.mxu0 %v4606
    %v4759 = vpop.f32.mrf.mxu0
    %v4760 = vadd.f32 0.0, %v4759
    %v4761 = vpop.f32.mrf.mxu0
    %v4762 = vadd.f32 0.0, %v4761
    %4763 = vmatmul.bf16.gmra.mxu0 %v4607
    %v4764 = vpop.f32.mrf.mxu0
    %v4765 = vadd.f32 0.0, %v4764
    %v4766 = vpop.f32.mrf.mxu0
    %v4767 = vadd.f32 0.0, %v4766
    %4768 = vmatmul.bf16.gmra.mxu0 %v4608
    %v4769 = vpop.f32.mrf.mxu0
    %v4770 = vadd.f32 0.0, %v4769
    %v4771 = vpop.f32.mrf.mxu0
    %v4772 = vadd.f32 0.0, %v4771
    %4773 = vmatmul.bf16.gmra.mxu0 %v4609
    %v4774 = vpop.f32.mrf.mxu0
    %v4775 = vadd.f32 0.0, %v4774
    %v4776 = vpop.f32.mrf.mxu0
    %v4777 = vadd.f32 0.0, %v4776
    %4778 = vmatmul.bf16.gmra.mxu0 %v4610
    %v4779 = vpop.f32.mrf.mxu0
    %v4780 = vadd.f32 0.0, %v4779
    %v4781 = vpop.f32.mrf.mxu0
    %v4782 = vadd.f32 0.0, %v4781
    %4783 = vmatmul.bf16.gmra.mxu0 %v4611
    %v4784 = vpop.f32.mrf.mxu0
    %v4785 = vadd.f32 0.0, %v4784
    %v4786 = vpop.f32.mrf.mxu0
    %v4787 = vadd.f32 0.0, %v4786
    %4788 = vmatmul.bf16.gmra.mxu0 %v4612
    %v4789 = vpop.f32.mrf.mxu0
    %v4790 = vadd.f32 0.0, %v4789
    %v4791 = vpop.f32.mrf.mxu0
    %v4792 = vadd.f32 0.0, %v4791
    %4793 = vmatmul.bf16.gmra.mxu0 %v4613
    %v4794 = vpop.f32.mrf.mxu0
    %v4795 = vadd.f32 0.0, %v4794
    %v4796 = vpop.f32.mrf.mxu0
    %v4797 = vadd.f32 0.0, %v4796
    %4798 = vdwg.mxu0
    %4799 = vmatpush.bf16.msra.mxu0 %v4693
    %4800 = vmatpush.bf16.msra.mxu0 %v4691
    %4801 = vmatpush.bf16.msra.mxu0 %v4689
    %4802 = vmatpush.bf16.msra.mxu0 %v4687
    %4803 = vmatpush.bf16.msra.mxu0 %v4685
    %4804 = vmatpush.bf16.msra.mxu0 %v4683
    %4805 = vmatpush.bf16.msra.mxu0 %v4681
    %4806 = vmatpush.bf16.msra.mxu0 %v4679
    %4807 = vmatmul.bf16.gmra.mxu0 %v4598
    %v4808 = vpop.f32.mrf.mxu0
    %v4809 = vadd.f32 0.0, %v4808
    %v4810 = vpop.f32.mrf.mxu0
    %v4811 = vadd.f32 0.0, %v4810
    %4812 = vmatmul.bf16.gmra.mxu0 %v4599
    %v4813 = vpop.f32.mrf.mxu0
    %v4814 = vadd.f32 0.0, %v4813
    %v4815 = vpop.f32.mrf.mxu0
    %v4816 = vadd.f32 0.0, %v4815
    %4817 = vmatmul.bf16.gmra.mxu0 %v4600
    %v4818 = vpop.f32.mrf.mxu0
    %v4819 = vadd.f32 0.0, %v4818
    %v4820 = vpop.f32.mrf.mxu0
    %v4821 = vadd.f32 0.0, %v4820
    %4822 = vmatmul.bf16.gmra.mxu0 %v4601
    %v4823 = vpop.f32.mrf.mxu0
    %v4824 = vadd.f32 0.0, %v4823
    %v4825 = vpop.f32.mrf.mxu0
    %v4826 = vadd.f32 0.0, %v4825
    %4827 = vmatmul.bf16.gmra.mxu0 %v4602
    %v4828 = vpop.f32.mrf.mxu0
    %v4829 = vadd.f32 0.0, %v4828
    %v4830 = vpop.f32.mrf.mxu0
    %v4831 = vadd.f32 0.0, %v4830
    %4832 = vmatmul.bf16.gmra.mxu0 %v4603
    %v4833 = vpop.f32.mrf.mxu0
    %v4834 = vadd.f32 0.0, %v4833
    %v4835 = vpop.f32.mrf.mxu0
    %v4836 = vadd.f32 0.0, %v4835
    %4837 = vmatmul.bf16.gmra.mxu0 %v4604
    %v4838 = vpop.f32.mrf.mxu0
    %v4839 = vadd.f32 0.0, %v4838
    %v4840 = vpop.f32.mrf.mxu0
    %v4841 = vadd.f32 0.0, %v4840
    %4842 = vmatmul.bf16.gmra.mxu0 %v4605
    %v4843 = vpop.f32.mrf.mxu0
    %v4844 = vadd.f32 0.0, %v4843
    %v4845 = vpop.f32.mrf.mxu0
    %v4846 = vadd.f32 0.0, %v4845
    %4847 = vmatmul.bf16.gmra.mxu0 %v4606
    %v4848 = vpop.f32.mrf.mxu0
    %v4849 = vadd.f32 0.0, %v4848
    %v4850 = vpop.f32.mrf.mxu0
    %v4851 = vadd.f32 0.0, %v4850
    %4852 = vmatmul.bf16.gmra.mxu0 %v4607
    %v4853 = vpop.f32.mrf.mxu0
    %v4854 = vadd.f32 0.0, %v4853
    %v4855 = vpop.f32.mrf.mxu0
    %v4856 = vadd.f32 0.0, %v4855
    %4857 = vmatmul.bf16.gmra.mxu0 %v4608
    %v4858 = vpop.f32.mrf.mxu0
    %v4859 = vadd.f32 0.0, %v4858
    %v4860 = vpop.f32.mrf.mxu0
    %v4861 = vadd.f32 0.0, %v4860
    %4862 = vmatmul.bf16.gmra.mxu0 %v4609
    %v4863 = vpop.f32.mrf.mxu0
    %v4864 = vadd.f32 0.0, %v4863
    %v4865 = vpop.f32.mrf.mxu0
    %v4866 = vadd.f32 0.0, %v4865
    %4867 = vmatmul.bf16.gmra.mxu0 %v4610
    %v4868 = vpop.f32.mrf.mxu0
    %v4869 = vadd.f32 0.0, %v4868
    %v4870 = vpop.f32.mrf.mxu0
    %v4871 = vadd.f32 0.0, %v4870
    %4872 = vmatmul.bf16.gmra.mxu0 %v4611
    %v4873 = vpop.f32.mrf.mxu0
    %v4874 = vadd.f32 0.0, %v4873
    %v4875 = vpop.f32.mrf.mxu0
    %v4876 = vadd.f32 0.0, %v4875
    %4877 = vmatmul.bf16.gmra.mxu0 %v4612
    %v4878 = vpop.f32.mrf.mxu0
    %v4879 = vadd.f32 0.0, %v4878
    %v4880 = vpop.f32.mrf.mxu0
    %v4881 = vadd.f32 0.0, %v4880
    %4882 = vmatmul.bf16.gmra.mxu0 %v4613
    %v4883 = vpop.f32.mrf.mxu0
    %v4884 = vadd.f32 0.0, %v4883
    %v4885 = vpop.f32.mrf.mxu0
    %v4886 = vadd.f32 0.0, %v4885
    %4887 = vdwg.mxu0
    %v4888 = vpack.c.bf16 %v4722, %v4720
    %v4889 = vpack.c.bf16 %v4811, %v4809
    %v4890 = vpack.c.bf16 %v4727, %v4725
    %v4891 = vpack.c.bf16 %v4816, %v4814
    %v4892 = vpack.c.bf16 %v4732, %v4730
    %v4893 = vpack.c.bf16 %v4821, %v4819
    %v4894 = vpack.c.bf16 %v4737, %v4735
    %v4895 = vpack.c.bf16 %v4826, %v4824
    %v4896 = vpack.c.bf16 %v4742, %v4740
    %v4897 = vpack.c.bf16 %v4831, %v4829
    %v4898 = vpack.c.bf16 %v4747, %v4745
    %v4899 = vpack.c.bf16 %v4836, %v4834
    %v4900 = vpack.c.bf16 %v4752, %v4750
    %v4901 = vpack.c.bf16 %v4841, %v4839
    %v4902 = vpack.c.bf16 %v4757, %v4755
    %v4903 = vpack.c.bf16 %v4846, %v4844
    %v4904 = vpack.c.bf16 %v4762, %v4760
    %v4905 = vpack.c.bf16 %v4851, %v4849
    %v4906 = vpack.c.bf16 %v4767, %v4765
    %v4907 = vpack.c.bf16 %v4856, %v4854
    %v4908 = vpack.c.bf16 %v4772, %v4770
    %v4909 = vpack.c.bf16 %v4861, %v4859
    %v4910 = vpack.c.bf16 %v4777, %v4775
    %v4911 = vpack.c.bf16 %v4866, %v4864
    %v4912 = vpack.c.bf16 %v4782, %v4780
    %v4913 = vpack.c.bf16 %v4871, %v4869
    %v4914 = vpack.c.bf16 %v4787, %v4785
    %v4915 = vpack.c.bf16 %v4876, %v4874
    %v4916 = vpack.c.bf16 %v4792, %v4790
    %v4917 = vpack.c.bf16 %v4881, %v4879
    %v4918 = vpack.c.bf16 %v4797, %v4795
    %v4919 = vpack.c.bf16 %v4886, %v4884
    %4920 = vmatpush.bf16.msra.mxu0 %v925
    %4921 = vmatpush.bf16.msra.mxu0 %v923
    %4922 = vmatpush.bf16.msra.mxu0 %v921
    %4923 = vmatpush.bf16.msra.mxu0 %v919
    %4924 = vmatpush.bf16.msra.mxu0 %v917
    %4925 = vmatpush.bf16.msra.mxu0 %v915
    %4926 = vmatpush.bf16.msra.mxu0 %v913
    %4927 = vmatpush.bf16.msra.mxu0 %v911
    %4928 = vmatmul.bf16.gmra.mxu0 %v4888
    %v4929 = vpop.f32.mrf.mxu0
    %v4930 = vadd.f32 0.0, %v4929
    %v4931 = vpop.f32.mrf.mxu0
    %v4932 = vadd.f32 0.0, %v4931
    %4933 = vmatmul.bf16.gmra.mxu0 %v4890
    %v4934 = vpop.f32.mrf.mxu0
    %v4935 = vadd.f32 0.0, %v4934
    %v4936 = vpop.f32.mrf.mxu0
    %v4937 = vadd.f32 0.0, %v4936
    %4938 = vmatmul.bf16.gmra.mxu0 %v4892
    %v4939 = vpop.f32.mrf.mxu0
    %v4940 = vadd.f32 0.0, %v4939
    %v4941 = vpop.f32.mrf.mxu0
    %v4942 = vadd.f32 0.0, %v4941
    %4943 = vmatmul.bf16.gmra.mxu0 %v4894
    %v4944 = vpop.f32.mrf.mxu0
    %v4945 = vadd.f32 0.0, %v4944
    %v4946 = vpop.f32.mrf.mxu0
    %v4947 = vadd.f32 0.0, %v4946
    %4948 = vmatmul.bf16.gmra.mxu0 %v4896
    %v4949 = vpop.f32.mrf.mxu0
    %v4950 = vadd.f32 0.0, %v4949
    %v4951 = vpop.f32.mrf.mxu0
    %v4952 = vadd.f32 0.0, %v4951
    %4953 = vmatmul.bf16.gmra.mxu0 %v4898
    %v4954 = vpop.f32.mrf.mxu0
    %v4955 = vadd.f32 0.0, %v4954
    %v4956 = vpop.f32.mrf.mxu0
    %v4957 = vadd.f32 0.0, %v4956
    %4958 = vmatmul.bf16.gmra.mxu0 %v4900
    %v4959 = vpop.f32.mrf.mxu0
    %v4960 = vadd.f32 0.0, %v4959
    %v4961 = vpop.f32.mrf.mxu0
    %v4962 = vadd.f32 0.0, %v4961
    %4963 = vmatmul.bf16.gmra.mxu0 %v4902
    %v4964 = vpop.f32.mrf.mxu0
    %v4965 = vadd.f32 0.0, %v4964
    %v4966 = vpop.f32.mrf.mxu0
    %v4967 = vadd.f32 0.0, %v4966
    %4968 = vmatmul.bf16.gmra.mxu0 %v4904
    %v4969 = vpop.f32.mrf.mxu0
    %v4970 = vadd.f32 0.0, %v4969
    %v4971 = vpop.f32.mrf.mxu0
    %v4972 = vadd.f32 0.0, %v4971
    %4973 = vmatmul.bf16.gmra.mxu0 %v4906
    %v4974 = vpop.f32.mrf.mxu0
    %v4975 = vadd.f32 0.0, %v4974
    %v4976 = vpop.f32.mrf.mxu0
    %v4977 = vadd.f32 0.0, %v4976
    %4978 = vmatmul.bf16.gmra.mxu0 %v4908
    %v4979 = vpop.f32.mrf.mxu0
    %v4980 = vadd.f32 0.0, %v4979
    %v4981 = vpop.f32.mrf.mxu0
    %v4982 = vadd.f32 0.0, %v4981
    %4983 = vmatmul.bf16.gmra.mxu0 %v4910
    %v4984 = vpop.f32.mrf.mxu0
    %v4985 = vadd.f32 0.0, %v4984
    %v4986 = vpop.f32.mrf.mxu0
    %v4987 = vadd.f32 0.0, %v4986
    %4988 = vmatmul.bf16.gmra.mxu0 %v4912
    %v4989 = vpop.f32.mrf.mxu0
    %v4990 = vadd.f32 0.0, %v4989
    %v4991 = vpop.f32.mrf.mxu0
    %v4992 = vadd.f32 0.0, %v4991
    %4993 = vmatmul.bf16.gmra.mxu0 %v4914
    %v4994 = vpop.f32.mrf.mxu0
    %v4995 = vadd.f32 0.0, %v4994
    %v4996 = vpop.f32.mrf.mxu0
    %v4997 = vadd.f32 0.0, %v4996
    %4998 = vmatmul.bf16.gmra.mxu0 %v4916
    %v4999 = vpop.f32.mrf.mxu0
    %v5000 = vadd.f32 0.0, %v4999
    %v5001 = vpop.f32.mrf.mxu0
    %v5002 = vadd.f32 0.0, %v5001
    %5003 = vmatmul.bf16.gmra.mxu0 %v4918
    %v5004 = vpop.f32.mrf.mxu0
    %v5005 = vadd.f32 0.0, %v5004
    %v5006 = vpop.f32.mrf.mxu0
    %v5007 = vadd.f32 0.0, %v5006
    %5008 = vdwg.mxu0
    %5009 = vmatpush.bf16.msra.mxu0 %v941
    %5010 = vmatpush.bf16.msra.mxu0 %v939
    %5011 = vmatpush.bf16.msra.mxu0 %v937
    %5012 = vmatpush.bf16.msra.mxu0 %v935
    %5013 = vmatpush.bf16.msra.mxu0 %v933
    %5014 = vmatpush.bf16.msra.mxu0 %v931
    %5015 = vmatpush.bf16.msra.mxu0 %v929
    %5016 = vmatpush.bf16.msra.mxu0 %v927
    %5017 = vmatmul.bf16.gmra.mxu0 %v4889
    %v5018 = vpop.f32.mrf.mxu0
    %v5019 = vadd.f32 %v4930, %v5018
    %v5020 = vpop.f32.mrf.mxu0
    %v5021 = vadd.f32 %v4932, %v5020
    %5022 = vmatmul.bf16.gmra.mxu0 %v4891
    %v5023 = vpop.f32.mrf.mxu0
    %v5024 = vadd.f32 %v4935, %v5023
    %v5025 = vpop.f32.mrf.mxu0
    %v5026 = vadd.f32 %v4937, %v5025
    %5027 = vmatmul.bf16.gmra.mxu0 %v4893
    %v5028 = vpop.f32.mrf.mxu0
    %v5029 = vadd.f32 %v4940, %v5028
    %v5030 = vpop.f32.mrf.mxu0
    %v5031 = vadd.f32 %v4942, %v5030
    %5032 = vmatmul.bf16.gmra.mxu0 %v4895
    %v5033 = vpop.f32.mrf.mxu0
    %v5034 = vadd.f32 %v4945, %v5033
    %v5035 = vpop.f32.mrf.mxu0
    %v5036 = vadd.f32 %v4947, %v5035
    %5037 = vmatmul.bf16.gmra.mxu0 %v4897
    %v5038 = vpop.f32.mrf.mxu0
    %v5039 = vadd.f32 %v4950, %v5038
    %v5040 = vpop.f32.mrf.mxu0
    %v5041 = vadd.f32 %v4952, %v5040
    %5042 = vmatmul.bf16.gmra.mxu0 %v4899
    %v5043 = vpop.f32.mrf.mxu0
    %v5044 = vadd.f32 %v4955, %v5043
    %v5045 = vpop.f32.mrf.mxu0
    %v5046 = vadd.f32 %v4957, %v5045
    %5047 = vmatmul.bf16.gmra.mxu0 %v4901
    %v5048 = vpop.f32.mrf.mxu0
    %v5049 = vadd.f32 %v4960, %v5048
    %v5050 = vpop.f32.mrf.mxu0
    %v5051 = vadd.f32 %v4962, %v5050
    %5052 = vmatmul.bf16.gmra.mxu0 %v4903
    %v5053 = vpop.f32.mrf.mxu0
    %v5054 = vadd.f32 %v4965, %v5053
    %v5055 = vpop.f32.mrf.mxu0
    %v5056 = vadd.f32 %v4967, %v5055
    %5057 = vmatmul.bf16.gmra.mxu0 %v4905
    %v5058 = vpop.f32.mrf.mxu0
    %v5059 = vadd.f32 %v4970, %v5058
    %v5060 = vpop.f32.mrf.mxu0
    %v5061 = vadd.f32 %v4972, %v5060
    %5062 = vmatmul.bf16.gmra.mxu0 %v4907
    %v5063 = vpop.f32.mrf.mxu0
    %v5064 = vadd.f32 %v4975, %v5063
    %v5065 = vpop.f32.mrf.mxu0
    %v5066 = vadd.f32 %v4977, %v5065
    %5067 = vmatmul.bf16.gmra.mxu0 %v4909
    %v5068 = vpop.f32.mrf.mxu0
    %v5069 = vadd.f32 %v4980, %v5068
    %v5070 = vpop.f32.mrf.mxu0
    %v5071 = vadd.f32 %v4982, %v5070
    %5072 = vmatmul.bf16.gmra.mxu0 %v4911
    %v5073 = vpop.f32.mrf.mxu0
    %v5074 = vadd.f32 %v4985, %v5073
    %v5075 = vpop.f32.mrf.mxu0
    %v5076 = vadd.f32 %v4987, %v5075
    %5077 = vmatmul.bf16.gmra.mxu0 %v4913
    %v5078 = vpop.f32.mrf.mxu0
    %v5079 = vadd.f32 %v4990, %v5078
    %v5080 = vpop.f32.mrf.mxu0
    %v5081 = vadd.f32 %v4992, %v5080
    %5082 = vmatmul.bf16.gmra.mxu0 %v4915
    %v5083 = vpop.f32.mrf.mxu0
    %v5084 = vadd.f32 %v4995, %v5083
    %v5085 = vpop.f32.mrf.mxu0
    %v5086 = vadd.f32 %v4997, %v5085
    %5087 = vmatmul.bf16.gmra.mxu0 %v4917
    %v5088 = vpop.f32.mrf.mxu0
    %v5089 = vadd.f32 %v5000, %v5088
    %v5090 = vpop.f32.mrf.mxu0
    %v5091 = vadd.f32 %v5002, %v5090
    %5092 = vmatmul.bf16.gmra.mxu0 %v4919
    %v5093 = vpop.f32.mrf.mxu0
    %v5094 = vadd.f32 %v5005, %v5093
    %v5095 = vpop.f32.mrf.mxu0
    %v5096 = vadd.f32 %v5007, %v5095
    %5097 = vdwg.mxu0
    %5098 = vmatpush.bf16.msra.mxu0 %v926
    %5099 = vmatpush.bf16.msra.mxu0 %v924
    %5100 = vmatpush.bf16.msra.mxu0 %v922
    %5101 = vmatpush.bf16.msra.mxu0 %v920
    %5102 = vmatpush.bf16.msra.mxu0 %v918
    %5103 = vmatpush.bf16.msra.mxu0 %v916
    %5104 = vmatpush.bf16.msra.mxu0 %v914
    %5105 = vmatpush.bf16.msra.mxu0 %v912
    %5106 = vmatmul.bf16.gmra.mxu0 %v4888
    %v5107 = vpop.f32.mrf.mxu0
    %v5108 = vadd.f32 0.0, %v5107
    %v5109 = vpop.f32.mrf.mxu0
    %v5110 = vadd.f32 0.0, %v5109
    %5111 = vmatmul.bf16.gmra.mxu0 %v4890
    %v5112 = vpop.f32.mrf.mxu0
    %v5113 = vadd.f32 0.0, %v5112
    %v5114 = vpop.f32.mrf.mxu0
    %v5115 = vadd.f32 0.0, %v5114
    %5116 = vmatmul.bf16.gmra.mxu0 %v4892
    %v5117 = vpop.f32.mrf.mxu0
    %v5118 = vadd.f32 0.0, %v5117
    %v5119 = vpop.f32.mrf.mxu0
    %v5120 = vadd.f32 0.0, %v5119
    %5121 = vmatmul.bf16.gmra.mxu0 %v4894
    %v5122 = vpop.f32.mrf.mxu0
    %v5123 = vadd.f32 0.0, %v5122
    %v5124 = vpop.f32.mrf.mxu0
    %v5125 = vadd.f32 0.0, %v5124
    %5126 = vmatmul.bf16.gmra.mxu0 %v4896
    %v5127 = vpop.f32.mrf.mxu0
    %v5128 = vadd.f32 0.0, %v5127
    %v5129 = vpop.f32.mrf.mxu0
    %v5130 = vadd.f32 0.0, %v5129
    %5131 = vmatmul.bf16.gmra.mxu0 %v4898
    %v5132 = vpop.f32.mrf.mxu0
    %v5133 = vadd.f32 0.0, %v5132
    %v5134 = vpop.f32.mrf.mxu0
    %v5135 = vadd.f32 0.0, %v5134
    %5136 = vmatmul.bf16.gmra.mxu0 %v4900
    %v5137 = vpop.f32.mrf.mxu0
    %v5138 = vadd.f32 0.0, %v5137
    %v5139 = vpop.f32.mrf.mxu0
    %v5140 = vadd.f32 0.0, %v5139
    %5141 = vmatmul.bf16.gmra.mxu0 %v4902
    %v5142 = vpop.f32.mrf.mxu0
    %v5143 = vadd.f32 0.0, %v5142
    %v5144 = vpop.f32.mrf.mxu0
    %v5145 = vadd.f32 0.0, %v5144
    %5146 = vmatmul.bf16.gmra.mxu0 %v4904
    %v5147 = vpop.f32.mrf.mxu0
    %v5148 = vadd.f32 0.0, %v5147
    %v5149 = vpop.f32.mrf.mxu0
    %v5150 = vadd.f32 0.0, %v5149
    %5151 = vmatmul.bf16.gmra.mxu0 %v4906
    %v5152 = vpop.f32.mrf.mxu0
    %v5153 = vadd.f32 0.0, %v5152
    %v5154 = vpop.f32.mrf.mxu0
    %v5155 = vadd.f32 0.0, %v5154
    %5156 = vmatmul.bf16.gmra.mxu0 %v4908
    %v5157 = vpop.f32.mrf.mxu0
    %v5158 = vadd.f32 0.0, %v5157
    %v5159 = vpop.f32.mrf.mxu0
    %v5160 = vadd.f32 0.0, %v5159
    %5161 = vmatmul.bf16.gmra.mxu0 %v4910
    %v5162 = vpop.f32.mrf.mxu0
    %v5163 = vadd.f32 0.0, %v5162
    %v5164 = vpop.f32.mrf.mxu0
    %v5165 = vadd.f32 0.0, %v5164
    %5166 = vmatmul.bf16.gmra.mxu0 %v4912
    %v5167 = vpop.f32.mrf.mxu0
    %v5168 = vadd.f32 0.0, %v5167
    %v5169 = vpop.f32.mrf.mxu0
    %v5170 = vadd.f32 0.0, %v5169
    %5171 = vmatmul.bf16.gmra.mxu0 %v4914
    %v5172 = vpop.f32.mrf.mxu0
    %v5173 = vadd.f32 0.0, %v5172
    %v5174 = vpop.f32.mrf.mxu0
    %v5175 = vadd.f32 0.0, %v5174
    %5176 = vmatmul.bf16.gmra.mxu0 %v4916
    %v5177 = vpop.f32.mrf.mxu0
    %v5178 = vadd.f32 0.0, %v5177
    %v5179 = vpop.f32.mrf.mxu0
    %v5180 = vadd.f32 0.0, %v5179
    %5181 = vmatmul.bf16.gmra.mxu0 %v4918
    %v5182 = vpop.f32.mrf.mxu0
    %v5183 = vadd.f32 0.0, %v5182
    %v5184 = vpop.f32.mrf.mxu0
    %v5185 = vadd.f32 0.0, %v5184
    %5186 = vdwg.mxu0
    %5187 = vmatpush.bf16.msra.mxu0 %v942
    %5188 = vmatpush.bf16.msra.mxu0 %v940
    %5189 = vmatpush.bf16.msra.mxu0 %v938
    %5190 = vmatpush.bf16.msra.mxu0 %v936
    %5191 = vmatpush.bf16.msra.mxu0 %v934
    %5192 = vmatpush.bf16.msra.mxu0 %v932
    %5193 = vmatpush.bf16.msra.mxu0 %v930
    %5194 = vmatpush.bf16.msra.mxu0 %v928
    %5195 = vmatmul.bf16.gmra.mxu0 %v4889
    %v5196 = vpop.f32.mrf.mxu0
    %v5197 = vadd.f32 %v5108, %v5196
    %v5198 = vpop.f32.mrf.mxu0
    %v5199 = vadd.f32 %v5110, %v5198
    %5200 = vmatmul.bf16.gmra.mxu0 %v4891
    %v5201 = vpop.f32.mrf.mxu0
    %v5202 = vadd.f32 %v5113, %v5201
    %v5203 = vpop.f32.mrf.mxu0
    %v5204 = vadd.f32 %v5115, %v5203
    %5205 = vmatmul.bf16.gmra.mxu0 %v4893
    %v5206 = vpop.f32.mrf.mxu0
    %v5207 = vadd.f32 %v5118, %v5206
    %v5208 = vpop.f32.mrf.mxu0
    %v5209 = vadd.f32 %v5120, %v5208
    %5210 = vmatmul.bf16.gmra.mxu0 %v4895
    %v5211 = vpop.f32.mrf.mxu0
    %v5212 = vadd.f32 %v5123, %v5211
    %v5213 = vpop.f32.mrf.mxu0
    %v5214 = vadd.f32 %v5125, %v5213
    %5215 = vmatmul.bf16.gmra.mxu0 %v4897
    %v5216 = vpop.f32.mrf.mxu0
    %v5217 = vadd.f32 %v5128, %v5216
    %v5218 = vpop.f32.mrf.mxu0
    %v5219 = vadd.f32 %v5130, %v5218
    %5220 = vmatmul.bf16.gmra.mxu0 %v4899
    %v5221 = vpop.f32.mrf.mxu0
    %v5222 = vadd.f32 %v5133, %v5221
    %v5223 = vpop.f32.mrf.mxu0
    %v5224 = vadd.f32 %v5135, %v5223
    %5225 = vmatmul.bf16.gmra.mxu0 %v4901
    %v5226 = vpop.f32.mrf.mxu0
    %v5227 = vadd.f32 %v5138, %v5226
    %v5228 = vpop.f32.mrf.mxu0
    %v5229 = vadd.f32 %v5140, %v5228
    %5230 = vmatmul.bf16.gmra.mxu0 %v4903
    %v5231 = vpop.f32.mrf.mxu0
    %v5232 = vadd.f32 %v5143, %v5231
    %v5233 = vpop.f32.mrf.mxu0
    %v5234 = vadd.f32 %v5145, %v5233
    %5235 = vmatmul.bf16.gmra.mxu0 %v4905
    %v5236 = vpop.f32.mrf.mxu0
    %v5237 = vadd.f32 %v5148, %v5236
    %v5238 = vpop.f32.mrf.mxu0
    %v5239 = vadd.f32 %v5150, %v5238
    %5240 = vmatmul.bf16.gmra.mxu0 %v4907
    %v5241 = vpop.f32.mrf.mxu0
    %v5242 = vadd.f32 %v5153, %v5241
    %v5243 = vpop.f32.mrf.mxu0
    %v5244 = vadd.f32 %v5155, %v5243
    %5245 = vmatmul.bf16.gmra.mxu0 %v4909
    %v5246 = vpop.f32.mrf.mxu0
    %v5247 = vadd.f32 %v5158, %v5246
    %v5248 = vpop.f32.mrf.mxu0
    %v5249 = vadd.f32 %v5160, %v5248
    %5250 = vmatmul.bf16.gmra.mxu0 %v4911
    %v5251 = vpop.f32.mrf.mxu0
    %v5252 = vadd.f32 %v5163, %v5251
    %v5253 = vpop.f32.mrf.mxu0
    %v5254 = vadd.f32 %v5165, %v5253
    %5255 = vmatmul.bf16.gmra.mxu0 %v4913
    %v5256 = vpop.f32.mrf.mxu0
    %v5257 = vadd.f32 %v5168, %v5256
    %v5258 = vpop.f32.mrf.mxu0
    %v5259 = vadd.f32 %v5170, %v5258
    %5260 = vmatmul.bf16.gmra.mxu0 %v4915
    %v5261 = vpop.f32.mrf.mxu0
    %v5262 = vadd.f32 %v5173, %v5261
    %v5263 = vpop.f32.mrf.mxu0
    %v5264 = vadd.f32 %v5175, %v5263
    %5265 = vmatmul.bf16.gmra.mxu0 %v4917
    %v5266 = vpop.f32.mrf.mxu0
    %v5267 = vadd.f32 %v5178, %v5266
    %v5268 = vpop.f32.mrf.mxu0
    %v5269 = vadd.f32 %v5180, %v5268
    %5270 = vmatmul.bf16.gmra.mxu0 %v4919
    %v5271 = vpop.f32.mrf.mxu0
    %v5272 = vadd.f32 %v5183, %v5271
    %v5273 = vpop.f32.mrf.mxu0
    %v5274 = vadd.f32 %v5185, %v5273
    %5275 = vdwg.mxu0
    %v5276 = vsub.f32 %v4720, %v5019
    %v5277 = vsub.f32 %v4809, %v5197
    %v5278 = vsub.f32 %v4722, %v5021
    %v5279 = vsub.f32 %v4811, %v5199
    %v5280 = vsub.f32 %v4725, %v5024
    %v5281 = vsub.f32 %v4814, %v5202
    %v5282 = vsub.f32 %v4727, %v5026
    %v5283 = vsub.f32 %v4816, %v5204
    %v5284 = vsub.f32 %v4730, %v5029
    %v5285 = vsub.f32 %v4819, %v5207
    %v5286 = vsub.f32 %v4732, %v5031
    %v5287 = vsub.f32 %v4821, %v5209
    %v5288 = vsub.f32 %v4735, %v5034
    %v5289 = vsub.f32 %v4824, %v5212
    %v5290 = vsub.f32 %v4737, %v5036
    %v5291 = vsub.f32 %v4826, %v5214
    %v5292 = vsub.f32 %v4740, %v5039
    %v5293 = vsub.f32 %v4829, %v5217
    %v5294 = vsub.f32 %v4742, %v5041
    %v5295 = vsub.f32 %v4831, %v5219
    %v5296 = vsub.f32 %v4745, %v5044
    %v5297 = vsub.f32 %v4834, %v5222
    %v5298 = vsub.f32 %v4747, %v5046
    %v5299 = vsub.f32 %v4836, %v5224
    %v5300 = vsub.f32 %v4750, %v5049
    %v5301 = vsub.f32 %v4839, %v5227
    %v5302 = vsub.f32 %v4752, %v5051
    %v5303 = vsub.f32 %v4841, %v5229
    %v5304 = vsub.f32 %v4755, %v5054
    %v5305 = vsub.f32 %v4844, %v5232
    %v5306 = vsub.f32 %v4757, %v5056
    %v5307 = vsub.f32 %v4846, %v5234
    %v5308 = vsub.f32 %v4760, %v5059
    %v5309 = vsub.f32 %v4849, %v5237
    %v5310 = vsub.f32 %v4762, %v5061
    %v5311 = vsub.f32 %v4851, %v5239
    %v5312 = vsub.f32 %v4765, %v5064
    %v5313 = vsub.f32 %v4854, %v5242
    %v5314 = vsub.f32 %v4767, %v5066
    %v5315 = vsub.f32 %v4856, %v5244
    %v5316 = vsub.f32 %v4770, %v5069
    %v5317 = vsub.f32 %v4859, %v5247
    %v5318 = vsub.f32 %v4772, %v5071
    %v5319 = vsub.f32 %v4861, %v5249
    %v5320 = vsub.f32 %v4775, %v5074
    %v5321 = vsub.f32 %v4864, %v5252
    %v5322 = vsub.f32 %v4777, %v5076
    %v5323 = vsub.f32 %v4866, %v5254
    %v5324 = vsub.f32 %v4780, %v5079
    %v5325 = vsub.f32 %v4869, %v5257
    %v5326 = vsub.f32 %v4782, %v5081
    %v5327 = vsub.f32 %v4871, %v5259
    %v5328 = vsub.f32 %v4785, %v5084
    %v5329 = vsub.f32 %v4874, %v5262
    %v5330 = vsub.f32 %v4787, %v5086
    %v5331 = vsub.f32 %v4876, %v5264
    %v5332 = vsub.f32 %v4790, %v5089
    %v5333 = vsub.f32 %v4879, %v5267
    %v5334 = vsub.f32 %v4792, %v5091
    %v5335 = vsub.f32 %v4881, %v5269
    %v5336 = vsub.f32 %v4795, %v5094
    %v5337 = vsub.f32 %v4884, %v5272
    %v5338 = vsub.f32 %v4797, %v5096
    %v5339 = vsub.f32 %v4886, %v5274
    %v5340 = vmul.f32 %v5276, %v5276
    %v5341 = vmul.f32 %v5277, %v5277
    %v5342 = vmul.f32 %v5278, %v5278
    %v5343 = vmul.f32 %v5279, %v5279
    %v5344 = vmul.f32 %v5280, %v5280
    %v5345 = vmul.f32 %v5281, %v5281
    %v5346 = vmul.f32 %v5282, %v5282
    %v5347 = vmul.f32 %v5283, %v5283
    %v5348 = vmul.f32 %v5284, %v5284
    %v5349 = vmul.f32 %v5285, %v5285
    %v5350 = vmul.f32 %v5286, %v5286
    %v5351 = vmul.f32 %v5287, %v5287
    %v5352 = vmul.f32 %v5288, %v5288
    %v5353 = vmul.f32 %v5289, %v5289
    %v5354 = vmul.f32 %v5290, %v5290
    %v5355 = vmul.f32 %v5291, %v5291
    %v5356 = vmul.f32 %v5292, %v5292
    %v5357 = vmul.f32 %v5293, %v5293
    %v5358 = vmul.f32 %v5294, %v5294
    %v5359 = vmul.f32 %v5295, %v5295
    %v5360 = vmul.f32 %v5296, %v5296
    %v5361 = vmul.f32 %v5297, %v5297
    %v5362 = vmul.f32 %v5298, %v5298
    %v5363 = vmul.f32 %v5299, %v5299
    %v5364 = vmul.f32 %v5300, %v5300
    %v5365 = vmul.f32 %v5301, %v5301
    %v5366 = vmul.f32 %v5302, %v5302
    %v5367 = vmul.f32 %v5303, %v5303
    %v5368 = vmul.f32 %v5304, %v5304
    %v5369 = vmul.f32 %v5305, %v5305
    %v5370 = vmul.f32 %v5306, %v5306
    %v5371 = vmul.f32 %v5307, %v5307
    %v5372 = vmul.f32 %v5308, %v5308
    %v5373 = vmul.f32 %v5309, %v5309
    %v5374 = vmul.f32 %v5310, %v5310
    %v5375 = vmul.f32 %v5311, %v5311
    %v5376 = vmul.f32 %v5312, %v5312
    %v5377 = vmul.f32 %v5313, %v5313
    %v5378 = vmul.f32 %v5314, %v5314
    %v5379 = vmul.f32 %v5315, %v5315
    %v5380 = vmul.f32 %v5316, %v5316
    %v5381 = vmul.f32 %v5317, %v5317
    %v5382 = vmul.f32 %v5318, %v5318
    %v5383 = vmul.f32 %v5319, %v5319
    %v5384 = vmul.f32 %v5320, %v5320
    %v5385 = vmul.f32 %v5321, %v5321
    %v5386 = vmul.f32 %v5322, %v5322
    %v5387 = vmul.f32 %v5323, %v5323
    %v5388 = vmul.f32 %v5324, %v5324
    %v5389 = vmul.f32 %v5325, %v5325
    %v5390 = vmul.f32 %v5326, %v5326
    %v5391 = vmul.f32 %v5327, %v5327
    %v5392 = vmul.f32 %v5328, %v5328
    %v5393 = vmul.f32 %v5329, %v5329
    %v5394 = vmul.f32 %v5330, %v5330
    %v5395 = vmul.f32 %v5331, %v5331
    %v5396 = vmul.f32 %v5332, %v5332
    %v5397 = vmul.f32 %v5333, %v5333
    %v5398 = vmul.f32 %v5334, %v5334
    %v5399 = vmul.f32 %v5335, %v5335
    %v5400 = vmul.f32 %v5336, %v5336
    %v5401 = vmul.f32 %v5337, %v5337
    %v5402 = vmul.f32 %v5338, %v5338
    %v5403 = vmul.f32 %v5339, %v5339
    %v5404 = vpack.c.bf16 %v5342, %v5340
    %v5405 = vpack.c.bf16 %v5343, %v5341
    %v5406 = vpack.c.bf16 %v5346, %v5344
    %v5407 = vpack.c.bf16 %v5347, %v5345
    %v5408 = vpack.c.bf16 %v5350, %v5348
    %v5409 = vpack.c.bf16 %v5351, %v5349
    %v5410 = vpack.c.bf16 %v5354, %v5352
    %v5411 = vpack.c.bf16 %v5355, %v5353
    %v5412 = vpack.c.bf16 %v5358, %v5356
    %v5413 = vpack.c.bf16 %v5359, %v5357
    %v5414 = vpack.c.bf16 %v5362, %v5360
    %v5415 = vpack.c.bf16 %v5363, %v5361
    %v5416 = vpack.c.bf16 %v5366, %v5364
    %v5417 = vpack.c.bf16 %v5367, %v5365
    %v5418 = vpack.c.bf16 %v5370, %v5368
    %v5419 = vpack.c.bf16 %v5371, %v5369
    %v5420 = vpack.c.bf16 %v5374, %v5372
    %v5421 = vpack.c.bf16 %v5375, %v5373
    %v5422 = vpack.c.bf16 %v5378, %v5376
    %v5423 = vpack.c.bf16 %v5379, %v5377
    %v5424 = vpack.c.bf16 %v5382, %v5380
    %v5425 = vpack.c.bf16 %v5383, %v5381
    %v5426 = vpack.c.bf16 %v5386, %v5384
    %v5427 = vpack.c.bf16 %v5387, %v5385
    %v5428 = vpack.c.bf16 %v5390, %v5388
    %v5429 = vpack.c.bf16 %v5391, %v5389
    %v5430 = vpack.c.bf16 %v5394, %v5392
    %v5431 = vpack.c.bf16 %v5395, %v5393
    %v5432 = vpack.c.bf16 %v5398, %v5396
    %v5433 = vpack.c.bf16 %v5399, %v5397
    %v5434 = vpack.c.bf16 %v5402, %v5400
    %v5435 = vpack.c.bf16 %v5403, %v5401
    %5436 = vmatpush.bf16.msra.mxu0 %v925
    %5437 = vmatpush.bf16.msra.mxu0 %v923
    %5438 = vmatpush.bf16.msra.mxu0 %v921
    %5439 = vmatpush.bf16.msra.mxu0 %v919
    %5440 = vmatpush.bf16.msra.mxu0 %v917
    %5441 = vmatpush.bf16.msra.mxu0 %v915
    %5442 = vmatpush.bf16.msra.mxu0 %v913
    %5443 = vmatpush.bf16.msra.mxu0 %v911
    %5444 = vmatmul.bf16.gmra.mxu0 %v5404
    %v5445 = vpop.f32.mrf.mxu0
    %v5446 = vadd.f32 1e-05, %v5445
    %v5447 = vpop.f32.mrf.mxu0
    %v5448 = vadd.f32 1e-05, %v5447
    %5449 = vmatmul.bf16.gmra.mxu0 %v5406
    %v5450 = vpop.f32.mrf.mxu0
    %v5451 = vadd.f32 1e-05, %v5450
    %v5452 = vpop.f32.mrf.mxu0
    %v5453 = vadd.f32 1e-05, %v5452
    %5454 = vmatmul.bf16.gmra.mxu0 %v5408
    %v5455 = vpop.f32.mrf.mxu0
    %v5456 = vadd.f32 1e-05, %v5455
    %v5457 = vpop.f32.mrf.mxu0
    %v5458 = vadd.f32 1e-05, %v5457
    %5459 = vmatmul.bf16.gmra.mxu0 %v5410
    %v5460 = vpop.f32.mrf.mxu0
    %v5461 = vadd.f32 1e-05, %v5460
    %v5462 = vpop.f32.mrf.mxu0
    %v5463 = vadd.f32 1e-05, %v5462
    %5464 = vmatmul.bf16.gmra.mxu0 %v5412
    %v5465 = vpop.f32.mrf.mxu0
    %v5466 = vadd.f32 1e-05, %v5465
    %v5467 = vpop.f32.mrf.mxu0
    %v5468 = vadd.f32 1e-05, %v5467
    %5469 = vmatmul.bf16.gmra.mxu0 %v5414
    %v5470 = vpop.f32.mrf.mxu0
    %v5471 = vadd.f32 1e-05, %v5470
    %v5472 = vpop.f32.mrf.mxu0
    %v5473 = vadd.f32 1e-05, %v5472
    %5474 = vmatmul.bf16.gmra.mxu0 %v5416
    %v5475 = vpop.f32.mrf.mxu0
    %v5476 = vadd.f32 1e-05, %v5475
    %v5477 = vpop.f32.mrf.mxu0
    %v5478 = vadd.f32 1e-05, %v5477
    %5479 = vmatmul.bf16.gmra.mxu0 %v5418
    %v5480 = vpop.f32.mrf.mxu0
    %v5481 = vadd.f32 1e-05, %v5480
    %v5482 = vpop.f32.mrf.mxu0
    %v5483 = vadd.f32 1e-05, %v5482
    %5484 = vmatmul.bf16.gmra.mxu0 %v5420
    %v5485 = vpop.f32.mrf.mxu0
    %v5486 = vadd.f32 1e-05, %v5485
    %v5487 = vpop.f32.mrf.mxu0
    %v5488 = vadd.f32 1e-05, %v5487
    %5489 = vmatmul.bf16.gmra.mxu0 %v5422
    %v5490 = vpop.f32.mrf.mxu0
    %v5491 = vadd.f32 1e-05, %v5490
    %v5492 = vpop.f32.mrf.mxu0
    %v5493 = vadd.f32 1e-05, %v5492
    %5494 = vmatmul.bf16.gmra.mxu0 %v5424
    %v5495 = vpop.f32.mrf.mxu0
    %v5496 = vadd.f32 1e-05, %v5495
    %v5497 = vpop.f32.mrf.mxu0
    %v5498 = vadd.f32 1e-05, %v5497
    %5499 = vmatmul.bf16.gmra.mxu0 %v5426
    %v5500 = vpop.f32.mrf.mxu0
    %v5501 = vadd.f32 1e-05, %v5500
    %v5502 = vpop.f32.mrf.mxu0
    %v5503 = vadd.f32 1e-05, %v5502
    %5504 = vmatmul.bf16.gmra.mxu0 %v5428
    %v5505 = vpop.f32.mrf.mxu0
    %v5506 = vadd.f32 1e-05, %v5505
    %v5507 = vpop.f32.mrf.mxu0
    %v5508 = vadd.f32 1e-05, %v5507
    %5509 = vmatmul.bf16.gmra.mxu0 %v5430
    %v5510 = vpop.f32.mrf.mxu0
    %v5511 = vadd.f32 1e-05, %v5510
    %v5512 = vpop.f32.mrf.mxu0
    %v5513 = vadd.f32 1e-05, %v5512
    %5514 = vmatmul.bf16.gmra.mxu0 %v5432
    %v5515 = vpop.f32.mrf.mxu0
    %v5516 = vadd.f32 1e-05, %v5515
    %v5517 = vpop.f32.mrf.mxu0
    %v5518 = vadd.f32 1e-05, %v5517
    %5519 = vmatmul.bf16.gmra.mxu0 %v5434
    %v5520 = vpop.f32.mrf.mxu0
    %v5521 = vadd.f32 1e-05, %v5520
    %v5522 = vpop.f32.mrf.mxu0
    %v5523 = vadd.f32 1e-05, %v5522
    %5524 = vdwg.mxu0
    %5525 = vmatpush.bf16.msra.mxu0 %v941
    %5526 = vmatpush.bf16.msra.mxu0 %v939
    %5527 = vmatpush.bf16.msra.mxu0 %v937
    %5528 = vmatpush.bf16.msra.mxu0 %v935
    %5529 = vmatpush.bf16.msra.mxu0 %v933
    %5530 = vmatpush.bf16.msra.mxu0 %v931
    %5531 = vmatpush.bf16.msra.mxu0 %v929
    %5532 = vmatpush.bf16.msra.mxu0 %v927
    %5533 = vmatmul.bf16.gmra.mxu0 %v5405
    %v5534 = vpop.f32.mrf.mxu0
    %v5535 = vadd.f32 %v5446, %v5534
    %v5536 = vpop.f32.mrf.mxu0
    %v5537 = vadd.f32 %v5448, %v5536
    %5538 = vmatmul.bf16.gmra.mxu0 %v5407
    %v5539 = vpop.f32.mrf.mxu0
    %v5540 = vadd.f32 %v5451, %v5539
    %v5541 = vpop.f32.mrf.mxu0
    %v5542 = vadd.f32 %v5453, %v5541
    %5543 = vmatmul.bf16.gmra.mxu0 %v5409
    %v5544 = vpop.f32.mrf.mxu0
    %v5545 = vadd.f32 %v5456, %v5544
    %v5546 = vpop.f32.mrf.mxu0
    %v5547 = vadd.f32 %v5458, %v5546
    %5548 = vmatmul.bf16.gmra.mxu0 %v5411
    %v5549 = vpop.f32.mrf.mxu0
    %v5550 = vadd.f32 %v5461, %v5549
    %v5551 = vpop.f32.mrf.mxu0
    %v5552 = vadd.f32 %v5463, %v5551
    %5553 = vmatmul.bf16.gmra.mxu0 %v5413
    %v5554 = vpop.f32.mrf.mxu0
    %v5555 = vadd.f32 %v5466, %v5554
    %v5556 = vpop.f32.mrf.mxu0
    %v5557 = vadd.f32 %v5468, %v5556
    %5558 = vmatmul.bf16.gmra.mxu0 %v5415
    %v5559 = vpop.f32.mrf.mxu0
    %v5560 = vadd.f32 %v5471, %v5559
    %v5561 = vpop.f32.mrf.mxu0
    %v5562 = vadd.f32 %v5473, %v5561
    %5563 = vmatmul.bf16.gmra.mxu0 %v5417
    %v5564 = vpop.f32.mrf.mxu0
    %v5565 = vadd.f32 %v5476, %v5564
    %v5566 = vpop.f32.mrf.mxu0
    %v5567 = vadd.f32 %v5478, %v5566
    %5568 = vmatmul.bf16.gmra.mxu0 %v5419
    %v5569 = vpop.f32.mrf.mxu0
    %v5570 = vadd.f32 %v5481, %v5569
    %v5571 = vpop.f32.mrf.mxu0
    %v5572 = vadd.f32 %v5483, %v5571
    %5573 = vmatmul.bf16.gmra.mxu0 %v5421
    %v5574 = vpop.f32.mrf.mxu0
    %v5575 = vadd.f32 %v5486, %v5574
    %v5576 = vpop.f32.mrf.mxu0
    %v5577 = vadd.f32 %v5488, %v5576
    %5578 = vmatmul.bf16.gmra.mxu0 %v5423
    %v5579 = vpop.f32.mrf.mxu0
    %v5580 = vadd.f32 %v5491, %v5579
    %v5581 = vpop.f32.mrf.mxu0
    %v5582 = vadd.f32 %v5493, %v5581
    %5583 = vmatmul.bf16.gmra.mxu0 %v5425
    %v5584 = vpop.f32.mrf.mxu0
    %v5585 = vadd.f32 %v5496, %v5584
    %v5586 = vpop.f32.mrf.mxu0
    %v5587 = vadd.f32 %v5498, %v5586
    %5588 = vmatmul.bf16.gmra.mxu0 %v5427
    %v5589 = vpop.f32.mrf.mxu0
    %v5590 = vadd.f32 %v5501, %v5589
    %v5591 = vpop.f32.mrf.mxu0
    %v5592 = vadd.f32 %v5503, %v5591
    %5593 = vmatmul.bf16.gmra.mxu0 %v5429
    %v5594 = vpop.f32.mrf.mxu0
    %v5595 = vadd.f32 %v5506, %v5594
    %v5596 = vpop.f32.mrf.mxu0
    %v5597 = vadd.f32 %v5508, %v5596
    %5598 = vmatmul.bf16.gmra.mxu0 %v5431
    %v5599 = vpop.f32.mrf.mxu0
    %v5600 = vadd.f32 %v5511, %v5599
    %v5601 = vpop.f32.mrf.mxu0
    %v5602 = vadd.f32 %v5513, %v5601
    %5603 = vmatmul.bf16.gmra.mxu0 %v5433
    %v5604 = vpop.f32.mrf.mxu0
    %v5605 = vadd.f32 %v5516, %v5604
    %v5606 = vpop.f32.mrf.mxu0
    %v5607 = vadd.f32 %v5518, %v5606
    %5608 = vmatmul.bf16.gmra.mxu0 %v5435
    %v5609 = vpop.f32.mrf.mxu0
    %v5610 = vadd.f32 %v5521, %v5609
    %v5611 = vpop.f32.mrf.mxu0
    %v5612 = vadd.f32 %v5523, %v5611
    %5613 = vdwg.mxu0
    %5614 = vmatpush.bf16.msra.mxu0 %v926
    %5615 = vmatpush.bf16.msra.mxu0 %v924
    %5616 = vmatpush.bf16.msra.mxu0 %v922
    %5617 = vmatpush.bf16.msra.mxu0 %v920
    %5618 = vmatpush.bf16.msra.mxu0 %v918
    %5619 = vmatpush.bf16.msra.mxu0 %v916
    %5620 = vmatpush.bf16.msra.mxu0 %v914
    %5621 = vmatpush.bf16.msra.mxu0 %v912
    %5622 = vmatmul.bf16.gmra.mxu0 %v5404
    %v5623 = vpop.f32.mrf.mxu0
    %v5624 = vadd.f32 1e-05, %v5623
    %v5625 = vpop.f32.mrf.mxu0
    %v5626 = vadd.f32 1e-05, %v5625
    %5627 = vmatmul.bf16.gmra.mxu0 %v5406
    %v5628 = vpop.f32.mrf.mxu0
    %v5629 = vadd.f32 1e-05, %v5628
    %v5630 = vpop.f32.mrf.mxu0
    %v5631 = vadd.f32 1e-05, %v5630
    %5632 = vmatmul.bf16.gmra.mxu0 %v5408
    %v5633 = vpop.f32.mrf.mxu0
    %v5634 = vadd.f32 1e-05, %v5633
    %v5635 = vpop.f32.mrf.mxu0
    %v5636 = vadd.f32 1e-05, %v5635
    %5637 = vmatmul.bf16.gmra.mxu0 %v5410
    %v5638 = vpop.f32.mrf.mxu0
    %v5639 = vadd.f32 1e-05, %v5638
    %v5640 = vpop.f32.mrf.mxu0
    %v5641 = vadd.f32 1e-05, %v5640
    %5642 = vmatmul.bf16.gmra.mxu0 %v5412
    %v5643 = vpop.f32.mrf.mxu0
    %v5644 = vadd.f32 1e-05, %v5643
    %v5645 = vpop.f32.mrf.mxu0
    %v5646 = vadd.f32 1e-05, %v5645
    %5647 = vmatmul.bf16.gmra.mxu0 %v5414
    %v5648 = vpop.f32.mrf.mxu0
    %v5649 = vadd.f32 1e-05, %v5648
    %v5650 = vpop.f32.mrf.mxu0
    %v5651 = vadd.f32 1e-05, %v5650
    %5652 = vmatmul.bf16.gmra.mxu0 %v5416
    %v5653 = vpop.f32.mrf.mxu0
    %v5654 = vadd.f32 1e-05, %v5653
    %v5655 = vpop.f32.mrf.mxu0
    %v5656 = vadd.f32 1e-05, %v5655
    %5657 = vmatmul.bf16.gmra.mxu0 %v5418
    %v5658 = vpop.f32.mrf.mxu0
    %v5659 = vadd.f32 1e-05, %v5658
    %v5660 = vpop.f32.mrf.mxu0
    %v5661 = vadd.f32 1e-05, %v5660
    %5662 = vmatmul.bf16.gmra.mxu0 %v5420
    %v5663 = vpop.f32.mrf.mxu0
    %v5664 = vadd.f32 1e-05, %v5663
    %v5665 = vpop.f32.mrf.mxu0
    %v5666 = vadd.f32 1e-05, %v5665
    %5667 = vmatmul.bf16.gmra.mxu0 %v5422
    %v5668 = vpop.f32.mrf.mxu0
    %v5669 = vadd.f32 1e-05, %v5668
    %v5670 = vpop.f32.mrf.mxu0
    %v5671 = vadd.f32 1e-05, %v5670
    %5672 = vmatmul.bf16.gmra.mxu0 %v5424
    %v5673 = vpop.f32.mrf.mxu0
    %v5674 = vadd.f32 1e-05, %v5673
    %v5675 = vpop.f32.mrf.mxu0
    %v5676 = vadd.f32 1e-05, %v5675
    %5677 = vmatmul.bf16.gmra.mxu0 %v5426
    %v5678 = vpop.f32.mrf.mxu0
    %v5679 = vadd.f32 1e-05, %v5678
    %v5680 = vpop.f32.mrf.mxu0
    %v5681 = vadd.f32 1e-05, %v5680
    %5682 = vmatmul.bf16.gmra.mxu0 %v5428
    %v5683 = vpop.f32.mrf.mxu0
    %v5684 = vadd.f32 1e-05, %v5683
    %v5685 = vpop.f32.mrf.mxu0
    %v5686 = vadd.f32 1e-05, %v5685
    %5687 = vmatmul.bf16.gmra.mxu0 %v5430
    %v5688 = vpop.f32.mrf.mxu0
    %v5689 = vadd.f32 1e-05, %v5688
    %v5690 = vpop.f32.mrf.mxu0
    %v5691 = vadd.f32 1e-05, %v5690
    %5692 = vmatmul.bf16.gmra.mxu0 %v5432
    %v5693 = vpop.f32.mrf.mxu0
    %v5694 = vadd.f32 1e-05, %v5693
    %v5695 = vpop.f32.mrf.mxu0
    %v5696 = vadd.f32 1e-05, %v5695
    %5697 = vmatmul.bf16.gmra.mxu0 %v5434
    %v5698 = vpop.f32.mrf.mxu0
    %v5699 = vadd.f32 1e-05, %v5698
    %v5700 = vpop.f32.mrf.mxu0
    %v5701 = vadd.f32 1e-05, %v5700
    %5702 = vdwg.mxu0
    %5703 = vmatpush.bf16.msra.mxu0 %v942
    %5704 = vmatpush.bf16.msra.mxu0 %v940
    %5705 = vmatpush.bf16.msra.mxu0 %v938
    %5706 = vmatpush.bf16.msra.mxu0 %v936
    %5707 = vmatpush.bf16.msra.mxu0 %v934
    %5708 = vmatpush.bf16.msra.mxu0 %v932
    %5709 = vmatpush.bf16.msra.mxu0 %v930
    %5710 = vmatpush.bf16.msra.mxu0 %v928
    %5711 = vmatmul.bf16.gmra.mxu0 %v5405
    %v5712 = vpop.f32.mrf.mxu0
    %v5713 = vadd.f32 %v5624, %v5712
    %v5714 = vpop.f32.mrf.mxu0
    %v5715 = vadd.f32 %v5626, %v5714
    %5716 = vmatmul.bf16.gmra.mxu0 %v5407
    %v5717 = vpop.f32.mrf.mxu0
    %v5718 = vadd.f32 %v5629, %v5717
    %v5719 = vpop.f32.mrf.mxu0
    %v5720 = vadd.f32 %v5631, %v5719
    %5721 = vmatmul.bf16.gmra.mxu0 %v5409
    %v5722 = vpop.f32.mrf.mxu0
    %v5723 = vadd.f32 %v5634, %v5722
    %v5724 = vpop.f32.mrf.mxu0
    %v5725 = vadd.f32 %v5636, %v5724
    %5726 = vmatmul.bf16.gmra.mxu0 %v5411
    %v5727 = vpop.f32.mrf.mxu0
    %v5728 = vadd.f32 %v5639, %v5727
    %v5729 = vpop.f32.mrf.mxu0
    %v5730 = vadd.f32 %v5641, %v5729
    %5731 = vmatmul.bf16.gmra.mxu0 %v5413
    %v5732 = vpop.f32.mrf.mxu0
    %v5733 = vadd.f32 %v5644, %v5732
    %v5734 = vpop.f32.mrf.mxu0
    %v5735 = vadd.f32 %v5646, %v5734
    %5736 = vmatmul.bf16.gmra.mxu0 %v5415
    %v5737 = vpop.f32.mrf.mxu0
    %v5738 = vadd.f32 %v5649, %v5737
    %v5739 = vpop.f32.mrf.mxu0
    %v5740 = vadd.f32 %v5651, %v5739
    %5741 = vmatmul.bf16.gmra.mxu0 %v5417
    %v5742 = vpop.f32.mrf.mxu0
    %v5743 = vadd.f32 %v5654, %v5742
    %v5744 = vpop.f32.mrf.mxu0
    %v5745 = vadd.f32 %v5656, %v5744
    %5746 = vmatmul.bf16.gmra.mxu0 %v5419
    %v5747 = vpop.f32.mrf.mxu0
    %v5748 = vadd.f32 %v5659, %v5747
    %v5749 = vpop.f32.mrf.mxu0
    %v5750 = vadd.f32 %v5661, %v5749
    %5751 = vmatmul.bf16.gmra.mxu0 %v5421
    %v5752 = vpop.f32.mrf.mxu0
    %v5753 = vadd.f32 %v5664, %v5752
    %v5754 = vpop.f32.mrf.mxu0
    %v5755 = vadd.f32 %v5666, %v5754
    %5756 = vmatmul.bf16.gmra.mxu0 %v5423
    %v5757 = vpop.f32.mrf.mxu0
    %v5758 = vadd.f32 %v5669, %v5757
    %v5759 = vpop.f32.mrf.mxu0
    %v5760 = vadd.f32 %v5671, %v5759
    %5761 = vmatmul.bf16.gmra.mxu0 %v5425
    %v5762 = vpop.f32.mrf.mxu0
    %v5763 = vadd.f32 %v5674, %v5762
    %v5764 = vpop.f32.mrf.mxu0
    %v5765 = vadd.f32 %v5676, %v5764
    %5766 = vmatmul.bf16.gmra.mxu0 %v5427
    %v5767 = vpop.f32.mrf.mxu0
    %v5768 = vadd.f32 %v5679, %v5767
    %v5769 = vpop.f32.mrf.mxu0
    %v5770 = vadd.f32 %v5681, %v5769
    %5771 = vmatmul.bf16.gmra.mxu0 %v5429
    %v5772 = vpop.f32.mrf.mxu0
    %v5773 = vadd.f32 %v5684, %v5772
    %v5774 = vpop.f32.mrf.mxu0
    %v5775 = vadd.f32 %v5686, %v5774
    %5776 = vmatmul.bf16.gmra.mxu0 %v5431
    %v5777 = vpop.f32.mrf.mxu0
    %v5778 = vadd.f32 %v5689, %v5777
    %v5779 = vpop.f32.mrf.mxu0
    %v5780 = vadd.f32 %v5691, %v5779
    %5781 = vmatmul.bf16.gmra.mxu0 %v5433
    %v5782 = vpop.f32.mrf.mxu0
    %v5783 = vadd.f32 %v5694, %v5782
    %v5784 = vpop.f32.mrf.mxu0
    %v5785 = vadd.f32 %v5696, %v5784
    %5786 = vmatmul.bf16.gmra.mxu0 %v5435
    %v5787 = vpop.f32.mrf.mxu0
    %v5788 = vadd.f32 %v5699, %v5787
    %v5789 = vpop.f32.mrf.mxu0
    %v5790 = vadd.f32 %v5701, %v5789
    %5791 = vdwg.mxu0
    %v5792 = vrsqrt.pop %v5535
    %v5793 = vmul.f32 %v5792, %v5535
    %v5794 = vmul.f32 %v5793, %v5792
    %v5795 = vmul.f32 0.5, %v5794
    %v5796 = vsub.f32 1.5, %v5795
    %v5797 = vmul.f32 %v5792, %v5796
    %vm5798 = vweird.f32 %v5535
    %vm5799 = vweird.f32 %v5792
    %vm5800 = vmor %vm5798, %vm5799
    %v5801 = vsel %vm5800, %v5792, %v5797
    %v5802 = vrsqrt.pop %v5713
    %v5803 = vmul.f32 %v5802, %v5713
    %v5804 = vmul.f32 %v5803, %v5802
    %v5805 = vmul.f32 0.5, %v5804
    %v5806 = vsub.f32 1.5, %v5805
    %v5807 = vmul.f32 %v5802, %v5806
    %vm5808 = vweird.f32 %v5713
    %vm5809 = vweird.f32 %v5802
    %vm5810 = vmor %vm5808, %vm5809
    %v5811 = vsel %vm5810, %v5802, %v5807
    %v5812 = vrsqrt.pop %v5537
    %v5813 = vmul.f32 %v5812, %v5537
    %v5814 = vmul.f32 %v5813, %v5812
    %v5815 = vmul.f32 0.5, %v5814
    %v5816 = vsub.f32 1.5, %v5815
    %v5817 = vmul.f32 %v5812, %v5816
    %vm5818 = vweird.f32 %v5537
    %vm5819 = vweird.f32 %v5812
    %vm5820 = vmor %vm5818, %vm5819
    %v5821 = vsel %vm5820, %v5812, %v5817
    %v5822 = vrsqrt.pop %v5715
    %v5823 = vmul.f32 %v5822, %v5715
    %v5824 = vmul.f32 %v5823, %v5822
    %v5825 = vmul.f32 0.5, %v5824
    %v5826 = vsub.f32 1.5, %v5825
    %v5827 = vmul.f32 %v5822, %v5826
    %vm5828 = vweird.f32 %v5715
    %vm5829 = vweird.f32 %v5822
    %vm5830 = vmor %vm5828, %vm5829
    %v5831 = vsel %vm5830, %v5822, %v5827
    %v5832 = vrsqrt.pop %v5540
    %v5833 = vmul.f32 %v5832, %v5540
    %v5834 = vmul.f32 %v5833, %v5832
    %v5835 = vmul.f32 0.5, %v5834
    %v5836 = vsub.f32 1.5, %v5835
    %v5837 = vmul.f32 %v5832, %v5836
    %vm5838 = vweird.f32 %v5540
    %vm5839 = vweird.f32 %v5832
    %vm5840 = vmor %vm5838, %vm5839
    %v5841 = vsel %vm5840, %v5832, %v5837
    %v5842 = vrsqrt.pop %v5718
    %v5843 = vmul.f32 %v5842, %v5718
    %v5844 = vmul.f32 %v5843, %v5842
    %v5845 = vmul.f32 0.5, %v5844
    %v5846 = vsub.f32 1.5, %v5845
    %v5847 = vmul.f32 %v5842, %v5846
    %vm5848 = vweird.f32 %v5718
    %vm5849 = vweird.f32 %v5842
    %vm5850 = vmor %vm5848, %vm5849
    %v5851 = vsel %vm5850, %v5842, %v5847
    %v5852 = vrsqrt.pop %v5542
    %v5853 = vmul.f32 %v5852, %v5542
    %v5854 = vmul.f32 %v5853, %v5852
    %v5855 = vmul.f32 0.5, %v5854
    %v5856 = vsub.f32 1.5, %v5855
    %v5857 = vmul.f32 %v5852, %v5856
    %vm5858 = vweird.f32 %v5542
    %vm5859 = vweird.f32 %v5852
    %vm5860 = vmor %vm5858, %vm5859
    %v5861 = vsel %vm5860, %v5852, %v5857
    %v5862 = vrsqrt.pop %v5720
    %v5863 = vmul.f32 %v5862, %v5720
    %v5864 = vmul.f32 %v5863, %v5862
    %v5865 = vmul.f32 0.5, %v5864
    %v5866 = vsub.f32 1.5, %v5865
    %v5867 = vmul.f32 %v5862, %v5866
    %vm5868 = vweird.f32 %v5720
    %vm5869 = vweird.f32 %v5862
    %vm5870 = vmor %vm5868, %vm5869
    %v5871 = vsel %vm5870, %v5862, %v5867
    %v5872 = vrsqrt.pop %v5545
    %v5873 = vmul.f32 %v5872, %v5545
    %v5874 = vmul.f32 %v5873, %v5872
    %v5875 = vmul.f32 0.5, %v5874
    %v5876 = vsub.f32 1.5, %v5875
    %v5877 = vmul.f32 %v5872, %v5876
    %vm5878 = vweird.f32 %v5545
    %vm5879 = vweird.f32 %v5872
    %vm5880 = vmor %vm5878, %vm5879
    %v5881 = vsel %vm5880, %v5872, %v5877
    %v5882 = vrsqrt.pop %v5723
    %v5883 = vmul.f32 %v5882, %v5723
    %v5884 = vmul.f32 %v5883, %v5882
    %v5885 = vmul.f32 0.5, %v5884
    %v5886 = vsub.f32 1.5, %v5885
    %v5887 = vmul.f32 %v5882, %v5886
    %vm5888 = vweird.f32 %v5723
    %vm5889 = vweird.f32 %v5882
    %vm5890 = vmor %vm5888, %vm5889
    %v5891 = vsel %vm5890, %v5882, %v5887
    %v5892 = vrsqrt.pop %v5547
    %v5893 = vmul.f32 %v5892, %v5547
    %v5894 = vmul.f32 %v5893, %v5892
    %v5895 = vmul.f32 0.5, %v5894
    %v5896 = vsub.f32 1.5, %v5895
    %v5897 = vmul.f32 %v5892, %v5896
    %vm5898 = vweird.f32 %v5547
    %vm5899 = vweird.f32 %v5892
    %vm5900 = vmor %vm5898, %vm5899
    %v5901 = vsel %vm5900, %v5892, %v5897
    %v5902 = vrsqrt.pop %v5725
    %v5903 = vmul.f32 %v5902, %v5725
    %v5904 = vmul.f32 %v5903, %v5902
    %v5905 = vmul.f32 0.5, %v5904
    %v5906 = vsub.f32 1.5, %v5905
    %v5907 = vmul.f32 %v5902, %v5906
    %vm5908 = vweird.f32 %v5725
    %vm5909 = vweird.f32 %v5902
    %vm5910 = vmor %vm5908, %vm5909
    %v5911 = vsel %vm5910, %v5902, %v5907
    %v5912 = vrsqrt.pop %v5550
    %v5913 = vmul.f32 %v5912, %v5550
    %v5914 = vmul.f32 %v5913, %v5912
    %v5915 = vmul.f32 0.5, %v5914
    %v5916 = vsub.f32 1.5, %v5915
    %v5917 = vmul.f32 %v5912, %v5916
    %vm5918 = vweird.f32 %v5550
    %vm5919 = vweird.f32 %v5912
    %vm5920 = vmor %vm5918, %vm5919
    %v5921 = vsel %vm5920, %v5912, %v5917
    %v5922 = vrsqrt.pop %v5728
    %v5923 = vmul.f32 %v5922, %v5728
    %v5924 = vmul.f32 %v5923, %v5922
    %v5925 = vmul.f32 0.5, %v5924
    %v5926 = vsub.f32 1.5, %v5925
    %v5927 = vmul.f32 %v5922, %v5926
    %vm5928 = vweird.f32 %v5728
    %vm5929 = vweird.f32 %v5922
    %vm5930 = vmor %vm5928, %vm5929
    %v5931 = vsel %vm5930, %v5922, %v5927
    %v5932 = vrsqrt.pop %v5552
    %v5933 = vmul.f32 %v5932, %v5552
    %v5934 = vmul.f32 %v5933, %v5932
    %v5935 = vmul.f32 0.5, %v5934
    %v5936 = vsub.f32 1.5, %v5935
    %v5937 = vmul.f32 %v5932, %v5936
    %vm5938 = vweird.f32 %v5552
    %vm5939 = vweird.f32 %v5932
    %vm5940 = vmor %vm5938, %vm5939
    %v5941 = vsel %vm5940, %v5932, %v5937
    %v5942 = vrsqrt.pop %v5730
    %v5943 = vmul.f32 %v5942, %v5730
    %v5944 = vmul.f32 %v5943, %v5942
    %v5945 = vmul.f32 0.5, %v5944
    %v5946 = vsub.f32 1.5, %v5945
    %v5947 = vmul.f32 %v5942, %v5946
    %vm5948 = vweird.f32 %v5730
    %vm5949 = vweird.f32 %v5942
    %vm5950 = vmor %vm5948, %vm5949
    %v5951 = vsel %vm5950, %v5942, %v5947
    %v5952 = vrsqrt.pop %v5555
    %v5953 = vmul.f32 %v5952, %v5555
    %v5954 = vmul.f32 %v5953, %v5952
    %v5955 = vmul.f32 0.5, %v5954
    %v5956 = vsub.f32 1.5, %v5955
    %v5957 = vmul.f32 %v5952, %v5956
    %vm5958 = vweird.f32 %v5555
    %vm5959 = vweird.f32 %v5952
    %vm5960 = vmor %vm5958, %vm5959
    %v5961 = vsel %vm5960, %v5952, %v5957
    %v5962 = vrsqrt.pop %v5733
    %v5963 = vmul.f32 %v5962, %v5733
    %v5964 = vmul.f32 %v5963, %v5962
    %v5965 = vmul.f32 0.5, %v5964
    %v5966 = vsub.f32 1.5, %v5965
    %v5967 = vmul.f32 %v5962, %v5966
    %vm5968 = vweird.f32 %v5733
    %vm5969 = vweird.f32 %v5962
    %vm5970 = vmor %vm5968, %vm5969
    %v5971 = vsel %vm5970, %v5962, %v5967
    %v5972 = vrsqrt.pop %v5557
    %v5973 = vmul.f32 %v5972, %v5557
    %v5974 = vmul.f32 %v5973, %v5972
    %v5975 = vmul.f32 0.5, %v5974
    %v5976 = vsub.f32 1.5, %v5975
    %v5977 = vmul.f32 %v5972, %v5976
    %vm5978 = vweird.f32 %v5557
    %vm5979 = vweird.f32 %v5972
    %vm5980 = vmor %vm5978, %vm5979
    %v5981 = vsel %vm5980, %v5972, %v5977
    %v5982 = vrsqrt.pop %v5735
    %v5983 = vmul.f32 %v5982, %v5735
    %v5984 = vmul.f32 %v5983, %v5982
    %v5985 = vmul.f32 0.5, %v5984
    %v5986 = vsub.f32 1.5, %v5985
    %v5987 = vmul.f32 %v5982, %v5986
    %vm5988 = vweird.f32 %v5735
    %vm5989 = vweird.f32 %v5982
    %vm5990 = vmor %vm5988, %vm5989
    %v5991 = vsel %vm5990, %v5982, %v5987
    %v5992 = vrsqrt.pop %v5560
    %v5993 = vmul.f32 %v5992, %v5560
    %v5994 = vmul.f32 %v5993, %v5992
    %v5995 = vmul.f32 0.5, %v5994
    %v5996 = vsub.f32 1.5, %v5995
    %v5997 = vmul.f32 %v5992, %v5996
    %vm5998 = vweird.f32 %v5560
    %vm5999 = vweird.f32 %v5992
    %vm6000 = vmor %vm5998, %vm5999
    %v6001 = vsel %vm6000, %v5992, %v5997
    %v6002 = vrsqrt.pop %v5738
    %v6003 = vmul.f32 %v6002, %v5738
    %v6004 = vmul.f32 %v6003, %v6002
    %v6005 = vmul.f32 0.5, %v6004
    %v6006 = vsub.f32 1.5, %v6005
    %v6007 = vmul.f32 %v6002, %v6006
    %vm6008 = vweird.f32 %v5738
    %vm6009 = vweird.f32 %v6002
    %vm6010 = vmor %vm6008, %vm6009
    %v6011 = vsel %vm6010, %v6002, %v6007
    %v6012 = vrsqrt.pop %v5562
    %v6013 = vmul.f32 %v6012, %v5562
    %v6014 = vmul.f32 %v6013, %v6012
    %v6015 = vmul.f32 0.5, %v6014
    %v6016 = vsub.f32 1.5, %v6015
    %v6017 = vmul.f32 %v6012, %v6016
    %vm6018 = vweird.f32 %v5562
    %vm6019 = vweird.f32 %v6012
    %vm6020 = vmor %vm6018, %vm6019
    %v6021 = vsel %vm6020, %v6012, %v6017
    %v6022 = vrsqrt.pop %v5740
    %v6023 = vmul.f32 %v6022, %v5740
    %v6024 = vmul.f32 %v6023, %v6022
    %v6025 = vmul.f32 0.5, %v6024
    %v6026 = vsub.f32 1.5, %v6025
    %v6027 = vmul.f32 %v6022, %v6026
    %vm6028 = vweird.f32 %v5740
    %vm6029 = vweird.f32 %v6022
    %vm6030 = vmor %vm6028, %vm6029
    %v6031 = vsel %vm6030, %v6022, %v6027
    %v6032 = vrsqrt.pop %v5565
    %v6033 = vmul.f32 %v6032, %v5565
    %v6034 = vmul.f32 %v6033, %v6032
    %v6035 = vmul.f32 0.5, %v6034
    %v6036 = vsub.f32 1.5, %v6035
    %v6037 = vmul.f32 %v6032, %v6036
    %vm6038 = vweird.f32 %v5565
    %vm6039 = vweird.f32 %v6032
    %vm6040 = vmor %vm6038, %vm6039
    %v6041 = vsel %vm6040, %v6032, %v6037
    %v6042 = vrsqrt.pop %v5743
    %v6043 = vmul.f32 %v6042, %v5743
    %v6044 = vmul.f32 %v6043, %v6042
    %v6045 = vmul.f32 0.5, %v6044
    %v6046 = vsub.f32 1.5, %v6045
    %v6047 = vmul.f32 %v6042, %v6046
    %vm6048 = vweird.f32 %v5743
    %vm6049 = vweird.f32 %v6042
    %vm6050 = vmor %vm6048, %vm6049
    %v6051 = vsel %vm6050, %v6042, %v6047
    %v6052 = vrsqrt.pop %v5567
    %v6053 = vmul.f32 %v6052, %v5567
    %v6054 = vmul.f32 %v6053, %v6052
    %v6055 = vmul.f32 0.5, %v6054
    %v6056 = vsub.f32 1.5, %v6055
    %v6057 = vmul.f32 %v6052, %v6056
    %vm6058 = vweird.f32 %v5567
    %vm6059 = vweird.f32 %v6052
    %vm6060 = vmor %vm6058, %vm6059
    %v6061 = vsel %vm6060, %v6052, %v6057
    %v6062 = vrsqrt.pop %v5745
    %v6063 = vmul.f32 %v6062, %v5745
    %v6064 = vmul.f32 %v6063, %v6062
    %v6065 = vmul.f32 0.5, %v6064
    %v6066 = vsub.f32 1.5, %v6065
    %v6067 = vmul.f32 %v6062, %v6066
    %vm6068 = vweird.f32 %v5745
    %vm6069 = vweird.f32 %v6062
    %vm6070 = vmor %vm6068, %vm6069
    %v6071 = vsel %vm6070, %v6062, %v6067
    %v6072 = vrsqrt.pop %v5570
    %v6073 = vmul.f32 %v6072, %v5570
    %v6074 = vmul.f32 %v6073, %v6072
    %v6075 = vmul.f32 0.5, %v6074
    %v6076 = vsub.f32 1.5, %v6075
    %v6077 = vmul.f32 %v6072, %v6076
    %vm6078 = vweird.f32 %v5570
    %vm6079 = vweird.f32 %v6072
    %vm6080 = vmor %vm6078, %vm6079
    %v6081 = vsel %vm6080, %v6072, %v6077
    %v6082 = vrsqrt.pop %v5748
    %v6083 = vmul.f32 %v6082, %v5748
    %v6084 = vmul.f32 %v6083, %v6082
    %v6085 = vmul.f32 0.5, %v6084
    %v6086 = vsub.f32 1.5, %v6085
    %v6087 = vmul.f32 %v6082, %v6086
    %vm6088 = vweird.f32 %v5748
    %vm6089 = vweird.f32 %v6082
    %vm6090 = vmor %vm6088, %vm6089
    %v6091 = vsel %vm6090, %v6082, %v6087
    %v6092 = vrsqrt.pop %v5572
    %v6093 = vmul.f32 %v6092, %v5572
    %v6094 = vmul.f32 %v6093, %v6092
    %v6095 = vmul.f32 0.5, %v6094
    %v6096 = vsub.f32 1.5, %v6095
    %v6097 = vmul.f32 %v6092, %v6096
    %vm6098 = vweird.f32 %v5572
    %vm6099 = vweird.f32 %v6092
    %vm6100 = vmor %vm6098, %vm6099
    %v6101 = vsel %vm6100, %v6092, %v6097
    %v6102 = vrsqrt.pop %v5750
    %v6103 = vmul.f32 %v6102, %v5750
    %v6104 = vmul.f32 %v6103, %v6102
    %v6105 = vmul.f32 0.5, %v6104
    %v6106 = vsub.f32 1.5, %v6105
    %v6107 = vmul.f32 %v6102, %v6106
    %vm6108 = vweird.f32 %v5750
    %vm6109 = vweird.f32 %v6102
    %vm6110 = vmor %vm6108, %vm6109
    %v6111 = vsel %vm6110, %v6102, %v6107
    %v6112 = vrsqrt.pop %v5575
    %v6113 = vmul.f32 %v6112, %v5575
    %v6114 = vmul.f32 %v6113, %v6112
    %v6115 = vmul.f32 0.5, %v6114
    %v6116 = vsub.f32 1.5, %v6115
    %v6117 = vmul.f32 %v6112, %v6116
    %vm6118 = vweird.f32 %v5575
    %vm6119 = vweird.f32 %v6112
    %vm6120 = vmor %vm6118, %vm6119
    %v6121 = vsel %vm6120, %v6112, %v6117
    %v6122 = vrsqrt.pop %v5753
    %v6123 = vmul.f32 %v6122, %v5753
    %v6124 = vmul.f32 %v6123, %v6122
    %v6125 = vmul.f32 0.5, %v6124
    %v6126 = vsub.f32 1.5, %v6125
    %v6127 = vmul.f32 %v6122, %v6126
    %vm6128 = vweird.f32 %v5753
    %vm6129 = vweird.f32 %v6122
    %vm6130 = vmor %vm6128, %vm6129
    %v6131 = vsel %vm6130, %v6122, %v6127
    %v6132 = vrsqrt.pop %v5577
    %v6133 = vmul.f32 %v6132, %v5577
    %v6134 = vmul.f32 %v6133, %v6132
    %v6135 = vmul.f32 0.5, %v6134
    %v6136 = vsub.f32 1.5, %v6135
    %v6137 = vmul.f32 %v6132, %v6136
    %vm6138 = vweird.f32 %v5577
    %vm6139 = vweird.f32 %v6132
    %vm6140 = vmor %vm6138, %vm6139
    %v6141 = vsel %vm6140, %v6132, %v6137
    %v6142 = vrsqrt.pop %v5755
    %v6143 = vmul.f32 %v6142, %v5755
    %v6144 = vmul.f32 %v6143, %v6142
    %v6145 = vmul.f32 0.5, %v6144
    %v6146 = vsub.f32 1.5, %v6145
    %v6147 = vmul.f32 %v6142, %v6146
    %vm6148 = vweird.f32 %v5755
    %vm6149 = vweird.f32 %v6142
    %vm6150 = vmor %vm6148, %vm6149
    %v6151 = vsel %vm6150, %v6142, %v6147
    %v6152 = vrsqrt.pop %v5580
    %v6153 = vmul.f32 %v6152, %v5580
    %v6154 = vmul.f32 %v6153, %v6152
    %v6155 = vmul.f32 0.5, %v6154
    %v6156 = vsub.f32 1.5, %v6155
    %v6157 = vmul.f32 %v6152, %v6156
    %vm6158 = vweird.f32 %v5580
    %vm6159 = vweird.f32 %v6152
    %vm6160 = vmor %vm6158, %vm6159
    %v6161 = vsel %vm6160, %v6152, %v6157
    %v6162 = vrsqrt.pop %v5758
    %v6163 = vmul.f32 %v6162, %v5758
    %v6164 = vmul.f32 %v6163, %v6162
    %v6165 = vmul.f32 0.5, %v6164
    %v6166 = vsub.f32 1.5, %v6165
    %v6167 = vmul.f32 %v6162, %v6166
    %vm6168 = vweird.f32 %v5758
    %vm6169 = vweird.f32 %v6162
    %vm6170 = vmor %vm6168, %vm6169
    %v6171 = vsel %vm6170, %v6162, %v6167
    %v6172 = vrsqrt.pop %v5582
    %v6173 = vmul.f32 %v6172, %v5582
    %v6174 = vmul.f32 %v6173, %v6172
    %v6175 = vmul.f32 0.5, %v6174
    %v6176 = vsub.f32 1.5, %v6175
    %v6177 = vmul.f32 %v6172, %v6176
    %vm6178 = vweird.f32 %v5582
    %vm6179 = vweird.f32 %v6172
    %vm6180 = vmor %vm6178, %vm6179
    %v6181 = vsel %vm6180, %v6172, %v6177
    %v6182 = vrsqrt.pop %v5760
    %v6183 = vmul.f32 %v6182, %v5760
    %v6184 = vmul.f32 %v6183, %v6182
    %v6185 = vmul.f32 0.5, %v6184
    %v6186 = vsub.f32 1.5, %v6185
    %v6187 = vmul.f32 %v6182, %v6186
    %vm6188 = vweird.f32 %v5760
    %vm6189 = vweird.f32 %v6182
    %vm6190 = vmor %vm6188, %vm6189
    %v6191 = vsel %vm6190, %v6182, %v6187
    %v6192 = vrsqrt.pop %v5585
    %v6193 = vmul.f32 %v6192, %v5585
    %v6194 = vmul.f32 %v6193, %v6192
    %v6195 = vmul.f32 0.5, %v6194
    %v6196 = vsub.f32 1.5, %v6195
    %v6197 = vmul.f32 %v6192, %v6196
    %vm6198 = vweird.f32 %v5585
    %vm6199 = vweird.f32 %v6192
    %vm6200 = vmor %vm6198, %vm6199
    %v6201 = vsel %vm6200, %v6192, %v6197
    %v6202 = vrsqrt.pop %v5763
    %v6203 = vmul.f32 %v6202, %v5763
    %v6204 = vmul.f32 %v6203, %v6202
    %v6205 = vmul.f32 0.5, %v6204
    %v6206 = vsub.f32 1.5, %v6205
    %v6207 = vmul.f32 %v6202, %v6206
    %vm6208 = vweird.f32 %v5763
    %vm6209 = vweird.f32 %v6202
    %vm6210 = vmor %vm6208, %vm6209
    %v6211 = vsel %vm6210, %v6202, %v6207
    %v6212 = vrsqrt.pop %v5587
    %v6213 = vmul.f32 %v6212, %v5587
    %v6214 = vmul.f32 %v6213, %v6212
    %v6215 = vmul.f32 0.5, %v6214
    %v6216 = vsub.f32 1.5, %v6215
    %v6217 = vmul.f32 %v6212, %v6216
    %vm6218 = vweird.f32 %v5587
    %vm6219 = vweird.f32 %v6212
    %vm6220 = vmor %vm6218, %vm6219
    %v6221 = vsel %vm6220, %v6212, %v6217
    %v6222 = vrsqrt.pop %v5765
    %v6223 = vmul.f32 %v6222, %v5765
    %v6224 = vmul.f32 %v6223, %v6222
    %v6225 = vmul.f32 0.5, %v6224
    %v6226 = vsub.f32 1.5, %v6225
    %v6227 = vmul.f32 %v6222, %v6226
    %vm6228 = vweird.f32 %v5765
    %vm6229 = vweird.f32 %v6222
    %vm6230 = vmor %vm6228, %vm6229
    %v6231 = vsel %vm6230, %v6222, %v6227
    %v6232 = vrsqrt.pop %v5590
    %v6233 = vmul.f32 %v6232, %v5590
    %v6234 = vmul.f32 %v6233, %v6232
    %v6235 = vmul.f32 0.5, %v6234
    %v6236 = vsub.f32 1.5, %v6235
    %v6237 = vmul.f32 %v6232, %v6236
    %vm6238 = vweird.f32 %v5590
    %vm6239 = vweird.f32 %v6232
    %vm6240 = vmor %vm6238, %vm6239
    %v6241 = vsel %vm6240, %v6232, %v6237
    %v6242 = vrsqrt.pop %v5768
    %v6243 = vmul.f32 %v6242, %v5768
    %v6244 = vmul.f32 %v6243, %v6242
    %v6245 = vmul.f32 0.5, %v6244
    %v6246 = vsub.f32 1.5, %v6245
    %v6247 = vmul.f32 %v6242, %v6246
    %vm6248 = vweird.f32 %v5768
    %vm6249 = vweird.f32 %v6242
    %vm6250 = vmor %vm6248, %vm6249
    %v6251 = vsel %vm6250, %v6242, %v6247
    %v6252 = vrsqrt.pop %v5592
    %v6253 = vmul.f32 %v6252, %v5592
    %v6254 = vmul.f32 %v6253, %v6252
    %v6255 = vmul.f32 0.5, %v6254
    %v6256 = vsub.f32 1.5, %v6255
    %v6257 = vmul.f32 %v6252, %v6256
    %vm6258 = vweird.f32 %v5592
    %vm6259 = vweird.f32 %v6252
    %vm6260 = vmor %vm6258, %vm6259
    %v6261 = vsel %vm6260, %v6252, %v6257
    %v6262 = vrsqrt.pop %v5770
    %v6263 = vmul.f32 %v6262, %v5770
    %v6264 = vmul.f32 %v6263, %v6262
    %v6265 = vmul.f32 0.5, %v6264
    %v6266 = vsub.f32 1.5, %v6265
    %v6267 = vmul.f32 %v6262, %v6266
    %vm6268 = vweird.f32 %v5770
    %vm6269 = vweird.f32 %v6262
    %vm6270 = vmor %vm6268, %vm6269
    %v6271 = vsel %vm6270, %v6262, %v6267
    %v6272 = vrsqrt.pop %v5595
    %v6273 = vmul.f32 %v6272, %v5595
    %v6274 = vmul.f32 %v6273, %v6272
    %v6275 = vmul.f32 0.5, %v6274
    %v6276 = vsub.f32 1.5, %v6275
    %v6277 = vmul.f32 %v6272, %v6276
    %vm6278 = vweird.f32 %v5595
    %vm6279 = vweird.f32 %v6272
    %vm6280 = vmor %vm6278, %vm6279
    %v6281 = vsel %vm6280, %v6272, %v6277
    %v6282 = vrsqrt.pop %v5773
    %v6283 = vmul.f32 %v6282, %v5773
    %v6284 = vmul.f32 %v6283, %v6282
    %v6285 = vmul.f32 0.5, %v6284
    %v6286 = vsub.f32 1.5, %v6285
    %v6287 = vmul.f32 %v6282, %v6286
    %vm6288 = vweird.f32 %v5773
    %vm6289 = vweird.f32 %v6282
    %vm6290 = vmor %vm6288, %vm6289
    %v6291 = vsel %vm6290, %v6282, %v6287
    %v6292 = vrsqrt.pop %v5597
    %v6293 = vmul.f32 %v6292, %v5597
    %v6294 = vmul.f32 %v6293, %v6292
    %v6295 = vmul.f32 0.5, %v6294
    %v6296 = vsub.f32 1.5, %v6295
    %v6297 = vmul.f32 %v6292, %v6296
    %vm6298 = vweird.f32 %v5597
    %vm6299 = vweird.f32 %v6292
    %vm6300 = vmor %vm6298, %vm6299
    %v6301 = vsel %vm6300, %v6292, %v6297
    %v6302 = vrsqrt.pop %v5775
    %v6303 = vmul.f32 %v6302, %v5775
    %v6304 = vmul.f32 %v6303, %v6302
    %v6305 = vmul.f32 0.5, %v6304
    %v6306 = vsub.f32 1.5, %v6305
    %v6307 = vmul.f32 %v6302, %v6306
    %vm6308 = vweird.f32 %v5775
    %vm6309 = vweird.f32 %v6302
    %vm6310 = vmor %vm6308, %vm6309
    %v6311 = vsel %vm6310, %v6302, %v6307
    %v6312 = vrsqrt.pop %v5600
    %v6313 = vmul.f32 %v6312, %v5600
    %v6314 = vmul.f32 %v6313, %v6312
    %v6315 = vmul.f32 0.5, %v6314
    %v6316 = vsub.f32 1.5, %v6315
    %v6317 = vmul.f32 %v6312, %v6316
    %vm6318 = vweird.f32 %v5600
    %vm6319 = vweird.f32 %v6312
    %vm6320 = vmor %vm6318, %vm6319
    %v6321 = vsel %vm6320, %v6312, %v6317
    %v6322 = vrsqrt.pop %v5778
    %v6323 = vmul.f32 %v6322, %v5778
    %v6324 = vmul.f32 %v6323, %v6322
    %v6325 = vmul.f32 0.5, %v6324
    %v6326 = vsub.f32 1.5, %v6325
    %v6327 = vmul.f32 %v6322, %v6326
    %vm6328 = vweird.f32 %v5778
    %vm6329 = vweird.f32 %v6322
    %vm6330 = vmor %vm6328, %vm6329
    %v6331 = vsel %vm6330, %v6322, %v6327
    %v6332 = vrsqrt.pop %v5602
    %v6333 = vmul.f32 %v6332, %v5602
    %v6334 = vmul.f32 %v6333, %v6332
    %v6335 = vmul.f32 0.5, %v6334
    %v6336 = vsub.f32 1.5, %v6335
    %v6337 = vmul.f32 %v6332, %v6336
    %vm6338 = vweird.f32 %v5602
    %vm6339 = vweird.f32 %v6332
    %vm6340 = vmor %vm6338, %vm6339
    %v6341 = vsel %vm6340, %v6332, %v6337
    %v6342 = vrsqrt.pop %v5780
    %v6343 = vmul.f32 %v6342, %v5780
    %v6344 = vmul.f32 %v6343, %v6342
    %v6345 = vmul.f32 0.5, %v6344
    %v6346 = vsub.f32 1.5, %v6345
    %v6347 = vmul.f32 %v6342, %v6346
    %vm6348 = vweird.f32 %v5780
    %vm6349 = vweird.f32 %v6342
    %vm6350 = vmor %vm6348, %vm6349
    %v6351 = vsel %vm6350, %v6342, %v6347
    %v6352 = vrsqrt.pop %v5605
    %v6353 = vmul.f32 %v6352, %v5605
    %v6354 = vmul.f32 %v6353, %v6352
    %v6355 = vmul.f32 0.5, %v6354
    %v6356 = vsub.f32 1.5, %v6355
    %v6357 = vmul.f32 %v6352, %v6356
    %vm6358 = vweird.f32 %v5605
    %vm6359 = vweird.f32 %v6352
    %vm6360 = vmor %vm6358, %vm6359
    %v6361 = vsel %vm6360, %v6352, %v6357
    %v6362 = vrsqrt.pop %v5783
    %v6363 = vmul.f32 %v6362, %v5783
    %v6364 = vmul.f32 %v6363, %v6362
    %v6365 = vmul.f32 0.5, %v6364
    %v6366 = vsub.f32 1.5, %v6365
    %v6367 = vmul.f32 %v6362, %v6366
    %vm6368 = vweird.f32 %v5783
    %vm6369 = vweird.f32 %v6362
    %vm6370 = vmor %vm6368, %vm6369
    %v6371 = vsel %vm6370, %v6362, %v6367
    %v6372 = vrsqrt.pop %v5607
    %v6373 = vmul.f32 %v6372, %v5607
    %v6374 = vmul.f32 %v6373, %v6372
    %v6375 = vmul.f32 0.5, %v6374
    %v6376 = vsub.f32 1.5, %v6375
    %v6377 = vmul.f32 %v6372, %v6376
    %vm6378 = vweird.f32 %v5607
    %vm6379 = vweird.f32 %v6372
    %vm6380 = vmor %vm6378, %vm6379
    %v6381 = vsel %vm6380, %v6372, %v6377
    %v6382 = vrsqrt.pop %v5785
    %v6383 = vmul.f32 %v6382, %v5785
    %v6384 = vmul.f32 %v6383, %v6382
    %v6385 = vmul.f32 0.5, %v6384
    %v6386 = vsub.f32 1.5, %v6385
    %v6387 = vmul.f32 %v6382, %v6386
    %vm6388 = vweird.f32 %v5785
    %vm6389 = vweird.f32 %v6382
    %vm6390 = vmor %vm6388, %vm6389
    %v6391 = vsel %vm6390, %v6382, %v6387
    %v6392 = vrsqrt.pop %v5610
    %v6393 = vmul.f32 %v6392, %v5610
    %v6394 = vmul.f32 %v6393, %v6392
    %v6395 = vmul.f32 0.5, %v6394
    %v6396 = vsub.f32 1.5, %v6395
    %v6397 = vmul.f32 %v6392, %v6396
    %vm6398 = vweird.f32 %v5610
    %vm6399 = vweird.f32 %v6392
    %vm6400 = vmor %vm6398, %vm6399
    %v6401 = vsel %vm6400, %v6392, %v6397
    %v6402 = vrsqrt.pop %v5788
    %v6403 = vmul.f32 %v6402, %v5788
    %v6404 = vmul.f32 %v6403, %v6402
    %v6405 = vmul.f32 0.5, %v6404
    %v6406 = vsub.f32 1.5, %v6405
    %v6407 = vmul.f32 %v6402, %v6406
    %vm6408 = vweird.f32 %v5788
    %vm6409 = vweird.f32 %v6402
    %vm6410 = vmor %vm6408, %vm6409
    %v6411 = vsel %vm6410, %v6402, %v6407
    %v6412 = vrsqrt.pop %v5612
    %v6413 = vmul.f32 %v6412, %v5612
    %v6414 = vmul.f32 %v6413, %v6412
    %v6415 = vmul.f32 0.5, %v6414
    %v6416 = vsub.f32 1.5, %v6415
    %v6417 = vmul.f32 %v6412, %v6416
    %vm6418 = vweird.f32 %v5612
    %vm6419 = vweird.f32 %v6412
    %vm6420 = vmor %vm6418, %vm6419
    %v6421 = vsel %vm6420, %v6412, %v6417
    %v6422 = vrsqrt.pop %v5790
    %v6423 = vmul.f32 %v6422, %v5790
    %v6424 = vmul.f32 %v6423, %v6422
    %v6425 = vmul.f32 0.5, %v6424
    %v6426 = vsub.f32 1.5, %v6425
    %v6427 = vmul.f32 %v6422, %v6426
    %vm6428 = vweird.f32 %v5790
    %vm6429 = vweird.f32 %v6422
    %vm6430 = vmor %vm6428, %vm6429
    %v6431 = vsel %vm6430, %v6422, %v6427
    %v6432 = vmul.f32 %v5276, %v5801
    %v6433 = vmul.f32 %v5277, %v5811
    %v6434 = vmul.f32 %v5278, %v5821
    %v6435 = vmul.f32 %v5279, %v5831
    %v6436 = vmul.f32 %v5280, %v5841
    %v6437 = vmul.f32 %v5281, %v5851
    %v6438 = vmul.f32 %v5282, %v5861
    %v6439 = vmul.f32 %v5283, %v5871
    %v6440 = vmul.f32 %v5284, %v5881
    %v6441 = vmul.f32 %v5285, %v5891
    %v6442 = vmul.f32 %v5286, %v5901
    %v6443 = vmul.f32 %v5287, %v5911
    %v6444 = vmul.f32 %v5288, %v5921
    %v6445 = vmul.f32 %v5289, %v5931
    %v6446 = vmul.f32 %v5290, %v5941
    %v6447 = vmul.f32 %v5291, %v5951
    %v6448 = vmul.f32 %v5292, %v5961
    %v6449 = vmul.f32 %v5293, %v5971
    %v6450 = vmul.f32 %v5294, %v5981
    %v6451 = vmul.f32 %v5295, %v5991
    %v6452 = vmul.f32 %v5296, %v6001
    %v6453 = vmul.f32 %v5297, %v6011
    %v6454 = vmul.f32 %v5298, %v6021
    %v6455 = vmul.f32 %v5299, %v6031
    %v6456 = vmul.f32 %v5300, %v6041
    %v6457 = vmul.f32 %v5301, %v6051
    %v6458 = vmul.f32 %v5302, %v6061
    %v6459 = vmul.f32 %v5303, %v6071
    %v6460 = vmul.f32 %v5304, %v6081
    %v6461 = vmul.f32 %v5305, %v6091
    %v6462 = vmul.f32 %v5306, %v6101
    %v6463 = vmul.f32 %v5307, %v6111
    %v6464 = vmul.f32 %v5308, %v6121
    %v6465 = vmul.f32 %v5309, %v6131
    %v6466 = vmul.f32 %v5310, %v6141
    %v6467 = vmul.f32 %v5311, %v6151
    %v6468 = vmul.f32 %v5312, %v6161
    %v6469 = vmul.f32 %v5313, %v6171
    %v6470 = vmul.f32 %v5314, %v6181
    %v6471 = vmul.f32 %v5315, %v6191
    %v6472 = vmul.f32 %v5316, %v6201
    %v6473 = vmul.f32 %v5317, %v6211
    %v6474 = vmul.f32 %v5318, %v6221
    %v6475 = vmul.f32 %v5319, %v6231
    %v6476 = vmul.f32 %v5320, %v6241
    %v6477 = vmul.f32 %v5321, %v6251
    %v6478 = vmul.f32 %v5322, %v6261
    %v6479 = vmul.f32 %v5323, %v6271
    %v6480 = vmul.f32 %v5324, %v6281
    %v6481 = vmul.f32 %v5325, %v6291
    %v6482 = vmul.f32 %v5326, %v6301
    %v6483 = vmul.f32 %v5327, %v6311
    %v6484 = vmul.f32 %v5328, %v6321
    %v6485 = vmul.f32 %v5329, %v6331
    %v6486 = vmul.f32 %v5330, %v6341
    %v6487 = vmul.f32 %v5331, %v6351
    %v6488 = vmul.f32 %v5332, %v6361
    %v6489 = vmul.f32 %v5333, %v6371
    %v6490 = vmul.f32 %v5334, %v6381
    %v6491 = vmul.f32 %v5335, %v6391
    %v6492 = vmul.f32 %v5336, %v6401
    %v6493 = vmul.f32 %v5337, %v6411
    %v6494 = vmul.f32 %v5338, %v6421
    %v6495 = vmul.f32 %v5339, %v6431
    %v6496 = vmax.f32 %v6432, 0.0
    %v6497 = vmax.f32 %v6433, 0.0
    %v6498 = vmax.f32 %v6434, 0.0
    %v6499 = vmax.f32 %v6435, 0.0
    %v6500 = vmax.f32 %v6436, 0.0
    %v6501 = vmax.f32 %v6437, 0.0
    %v6502 = vmax.f32 %v6438, 0.0
    %v6503 = vmax.f32 %v6439, 0.0
    %v6504 = vmax.f32 %v6440, 0.0
    %v6505 = vmax.f32 %v6441, 0.0
    %v6506 = vmax.f32 %v6442, 0.0
    %v6507 = vmax.f32 %v6443, 0.0
    %v6508 = vmax.f32 %v6444, 0.0
    %v6509 = vmax.f32 %v6445, 0.0
    %v6510 = vmax.f32 %v6446, 0.0
    %v6511 = vmax.f32 %v6447, 0.0
    %v6512 = vmax.f32 %v6448, 0.0
    %v6513 = vmax.f32 %v6449, 0.0
    %v6514 = vmax.f32 %v6450, 0.0
    %v6515 = vmax.f32 %v6451, 0.0
    %v6516 = vmax.f32 %v6452, 0.0
    %v6517 = vmax.f32 %v6453, 0.0
    %v6518 = vmax.f32 %v6454, 0.0
    %v6519 = vmax.f32 %v6455, 0.0
    %v6520 = vmax.f32 %v6456, 0.0
    %v6521 = vmax.f32 %v6457, 0.0
    %v6522 = vmax.f32 %v6458, 0.0
    %v6523 = vmax.f32 %v6459, 0.0
    %v6524 = vmax.f32 %v6460, 0.0
    %v6525 = vmax.f32 %v6461, 0.0
    %v6526 = vmax.f32 %v6462, 0.0
    %v6527 = vmax.f32 %v6463, 0.0
    %v6528 = vmax.f32 %v6464, 0.0
    %v6529 = vmax.f32 %v6465, 0.0
    %v6530 = vmax.f32 %v6466, 0.0
    %v6531 = vmax.f32 %v6467, 0.0
    %v6532 = vmax.f32 %v6468, 0.0
    %v6533 = vmax.f32 %v6469, 0.0
    %v6534 = vmax.f32 %v6470, 0.0
    %v6535 = vmax.f32 %v6471, 0.0
    %v6536 = vmax.f32 %v6472, 0.0
    %v6537 = vmax.f32 %v6473, 0.0
    %v6538 = vmax.f32 %v6474, 0.0
    %v6539 = vmax.f32 %v6475, 0.0
    %v6540 = vmax.f32 %v6476, 0.0
    %v6541 = vmax.f32 %v6477, 0.0
    %v6542 = vmax.f32 %v6478, 0.0
    %v6543 = vmax.f32 %v6479, 0.0
    %v6544 = vmax.f32 %v6480, 0.0
    %v6545 = vmax.f32 %v6481, 0.0
    %v6546 = vmax.f32 %v6482, 0.0
    %v6547 = vmax.f32 %v6483, 0.0
    %v6548 = vmax.f32 %v6484, 0.0
    %v6549 = vmax.f32 %v6485, 0.0
    %v6550 = vmax.f32 %v6486, 0.0
    %v6551 = vmax.f32 %v6487, 0.0
    %v6552 = vmax.f32 %v6488, 0.0
    %v6553 = vmax.f32 %v6489, 0.0
    %v6554 = vmax.f32 %v6490, 0.0
    %v6555 = vmax.f32 %v6491, 0.0
    %v6556 = vmax.f32 %v6492, 0.0
    %v6557 = vmax.f32 %v6493, 0.0
    %v6558 = vmax.f32 %v6494, 0.0
    %v6559 = vmax.f32 %v6495, 0.0
    %v6560 = vpack.c.bf16 %v6498, %v6496
    %v6561 = vpack.c.bf16 %v6499, %v6497
    %v6562 = vpack.c.bf16 %v6502, %v6500
    %v6563 = vpack.c.bf16 %v6503, %v6501
    %v6564 = vpack.c.bf16 %v6506, %v6504
    %v6565 = vpack.c.bf16 %v6507, %v6505
    %v6566 = vpack.c.bf16 %v6510, %v6508
    %v6567 = vpack.c.bf16 %v6511, %v6509
    %v6568 = vpack.c.bf16 %v6514, %v6512
    %v6569 = vpack.c.bf16 %v6515, %v6513
    %v6570 = vpack.c.bf16 %v6518, %v6516
    %v6571 = vpack.c.bf16 %v6519, %v6517
    %v6572 = vpack.c.bf16 %v6522, %v6520
    %v6573 = vpack.c.bf16 %v6523, %v6521
    %v6574 = vpack.c.bf16 %v6526, %v6524
    %v6575 = vpack.c.bf16 %v6527, %v6525
    %v6576 = vpack.c.bf16 %v6530, %v6528
    %v6577 = vpack.c.bf16 %v6531, %v6529
    %v6578 = vpack.c.bf16 %v6534, %v6532
    %v6579 = vpack.c.bf16 %v6535, %v6533
    %v6580 = vpack.c.bf16 %v6538, %v6536
    %v6581 = vpack.c.bf16 %v6539, %v6537
    %v6582 = vpack.c.bf16 %v6542, %v6540
    %v6583 = vpack.c.bf16 %v6543, %v6541
    %v6584 = vpack.c.bf16 %v6546, %v6544
    %v6585 = vpack.c.bf16 %v6547, %v6545
    %v6586 = vpack.c.bf16 %v6550, %v6548
    %v6587 = vpack.c.bf16 %v6551, %v6549
    %v6588 = vpack.c.bf16 %v6554, %v6552
    %v6589 = vpack.c.bf16 %v6555, %v6553
    %v6590 = vpack.c.bf16 %v6558, %v6556
    %v6591 = vpack.c.bf16 %v6559, %v6557
    %v6592 = vld [vmem:[%s5] sm:$0xff]
    %v6593 = vld [vmem:[%s5 + $0x8] sm:$0xff]
    %v6594 = vld [vmem:[%s5 + $0x10] sm:$0xff]
    %v6595 = vld [vmem:[%s5 + $0x18] sm:$0xff]
    %v6596 = vld [vmem:[%s5 + $0x20] sm:$0xff]
    %v6597 = vld [vmem:[%s5 + $0x28] sm:$0xff]
    %v6598 = vld [vmem:[%s5 + $0x30] sm:$0xff]
    %v6599 = vld [vmem:[%s5 + $0x38] sm:$0xff]
    %v6600 = vld [vmem:[%s5 + $0x40] sm:$0xff]
    %v6601 = vld [vmem:[%s5 + $0x48] sm:$0xff]
    %v6602 = vld [vmem:[%s5 + $0x50] sm:$0xff]
    %v6603 = vld [vmem:[%s5 + $0x58] sm:$0xff]
    %v6604 = vld [vmem:[%s5 + $0x60] sm:$0xff]
    %v6605 = vld [vmem:[%s5 + $0x68] sm:$0xff]
    %v6606 = vld [vmem:[%s5 + $0x70] sm:$0xff]
    %v6607 = vld [vmem:[%s5 + $0x78] sm:$0xff]
    %v6608 = vld [vmem:[%s5 + $0x80] sm:$0xff]
    %v6609 = vld [vmem:[%s5 + $0x88] sm:$0xff]
    %v6610 = vld [vmem:[%s5 + $0x90] sm:$0xff]
    %v6611 = vld [vmem:[%s5 + $0x98] sm:$0xff]
    %v6612 = vld [vmem:[%s5 + $0xa0] sm:$0xff]
    %v6613 = vld [vmem:[%s5 + $0xa8] sm:$0xff]
    %v6614 = vld [vmem:[%s5 + $0xb0] sm:$0xff]
    %v6615 = vld [vmem:[%s5 + $0xb8] sm:$0xff]
    %v6616 = vld [vmem:[%s5 + $0xc0] sm:$0xff]
    %v6617 = vld [vmem:[%s5 + $0xc8] sm:$0xff]
    %v6618 = vld [vmem:[%s5 + $0xd0] sm:$0xff]
    %v6619 = vld [vmem:[%s5 + $0xd8] sm:$0xff]
    %v6620 = vld [vmem:[%s5 + $0xe0] sm:$0xff]
    %v6621 = vld [vmem:[%s5 + $0xe8] sm:$0xff]
    %v6622 = vld [vmem:[%s5 + $0xf0] sm:$0xff]
    %v6623 = vld [vmem:[%s5 + $0xf8] sm:$0xff]
    %v6656 = vunpack.c.l.b16 %v6592
    %v6657 = vunpack.c.h.b16 %v6592
    %v6658 = vunpack.c.l.b16 %v6593
    %v6659 = vunpack.c.h.b16 %v6593
    %v6660 = vunpack.c.l.b16 %v6594
    %v6661 = vunpack.c.h.b16 %v6594
    %v6662 = vunpack.c.l.b16 %v6595
    %v6663 = vunpack.c.h.b16 %v6595
    %v6664 = vunpack.c.l.b16 %v6596
    %v6665 = vunpack.c.h.b16 %v6596
    %v6666 = vunpack.c.l.b16 %v6597
    %v6667 = vunpack.c.h.b16 %v6597
    %v6668 = vunpack.c.l.b16 %v6598
    %v6669 = vunpack.c.h.b16 %v6598
    %v6670 = vunpack.c.l.b16 %v6599
    %v6671 = vunpack.c.h.b16 %v6599
    %v6672 = vunpack.c.l.b16 %v6600
    %v6673 = vunpack.c.h.b16 %v6600
    %v6674 = vunpack.c.l.b16 %v6601
    %v6675 = vunpack.c.h.b16 %v6601
    %v6676 = vunpack.c.l.b16 %v6602
    %v6677 = vunpack.c.h.b16 %v6602
    %v6678 = vunpack.c.l.b16 %v6603
    %v6679 = vunpack.c.h.b16 %v6603
    %v6680 = vunpack.c.l.b16 %v6604
    %v6681 = vunpack.c.h.b16 %v6604
    %v6682 = vunpack.c.l.b16 %v6605
    %v6683 = vunpack.c.h.b16 %v6605
    %v6684 = vunpack.c.l.b16 %v6606
    %v6685 = vunpack.c.h.b16 %v6606
    %v6686 = vunpack.c.l.b16 %v6607
    %v6687 = vunpack.c.h.b16 %v6607
    %v6688 = vunpack.c.l.b16 %v6608
    %v6689 = vunpack.c.h.b16 %v6608
    %v6690 = vunpack.c.l.b16 %v6609
    %v6691 = vunpack.c.h.b16 %v6609
    %v6692 = vunpack.c.l.b16 %v6610
    %v6693 = vunpack.c.h.b16 %v6610
    %v6694 = vunpack.c.l.b16 %v6611
    %v6695 = vunpack.c.h.b16 %v6611
    %v6696 = vunpack.c.l.b16 %v6612
    %v6697 = vunpack.c.h.b16 %v6612
    %v6698 = vunpack.c.l.b16 %v6613
    %v6699 = vunpack.c.h.b16 %v6613
    %v6700 = vunpack.c.l.b16 %v6614
    %v6701 = vunpack.c.h.b16 %v6614
    %v6702 = vunpack.c.l.b16 %v6615
    %v6703 = vunpack.c.h.b16 %v6615
    %v6704 = vunpack.c.l.b16 %v6616
    %v6705 = vunpack.c.h.b16 %v6616
    %v6706 = vunpack.c.l.b16 %v6617
    %v6707 = vunpack.c.h.b16 %v6617
    %v6708 = vunpack.c.l.b16 %v6618
    %v6709 = vunpack.c.h.b16 %v6618
    %v6710 = vunpack.c.l.b16 %v6619
    %v6711 = vunpack.c.h.b16 %v6619
    %v6712 = vunpack.c.l.b16 %v6620
    %v6713 = vunpack.c.h.b16 %v6620
    %v6714 = vunpack.c.l.b16 %v6621
    %v6715 = vunpack.c.h.b16 %v6621
    %v6716 = vunpack.c.l.b16 %v6622
    %v6717 = vunpack.c.h.b16 %v6622
    %v6718 = vunpack.c.l.b16 %v6623
    %v6719 = vunpack.c.h.b16 %v6623
    %v6720 = vpack.c.b16 %v6658, %v6656
    %v6721 = vpack.c.b16 %v6659, %v6657
    %v6722 = vpack.c.b16 %v6662, %v6660
    %v6723 = vpack.c.b16 %v6663, %v6661
    %v6724 = vpack.c.b16 %v6666, %v6664
    %v6725 = vpack.c.b16 %v6667, %v6665
    %v6726 = vpack.c.b16 %v6670, %v6668
    %v6727 = vpack.c.b16 %v6671, %v6669
    %v6728 = vpack.c.b16 %v6674, %v6672
    %v6729 = vpack.c.b16 %v6675, %v6673
    %v6730 = vpack.c.b16 %v6678, %v6676
    %v6731 = vpack.c.b16 %v6679, %v6677
    %v6732 = vpack.c.b16 %v6682, %v6680
    %v6733 = vpack.c.b16 %v6683, %v6681
    %v6734 = vpack.c.b16 %v6686, %v6684
    %v6735 = vpack.c.b16 %v6687, %v6685
    %v6736 = vpack.c.b16 %v6690, %v6688
    %v6737 = vpack.c.b16 %v6691, %v6689
    %v6738 = vpack.c.b16 %v6694, %v6692
    %v6739 = vpack.c.b16 %v6695, %v6693
    %v6740 = vpack.c.b16 %v6698, %v6696
    %v6741 = vpack.c.b16 %v6699, %v6697
    %v6742 = vpack.c.b16 %v6702, %v6700
    %v6743 = vpack.c.b16 %v6703, %v6701
    %v6744 = vpack.c.b16 %v6706, %v6704
    %v6745 = vpack.c.b16 %v6707, %v6705
    %v6746 = vpack.c.b16 %v6710, %v6708
    %v6747 = vpack.c.b16 %v6711, %v6709
    %v6748 = vpack.c.b16 %v6714, %v6712
    %v6749 = vpack.c.b16 %v6715, %v6713
    %v6750 = vpack.c.b16 %v6718, %v6716
    %v6751 = vpack.c.b16 %v6719, %v6717
    %6784 = vmatpush.bf16.msra.mxu0 %v6734
    %6785 = vmatpush.bf16.msra.mxu0 %v6732
    %6786 = vmatpush.bf16.msra.mxu0 %v6730
    %6787 = vmatpush.bf16.msra.mxu0 %v6728
    %6788 = vmatpush.bf16.msra.mxu0 %v6726
    %6789 = vmatpush.bf16.msra.mxu0 %v6724
    %6790 = vmatpush.bf16.msra.mxu0 %v6722
    %6791 = vmatpush.bf16.msra.mxu0 %v6720
    %6792 = vmatmul.bf16.gmra.mxu0 %v6560
    %v6793 = vpop.f32.mrf.mxu0
    %v6794 = vadd.f32 0.0, %v6793
    %v6795 = vpop.f32.mrf.mxu0
    %v6796 = vadd.f32 0.0, %v6795
    %6797 = vmatmul.bf16.gmra.mxu0 %v6562
    %v6798 = vpop.f32.mrf.mxu0
    %v6799 = vadd.f32 0.0, %v6798
    %v6800 = vpop.f32.mrf.mxu0
    %v6801 = vadd.f32 0.0, %v6800
    %6802 = vmatmul.bf16.gmra.mxu0 %v6564
    %v6803 = vpop.f32.mrf.mxu0
    %v6804 = vadd.f32 0.0, %v6803
    %v6805 = vpop.f32.mrf.mxu0
    %v6806 = vadd.f32 0.0, %v6805
    %6807 = vmatmul.bf16.gmra.mxu0 %v6566
    %v6808 = vpop.f32.mrf.mxu0
    %v6809 = vadd.f32 0.0, %v6808
    %v6810 = vpop.f32.mrf.mxu0
    %v6811 = vadd.f32 0.0, %v6810
    %6812 = vmatmul.bf16.gmra.mxu0 %v6568
    %v6813 = vpop.f32.mrf.mxu0
    %v6814 = vadd.f32 0.0, %v6813
    %v6815 = vpop.f32.mrf.mxu0
    %v6816 = vadd.f32 0.0, %v6815
    %6817 = vmatmul.bf16.gmra.mxu0 %v6570
    %v6818 = vpop.f32.mrf.mxu0
    %v6819 = vadd.f32 0.0, %v6818
    %v6820 = vpop.f32.mrf.mxu0
    %v6821 = vadd.f32 0.0, %v6820
    %6822 = vmatmul.bf16.gmra.mxu0 %v6572
    %v6823 = vpop.f32.mrf.mxu0
    %v6824 = vadd.f32 0.0, %v6823
    %v6825 = vpop.f32.mrf.mxu0
    %v6826 = vadd.f32 0.0, %v6825
    %6827 = vmatmul.bf16.gmra.mxu0 %v6574
    %v6828 = vpop.f32.mrf.mxu0
    %v6829 = vadd.f32 0.0, %v6828
    %v6830 = vpop.f32.mrf.mxu0
    %v6831 = vadd.f32 0.0, %v6830
    %6832 = vmatmul.bf16.gmra.mxu0 %v6576
    %v6833 = vpop.f32.mrf.mxu0
    %v6834 = vadd.f32 0.0, %v6833
    %v6835 = vpop.f32.mrf.mxu0
    %v6836 = vadd.f32 0.0, %v6835
    %6837 = vmatmul.bf16.gmra.mxu0 %v6578
    %v6838 = vpop.f32.mrf.mxu0
    %v6839 = vadd.f32 0.0, %v6838
    %v6840 = vpop.f32.mrf.mxu0
    %v6841 = vadd.f32 0.0, %v6840
    %6842 = vmatmul.bf16.gmra.mxu0 %v6580
    %v6843 = vpop.f32.mrf.mxu0
    %v6844 = vadd.f32 0.0, %v6843
    %v6845 = vpop.f32.mrf.mxu0
    %v6846 = vadd.f32 0.0, %v6845
    %6847 = vmatmul.bf16.gmra.mxu0 %v6582
    %v6848 = vpop.f32.mrf.mxu0
    %v6849 = vadd.f32 0.0, %v6848
    %v6850 = vpop.f32.mrf.mxu0
    %v6851 = vadd.f32 0.0, %v6850
    %6852 = vmatmul.bf16.gmra.mxu0 %v6584
    %v6853 = vpop.f32.mrf.mxu0
    %v6854 = vadd.f32 0.0, %v6853
    %v6855 = vpop.f32.mrf.mxu0
    %v6856 = vadd.f32 0.0, %v6855
    %6857 = vmatmul.bf16.gmra.mxu0 %v6586
    %v6858 = vpop.f32.mrf.mxu0
    %v6859 = vadd.f32 0.0, %v6858
    %v6860 = vpop.f32.mrf.mxu0
    %v6861 = vadd.f32 0.0, %v6860
    %6862 = vmatmul.bf16.gmra.mxu0 %v6588
    %v6863 = vpop.f32.mrf.mxu0
    %v6864 = vadd.f32 0.0, %v6863
    %v6865 = vpop.f32.mrf.mxu0
    %v6866 = vadd.f32 0.0, %v6865
    %6867 = vmatmul.bf16.gmra.mxu0 %v6590
    %v6868 = vpop.f32.mrf.mxu0
    %v6869 = vadd.f32 0.0, %v6868
    %v6870 = vpop.f32.mrf.mxu0
    %v6871 = vadd.f32 0.0, %v6870
    %6872 = vdwg.mxu0
    %6873 = vmatpush.bf16.msra.mxu0 %v6750
    %6874 = vmatpush.bf16.msra.mxu0 %v6748
    %6875 = vmatpush.bf16.msra.mxu0 %v6746
    %6876 = vmatpush.bf16.msra.mxu0 %v6744
    %6877 = vmatpush.bf16.msra.mxu0 %v6742
    %6878 = vmatpush.bf16.msra.mxu0 %v6740
    %6879 = vmatpush.bf16.msra.mxu0 %v6738
    %6880 = vmatpush.bf16.msra.mxu0 %v6736
    %6881 = vmatmul.bf16.gmra.mxu0 %v6561
    %v6882 = vpop.f32.mrf.mxu0
    %v6883 = vadd.f32 %v6794, %v6882
    %v6884 = vpop.f32.mrf.mxu0
    %v6885 = vadd.f32 %v6796, %v6884
    %6886 = vmatmul.bf16.gmra.mxu0 %v6563
    %v6887 = vpop.f32.mrf.mxu0
    %v6888 = vadd.f32 %v6799, %v6887
    %v6889 = vpop.f32.mrf.mxu0
    %v6890 = vadd.f32 %v6801, %v6889
    %6891 = vmatmul.bf16.gmra.mxu0 %v6565
    %v6892 = vpop.f32.mrf.mxu0
    %v6893 = vadd.f32 %v6804, %v6892
    %v6894 = vpop.f32.mrf.mxu0
    %v6895 = vadd.f32 %v6806, %v6894
    %6896 = vmatmul.bf16.gmra.mxu0 %v6567
    %v6897 = vpop.f32.mrf.mxu0
    %v6898 = vadd.f32 %v6809, %v6897
    %v6899 = vpop.f32.mrf.mxu0
    %v6900 = vadd.f32 %v6811, %v6899
    %6901 = vmatmul.bf16.gmra.mxu0 %v6569
    %v6902 = vpop.f32.mrf.mxu0
    %v6903 = vadd.f32 %v6814, %v6902
    %v6904 = vpop.f32.mrf.mxu0
    %v6905 = vadd.f32 %v6816, %v6904
    %6906 = vmatmul.bf16.gmra.mxu0 %v6571
    %v6907 = vpop.f32.mrf.mxu0
    %v6908 = vadd.f32 %v6819, %v6907
    %v6909 = vpop.f32.mrf.mxu0
    %v6910 = vadd.f32 %v6821, %v6909
    %6911 = vmatmul.bf16.gmra.mxu0 %v6573
    %v6912 = vpop.f32.mrf.mxu0
    %v6913 = vadd.f32 %v6824, %v6912
    %v6914 = vpop.f32.mrf.mxu0
    %v6915 = vadd.f32 %v6826, %v6914
    %6916 = vmatmul.bf16.gmra.mxu0 %v6575
    %v6917 = vpop.f32.mrf.mxu0
    %v6918 = vadd.f32 %v6829, %v6917
    %v6919 = vpop.f32.mrf.mxu0
    %v6920 = vadd.f32 %v6831, %v6919
    %6921 = vmatmul.bf16.gmra.mxu0 %v6577
    %v6922 = vpop.f32.mrf.mxu0
    %v6923 = vadd.f32 %v6834, %v6922
    %v6924 = vpop.f32.mrf.mxu0
    %v6925 = vadd.f32 %v6836, %v6924
    %6926 = vmatmul.bf16.gmra.mxu0 %v6579
    %v6927 = vpop.f32.mrf.mxu0
    %v6928 = vadd.f32 %v6839, %v6927
    %v6929 = vpop.f32.mrf.mxu0
    %v6930 = vadd.f32 %v6841, %v6929
    %6931 = vmatmul.bf16.gmra.mxu0 %v6581
    %v6932 = vpop.f32.mrf.mxu0
    %v6933 = vadd.f32 %v6844, %v6932
    %v6934 = vpop.f32.mrf.mxu0
    %v6935 = vadd.f32 %v6846, %v6934
    %6936 = vmatmul.bf16.gmra.mxu0 %v6583
    %v6937 = vpop.f32.mrf.mxu0
    %v6938 = vadd.f32 %v6849, %v6937
    %v6939 = vpop.f32.mrf.mxu0
    %v6940 = vadd.f32 %v6851, %v6939
    %6941 = vmatmul.bf16.gmra.mxu0 %v6585
    %v6942 = vpop.f32.mrf.mxu0
    %v6943 = vadd.f32 %v6854, %v6942
    %v6944 = vpop.f32.mrf.mxu0
    %v6945 = vadd.f32 %v6856, %v6944
    %6946 = vmatmul.bf16.gmra.mxu0 %v6587
    %v6947 = vpop.f32.mrf.mxu0
    %v6948 = vadd.f32 %v6859, %v6947
    %v6949 = vpop.f32.mrf.mxu0
    %v6950 = vadd.f32 %v6861, %v6949
    %6951 = vmatmul.bf16.gmra.mxu0 %v6589
    %v6952 = vpop.f32.mrf.mxu0
    %v6953 = vadd.f32 %v6864, %v6952
    %v6954 = vpop.f32.mrf.mxu0
    %v6955 = vadd.f32 %v6866, %v6954
    %6956 = vmatmul.bf16.gmra.mxu0 %v6591
    %v6957 = vpop.f32.mrf.mxu0
    %v6958 = vadd.f32 %v6869, %v6957
    %v6959 = vpop.f32.mrf.mxu0
    %v6960 = vadd.f32 %v6871, %v6959
    %6961 = vdwg.mxu0
    %6962 = vmatpush.bf16.msra.mxu0 %v6735
    %6963 = vmatpush.bf16.msra.mxu0 %v6733
    %6964 = vmatpush.bf16.msra.mxu0 %v6731
    %6965 = vmatpush.bf16.msra.mxu0 %v6729
    %6966 = vmatpush.bf16.msra.mxu0 %v6727
    %6967 = vmatpush.bf16.msra.mxu0 %v6725
    %6968 = vmatpush.bf16.msra.mxu0 %v6723
    %6969 = vmatpush.bf16.msra.mxu0 %v6721
    %6970 = vmatmul.bf16.gmra.mxu0 %v6560
    %v6971 = vpop.f32.mrf.mxu0
    %v6972 = vadd.f32 0.0, %v6971
    %v6973 = vpop.f32.mrf.mxu0
    %v6974 = vadd.f32 0.0, %v6973
    %6975 = vmatmul.bf16.gmra.mxu0 %v6562
    %v6976 = vpop.f32.mrf.mxu0
    %v6977 = vadd.f32 0.0, %v6976
    %v6978 = vpop.f32.mrf.mxu0
    %v6979 = vadd.f32 0.0, %v6978
    %6980 = vmatmul.bf16.gmra.mxu0 %v6564
    %v6981 = vpop.f32.mrf.mxu0
    %v6982 = vadd.f32 0.0, %v6981
    %v6983 = vpop.f32.mrf.mxu0
    %v6984 = vadd.f32 0.0, %v6983
    %6985 = vmatmul.bf16.gmra.mxu0 %v6566
    %v6986 = vpop.f32.mrf.mxu0
    %v6987 = vadd.f32 0.0, %v6986
    %v6988 = vpop.f32.mrf.mxu0
    %v6989 = vadd.f32 0.0, %v6988
    %6990 = vmatmul.bf16.gmra.mxu0 %v6568
    %v6991 = vpop.f32.mrf.mxu0
    %v6992 = vadd.f32 0.0, %v6991
    %v6993 = vpop.f32.mrf.mxu0
    %v6994 = vadd.f32 0.0, %v6993
    %6995 = vmatmul.bf16.gmra.mxu0 %v6570
    %v6996 = vpop.f32.mrf.mxu0
    %v6997 = vadd.f32 0.0, %v6996
    %v6998 = vpop.f32.mrf.mxu0
    %v6999 = vadd.f32 0.0, %v6998
    %7000 = vmatmul.bf16.gmra.mxu0 %v6572
    %v7001 = vpop.f32.mrf.mxu0
    %v7002 = vadd.f32 0.0, %v7001
    %v7003 = vpop.f32.mrf.mxu0
    %v7004 = vadd.f32 0.0, %v7003
    %7005 = vmatmul.bf16.gmra.mxu0 %v6574
    %v7006 = vpop.f32.mrf.mxu0
    %v7007 = vadd.f32 0.0, %v7006
    %v7008 = vpop.f32.mrf.mxu0
    %v7009 = vadd.f32 0.0, %v7008
    %7010 = vmatmul.bf16.gmra.mxu0 %v6576
    %v7011 = vpop.f32.mrf.mxu0
    %v7012 = vadd.f32 0.0, %v7011
    %v7013 = vpop.f32.mrf.mxu0
    %v7014 = vadd.f32 0.0, %v7013
    %7015 = vmatmul.bf16.gmra.mxu0 %v6578
    %v7016 = vpop.f32.mrf.mxu0
    %v7017 = vadd.f32 0.0, %v7016
    %v7018 = vpop.f32.mrf.mxu0
    %v7019 = vadd.f32 0.0, %v7018
    %7020 = vmatmul.bf16.gmra.mxu0 %v6580
    %v7021 = vpop.f32.mrf.mxu0
    %v7022 = vadd.f32 0.0, %v7021
    %v7023 = vpop.f32.mrf.mxu0
    %v7024 = vadd.f32 0.0, %v7023
    %7025 = vmatmul.bf16.gmra.mxu0 %v6582
    %v7026 = vpop.f32.mrf.mxu0
    %v7027 = vadd.f32 0.0, %v7026
    %v7028 = vpop.f32.mrf.mxu0
    %v7029 = vadd.f32 0.0, %v7028
    %7030 = vmatmul.bf16.gmra.mxu0 %v6584
    %v7031 = vpop.f32.mrf.mxu0
    %v7032 = vadd.f32 0.0, %v7031
    %v7033 = vpop.f32.mrf.mxu0
    %v7034 = vadd.f32 0.0, %v7033
    %7035 = vmatmul.bf16.gmra.mxu0 %v6586
    %v7036 = vpop.f32.mrf.mxu0
    %v7037 = vadd.f32 0.0, %v7036
    %v7038 = vpop.f32.mrf.mxu0
    %v7039 = vadd.f32 0.0, %v7038
    %7040 = vmatmul.bf16.gmra.mxu0 %v6588
    %v7041 = vpop.f32.mrf.mxu0
    %v7042 = vadd.f32 0.0, %v7041
    %v7043 = vpop.f32.mrf.mxu0
    %v7044 = vadd.f32 0.0, %v7043
    %7045 = vmatmul.bf16.gmra.mxu0 %v6590
    %v7046 = vpop.f32.mrf.mxu0
    %v7047 = vadd.f32 0.0, %v7046
    %v7048 = vpop.f32.mrf.mxu0
    %v7049 = vadd.f32 0.0, %v7048
    %7050 = vdwg.mxu0
    %7051 = vmatpush.bf16.msra.mxu0 %v6751
    %7052 = vmatpush.bf16.msra.mxu0 %v6749
    %7053 = vmatpush.bf16.msra.mxu0 %v6747
    %7054 = vmatpush.bf16.msra.mxu0 %v6745
    %7055 = vmatpush.bf16.msra.mxu0 %v6743
    %7056 = vmatpush.bf16.msra.mxu0 %v6741
    %7057 = vmatpush.bf16.msra.mxu0 %v6739
    %7058 = vmatpush.bf16.msra.mxu0 %v6737
    %7059 = vmatmul.bf16.gmra.mxu0 %v6561
    %v7060 = vpop.f32.mrf.mxu0
    %v7061 = vadd.f32 %v6972, %v7060
    %v7062 = vpop.f32.mrf.mxu0
    %v7063 = vadd.f32 %v6974, %v7062
    %7064 = vmatmul.bf16.gmra.mxu0 %v6563
    %v7065 = vpop.f32.mrf.mxu0
    %v7066 = vadd.f32 %v6977, %v7065
    %v7067 = vpop.f32.mrf.mxu0
    %v7068 = vadd.f32 %v6979, %v7067
    %7069 = vmatmul.bf16.gmra.mxu0 %v6565
    %v7070 = vpop.f32.mrf.mxu0
    %v7071 = vadd.f32 %v6982, %v7070
    %v7072 = vpop.f32.mrf.mxu0
    %v7073 = vadd.f32 %v6984, %v7072
    %7074 = vmatmul.bf16.gmra.mxu0 %v6567
    %v7075 = vpop.f32.mrf.mxu0
    %v7076 = vadd.f32 %v6987, %v7075
    %v7077 = vpop.f32.mrf.mxu0
    %v7078 = vadd.f32 %v6989, %v7077
    %7079 = vmatmul.bf16.gmra.mxu0 %v6569
    %v7080 = vpop.f32.mrf.mxu0
    %v7081 = vadd.f32 %v6992, %v7080
    %v7082 = vpop.f32.mrf.mxu0
    %v7083 = vadd.f32 %v6994, %v7082
    %7084 = vmatmul.bf16.gmra.mxu0 %v6571
    %v7085 = vpop.f32.mrf.mxu0
    %v7086 = vadd.f32 %v6997, %v7085
    %v7087 = vpop.f32.mrf.mxu0
    %v7088 = vadd.f32 %v6999, %v7087
    %7089 = vmatmul.bf16.gmra.mxu0 %v6573
    %v7090 = vpop.f32.mrf.mxu0
    %v7091 = vadd.f32 %v7002, %v7090
    %v7092 = vpop.f32.mrf.mxu0
    %v7093 = vadd.f32 %v7004, %v7092
    %7094 = vmatmul.bf16.gmra.mxu0 %v6575
    %v7095 = vpop.f32.mrf.mxu0
    %v7096 = vadd.f32 %v7007, %v7095
    %v7097 = vpop.f32.mrf.mxu0
    %v7098 = vadd.f32 %v7009, %v7097
    %7099 = vmatmul.bf16.gmra.mxu0 %v6577
    %v7100 = vpop.f32.mrf.mxu0
    %v7101 = vadd.f32 %v7012, %v7100
    %v7102 = vpop.f32.mrf.mxu0
    %v7103 = vadd.f32 %v7014, %v7102
    %7104 = vmatmul.bf16.gmra.mxu0 %v6579
    %v7105 = vpop.f32.mrf.mxu0
    %v7106 = vadd.f32 %v7017, %v7105
    %v7107 = vpop.f32.mrf.mxu0
    %v7108 = vadd.f32 %v7019, %v7107
    %7109 = vmatmul.bf16.gmra.mxu0 %v6581
    %v7110 = vpop.f32.mrf.mxu0
    %v7111 = vadd.f32 %v7022, %v7110
    %v7112 = vpop.f32.mrf.mxu0
    %v7113 = vadd.f32 %v7024, %v7112
    %7114 = vmatmul.bf16.gmra.mxu0 %v6583
    %v7115 = vpop.f32.mrf.mxu0
    %v7116 = vadd.f32 %v7027, %v7115
    %v7117 = vpop.f32.mrf.mxu0
    %v7118 = vadd.f32 %v7029, %v7117
    %7119 = vmatmul.bf16.gmra.mxu0 %v6585
    %v7120 = vpop.f32.mrf.mxu0
    %v7121 = vadd.f32 %v7032, %v7120
    %v7122 = vpop.f32.mrf.mxu0
    %v7123 = vadd.f32 %v7034, %v7122
    %7124 = vmatmul.bf16.gmra.mxu0 %v6587
    %v7125 = vpop.f32.mrf.mxu0
    %v7126 = vadd.f32 %v7037, %v7125
    %v7127 = vpop.f32.mrf.mxu0
    %v7128 = vadd.f32 %v7039, %v7127
    %7129 = vmatmul.bf16.gmra.mxu0 %v6589
    %v7130 = vpop.f32.mrf.mxu0
    %v7131 = vadd.f32 %v7042, %v7130
    %v7132 = vpop.f32.mrf.mxu0
    %v7133 = vadd.f32 %v7044, %v7132
    %7134 = vmatmul.bf16.gmra.mxu0 %v6591
    %v7135 = vpop.f32.mrf.mxu0
    %v7136 = vadd.f32 %v7047, %v7135
    %v7137 = vpop.f32.mrf.mxu0
    %v7138 = vadd.f32 %v7049, %v7137
    %7139 = vdwg.mxu0
    %v7140 = vtanh.pop %v6883
    %v7141 = vtanh.pop %v7061
    %v7142 = vtanh.pop %v6885
    %v7143 = vtanh.pop %v7063
    %v7144 = vtanh.pop %v6888
    %v7145 = vtanh.pop %v7066
    %v7146 = vtanh.pop %v6890
    %v7147 = vtanh.pop %v7068
    %v7148 = vtanh.pop %v6893
    %v7149 = vtanh.pop %v7071
    %v7150 = vtanh.pop %v6895
    %v7151 = vtanh.pop %v7073
    %v7152 = vtanh.pop %v6898
    %v7153 = vtanh.pop %v7076
    %v7154 = vtanh.pop %v6900
    %v7155 = vtanh.pop %v7078
    %v7156 = vtanh.pop %v6903
    %v7157 = vtanh.pop %v7081
    %v7158 = vtanh.pop %v6905
    %v7159 = vtanh.pop %v7083
    %v7160 = vtanh.pop %v6908
    %v7161 = vtanh.pop %v7086
    %v7162 = vtanh.pop %v6910
    %v7163 = vtanh.pop %v7088
    %v7164 = vtanh.pop %v6913
    %v7165 = vtanh.pop %v7091
    %v7166 = vtanh.pop %v6915
    %v7167 = vtanh.pop %v7093
    %v7168 = vtanh.pop %v6918
    %v7169 = vtanh.pop %v7096
    %v7170 = vtanh.pop %v6920
    %v7171 = vtanh.pop %v7098
    %v7172 = vtanh.pop %v6923
    %v7173 = vtanh.pop %v7101
    %v7174 = vtanh.pop %v6925
    %v7175 = vtanh.pop %v7103
    %v7176 = vtanh.pop %v6928
    %v7177 = vtanh.pop %v7106
    %v7178 = vtanh.pop %v6930
    %v7179 = vtanh.pop %v7108
    %v7180 = vtanh.pop %v6933
    %v7181 = vtanh.pop %v7111
    %v7182 = vtanh.pop %v6935
    %v7183 = vtanh.pop %v7113
    %v7184 = vtanh.pop %v6938
    %v7185 = vtanh.pop %v7116
    %v7186 = vtanh.pop %v6940
    %v7187 = vtanh.pop %v7118
    %v7188 = vtanh.pop %v6943
    %v7189 = vtanh.pop %v7121
    %v7190 = vtanh.pop %v6945
    %v7191 = vtanh.pop %v7123
    %v7192 = vtanh.pop %v6948
    %v7193 = vtanh.pop %v7126
    %v7194 = vtanh.pop %v6950
    %v7195 = vtanh.pop %v7128
    %v7196 = vtanh.pop %v6953
    %v7197 = vtanh.pop %v7131
    %v7198 = vtanh.pop %v6955
    %v7199 = vtanh.pop %v7133
    %v7200 = vtanh.pop %v6958
    %v7201 = vtanh.pop %v7136
    %v7202 = vtanh.pop %v6960
    %v7203 = vtanh.pop %v7138
    %7204 = vst [vmem:[%s8] sm:$0xff] %v7140
    %7205 = vst [vmem:[%s8 + $0x8] sm:$0xff] %v7141
    %7206 = vst [vmem:[%s8 + $0x10] sm:$0xff] %v7142
    %7207 = vst [vmem:[%s8 + $0x18] sm:$0xff] %v7143
    %7208 = vst [vmem:[%s8 + $0x20] sm:$0xff] %v7144
    %7209 = vst [vmem:[%s8 + $0x28] sm:$0xff] %v7145
    %7210 = vst [vmem:[%s8 + $0x30] sm:$0xff] %v7146
    %7211 = vst [vmem:[%s8 + $0x38] sm:$0xff] %v7147
    %7212 = vst [vmem:[%s8 + $0x40] sm:$0xff] %v7148
    %7213 = vst [vmem:[%s8 + $0x48] sm:$0xff] %v7149
    %7214 = vst [vmem:[%s8 + $0x50] sm:$0xff] %v7150
    %7215 = vst [vmem:[%s8 + $0x58] sm:$0xff] %v7151
    %7216 = vst [vmem:[%s8 + $0x60] sm:$0xff] %v7152
    %7217 = vst [vmem:[%s8 + $0x68] sm:$0xff] %v7153
    %7218 = vst [vmem:[%s8 + $0x70] sm:$0xff] %v7154
    %7219 = vst [vmem:[%s8 + $0x78] sm:$0xff] %v7155
    %7220 = vst [vmem:[%s8 + $0x80] sm:$0xff] %v7156
    %7221 = vst [vmem:[%s8 + $0x88] sm:$0xff] %v7157
    %7222 = vst [vmem:[%s8 + $0x90] sm:$0xff] %v7158
    %7223 = vst [vmem:[%s8 + $0x98] sm:$0xff] %v7159
    %7224 = vst [vmem:[%s8 + $0xa0] sm:$0xff] %v7160
    %7225 = vst [vmem:[%s8 + $0xa8] sm:$0xff] %v7161
    %7226 = vst [vmem:[%s8 + $0xb0] sm:$0xff] %v7162
    %7227 = vst [vmem:[%s8 + $0xb8] sm:$0xff] %v7163
    %7228 = vst [vmem:[%s8 + $0xc0] sm:$0xff] %v7164
    %7229 = vst [vmem:[%s8 + $0xc8] sm:$0xff] %v7165
    %7230 = vst [vmem:[%s8 + $0xd0] sm:$0xff] %v7166
    %7231 = vst [vmem:[%s8 + $0xd8] sm:$0xff] %v7167
    %7232 = vst [vmem:[%s8 + $0xe0] sm:$0xff] %v7168
    %7233 = vst [vmem:[%s8 + $0xe8] sm:$0xff] %v7169
    %7234 = vst [vmem:[%s8 + $0xf0] sm:$0xff] %v7170
    %7235 = vst [vmem:[%s8 + $0xf8] sm:$0xff] %v7171
    %7236 = vst [vmem:[%s8 + $0x100] sm:$0xff] %v7172
    %7237 = vst [vmem:[%s8 + $0x108] sm:$0xff] %v7173
    %7238 = vst [vmem:[%s8 + $0x110] sm:$0xff] %v7174
    %7239 = vst [vmem:[%s8 + $0x118] sm:$0xff] %v7175
    %7240 = vst [vmem:[%s8 + $0x120] sm:$0xff] %v7176
    %7241 = vst [vmem:[%s8 + $0x128] sm:$0xff] %v7177
    %7242 = vst [vmem:[%s8 + $0x130] sm:$0xff] %v7178
    %7243 = vst [vmem:[%s8 + $0x138] sm:$0xff] %v7179
    %7244 = vst [vmem:[%s8 + $0x140] sm:$0xff] %v7180
    %7245 = vst [vmem:[%s8 + $0x148] sm:$0xff] %v7181
    %7246 = vst [vmem:[%s8 + $0x150] sm:$0xff] %v7182
    %7247 = vst [vmem:[%s8 + $0x158] sm:$0xff] %v7183
    %7248 = vst [vmem:[%s8 + $0x160] sm:$0xff] %v7184
    %7249 = vst [vmem:[%s8 + $0x168] sm:$0xff] %v7185
    %7250 = vst [vmem:[%s8 + $0x170] sm:$0xff] %v7186
    %7251 = vst [vmem:[%s8 + $0x178] sm:$0xff] %v7187
    %7252 = vst [vmem:[%s8 + $0x180] sm:$0xff] %v7188
    %7253 = vst [vmem:[%s8 + $0x188] sm:$0xff] %v7189
    %7254 = vst [vmem:[%s8 + $0x190] sm:$0xff] %v7190
    %7255 = vst [vmem:[%s8 + $0x198] sm:$0xff] %v7191
    %7256 = vst [vmem:[%s8 + $0x1a0] sm:$0xff] %v7192
    %7257 = vst [vmem:[%s8 + $0x1a8] sm:$0xff] %v7193
    %7258 = vst [vmem:[%s8 + $0x1b0] sm:$0xff] %v7194
    %7259 = vst [vmem:[%s8 + $0x1b8] sm:$0xff] %v7195
    %7260 = vst [vmem:[%s8 + $0x1c0] sm:$0xff] %v7196
    %7261 = vst [vmem:[%s8 + $0x1c8] sm:$0xff] %v7197
    %7262 = vst [vmem:[%s8 + $0x1d0] sm:$0xff] %v7198
    %7263 = vst [vmem:[%s8 + $0x1d8] sm:$0xff] %v7199
    %7264 = vst [vmem:[%s8 + $0x1e0] sm:$0xff] %v7200
    %7265 = vst [vmem:[%s8 + $0x1e8] sm:$0xff] %v7201
    %7266 = vst [vmem:[%s8 + $0x1f0] sm:$0xff] %v7202
    %7267 = vst [vmem:[%s8 + $0x1f8] sm:$0xff] %v7203
    // Predicated region
    $region54: #{aedc_forward.1} parent=1 // pred_check
      _
    $region55: #{aedc_forward.1} parent=1 // pred_check_branch
      %7269 = sbr.rel (0) target = $region57
    $region56: #{aedc_forward.1} parent=1 // pred_region
      _
    $region57: #{aedc_forward.1} parent=1 // pred_fallthru
      _
    // Predicated region
    $region58: #{aedc_forward.1} parent=1 // pred_check
      _
    $region59: #{aedc_forward.1} parent=1 // pred_check_branch
      %7271 = sbr.rel (0) target = $region61
    $region60: #{aedc_forward.1} parent=1 // pred_region
      _
    $region61: #{aedc_forward.1} parent=1 // pred_fallthru
      _
    %7272 = vsyncpa [#allocation3], 1
    %7273 = vsyncpa [#allocation5], 1
    %7274 = vsyncpa [#allocation8], 1

</llo_original>
